<compile_context>
chip_gen: v7x
topology: tpu7x:2x2x1
jax: 0.10.0
libtpu: 0.0.40
codegen_flags: <defaults>
</compile_context>

<pallas_src>
import functools

import jax
import jax.numpy as jnp
from jax.experimental import pallas as pl
from jax.experimental.pallas import tpu as pltpu


_VMEM = pl.BlockSpec(memory_space=pltpu.MemorySpace.VMEM)
_CPARAMS = pltpu.CompilerParams(vmem_limit_bytes=32 * 1024 * 1024)


# ----------------------------------------------------------------------------
# Pallas kernels
# ----------------------------------------------------------------------------
def _conv_pool_kernel(mp, p_ref, w_ref, b_ref, o_ref):
    """Fused conv-as-matmul + bias + ReLU + 2x2/stride-2 max-pool.

    p_ref: (4*mp, K) bf16  im2col patches, group-major by output-pixel parity
                           (mp = padded B*Ho*Wo pooled-pixel count, K = 9*Cin).
    w_ref: (K, N)   bf16   packed conv weights.
    b_ref: (1, N)   f32    bias.
    o_ref: (mp, N)  bf16   pooled, ReLU'd activations.
    """
    # One long MXU pass instead of 4 short ones (amortizes fill/drain + MRF pops).
    acc = jnp.dot(p_ref[...], w_ref[...], preferred_element_type=jnp.float32)
    # Static, sublane-aligned slices (mp is a multiple of 8).
    m01 = jnp.maximum(acc[0 * mp:1 * mp], acc[1 * mp:2 * mp])
    m23 = jnp.maximum(acc[2 * mp:3 * mp], acc[3 * mp:4 * mp])
    # bias is shared by the 4 candidates and ReLU is monotone, so
    # relu(max_i(acc_i) + b) == max_i(relu(acc_i + b))  (== pool(relu(conv+b))).
    z = jnp.maximum(m01, m23) + b_ref[...]          # f32 epilogue
    o_ref[...] = jnp.maximum(z, 0.0).astype(o_ref.dtype)


def _fc_stack_kernel(x_ref, w1_ref, b1_ref, w2_ref, b2_ref, w3_ref, b3_ref, o_ref):
    """fc1+ReLU -> fc2+ReLU -> fc3, all weights resident in VMEM, one launch.

    x / weights are bf16, accumulation + bias/ReLU in f32, final output f32.
    """
    h = jnp.dot(x_ref[...], w1_ref[...], preferred_element_type=jnp.float32)
    h = jnp.maximum(h + b1_ref[...], 0.0).astype(w2_ref.dtype)
    h = jnp.dot(h, w2_ref[...], preferred_element_type=jnp.float32)
    h = jnp.maximum(h + b2_ref[...], 0.0).astype(w3_ref.dtype)
    out = jnp.dot(h, w3_ref[...], preferred_element_type=jnp.float32) + b3_ref[...]
    o_ref[...] = out.astype(o_ref.dtype)


# ----------------------------------------------------------------------------
# Wrappers
# ----------------------------------------------------------------------------
def _round_up(n, m):
    return ((n + m - 1) // m) * m


def conv3x3_relu_pool(x_nhwc, w_packed, b_packed):
    """3x3 / stride-1 / pad-1 conv + bias + ReLU + 2x2 max-pool in one Pallas call."""
    B, H, W, Cin = x_nhwc.shape
    Kp, Cout = w_packed.shape
    Ho, Wo = H // 2, W // 2
    M = B * Ho * Wo
    Mp = _round_up(M, 8)          # sublane-aligned per-parity row count
    K = 9 * Cin

    # Pad once (bf16), then build the 4 parity groups directly with stride-2
    # slices -- single bf16 materialization of the patch tensor, no 6-D transpose.
    xp = jnp.pad(x_nhwc.astype(jnp.bfloat16), ((0, 0), (1, 1), (1, 1), (0, 0)))
    groups = []
    for ph in range(2):
        for pw in range(2):
            cols = [
                xp[:, ph + kh: ph + kh + 2 * Ho: 2,
                      pw + kw: pw + kw + 2 * Wo: 2, :]
                for kh in range(3) for kw in range(3)
            ]  # each (B, Ho, Wo, Cin); column order (kh, kw, cin) matches weights
            if Kp > K:
                cols.append(jnp.zeros((B, Ho, Wo, Kp - K), jnp.bfloat16))
            groups.append(jnp.concatenate(cols, axis=-1).reshape(M, Kp))
    p = jnp.stack(groups, axis=0)                   # (4, M, Kp), group-major
    if Mp > M:
        p = jnp.pad(p, ((0, 0), (0, Mp - M), (0, 0)))
    p = p.reshape(4 * Mp, Kp)                       # free reshape (leading axes)

    cost = pl.CostEstimate(
        flops=2 * 4 * Mp * Kp * Cout,
        transcendentals=0,
        bytes_accessed=(4 * Mp * Kp * 2 + Kp * Cout * 2 + Cout * 4 + Mp * Cout * 2),
    )

    out = pl.pallas_call(
        functools.partial(_conv_pool_kernel, Mp),
        out_shape=jax.ShapeDtypeStruct((Mp, Cout), jnp.bfloat16),
        in_specs=[_VMEM, _VMEM, _VMEM],
        out_specs=_VMEM,
        compiler_params=_CPARAMS,
        cost_estimate=cost,
    )(p, w_packed, b_packed)
    return out[:M].reshape(B, Ho, Wo, Cout)         # NHWC, bf16


def fc_stack(x, p):
    B = x.shape[0]
    k1, n1 = p["fc1_w"].shape
    _, n2 = p["fc2_w"].shape
    _, n3 = p["fc3_w"].shape
    cost = pl.CostEstimate(
        flops=2 * B * (k1 * n1 + n1 * n2 + n2 * n3),
        transcendentals=0,
        bytes_accessed=(B * k1 * 2
                        + (k1 * n1 + n1 * n2 + n2 * n3) * 2
                        + (n1 + n2 + n3) * 4
                        + B * n3 * 4),
    )
    return pl.pallas_call(
        _fc_stack_kernel,
        out_shape=jax.ShapeDtypeStruct((B, n3), jnp.float32),
        in_specs=[_VMEM] * 7,
        out_specs=_VMEM,
        compiler_params=_CPARAMS,
        cost_estimate=cost,
    )(x, p["fc1_w"], p["fc1_b"], p["fc2_w"], p["fc2_b"], p["fc3_w"], p["fc3_b"])


def convnet_forward(x_nchw, p):
    # Single tiny NCHW->NHWC relayout (~46 KB); the rest of the layout work is
    # folded into the im2col slicing / pre-packed weights.
    x = jnp.transpose(x_nchw, (0, 2, 3, 1))
    x = conv3x3_relu_pool(x, p["conv1_w"], p["conv1_b"])   # (B, 22, 22, 32) bf16
    x = conv3x3_relu_pool(x, p["conv2_w"], p["conv2_b"])   # (B, 11, 11, 32) bf16
    x = x.reshape(x.shape[0], -1)                          # NHWC flatten (B, 3872)
    return fc_stack(x, p)                                  # (B, 80) f32


# ----------------------------------------------------------------------------
# Parameters: torch-layout init + one-time packing (outside jit)
# ----------------------------------------------------------------------------
def init_params(key):
    ks = jax.random.split(key, 10)

    def u(k, shape, fan_in):
        bound = 1.0 / jnp.sqrt(fan_in)
        return jax.random.uniform(k, shape, jnp.float32, -bound, bound)

    return {
        # torch layouts: conv (Cout, Cin, kh, kw); linear (out, in)
        "conv1_w": u(ks[0], (32, 3, 3, 3), 3 * 9),
        "conv1_b": u(ks[1], (32,), 3 * 9),
        "conv2_w": u(ks[2], (32, 32, 3, 3), 32 * 9),
        "conv2_b": u(ks[3], (32,), 32 * 9),
        "fc1_w": u(ks[4], (256, 3872), 3872),
        "fc1_b": u(ks[5], (256,), 3872),
        "fc2_w": u(ks[6], (128, 256), 256),
        "fc2_b": u(ks[7], (128,), 256),
        "fc3_w": u(ks[8], (80, 128), 128),
        "fc3_b": u(ks[9], (80,), 128),
    }


def _pack_conv_w(w_oihw, k_pad):
    """torch (Cout, Cin, 3, 3) -> bf16 (9*Cin [zero-padded to k_pad], Cout)."""
    cout, cin = w_oihw.shape[0], w_oihw.shape[1]
    wmat = jnp.transpose(w_oihw, (2, 3, 1, 0)).reshape(9 * cin, cout)
    return jnp.pad(wmat, ((0, k_pad - 9 * cin), (0, 0))).astype(jnp.bfloat16)


def pack_params(p, *, ho=11, wo=11, c=32):
    """One-time weight packing (run eagerly, outside the jitted forward)."""
    # fc1: fold torch's NCHW Flatten + our NHWC flatten into a row permutation.
    fc1 = p["fc1_w"].reshape(-1, c, ho, wo)       # (out, C, H, W)
    fc1 = jnp.transpose(fc1, (2, 3, 1, 0))        # (H, W, C, out)
    fc1 = fc1.reshape(ho * wo * c, -1)            # row = h*W*C + w*C + c  (NHWC order)
    return {
        "conv1_w": _pack_conv_w(p["conv1_w"], _round_up(9 * 3, 32)),   # (32, 32)  bf16
        "conv1_b": p["conv1_b"].reshape(1, -1),                        # f32
        "conv2_w": _pack_conv_w(p["conv2_w"], _round_up(9 * 32, 32)),  # (288, 32) bf16
        "conv2_b": p["conv2_b"].reshape(1, -1),                        # f32
        "fc1_w": fc1.astype(jnp.bfloat16),                             # (3872, 256)
        "fc1_b": p["fc1_b"].reshape(1, -1),
        "fc2_w": p["fc2_w"].T.astype(jnp.bfloat16),                    # (256, 128)
        "fc2_b": p["fc2_b"].reshape(1, -1),
        "fc3_w": p["fc3_w"].T.astype(jnp.bfloat16),                    # (128, 80)
        "fc3_b": p["fc3_b"].reshape(1, -1),
    }


# ----------------------------------------------------------------------------
# Pure-XLA reference (torch semantics, NCHW, f32) for a lightweight self-check
# ----------------------------------------------------------------------------
def reference_forward(x, p):
    dn = ("NCHW", "OIHW", "NCHW")
    hp = jax.lax.Precision.HIGHEST
    x = jax.lax.conv_general_dilated(x, p["conv1_w"], (1, 1), ((1, 1), (1, 1)),
                                     dimension_numbers=dn, precision=hp)
    x = jnp.maximum(x + p["conv1_b"][None, :, None, None], 0.0)
    b, c, h, w = x.shape
    x = x.reshape(b, c, h // 2, 2, w // 2, 2).max(axis=(3, 5))
    x = jax.lax.conv_general_dilated(x, p["conv2_w"], (1, 1), ((1, 1), (1, 1)),
                                     dimension_numbers=dn, precision=hp)
    x = jnp.maximum(x + p["conv2_b"][None, :, None, None], 0.0)
    b, c, h, w = x.shape
    x = x.reshape(b, c, h // 2, 2, w // 2, 2).max(axis=(3, 5))
    x = x.reshape(b, -1)
    x = jnp.maximum(jnp.dot(x, p["fc1_w"].T, precision=hp) + p["fc1_b"], 0.0)
    x = jnp.maximum(jnp.dot(x, p["fc2_w"].T, precision=hp) + p["fc2_b"], 0.0)
    return jnp.dot(x, p["fc3_w"].T, precision=hp) + p["fc3_b"]


if __name__ == "__main__":
    key = jax.random.PRNGKey(0)
    kx, kp = jax.random.split(key)
    # Spatial size 44 is implied by fc1 in_features: 32 * 11 * 11 = 3872.
    x = jax.random.normal(kx, (2, 3, 44, 44), dtype=jnp.float32)
    raw_params = init_params(kp)
    packed = pack_params(raw_params)     # one-time packing, outside the jit

    out = jax.jit(convnet_forward)(x, packed)
    out = jax.block_until_ready(out)
    assert out.shape == (2, 80) and out.dtype == jnp.float32

    # lightweight numerical self-check vs torch-equivalent XLA reference
    ref = reference_forward(x, raw_params)
    rel_err = jnp.max(jnp.abs(out - ref)) / (jnp.max(jnp.abs(ref)) + 1e-6)
    assert float(rel_err) < 5e-2, f"mismatch vs reference: rel err {float(rel_err)}"

    print("KERNEL_OK")
</pallas_src>

<mosaic_0001>
module attributes {stable_mosaic.version = 11 : i64} {
  func.func @_conv_pool_kernel(%arg0: memref<3872x32xbf16, #tpu.memory_space<vmem>>, %arg1: memref<32x32xbf16, #tpu.memory_space<vmem>>, %arg2: memref<1x32xf32, #tpu.memory_space<vmem>>, %arg3: memref<968x32xbf16, #tpu.memory_space<vmem>>) attributes {dimension_semantics = [], scalar_prefetch = 0 : i64, scratch_operands = 0 : i64, tpu.core_type = #tpu.core_type<tc>} {
    %c0 = arith.constant 0 : index
    %c0_0 = arith.constant 0 : index
    %0 = vector.load %arg0[%c0, %c0_0] : memref<3872x32xbf16, #tpu.memory_space<vmem>>, vector<3872x32xbf16>
    %c0_1 = arith.constant 0 : index
    %c0_2 = arith.constant 0 : index
    %1 = vector.load %arg1[%c0_1, %c0_2] : memref<32x32xbf16, #tpu.memory_space<vmem>>, vector<32x32xbf16>
    %cst = arith.constant dense<0.000000e+00> : vector<3872x32xf32>
    %2 = tpu.matmul %0, %1, %cst {dimension_numbers = #tpu.dot_dimension_numbers<[1], [0], [0], [1], [0, 0, 1, 1], [], []>} : vector<3872x32xbf16>, vector<32x32xbf16>, vector<3872x32xf32> -> vector<3872x32xf32>
    %3 = vector.extract_strided_slice %2 {offsets = [0, 0], sizes = [968, 32], strides = [1, 1]} : vector<3872x32xf32> to vector<968x32xf32>
    %4 = vector.extract_strided_slice %2 {offsets = [968, 0], sizes = [968, 32], strides = [1, 1]} : vector<3872x32xf32> to vector<968x32xf32>
    %5 = arith.maximumf %3, %4 : vector<968x32xf32>
    %6 = vector.extract_strided_slice %2 {offsets = [1936, 0], sizes = [968, 32], strides = [1, 1]} : vector<3872x32xf32> to vector<968x32xf32>
    %7 = vector.extract_strided_slice %2 {offsets = [2904, 0], sizes = [968, 32], strides = [1, 1]} : vector<3872x32xf32> to vector<968x32xf32>
    %8 = arith.maximumf %6, %7 : vector<968x32xf32>
    %9 = arith.maximumf %5, %8 : vector<968x32xf32>
    %c0_3 = arith.constant 0 : index
    %c0_4 = arith.constant 0 : index
    %10 = vector.load %arg2[%c0_3, %c0_4] : memref<1x32xf32, #tpu.memory_space<vmem>>, vector<1x32xf32>
    %11 = vector.broadcast %10 : vector<1x32xf32> to vector<968x32xf32>
    %12 = arith.addf %9, %11 : vector<968x32xf32>
    %cst_5 = arith.constant 0.000000e+00 : f32
    %13 = vector.broadcast %cst_5 : f32 to vector<968x32xf32>
    %14 = arith.maximumf %12, %13 : vector<968x32xf32>
    %15 = arith.truncf %14 : vector<968x32xf32> to vector<968x32xbf16>
    %c0_6 = arith.constant 0 : index
    %c0_7 = arith.constant 0 : index
    %16 = vector.load %arg3[%c0_6, %c0_7] : memref<968x32xbf16, #tpu.memory_space<vmem>>, vector<968x32xbf16>
    tpu.vector_store %arg3[%c0_6, %c0_7], %15 {strides = array<i32>} : memref<968x32xbf16, #tpu.memory_space<vmem>>, vector<968x32xbf16>,
    return
  }
}

module attributes {stable_mosaic.version = 11 : i64} {
  func.func @_conv_pool_kernel(%arg0: memref<992x288xbf16, #tpu.memory_space<vmem>>, %arg1: memref<288x32xbf16, #tpu.memory_space<vmem>>, %arg2: memref<1x32xf32, #tpu.memory_space<vmem>>, %arg3: memref<248x32xbf16, #tpu.memory_space<vmem>>) attributes {dimension_semantics = [], scalar_prefetch = 0 : i64, scratch_operands = 0 : i64, tpu.core_type = #tpu.core_type<tc>} {
    %c0 = arith.constant 0 : index
    %c0_0 = arith.constant 0 : index
    %0 = vector.load %arg0[%c0, %c0_0] : memref<992x288xbf16, #tpu.memory_space<vmem>>, vector<992x288xbf16>
    %c0_1 = arith.constant 0 : index
    %c0_2 = arith.constant 0 : index
    %1 = vector.load %arg1[%c0_1, %c0_2] : memref<288x32xbf16, #tpu.memory_space<vmem>>, vector<288x32xbf16>
    %cst = arith.constant dense<0.000000e+00> : vector<992x32xf32>
    %2 = tpu.matmul %0, %1, %cst {dimension_numbers = #tpu.dot_dimension_numbers<[1], [0], [0], [1], [0, 0, 1, 1], [], []>} : vector<992x288xbf16>, vector<288x32xbf16>, vector<992x32xf32> -> vector<992x32xf32>
    %3 = vector.extract_strided_slice %2 {offsets = [0, 0], sizes = [248, 32], strides = [1, 1]} : vector<992x32xf32> to vector<248x32xf32>
    %4 = vector.extract_strided_slice %2 {offsets = [248, 0], sizes = [248, 32], strides = [1, 1]} : vector<992x32xf32> to vector<248x32xf32>
    %5 = arith.maximumf %3, %4 : vector<248x32xf32>
    %6 = vector.extract_strided_slice %2 {offsets = [496, 0], sizes = [248, 32], strides = [1, 1]} : vector<992x32xf32> to vector<248x32xf32>
    %7 = vector.extract_strided_slice %2 {offsets = [744, 0], sizes = [248, 32], strides = [1, 1]} : vector<992x32xf32> to vector<248x32xf32>
    %8 = arith.maximumf %6, %7 : vector<248x32xf32>
    %9 = arith.maximumf %5, %8 : vector<248x32xf32>
    %c0_3 = arith.constant 0 : index
    %c0_4 = arith.constant 0 : index
    %10 = vector.load %arg2[%c0_3, %c0_4] : memref<1x32xf32, #tpu.memory_space<vmem>>, vector<1x32xf32>
    %11 = vector.broadcast %10 : vector<1x32xf32> to vector<248x32xf32>
    %12 = arith.addf %9, %11 : vector<248x32xf32>
    %cst_5 = arith.constant 0.000000e+00 : f32
    %13 = vector.broadcast %cst_5 : f32 to vector<248x32xf32>
    %14 = arith.maximumf %12, %13 : vector<248x32xf32>
    %15 = arith.truncf %14 : vector<248x32xf32> to vector<248x32xbf16>
    %c0_6 = arith.constant 0 : index
    %c0_7 = arith.constant 0 : index
    %16 = vector.load %arg3[%c0_6, %c0_7] : memref<248x32xbf16, #tpu.memory_space<vmem>>, vector<248x32xbf16>
    tpu.vector_store %arg3[%c0_6, %c0_7], %15 {strides = array<i32>} : memref<248x32xbf16, #tpu.memory_space<vmem>>, vector<248x32xbf16>,
    return
  }
}

module attributes {stable_mosaic.version = 11 : i64} {
  func.func @_fc_stack_kernel(%arg0: memref<2x3872xbf16, #tpu.memory_space<vmem>>, %arg1: memref<3872x256xbf16, #tpu.memory_space<vmem>>, %arg2: memref<1x256xf32, #tpu.memory_space<vmem>>, %arg3: memref<256x128xbf16, #tpu.memory_space<vmem>>, %arg4: memref<1x128xf32, #tpu.memory_space<vmem>>, %arg5: memref<128x80xbf16, #tpu.memory_space<vmem>>, %arg6: memref<1x80xf32, #tpu.memory_space<vmem>>, %arg7: memref<2x80xf32, #tpu.memory_space<vmem>>) attributes {dimension_semantics = [], scalar_prefetch = 0 : i64, scratch_operands = 0 : i64, tpu.core_type = #tpu.core_type<tc>} {
    %c0 = arith.constant 0 : index
    %c0_0 = arith.constant 0 : index
    %0 = vector.load %arg0[%c0, %c0_0] : memref<2x3872xbf16, #tpu.memory_space<vmem>>, vector<2x3872xbf16>
    %c0_1 = arith.constant 0 : index
    %c0_2 = arith.constant 0 : index
    %1 = vector.load %arg1[%c0_1, %c0_2] : memref<3872x256xbf16, #tpu.memory_space<vmem>>, vector<3872x256xbf16>
    %cst = arith.constant dense<0.000000e+00> : vector<2x256xf32>
    %2 = tpu.matmul %0, %1, %cst {dimension_numbers = #tpu.dot_dimension_numbers<[1], [0], [0], [1], [0, 0, 1, 1], [], []>} : vector<2x3872xbf16>, vector<3872x256xbf16>, vector<2x256xf32> -> vector<2x256xf32>
    %c0_3 = arith.constant 0 : index
    %c0_4 = arith.constant 0 : index
    %3 = vector.load %arg2[%c0_3, %c0_4] : memref<1x256xf32, #tpu.memory_space<vmem>>, vector<1x256xf32>
    %4 = vector.broadcast %3 : vector<1x256xf32> to vector<2x256xf32>
    %5 = arith.addf %2, %4 : vector<2x256xf32>
    %cst_5 = arith.constant 0.000000e+00 : f32
    %6 = vector.broadcast %cst_5 : f32 to vector<2x256xf32>
    %7 = arith.maximumf %5, %6 : vector<2x256xf32>
    %8 = arith.truncf %7 : vector<2x256xf32> to vector<2x256xbf16>
    %c0_6 = arith.constant 0 : index
    %c0_7 = arith.constant 0 : index
    %9 = vector.load %arg3[%c0_6, %c0_7] : memref<256x128xbf16, #tpu.memory_space<vmem>>, vector<256x128xbf16>
    %cst_8 = arith.constant dense<0.000000e+00> : vector<2x128xf32>
    %10 = tpu.matmul %8, %9, %cst_8 {dimension_numbers = #tpu.dot_dimension_numbers<[1], [0], [0], [1], [0, 0, 1, 1], [], []>} : vector<2x256xbf16>, vector<256x128xbf16>, vector<2x128xf32> -> vector<2x128xf32>
    %c0_9 = arith.constant 0 : index
    %c0_10 = arith.constant 0 : index
    %11 = vector.load %arg4[%c0_9, %c0_10] : memref<1x128xf32, #tpu.memory_space<vmem>>, vector<1x128xf32>
    %12 = vector.broadcast %11 : vector<1x128xf32> to vector<2x128xf32>
    %13 = arith.addf %10, %12 : vector<2x128xf32>
    %cst_11 = arith.constant 0.000000e+00 : f32
    %14 = vector.broadcast %cst_11 : f32 to vector<2x128xf32>
    %15 = arith.maximumf %13, %14 : vector<2x128xf32>
    %16 = arith.truncf %15 : vector<2x128xf32> to vector<2x128xbf16>
    %c0_12 = arith.constant 0 : index
    %c0_13 = arith.constant 0 : index
    %17 = vector.load %arg5[%c0_12, %c0_13] : memref<128x80xbf16, #tpu.memory_space<vmem>>, vector<128x80xbf16>
    %cst_14 = arith.constant dense<0.000000e+00> : vector<2x80xf32>
    %18 = tpu.matmul %16, %17, %cst_14 {dimension_numbers = #tpu.dot_dimension_numbers<[1], [0], [0], [1], [0, 0, 1, 1], [], []>} : vector<2x128xbf16>, vector<128x80xbf16>, vector<2x80xf32> -> vector<2x80xf32>
    %c0_15 = arith.constant 0 : index
    %c0_16 = arith.constant 0 : index
    %19 = vector.load %arg6[%c0_15, %c0_16] : memref<1x80xf32, #tpu.memory_space<vmem>>, vector<1x80xf32>
    %20 = vector.broadcast %19 : vector<1x80xf32> to vector<2x80xf32>
    %21 = arith.addf %18, %20 : vector<2x80xf32>
    %c0_17 = arith.constant 0 : index
    %c0_18 = arith.constant 0 : index
    %22 = vector.load %arg7[%c0_17, %c0_18] : memref<2x80xf32, #tpu.memory_space<vmem>>, vector<2x80xf32>
    tpu.vector_store %arg7[%c0_17, %c0_18], %21 {strides = array<i32>} : memref<2x80xf32, #tpu.memory_space<vmem>>, vector<2x80xf32>,
    return
  }
}

</mosaic_0001>

<llo_original>
// kernel: convnet_forward.3
$region0: #{convnet_forward.3}
  #allocation0 [shape = 'u32[]', space=smem, size = 0x4, offset = 0x4, fixed_abs, tag = 'smem constant byte address 0x4 - core index']
  #allocation1 [shape = 'u32[144,128]{1,0:T(1,128)}', space=vmem, size = 0x12000, scoped, tag = 'internal scratch']
  %s0 = inlined_call_operand.vmem [shape: bf16[3872,32], index: 0, kind: input, shape index: {}]
  %s1 = inlined_call_operand.vmem [shape: bf16[32,32], index: 1, kind: input, shape index: {}]
  %s2 = inlined_call_operand.vmem [shape: f32[1,32], index: 2, kind: input, shape index: {}]
  %s3 = inlined_call_operand.vmem [shape: bf16[968,32], index: 3, kind: output, shape index: {}]
  %s4 = sld [smem:[#allocation0]]
  $region22: #{convnet_forward.3} parent=0
    _
  %s6 = ssub.s32 1, %s4
  %s7 = scalar_select 0, %s6, %s4
  // Predicated region
  $region2: #{convnet_forward.3} parent=0 // pred_check
    _
  $region3: #{convnet_forward.3} parent=0 // pred_check_branch
    %9 = sbr.rel (0) target = $region5
  $region4: #{convnet_forward.3} parent=0 // pred_region
    _
  $region5: #{convnet_forward.3} parent=0 // pred_fallthru
    _
  // Predicated region
  $region6: #{convnet_forward.3} parent=0 // pred_check
    _
  $region7: #{convnet_forward.3} parent=0 // pred_check_branch
    %11 = sbr.rel (0) target = $region9
  $region8: #{convnet_forward.3} parent=0 // pred_region
    _
  $region9: #{convnet_forward.3} parent=0 // pred_fallthru
    _
  // Predicated region
  $region10: #{convnet_forward.3} parent=0 // pred_check
    _
  $region11: #{convnet_forward.3} parent=0 // pred_check_branch
    %13 = sbr.rel (0) target = $region13
  $region12: #{convnet_forward.3} parent=0 // pred_region
    _
  $region13: #{convnet_forward.3} parent=0 // pred_fallthru
    _
  %v15 = vld [vmem:[%s0] sm:$0xf]
  %v16 = vld [vmem:[%s0 + $0x4] sm:$0xf]
  %v17 = vld [vmem:[%s0 + $0x8] sm:$0xf]
  %v18 = vld [vmem:[%s0 + $0xc] sm:$0xf]
  %v19 = vld [vmem:[%s0 + $0x10] sm:$0xf]
  %v20 = vld [vmem:[%s0 + $0x14] sm:$0xf]
  %v21 = vld [vmem:[%s0 + $0x18] sm:$0xf]
  %v22 = vld [vmem:[%s0 + $0x1c] sm:$0xf]
  %v23 = vld [vmem:[%s0 + $0x20] sm:$0xf]
  %v24 = vld [vmem:[%s0 + $0x24] sm:$0xf]
  %v25 = vld [vmem:[%s0 + $0x28] sm:$0xf]
  %v26 = vld [vmem:[%s0 + $0x2c] sm:$0xf]
  %v27 = vld [vmem:[%s0 + $0x30] sm:$0xf]
  %v28 = vld [vmem:[%s0 + $0x34] sm:$0xf]
  %v29 = vld [vmem:[%s0 + $0x38] sm:$0xf]
  %v30 = vld [vmem:[%s0 + $0x3c] sm:$0xf]
  %v31 = vld [vmem:[%s0 + $0x40] sm:$0xf]
  %v32 = vld [vmem:[%s0 + $0x44] sm:$0xf]
  %v33 = vld [vmem:[%s0 + $0x48] sm:$0xf]
  %v34 = vld [vmem:[%s0 + $0x4c] sm:$0xf]
  %v35 = vld [vmem:[%s0 + $0x50] sm:$0xf]
  %v36 = vld [vmem:[%s0 + $0x54] sm:$0xf]
  %v37 = vld [vmem:[%s0 + $0x58] sm:$0xf]
  %v38 = vld [vmem:[%s0 + $0x5c] sm:$0xf]
  %v39 = vld [vmem:[%s0 + $0x60] sm:$0xf]
  %v40 = vld [vmem:[%s0 + $0x64] sm:$0xf]
  %v41 = vld [vmem:[%s0 + $0x68] sm:$0xf]
  %v42 = vld [vmem:[%s0 + $0x6c] sm:$0xf]
  %v43 = vld [vmem:[%s0 + $0x70] sm:$0xf]
  %v44 = vld [vmem:[%s0 + $0x74] sm:$0xf]
  %v45 = vld [vmem:[%s0 + $0x78] sm:$0xf]
  %v46 = vld [vmem:[%s0 + $0x7c] sm:$0xf]
  %v47 = vld [vmem:[%s0 + $0x80] sm:$0xf]
  %v48 = vld [vmem:[%s0 + $0x84] sm:$0xf]
  %v49 = vld [vmem:[%s0 + $0x88] sm:$0xf]
  %v50 = vld [vmem:[%s0 + $0x8c] sm:$0xf]
  %v51 = vld [vmem:[%s0 + $0x90] sm:$0xf]
  %v52 = vld [vmem:[%s0 + $0x94] sm:$0xf]
  %v53 = vld [vmem:[%s0 + $0x98] sm:$0xf]
  %v54 = vld [vmem:[%s0 + $0x9c] sm:$0xf]
  %v55 = vld [vmem:[%s0 + $0xa0] sm:$0xf]
  %v56 = vld [vmem:[%s0 + $0xa4] sm:$0xf]
  %v57 = vld [vmem:[%s0 + $0xa8] sm:$0xf]
  %v58 = vld [vmem:[%s0 + $0xac] sm:$0xf]
  %v59 = vld [vmem:[%s0 + $0xb0] sm:$0xf]
  %v60 = vld [vmem:[%s0 + $0xb4] sm:$0xf]
  %v61 = vld [vmem:[%s0 + $0xb8] sm:$0xf]
  %v62 = vld [vmem:[%s0 + $0xbc] sm:$0xf]
  %v63 = vld [vmem:[%s0 + $0xc0] sm:$0xf]
  %v64 = vld [vmem:[%s0 + $0xc4] sm:$0xf]
  %v65 = vld [vmem:[%s0 + $0xc8] sm:$0xf]
  %v66 = vld [vmem:[%s0 + $0xcc] sm:$0xf]
  %v67 = vld [vmem:[%s0 + $0xd0] sm:$0xf]
  %v68 = vld [vmem:[%s0 + $0xd4] sm:$0xf]
  %v69 = vld [vmem:[%s0 + $0xd8] sm:$0xf]
  %v70 = vld [vmem:[%s0 + $0xdc] sm:$0xf]
  %v71 = vld [vmem:[%s0 + $0xe0] sm:$0xf]
  %v72 = vld [vmem:[%s0 + $0xe4] sm:$0xf]
  %v73 = vld [vmem:[%s0 + $0xe8] sm:$0xf]
  %v74 = vld [vmem:[%s0 + $0xec] sm:$0xf]
  %v75 = vld [vmem:[%s0 + $0xf0] sm:$0xf]
  %v76 = vld [vmem:[%s0 + $0xf4] sm:$0xf]
  %v77 = vld [vmem:[%s0 + $0xf8] sm:$0xf]
  %v78 = vld [vmem:[%s0 + $0xfc] sm:$0xf]
  %v79 = vld [vmem:[%s0 + $0x100] sm:$0xf]
  %v80 = vld [vmem:[%s0 + $0x104] sm:$0xf]
  %v81 = vld [vmem:[%s0 + $0x108] sm:$0xf]
  %v82 = vld [vmem:[%s0 + $0x10c] sm:$0xf]
  %v83 = vld [vmem:[%s0 + $0x110] sm:$0xf]
  %v84 = vld [vmem:[%s0 + $0x114] sm:$0xf]
  %v85 = vld [vmem:[%s0 + $0x118] sm:$0xf]
  %v86 = vld [vmem:[%s0 + $0x11c] sm:$0xf]
  %v87 = vld [vmem:[%s0 + $0x120] sm:$0xf]
  %v88 = vld [vmem:[%s0 + $0x124] sm:$0xf]
  %v89 = vld [vmem:[%s0 + $0x128] sm:$0xf]
  %v90 = vld [vmem:[%s0 + $0x12c] sm:$0xf]
  %v91 = vld [vmem:[%s0 + $0x130] sm:$0xf]
  %v92 = vld [vmem:[%s0 + $0x134] sm:$0xf]
  %v93 = vld [vmem:[%s0 + $0x138] sm:$0xf]
  %v94 = vld [vmem:[%s0 + $0x13c] sm:$0xf]
  %v95 = vld [vmem:[%s0 + $0x140] sm:$0xf]
  %v96 = vld [vmem:[%s0 + $0x144] sm:$0xf]
  %v97 = vld [vmem:[%s0 + $0x148] sm:$0xf]
  %v98 = vld [vmem:[%s0 + $0x14c] sm:$0xf]
  %v99 = vld [vmem:[%s0 + $0x150] sm:$0xf]
  %v100 = vld [vmem:[%s0 + $0x154] sm:$0xf]
  %v101 = vld [vmem:[%s0 + $0x158] sm:$0xf]
  %v102 = vld [vmem:[%s0 + $0x15c] sm:$0xf]
  %v103 = vld [vmem:[%s0 + $0x160] sm:$0xf]
  %v104 = vld [vmem:[%s0 + $0x164] sm:$0xf]
  %v105 = vld [vmem:[%s0 + $0x168] sm:$0xf]
  %v106 = vld [vmem:[%s0 + $0x16c] sm:$0xf]
  %v107 = vld [vmem:[%s0 + $0x170] sm:$0xf]
  %v108 = vld [vmem:[%s0 + $0x174] sm:$0xf]
  %v109 = vld [vmem:[%s0 + $0x178] sm:$0xf]
  %v110 = vld [vmem:[%s0 + $0x17c] sm:$0xf]
  %v111 = vld [vmem:[%s0 + $0x180] sm:$0xf]
  %v112 = vld [vmem:[%s0 + $0x184] sm:$0xf]
  %v113 = vld [vmem:[%s0 + $0x188] sm:$0xf]
  %v114 = vld [vmem:[%s0 + $0x18c] sm:$0xf]
  %v115 = vld [vmem:[%s0 + $0x190] sm:$0xf]
  %v116 = vld [vmem:[%s0 + $0x194] sm:$0xf]
  %v117 = vld [vmem:[%s0 + $0x198] sm:$0xf]
  %v118 = vld [vmem:[%s0 + $0x19c] sm:$0xf]
  %v119 = vld [vmem:[%s0 + $0x1a0] sm:$0xf]
  %v120 = vld [vmem:[%s0 + $0x1a4] sm:$0xf]
  %v121 = vld [vmem:[%s0 + $0x1a8] sm:$0xf]
  %v122 = vld [vmem:[%s0 + $0x1ac] sm:$0xf]
  %v123 = vld [vmem:[%s0 + $0x1b0] sm:$0xf]
  %v124 = vld [vmem:[%s0 + $0x1b4] sm:$0xf]
  %v125 = vld [vmem:[%s0 + $0x1b8] sm:$0xf]
  %v126 = vld [vmem:[%s0 + $0x1bc] sm:$0xf]
  %v127 = vld [vmem:[%s0 + $0x1c0] sm:$0xf]
  %v128 = vld [vmem:[%s0 + $0x1c4] sm:$0xf]
  %v129 = vld [vmem:[%s0 + $0x1c8] sm:$0xf]
  %v130 = vld [vmem:[%s0 + $0x1cc] sm:$0xf]
  %v131 = vld [vmem:[%s0 + $0x1d0] sm:$0xf]
  %v132 = vld [vmem:[%s0 + $0x1d4] sm:$0xf]
  %v133 = vld [vmem:[%s0 + $0x1d8] sm:$0xf]
  %v134 = vld [vmem:[%s0 + $0x1dc] sm:$0xf]
  %v135 = vld [vmem:[%s0 + $0x1e0] sm:$0xf]
  %v136 = vld [vmem:[%s0 + $0x1e4] sm:$0xf]
  %v137 = vld [vmem:[%s0 + $0x1e8] sm:$0xf]
  %v138 = vld [vmem:[%s0 + $0x1ec] sm:$0xf]
  %v139 = vld [vmem:[%s0 + $0x1f0] sm:$0xf]
  %v140 = vld [vmem:[%s0 + $0x1f4] sm:$0xf]
  %v141 = vld [vmem:[%s0 + $0x1f8] sm:$0xf]
  %v142 = vld [vmem:[%s0 + $0x1fc] sm:$0xf]
  %v143 = vld [vmem:[%s0 + $0x200] sm:$0xf]
  %v144 = vld [vmem:[%s0 + $0x204] sm:$0xf]
  %v145 = vld [vmem:[%s0 + $0x208] sm:$0xf]
  %v146 = vld [vmem:[%s0 + $0x20c] sm:$0xf]
  %v147 = vld [vmem:[%s0 + $0x210] sm:$0xf]
  %v148 = vld [vmem:[%s0 + $0x214] sm:$0xf]
  %v149 = vld [vmem:[%s0 + $0x218] sm:$0xf]
  %v150 = vld [vmem:[%s0 + $0x21c] sm:$0xf]
  %v151 = vld [vmem:[%s0 + $0x220] sm:$0xf]
  %v152 = vld [vmem:[%s0 + $0x224] sm:$0xf]
  %v153 = vld [vmem:[%s0 + $0x228] sm:$0xf]
  %v154 = vld [vmem:[%s0 + $0x22c] sm:$0xf]
  %v155 = vld [vmem:[%s0 + $0x230] sm:$0xf]
  %v156 = vld [vmem:[%s0 + $0x234] sm:$0xf]
  %v157 = vld [vmem:[%s0 + $0x238] sm:$0xf]
  %v158 = vld [vmem:[%s0 + $0x23c] sm:$0xf]
  %v159 = vld [vmem:[%s0 + $0x240] sm:$0xf]
  %v160 = vld [vmem:[%s0 + $0x244] sm:$0xf]
  %v161 = vld [vmem:[%s0 + $0x248] sm:$0xf]
  %v162 = vld [vmem:[%s0 + $0x24c] sm:$0xf]
  %v163 = vld [vmem:[%s0 + $0x250] sm:$0xf]
  %v164 = vld [vmem:[%s0 + $0x254] sm:$0xf]
  %v165 = vld [vmem:[%s0 + $0x258] sm:$0xf]
  %v166 = vld [vmem:[%s0 + $0x25c] sm:$0xf]
  %v167 = vld [vmem:[%s0 + $0x260] sm:$0xf]
  %v168 = vld [vmem:[%s0 + $0x264] sm:$0xf]
  %v169 = vld [vmem:[%s0 + $0x268] sm:$0xf]
  %v170 = vld [vmem:[%s0 + $0x26c] sm:$0xf]
  %v171 = vld [vmem:[%s0 + $0x270] sm:$0xf]
  %v172 = vld [vmem:[%s0 + $0x274] sm:$0xf]
  %v173 = vld [vmem:[%s0 + $0x278] sm:$0xf]
  %v174 = vld [vmem:[%s0 + $0x27c] sm:$0xf]
  %v175 = vld [vmem:[%s0 + $0x280] sm:$0xf]
  %v176 = vld [vmem:[%s0 + $0x284] sm:$0xf]
  %v177 = vld [vmem:[%s0 + $0x288] sm:$0xf]
  %v178 = vld [vmem:[%s0 + $0x28c] sm:$0xf]
  %v179 = vld [vmem:[%s0 + $0x290] sm:$0xf]
  %v180 = vld [vmem:[%s0 + $0x294] sm:$0xf]
  %v181 = vld [vmem:[%s0 + $0x298] sm:$0xf]
  %v182 = vld [vmem:[%s0 + $0x29c] sm:$0xf]
  %v183 = vld [vmem:[%s0 + $0x2a0] sm:$0xf]
  %v184 = vld [vmem:[%s0 + $0x2a4] sm:$0xf]
  %v185 = vld [vmem:[%s0 + $0x2a8] sm:$0xf]
  %v186 = vld [vmem:[%s0 + $0x2ac] sm:$0xf]
  %v187 = vld [vmem:[%s0 + $0x2b0] sm:$0xf]
  %v188 = vld [vmem:[%s0 + $0x2b4] sm:$0xf]
  %v189 = vld [vmem:[%s0 + $0x2b8] sm:$0xf]
  %v190 = vld [vmem:[%s0 + $0x2bc] sm:$0xf]
  %v191 = vld [vmem:[%s0 + $0x2c0] sm:$0xf]
  %v192 = vld [vmem:[%s0 + $0x2c4] sm:$0xf]
  %v193 = vld [vmem:[%s0 + $0x2c8] sm:$0xf]
  %v194 = vld [vmem:[%s0 + $0x2cc] sm:$0xf]
  %v195 = vld [vmem:[%s0 + $0x2d0] sm:$0xf]
  %v196 = vld [vmem:[%s0 + $0x2d4] sm:$0xf]
  %v197 = vld [vmem:[%s0 + $0x2d8] sm:$0xf]
  %v198 = vld [vmem:[%s0 + $0x2dc] sm:$0xf]
  %v199 = vld [vmem:[%s0 + $0x2e0] sm:$0xf]
  %v200 = vld [vmem:[%s0 + $0x2e4] sm:$0xf]
  %v201 = vld [vmem:[%s0 + $0x2e8] sm:$0xf]
  %v202 = vld [vmem:[%s0 + $0x2ec] sm:$0xf]
  %v203 = vld [vmem:[%s0 + $0x2f0] sm:$0xf]
  %v204 = vld [vmem:[%s0 + $0x2f4] sm:$0xf]
  %v205 = vld [vmem:[%s0 + $0x2f8] sm:$0xf]
  %v206 = vld [vmem:[%s0 + $0x2fc] sm:$0xf]
  %v207 = vld [vmem:[%s0 + $0x300] sm:$0xf]
  %v208 = vld [vmem:[%s0 + $0x304] sm:$0xf]
  %v209 = vld [vmem:[%s0 + $0x308] sm:$0xf]
  %v210 = vld [vmem:[%s0 + $0x30c] sm:$0xf]
  %v211 = vld [vmem:[%s0 + $0x310] sm:$0xf]
  %v212 = vld [vmem:[%s0 + $0x314] sm:$0xf]
  %v213 = vld [vmem:[%s0 + $0x318] sm:$0xf]
  %v214 = vld [vmem:[%s0 + $0x31c] sm:$0xf]
  %v215 = vld [vmem:[%s0 + $0x320] sm:$0xf]
  %v216 = vld [vmem:[%s0 + $0x324] sm:$0xf]
  %v217 = vld [vmem:[%s0 + $0x328] sm:$0xf]
  %v218 = vld [vmem:[%s0 + $0x32c] sm:$0xf]
  %v219 = vld [vmem:[%s0 + $0x330] sm:$0xf]
  %v220 = vld [vmem:[%s0 + $0x334] sm:$0xf]
  %v221 = vld [vmem:[%s0 + $0x338] sm:$0xf]
  %v222 = vld [vmem:[%s0 + $0x33c] sm:$0xf]
  %v223 = vld [vmem:[%s0 + $0x340] sm:$0xf]
  %v224 = vld [vmem:[%s0 + $0x344] sm:$0xf]
  %v225 = vld [vmem:[%s0 + $0x348] sm:$0xf]
  %v226 = vld [vmem:[%s0 + $0x34c] sm:$0xf]
  %v227 = vld [vmem:[%s0 + $0x350] sm:$0xf]
  %v228 = vld [vmem:[%s0 + $0x354] sm:$0xf]
  %v229 = vld [vmem:[%s0 + $0x358] sm:$0xf]
  %v230 = vld [vmem:[%s0 + $0x35c] sm:$0xf]
  %v231 = vld [vmem:[%s0 + $0x360] sm:$0xf]
  %v232 = vld [vmem:[%s0 + $0x364] sm:$0xf]
  %v233 = vld [vmem:[%s0 + $0x368] sm:$0xf]
  %v234 = vld [vmem:[%s0 + $0x36c] sm:$0xf]
  %v235 = vld [vmem:[%s0 + $0x370] sm:$0xf]
  %v236 = vld [vmem:[%s0 + $0x374] sm:$0xf]
  %v237 = vld [vmem:[%s0 + $0x378] sm:$0xf]
  %v238 = vld [vmem:[%s0 + $0x37c] sm:$0xf]
  %v239 = vld [vmem:[%s0 + $0x380] sm:$0xf]
  %v240 = vld [vmem:[%s0 + $0x384] sm:$0xf]
  %v241 = vld [vmem:[%s0 + $0x388] sm:$0xf]
  %v242 = vld [vmem:[%s0 + $0x38c] sm:$0xf]
  %v243 = vld [vmem:[%s0 + $0x390] sm:$0xf]
  %v244 = vld [vmem:[%s0 + $0x394] sm:$0xf]
  %v245 = vld [vmem:[%s0 + $0x398] sm:$0xf]
  %v246 = vld [vmem:[%s0 + $0x39c] sm:$0xf]
  %v247 = vld [vmem:[%s0 + $0x3a0] sm:$0xf]
  %v248 = vld [vmem:[%s0 + $0x3a4] sm:$0xf]
  %v249 = vld [vmem:[%s0 + $0x3a8] sm:$0xf]
  %v250 = vld [vmem:[%s0 + $0x3ac] sm:$0xf]
  %v251 = vld [vmem:[%s0 + $0x3b0] sm:$0xf]
  %v252 = vld [vmem:[%s0 + $0x3b4] sm:$0xf]
  %v253 = vld [vmem:[%s0 + $0x3b8] sm:$0xf]
  %v254 = vld [vmem:[%s0 + $0x3bc] sm:$0xf]
  %v255 = vld [vmem:[%s0 + $0x3c0] sm:$0xf]
  %v256 = vld [vmem:[%s0 + $0x3c4] sm:$0xf]
  %v257 = vld [vmem:[%s0 + $0x3c8] sm:$0xf]
  %v258 = vld [vmem:[%s0 + $0x3cc] sm:$0xf]
  %v259 = vld [vmem:[%s0 + $0x3d0] sm:$0xf]
  %v260 = vld [vmem:[%s0 + $0x3d4] sm:$0xf]
  %v261 = vld [vmem:[%s0 + $0x3d8] sm:$0xf]
  %v262 = vld [vmem:[%s0 + $0x3dc] sm:$0xf]
  %v263 = vld [vmem:[%s0 + $0x3e0] sm:$0xf]
  %v264 = vld [vmem:[%s0 + $0x3e4] sm:$0xf]
  %v265 = vld [vmem:[%s0 + $0x3e8] sm:$0xf]
  %v266 = vld [vmem:[%s0 + $0x3ec] sm:$0xf]
  %v267 = vld [vmem:[%s0 + $0x3f0] sm:$0xf]
  %v268 = vld [vmem:[%s0 + $0x3f4] sm:$0xf]
  %v269 = vld [vmem:[%s0 + $0x3f8] sm:$0xf]
  %v270 = vld [vmem:[%s0 + $0x3fc] sm:$0xf]
  %v271 = vld [vmem:[%s0 + $0x400] sm:$0xf]
  %v272 = vld [vmem:[%s0 + $0x404] sm:$0xf]
  %v273 = vld [vmem:[%s0 + $0x408] sm:$0xf]
  %v274 = vld [vmem:[%s0 + $0x40c] sm:$0xf]
  %v275 = vld [vmem:[%s0 + $0x410] sm:$0xf]
  %v276 = vld [vmem:[%s0 + $0x414] sm:$0xf]
  %v277 = vld [vmem:[%s0 + $0x418] sm:$0xf]
  %v278 = vld [vmem:[%s0 + $0x41c] sm:$0xf]
  %v279 = vld [vmem:[%s0 + $0x420] sm:$0xf]
  %v280 = vld [vmem:[%s0 + $0x424] sm:$0xf]
  %v281 = vld [vmem:[%s0 + $0x428] sm:$0xf]
  %v282 = vld [vmem:[%s0 + $0x42c] sm:$0xf]
  %v283 = vld [vmem:[%s0 + $0x430] sm:$0xf]
  %v284 = vld [vmem:[%s0 + $0x434] sm:$0xf]
  %v285 = vld [vmem:[%s0 + $0x438] sm:$0xf]
  %v286 = vld [vmem:[%s0 + $0x43c] sm:$0xf]
  %v287 = vld [vmem:[%s0 + $0x440] sm:$0xf]
  %v288 = vld [vmem:[%s0 + $0x444] sm:$0xf]
  %v289 = vld [vmem:[%s0 + $0x448] sm:$0xf]
  %v290 = vld [vmem:[%s0 + $0x44c] sm:$0xf]
  %v291 = vld [vmem:[%s0 + $0x450] sm:$0xf]
  %v292 = vld [vmem:[%s0 + $0x454] sm:$0xf]
  %v293 = vld [vmem:[%s0 + $0x458] sm:$0xf]
  %v294 = vld [vmem:[%s0 + $0x45c] sm:$0xf]
  %v295 = vld [vmem:[%s0 + $0x460] sm:$0xf]
  %v296 = vld [vmem:[%s0 + $0x464] sm:$0xf]
  %v297 = vld [vmem:[%s0 + $0x468] sm:$0xf]
  %v298 = vld [vmem:[%s0 + $0x46c] sm:$0xf]
  %v299 = vld [vmem:[%s0 + $0x470] sm:$0xf]
  %v300 = vld [vmem:[%s0 + $0x474] sm:$0xf]
  %v301 = vld [vmem:[%s0 + $0x478] sm:$0xf]
  %v302 = vld [vmem:[%s0 + $0x47c] sm:$0xf]
  %v303 = vld [vmem:[%s0 + $0x480] sm:$0xf]
  %v304 = vld [vmem:[%s0 + $0x484] sm:$0xf]
  %v305 = vld [vmem:[%s0 + $0x488] sm:$0xf]
  %v306 = vld [vmem:[%s0 + $0x48c] sm:$0xf]
  %v307 = vld [vmem:[%s0 + $0x490] sm:$0xf]
  %v308 = vld [vmem:[%s0 + $0x494] sm:$0xf]
  %v309 = vld [vmem:[%s0 + $0x498] sm:$0xf]
  %v310 = vld [vmem:[%s0 + $0x49c] sm:$0xf]
  %v311 = vld [vmem:[%s0 + $0x4a0] sm:$0xf]
  %v312 = vld [vmem:[%s0 + $0x4a4] sm:$0xf]
  %v313 = vld [vmem:[%s0 + $0x4a8] sm:$0xf]
  %v314 = vld [vmem:[%s0 + $0x4ac] sm:$0xf]
  %v315 = vld [vmem:[%s0 + $0x4b0] sm:$0xf]
  %v316 = vld [vmem:[%s0 + $0x4b4] sm:$0xf]
  %v317 = vld [vmem:[%s0 + $0x4b8] sm:$0xf]
  %v318 = vld [vmem:[%s0 + $0x4bc] sm:$0xf]
  %v319 = vld [vmem:[%s0 + $0x4c0] sm:$0xf]
  %v320 = vld [vmem:[%s0 + $0x4c4] sm:$0xf]
  %v321 = vld [vmem:[%s0 + $0x4c8] sm:$0xf]
  %v322 = vld [vmem:[%s0 + $0x4cc] sm:$0xf]
  %v323 = vld [vmem:[%s0 + $0x4d0] sm:$0xf]
  %v324 = vld [vmem:[%s0 + $0x4d4] sm:$0xf]
  %v325 = vld [vmem:[%s0 + $0x4d8] sm:$0xf]
  %v326 = vld [vmem:[%s0 + $0x4dc] sm:$0xf]
  %v327 = vld [vmem:[%s0 + $0x4e0] sm:$0xf]
  %v328 = vld [vmem:[%s0 + $0x4e4] sm:$0xf]
  %v329 = vld [vmem:[%s0 + $0x4e8] sm:$0xf]
  %v330 = vld [vmem:[%s0 + $0x4ec] sm:$0xf]
  %v331 = vld [vmem:[%s0 + $0x4f0] sm:$0xf]
  %v332 = vld [vmem:[%s0 + $0x4f4] sm:$0xf]
  %v333 = vld [vmem:[%s0 + $0x4f8] sm:$0xf]
  %v334 = vld [vmem:[%s0 + $0x4fc] sm:$0xf]
  %v335 = vld [vmem:[%s0 + $0x500] sm:$0xf]
  %v336 = vld [vmem:[%s0 + $0x504] sm:$0xf]
  %v337 = vld [vmem:[%s0 + $0x508] sm:$0xf]
  %v338 = vld [vmem:[%s0 + $0x50c] sm:$0xf]
  %v339 = vld [vmem:[%s0 + $0x510] sm:$0xf]
  %v340 = vld [vmem:[%s0 + $0x514] sm:$0xf]
  %v341 = vld [vmem:[%s0 + $0x518] sm:$0xf]
  %v342 = vld [vmem:[%s0 + $0x51c] sm:$0xf]
  %v343 = vld [vmem:[%s0 + $0x520] sm:$0xf]
  %v344 = vld [vmem:[%s0 + $0x524] sm:$0xf]
  %v345 = vld [vmem:[%s0 + $0x528] sm:$0xf]
  %v346 = vld [vmem:[%s0 + $0x52c] sm:$0xf]
  %v347 = vld [vmem:[%s0 + $0x530] sm:$0xf]
  %v348 = vld [vmem:[%s0 + $0x534] sm:$0xf]
  %v349 = vld [vmem:[%s0 + $0x538] sm:$0xf]
  %v350 = vld [vmem:[%s0 + $0x53c] sm:$0xf]
  %v351 = vld [vmem:[%s0 + $0x540] sm:$0xf]
  %v352 = vld [vmem:[%s0 + $0x544] sm:$0xf]
  %v353 = vld [vmem:[%s0 + $0x548] sm:$0xf]
  %v354 = vld [vmem:[%s0 + $0x54c] sm:$0xf]
  %v355 = vld [vmem:[%s0 + $0x550] sm:$0xf]
  %v356 = vld [vmem:[%s0 + $0x554] sm:$0xf]
  %v357 = vld [vmem:[%s0 + $0x558] sm:$0xf]
  %v358 = vld [vmem:[%s0 + $0x55c] sm:$0xf]
  %v359 = vld [vmem:[%s0 + $0x560] sm:$0xf]
  %v360 = vld [vmem:[%s0 + $0x564] sm:$0xf]
  %v361 = vld [vmem:[%s0 + $0x568] sm:$0xf]
  %v362 = vld [vmem:[%s0 + $0x56c] sm:$0xf]
  %v363 = vld [vmem:[%s0 + $0x570] sm:$0xf]
  %v364 = vld [vmem:[%s0 + $0x574] sm:$0xf]
  %v365 = vld [vmem:[%s0 + $0x578] sm:$0xf]
  %v366 = vld [vmem:[%s0 + $0x57c] sm:$0xf]
  %v367 = vld [vmem:[%s0 + $0x580] sm:$0xf]
  %v368 = vld [vmem:[%s0 + $0x584] sm:$0xf]
  %v369 = vld [vmem:[%s0 + $0x588] sm:$0xf]
  %v370 = vld [vmem:[%s0 + $0x58c] sm:$0xf]
  %v371 = vld [vmem:[%s0 + $0x590] sm:$0xf]
  %v372 = vld [vmem:[%s0 + $0x594] sm:$0xf]
  %v373 = vld [vmem:[%s0 + $0x598] sm:$0xf]
  %v374 = vld [vmem:[%s0 + $0x59c] sm:$0xf]
  %v375 = vld [vmem:[%s0 + $0x5a0] sm:$0xf]
  %v376 = vld [vmem:[%s0 + $0x5a4] sm:$0xf]
  %v377 = vld [vmem:[%s0 + $0x5a8] sm:$0xf]
  %v378 = vld [vmem:[%s0 + $0x5ac] sm:$0xf]
  %v379 = vld [vmem:[%s0 + $0x5b0] sm:$0xf]
  %v380 = vld [vmem:[%s0 + $0x5b4] sm:$0xf]
  %v381 = vld [vmem:[%s0 + $0x5b8] sm:$0xf]
  %v382 = vld [vmem:[%s0 + $0x5bc] sm:$0xf]
  %v383 = vld [vmem:[%s0 + $0x5c0] sm:$0xf]
  %v384 = vld [vmem:[%s0 + $0x5c4] sm:$0xf]
  %v385 = vld [vmem:[%s0 + $0x5c8] sm:$0xf]
  %v386 = vld [vmem:[%s0 + $0x5cc] sm:$0xf]
  %v387 = vld [vmem:[%s0 + $0x5d0] sm:$0xf]
  %v388 = vld [vmem:[%s0 + $0x5d4] sm:$0xf]
  %v389 = vld [vmem:[%s0 + $0x5d8] sm:$0xf]
  %v390 = vld [vmem:[%s0 + $0x5dc] sm:$0xf]
  %v391 = vld [vmem:[%s0 + $0x5e0] sm:$0xf]
  %v392 = vld [vmem:[%s0 + $0x5e4] sm:$0xf]
  %v393 = vld [vmem:[%s0 + $0x5e8] sm:$0xf]
  %v394 = vld [vmem:[%s0 + $0x5ec] sm:$0xf]
  %v395 = vld [vmem:[%s0 + $0x5f0] sm:$0xf]
  %v396 = vld [vmem:[%s0 + $0x5f4] sm:$0xf]
  %v397 = vld [vmem:[%s0 + $0x5f8] sm:$0xf]
  %v398 = vld [vmem:[%s0 + $0x5fc] sm:$0xf]
  %v399 = vld [vmem:[%s0 + $0x600] sm:$0xf]
  %v400 = vld [vmem:[%s0 + $0x604] sm:$0xf]
  %v401 = vld [vmem:[%s0 + $0x608] sm:$0xf]
  %v402 = vld [vmem:[%s0 + $0x60c] sm:$0xf]
  %v403 = vld [vmem:[%s0 + $0x610] sm:$0xf]
  %v404 = vld [vmem:[%s0 + $0x614] sm:$0xf]
  %v405 = vld [vmem:[%s0 + $0x618] sm:$0xf]
  %v406 = vld [vmem:[%s0 + $0x61c] sm:$0xf]
  %v407 = vld [vmem:[%s0 + $0x620] sm:$0xf]
  %v408 = vld [vmem:[%s0 + $0x624] sm:$0xf]
  %v409 = vld [vmem:[%s0 + $0x628] sm:$0xf]
  %v410 = vld [vmem:[%s0 + $0x62c] sm:$0xf]
  %v411 = vld [vmem:[%s0 + $0x630] sm:$0xf]
  %v412 = vld [vmem:[%s0 + $0x634] sm:$0xf]
  %v413 = vld [vmem:[%s0 + $0x638] sm:$0xf]
  %v414 = vld [vmem:[%s0 + $0x63c] sm:$0xf]
  %v415 = vld [vmem:[%s0 + $0x640] sm:$0xf]
  %v416 = vld [vmem:[%s0 + $0x644] sm:$0xf]
  %v417 = vld [vmem:[%s0 + $0x648] sm:$0xf]
  %v418 = vld [vmem:[%s0 + $0x64c] sm:$0xf]
  %v419 = vld [vmem:[%s0 + $0x650] sm:$0xf]
  %v420 = vld [vmem:[%s0 + $0x654] sm:$0xf]
  %v421 = vld [vmem:[%s0 + $0x658] sm:$0xf]
  %v422 = vld [vmem:[%s0 + $0x65c] sm:$0xf]
  %v423 = vld [vmem:[%s0 + $0x660] sm:$0xf]
  %v424 = vld [vmem:[%s0 + $0x664] sm:$0xf]
  %v425 = vld [vmem:[%s0 + $0x668] sm:$0xf]
  %v426 = vld [vmem:[%s0 + $0x66c] sm:$0xf]
  %v427 = vld [vmem:[%s0 + $0x670] sm:$0xf]
  %v428 = vld [vmem:[%s0 + $0x674] sm:$0xf]
  %v429 = vld [vmem:[%s0 + $0x678] sm:$0xf]
  %v430 = vld [vmem:[%s0 + $0x67c] sm:$0xf]
  %v431 = vld [vmem:[%s0 + $0x680] sm:$0xf]
  %v432 = vld [vmem:[%s0 + $0x684] sm:$0xf]
  %v433 = vld [vmem:[%s0 + $0x688] sm:$0xf]
  %v434 = vld [vmem:[%s0 + $0x68c] sm:$0xf]
  %v435 = vld [vmem:[%s0 + $0x690] sm:$0xf]
  %v436 = vld [vmem:[%s0 + $0x694] sm:$0xf]
  %v437 = vld [vmem:[%s0 + $0x698] sm:$0xf]
  %v438 = vld [vmem:[%s0 + $0x69c] sm:$0xf]
  %v439 = vld [vmem:[%s0 + $0x6a0] sm:$0xf]
  %v440 = vld [vmem:[%s0 + $0x6a4] sm:$0xf]
  %v441 = vld [vmem:[%s0 + $0x6a8] sm:$0xf]
  %v442 = vld [vmem:[%s0 + $0x6ac] sm:$0xf]
  %v443 = vld [vmem:[%s0 + $0x6b0] sm:$0xf]
  %v444 = vld [vmem:[%s0 + $0x6b4] sm:$0xf]
  %v445 = vld [vmem:[%s0 + $0x6b8] sm:$0xf]
  %v446 = vld [vmem:[%s0 + $0x6bc] sm:$0xf]
  %v447 = vld [vmem:[%s0 + $0x6c0] sm:$0xf]
  %v448 = vld [vmem:[%s0 + $0x6c4] sm:$0xf]
  %v449 = vld [vmem:[%s0 + $0x6c8] sm:$0xf]
  %v450 = vld [vmem:[%s0 + $0x6cc] sm:$0xf]
  %v451 = vld [vmem:[%s0 + $0x6d0] sm:$0xf]
  %v452 = vld [vmem:[%s0 + $0x6d4] sm:$0xf]
  %v453 = vld [vmem:[%s0 + $0x6d8] sm:$0xf]
  %v454 = vld [vmem:[%s0 + $0x6dc] sm:$0xf]
  %v455 = vld [vmem:[%s0 + $0x6e0] sm:$0xf]
  %v456 = vld [vmem:[%s0 + $0x6e4] sm:$0xf]
  %v457 = vld [vmem:[%s0 + $0x6e8] sm:$0xf]
  %v458 = vld [vmem:[%s0 + $0x6ec] sm:$0xf]
  %v459 = vld [vmem:[%s0 + $0x6f0] sm:$0xf]
  %v460 = vld [vmem:[%s0 + $0x6f4] sm:$0xf]
  %v461 = vld [vmem:[%s0 + $0x6f8] sm:$0xf]
  %v462 = vld [vmem:[%s0 + $0x6fc] sm:$0xf]
  %v463 = vld [vmem:[%s0 + $0x700] sm:$0xf]
  %v464 = vld [vmem:[%s0 + $0x704] sm:$0xf]
  %v465 = vld [vmem:[%s0 + $0x708] sm:$0xf]
  %v466 = vld [vmem:[%s0 + $0x70c] sm:$0xf]
  %v467 = vld [vmem:[%s0 + $0x710] sm:$0xf]
  %v468 = vld [vmem:[%s0 + $0x714] sm:$0xf]
  %v469 = vld [vmem:[%s0 + $0x718] sm:$0xf]
  %v470 = vld [vmem:[%s0 + $0x71c] sm:$0xf]
  %v471 = vld [vmem:[%s0 + $0x720] sm:$0xf]
  %v472 = vld [vmem:[%s0 + $0x724] sm:$0xf]
  %v473 = vld [vmem:[%s0 + $0x728] sm:$0xf]
  %v474 = vld [vmem:[%s0 + $0x72c] sm:$0xf]
  %v475 = vld [vmem:[%s0 + $0x730] sm:$0xf]
  %v476 = vld [vmem:[%s0 + $0x734] sm:$0xf]
  %v477 = vld [vmem:[%s0 + $0x738] sm:$0xf]
  %v478 = vld [vmem:[%s0 + $0x73c] sm:$0xf]
  %v479 = vld [vmem:[%s0 + $0x740] sm:$0xf]
  %v480 = vld [vmem:[%s0 + $0x744] sm:$0xf]
  %v481 = vld [vmem:[%s0 + $0x748] sm:$0xf]
  %v482 = vld [vmem:[%s0 + $0x74c] sm:$0xf]
  %v483 = vld [vmem:[%s0 + $0x750] sm:$0xf]
  %v484 = vld [vmem:[%s0 + $0x754] sm:$0xf]
  %v485 = vld [vmem:[%s0 + $0x758] sm:$0xf]
  %v486 = vld [vmem:[%s0 + $0x75c] sm:$0xf]
  %v487 = vld [vmem:[%s0 + $0x760] sm:$0xf]
  %v488 = vld [vmem:[%s0 + $0x764] sm:$0xf]
  %v489 = vld [vmem:[%s0 + $0x768] sm:$0xf]
  %v490 = vld [vmem:[%s0 + $0x76c] sm:$0xf]
  %v491 = vld [vmem:[%s0 + $0x770] sm:$0xf]
  %v492 = vld [vmem:[%s0 + $0x774] sm:$0xf]
  %v493 = vld [vmem:[%s0 + $0x778] sm:$0xf]
  %v494 = vld [vmem:[%s0 + $0x77c] sm:$0xf]
  %v495 = vld [vmem:[%s0 + $0x780] sm:$0xf]
  %v496 = vld [vmem:[%s0 + $0x784] sm:$0xf]
  %v497 = vld [vmem:[%s0 + $0x788] sm:$0xf]
  %v498 = vld [vmem:[%s0 + $0x78c] sm:$0xf]
  %v499 = vld [vmem:[%s1] sm:$0xf]
  %v500 = vld [vmem:[%s1 + $0x4] sm:$0xf]
  %v501 = vld [vmem:[%s1 + $0x8] sm:$0xf]
  %v502 = vld [vmem:[%s1 + $0xc] sm:$0xf]
  %v987 = vunpack.c.l.b16 %v15
  %v988 = vunpack.c.l.b16 %v16
  %v989 = vunpack.c.l.b16 %v17
  %v990 = vunpack.c.l.b16 %v18
  %v991 = vunpack.c.l.b16 %v19
  %v992 = vunpack.c.l.b16 %v20
  %v993 = vunpack.c.l.b16 %v21
  %v994 = vunpack.c.l.b16 %v22
  %v995 = vunpack.c.l.b16 %v23
  %v996 = vunpack.c.l.b16 %v24
  %v997 = vunpack.c.l.b16 %v25
  %v998 = vunpack.c.l.b16 %v26
  %v999 = vunpack.c.l.b16 %v27
  %v1000 = vunpack.c.l.b16 %v28
  %v1001 = vunpack.c.l.b16 %v29
  %v1002 = vunpack.c.l.b16 %v30
  %v1003 = vunpack.c.l.b16 %v31
  %v1004 = vunpack.c.l.b16 %v32
  %v1005 = vunpack.c.l.b16 %v33
  %v1006 = vunpack.c.l.b16 %v34
  %v1007 = vunpack.c.l.b16 %v35
  %v1008 = vunpack.c.l.b16 %v36
  %v1009 = vunpack.c.l.b16 %v37
  %v1010 = vunpack.c.l.b16 %v38
  %v1011 = vunpack.c.l.b16 %v39
  %v1012 = vunpack.c.l.b16 %v40
  %v1013 = vunpack.c.l.b16 %v41
  %v1014 = vunpack.c.l.b16 %v42
  %v1015 = vunpack.c.l.b16 %v43
  %v1016 = vunpack.c.l.b16 %v44
  %v1017 = vunpack.c.l.b16 %v45
  %v1018 = vunpack.c.l.b16 %v46
  %v1019 = vunpack.c.l.b16 %v47
  %v1020 = vunpack.c.l.b16 %v48
  %v1021 = vunpack.c.l.b16 %v49
  %v1022 = vunpack.c.l.b16 %v50
  %v1023 = vunpack.c.l.b16 %v51
  %v1024 = vunpack.c.l.b16 %v52
  %v1025 = vunpack.c.l.b16 %v53
  %v1026 = vunpack.c.l.b16 %v54
  %v1027 = vunpack.c.l.b16 %v55
  %v1028 = vunpack.c.l.b16 %v56
  %v1029 = vunpack.c.l.b16 %v57
  %v1030 = vunpack.c.l.b16 %v58
  %v1031 = vunpack.c.l.b16 %v59
  %v1032 = vunpack.c.l.b16 %v60
  %v1033 = vunpack.c.l.b16 %v61
  %v1034 = vunpack.c.l.b16 %v62
  %v1035 = vunpack.c.l.b16 %v63
  %v1036 = vunpack.c.l.b16 %v64
  %v1037 = vunpack.c.l.b16 %v65
  %v1038 = vunpack.c.l.b16 %v66
  %v1039 = vunpack.c.l.b16 %v67
  %v1040 = vunpack.c.l.b16 %v68
  %v1041 = vunpack.c.l.b16 %v69
  %v1042 = vunpack.c.l.b16 %v70
  %v1043 = vunpack.c.l.b16 %v71
  %v1044 = vunpack.c.l.b16 %v72
  %v1045 = vunpack.c.l.b16 %v73
  %v1046 = vunpack.c.l.b16 %v74
  %v1047 = vunpack.c.l.b16 %v75
  %v1048 = vunpack.c.l.b16 %v76
  %v1049 = vunpack.c.l.b16 %v77
  %v1050 = vunpack.c.l.b16 %v78
  %v1051 = vunpack.c.l.b16 %v79
  %v1052 = vunpack.c.l.b16 %v80
  %v1053 = vunpack.c.l.b16 %v81
  %v1054 = vunpack.c.l.b16 %v82
  %v1055 = vunpack.c.l.b16 %v83
  %v1056 = vunpack.c.l.b16 %v84
  %v1057 = vunpack.c.l.b16 %v85
  %v1058 = vunpack.c.l.b16 %v86
  %v1059 = vunpack.c.l.b16 %v87
  %v1060 = vunpack.c.l.b16 %v88
  %v1061 = vunpack.c.l.b16 %v89
  %v1062 = vunpack.c.l.b16 %v90
  %v1063 = vunpack.c.l.b16 %v91
  %v1064 = vunpack.c.l.b16 %v92
  %v1065 = vunpack.c.l.b16 %v93
  %v1066 = vunpack.c.l.b16 %v94
  %v1067 = vunpack.c.l.b16 %v95
  %v1068 = vunpack.c.l.b16 %v96
  %v1069 = vunpack.c.l.b16 %v97
  %v1070 = vunpack.c.l.b16 %v98
  %v1071 = vunpack.c.l.b16 %v99
  %v1072 = vunpack.c.l.b16 %v100
  %v1073 = vunpack.c.l.b16 %v101
  %v1074 = vunpack.c.l.b16 %v102
  %v1075 = vunpack.c.l.b16 %v103
  %v1076 = vunpack.c.l.b16 %v104
  %v1077 = vunpack.c.l.b16 %v105
  %v1078 = vunpack.c.l.b16 %v106
  %v1079 = vunpack.c.l.b16 %v107
  %v1080 = vunpack.c.l.b16 %v108
  %v1081 = vunpack.c.l.b16 %v109
  %v1082 = vunpack.c.l.b16 %v110
  %v1083 = vunpack.c.l.b16 %v111
  %v1084 = vunpack.c.l.b16 %v112
  %v1085 = vunpack.c.l.b16 %v113
  %v1086 = vunpack.c.l.b16 %v114
  %v1087 = vunpack.c.l.b16 %v115
  %v1088 = vunpack.c.l.b16 %v116
  %v1089 = vunpack.c.l.b16 %v117
  %v1090 = vunpack.c.l.b16 %v118
  %v1091 = vunpack.c.l.b16 %v119
  %v1092 = vunpack.c.l.b16 %v120
  %v1093 = vunpack.c.l.b16 %v121
  %v1094 = vunpack.c.l.b16 %v122
  %v1095 = vunpack.c.l.b16 %v123
  %v1096 = vunpack.c.l.b16 %v124
  %v1097 = vunpack.c.l.b16 %v125
  %v1098 = vunpack.c.l.b16 %v126
  %v1099 = vunpack.c.l.b16 %v127
  %v1100 = vunpack.c.l.b16 %v128
  %v1101 = vunpack.c.l.b16 %v129
  %v1102 = vunpack.c.l.b16 %v130
  %v1103 = vunpack.c.l.b16 %v131
  %v1104 = vunpack.c.l.b16 %v132
  %v1105 = vunpack.c.l.b16 %v133
  %v1106 = vunpack.c.l.b16 %v134
  %v1107 = vunpack.c.l.b16 %v135
  %v1108 = vunpack.c.l.b16 %v136
  %v1109 = vunpack.c.l.b16 %v137
  %v1110 = vunpack.c.l.b16 %v138
  %v1111 = vunpack.c.l.b16 %v139
  %v1112 = vunpack.c.l.b16 %v140
  %v1113 = vunpack.c.l.b16 %v141
  %v1114 = vunpack.c.l.b16 %v142
  %v1115 = vunpack.c.l.b16 %v143
  %v1116 = vunpack.c.l.b16 %v144
  %v1117 = vunpack.c.l.b16 %v145
  %v1118 = vunpack.c.l.b16 %v146
  %v1119 = vunpack.c.l.b16 %v147
  %v1120 = vunpack.c.l.b16 %v148
  %v1121 = vunpack.c.l.b16 %v149
  %v1122 = vunpack.c.l.b16 %v150
  %v1123 = vunpack.c.l.b16 %v151
  %v1124 = vunpack.c.l.b16 %v152
  %v1125 = vunpack.c.l.b16 %v153
  %v1126 = vunpack.c.l.b16 %v154
  %v1127 = vunpack.c.l.b16 %v155
  %v1128 = vunpack.c.l.b16 %v156
  %v1129 = vunpack.c.l.b16 %v157
  %v1130 = vunpack.c.l.b16 %v158
  %v1131 = vunpack.c.l.b16 %v159
  %v1132 = vunpack.c.l.b16 %v160
  %v1133 = vunpack.c.l.b16 %v161
  %v1134 = vunpack.c.l.b16 %v162
  %v1135 = vunpack.c.l.b16 %v163
  %v1136 = vunpack.c.l.b16 %v164
  %v1137 = vunpack.c.l.b16 %v165
  %v1138 = vunpack.c.l.b16 %v166
  %v1139 = vunpack.c.l.b16 %v167
  %v1140 = vunpack.c.l.b16 %v168
  %v1141 = vunpack.c.l.b16 %v169
  %v1142 = vunpack.c.l.b16 %v170
  %v1143 = vunpack.c.l.b16 %v171
  %v1144 = vunpack.c.l.b16 %v172
  %v1145 = vunpack.c.l.b16 %v173
  %v1146 = vunpack.c.l.b16 %v174
  %v1147 = vunpack.c.l.b16 %v175
  %v1148 = vunpack.c.l.b16 %v176
  %v1149 = vunpack.c.l.b16 %v177
  %v1150 = vunpack.c.l.b16 %v178
  %v1151 = vunpack.c.l.b16 %v179
  %v1152 = vunpack.c.l.b16 %v180
  %v1153 = vunpack.c.l.b16 %v181
  %v1154 = vunpack.c.l.b16 %v182
  %v1155 = vunpack.c.l.b16 %v183
  %v1156 = vunpack.c.l.b16 %v184
  %v1157 = vunpack.c.l.b16 %v185
  %v1158 = vunpack.c.l.b16 %v186
  %v1159 = vunpack.c.l.b16 %v187
  %v1160 = vunpack.c.l.b16 %v188
  %v1161 = vunpack.c.l.b16 %v189
  %v1162 = vunpack.c.l.b16 %v190
  %v1163 = vunpack.c.l.b16 %v191
  %v1164 = vunpack.c.l.b16 %v192
  %v1165 = vunpack.c.l.b16 %v193
  %v1166 = vunpack.c.l.b16 %v194
  %v1167 = vunpack.c.l.b16 %v195
  %v1168 = vunpack.c.l.b16 %v196
  %v1169 = vunpack.c.l.b16 %v197
  %v1170 = vunpack.c.l.b16 %v198
  %v1171 = vunpack.c.l.b16 %v199
  %v1172 = vunpack.c.l.b16 %v200
  %v1173 = vunpack.c.l.b16 %v201
  %v1174 = vunpack.c.l.b16 %v202
  %v1175 = vunpack.c.l.b16 %v203
  %v1176 = vunpack.c.l.b16 %v204
  %v1177 = vunpack.c.l.b16 %v205
  %v1178 = vunpack.c.l.b16 %v206
  %v1179 = vunpack.c.l.b16 %v207
  %v1180 = vunpack.c.l.b16 %v208
  %v1181 = vunpack.c.l.b16 %v209
  %v1182 = vunpack.c.l.b16 %v210
  %v1183 = vunpack.c.l.b16 %v211
  %v1184 = vunpack.c.l.b16 %v212
  %v1185 = vunpack.c.l.b16 %v213
  %v1186 = vunpack.c.l.b16 %v214
  %v1187 = vunpack.c.l.b16 %v215
  %v1188 = vunpack.c.l.b16 %v216
  %v1189 = vunpack.c.l.b16 %v217
  %v1190 = vunpack.c.l.b16 %v218
  %v1191 = vunpack.c.l.b16 %v219
  %v1192 = vunpack.c.l.b16 %v220
  %v1193 = vunpack.c.l.b16 %v221
  %v1194 = vunpack.c.l.b16 %v222
  %v1195 = vunpack.c.l.b16 %v223
  %v1196 = vunpack.c.l.b16 %v224
  %v1197 = vunpack.c.l.b16 %v225
  %v1198 = vunpack.c.l.b16 %v226
  %v1199 = vunpack.c.l.b16 %v227
  %v1200 = vunpack.c.l.b16 %v228
  %v1201 = vunpack.c.l.b16 %v229
  %v1202 = vunpack.c.l.b16 %v230
  %v1203 = vunpack.c.l.b16 %v231
  %v1204 = vunpack.c.l.b16 %v232
  %v1205 = vunpack.c.l.b16 %v233
  %v1206 = vunpack.c.l.b16 %v234
  %v1207 = vunpack.c.l.b16 %v235
  %v1208 = vunpack.c.l.b16 %v236
  %v1209 = vunpack.c.l.b16 %v237
  %v1210 = vunpack.c.l.b16 %v238
  %v1211 = vunpack.c.l.b16 %v239
  %v1212 = vunpack.c.l.b16 %v240
  %v1213 = vunpack.c.l.b16 %v241
  %v1214 = vunpack.c.l.b16 %v242
  %v1215 = vunpack.c.l.b16 %v243
  %v1216 = vunpack.c.l.b16 %v244
  %v1217 = vunpack.c.l.b16 %v245
  %v1218 = vunpack.c.l.b16 %v246
  %v1219 = vunpack.c.l.b16 %v247
  %v1220 = vunpack.c.l.b16 %v248
  %v1221 = vunpack.c.l.b16 %v249
  %v1222 = vunpack.c.l.b16 %v250
  %v1223 = vunpack.c.l.b16 %v251
  %v1224 = vunpack.c.l.b16 %v252
  %v1225 = vunpack.c.l.b16 %v253
  %v1226 = vunpack.c.l.b16 %v254
  %v1227 = vunpack.c.l.b16 %v255
  %v1228 = vunpack.c.l.b16 %v256
  %v1229 = vunpack.c.l.b16 %v257
  %v1230 = vunpack.c.l.b16 %v258
  %v1231 = vunpack.c.l.b16 %v259
  %v1232 = vunpack.c.l.b16 %v260
  %v1233 = vunpack.c.l.b16 %v261
  %v1234 = vunpack.c.l.b16 %v262
  %v1235 = vunpack.c.l.b16 %v263
  %v1236 = vunpack.c.l.b16 %v264
  %v1237 = vunpack.c.l.b16 %v265
  %v1238 = vunpack.c.l.b16 %v266
  %v1239 = vunpack.c.l.b16 %v267
  %v1240 = vunpack.c.l.b16 %v268
  %v1241 = vunpack.c.l.b16 %v269
  %v1242 = vunpack.c.l.b16 %v270
  %v1243 = vunpack.c.l.b16 %v271
  %v1244 = vunpack.c.l.b16 %v272
  %v1245 = vunpack.c.l.b16 %v273
  %v1246 = vunpack.c.l.b16 %v274
  %v1247 = vunpack.c.l.b16 %v275
  %v1248 = vunpack.c.l.b16 %v276
  %v1249 = vunpack.c.l.b16 %v277
  %v1250 = vunpack.c.l.b16 %v278
  %v1251 = vunpack.c.l.b16 %v279
  %v1252 = vunpack.c.l.b16 %v280
  %v1253 = vunpack.c.l.b16 %v281
  %v1254 = vunpack.c.l.b16 %v282
  %v1255 = vunpack.c.l.b16 %v283
  %v1256 = vunpack.c.l.b16 %v284
  %v1257 = vunpack.c.l.b16 %v285
  %v1258 = vunpack.c.l.b16 %v286
  %v1259 = vunpack.c.l.b16 %v287
  %v1260 = vunpack.c.l.b16 %v288
  %v1261 = vunpack.c.l.b16 %v289
  %v1262 = vunpack.c.l.b16 %v290
  %v1263 = vunpack.c.l.b16 %v291
  %v1264 = vunpack.c.l.b16 %v292
  %v1265 = vunpack.c.l.b16 %v293
  %v1266 = vunpack.c.l.b16 %v294
  %v1267 = vunpack.c.l.b16 %v295
  %v1268 = vunpack.c.l.b16 %v296
  %v1269 = vunpack.c.l.b16 %v297
  %v1270 = vunpack.c.l.b16 %v298
  %v1271 = vunpack.c.l.b16 %v299
  %v1272 = vunpack.c.l.b16 %v300
  %v1273 = vunpack.c.l.b16 %v301
  %v1274 = vunpack.c.l.b16 %v302
  %v1275 = vunpack.c.l.b16 %v303
  %v1276 = vunpack.c.l.b16 %v304
  %v1277 = vunpack.c.l.b16 %v305
  %v1278 = vunpack.c.l.b16 %v306
  %v1279 = vunpack.c.l.b16 %v307
  %v1280 = vunpack.c.l.b16 %v308
  %v1281 = vunpack.c.l.b16 %v309
  %v1282 = vunpack.c.l.b16 %v310
  %v1283 = vunpack.c.l.b16 %v311
  %v1284 = vunpack.c.l.b16 %v312
  %v1285 = vunpack.c.l.b16 %v313
  %v1286 = vunpack.c.l.b16 %v314
  %v1287 = vunpack.c.l.b16 %v315
  %v1288 = vunpack.c.l.b16 %v316
  %v1289 = vunpack.c.l.b16 %v317
  %v1290 = vunpack.c.l.b16 %v318
  %v1291 = vunpack.c.l.b16 %v319
  %v1292 = vunpack.c.l.b16 %v320
  %v1293 = vunpack.c.l.b16 %v321
  %v1294 = vunpack.c.l.b16 %v322
  %v1295 = vunpack.c.l.b16 %v323
  %v1296 = vunpack.c.l.b16 %v324
  %v1297 = vunpack.c.l.b16 %v325
  %v1298 = vunpack.c.l.b16 %v326
  %v1299 = vunpack.c.l.b16 %v327
  %v1300 = vunpack.c.l.b16 %v328
  %v1301 = vunpack.c.l.b16 %v329
  %v1302 = vunpack.c.l.b16 %v330
  %v1303 = vunpack.c.l.b16 %v331
  %v1304 = vunpack.c.l.b16 %v332
  %v1305 = vunpack.c.l.b16 %v333
  %v1306 = vunpack.c.l.b16 %v334
  %v1307 = vunpack.c.l.b16 %v335
  %v1308 = vunpack.c.l.b16 %v336
  %v1309 = vunpack.c.l.b16 %v337
  %v1310 = vunpack.c.l.b16 %v338
  %v1311 = vunpack.c.l.b16 %v339
  %v1312 = vunpack.c.l.b16 %v340
  %v1313 = vunpack.c.l.b16 %v341
  %v1314 = vunpack.c.l.b16 %v342
  %v1315 = vunpack.c.l.b16 %v343
  %v1316 = vunpack.c.l.b16 %v344
  %v1317 = vunpack.c.l.b16 %v345
  %v1318 = vunpack.c.l.b16 %v346
  %v1319 = vunpack.c.l.b16 %v347
  %v1320 = vunpack.c.l.b16 %v348
  %v1321 = vunpack.c.l.b16 %v349
  %v1322 = vunpack.c.l.b16 %v350
  %v1323 = vunpack.c.l.b16 %v351
  %v1324 = vunpack.c.l.b16 %v352
  %v1325 = vunpack.c.l.b16 %v353
  %v1326 = vunpack.c.l.b16 %v354
  %v1327 = vunpack.c.l.b16 %v355
  %v1328 = vunpack.c.l.b16 %v356
  %v1329 = vunpack.c.l.b16 %v357
  %v1330 = vunpack.c.l.b16 %v358
  %v1331 = vunpack.c.l.b16 %v359
  %v1332 = vunpack.c.l.b16 %v360
  %v1333 = vunpack.c.l.b16 %v361
  %v1334 = vunpack.c.l.b16 %v362
  %v1335 = vunpack.c.l.b16 %v363
  %v1336 = vunpack.c.l.b16 %v364
  %v1337 = vunpack.c.l.b16 %v365
  %v1338 = vunpack.c.l.b16 %v366
  %v1339 = vunpack.c.l.b16 %v367
  %v1340 = vunpack.c.l.b16 %v368
  %v1341 = vunpack.c.l.b16 %v369
  %v1342 = vunpack.c.l.b16 %v370
  %v1343 = vunpack.c.l.b16 %v371
  %v1344 = vunpack.c.l.b16 %v372
  %v1345 = vunpack.c.l.b16 %v373
  %v1346 = vunpack.c.l.b16 %v374
  %v1347 = vunpack.c.l.b16 %v375
  %v1348 = vunpack.c.l.b16 %v376
  %v1349 = vunpack.c.l.b16 %v377
  %v1350 = vunpack.c.l.b16 %v378
  %v1351 = vunpack.c.l.b16 %v379
  %v1352 = vunpack.c.l.b16 %v380
  %v1353 = vunpack.c.l.b16 %v381
  %v1354 = vunpack.c.l.b16 %v382
  %v1355 = vunpack.c.l.b16 %v383
  %v1356 = vunpack.c.l.b16 %v384
  %v1357 = vunpack.c.l.b16 %v385
  %v1358 = vunpack.c.l.b16 %v386
  %v1359 = vunpack.c.l.b16 %v387
  %v1360 = vunpack.c.l.b16 %v388
  %v1361 = vunpack.c.l.b16 %v389
  %v1362 = vunpack.c.l.b16 %v390
  %v1363 = vunpack.c.l.b16 %v391
  %v1364 = vunpack.c.l.b16 %v392
  %v1365 = vunpack.c.l.b16 %v393
  %v1366 = vunpack.c.l.b16 %v394
  %v1367 = vunpack.c.l.b16 %v395
  %v1368 = vunpack.c.l.b16 %v396
  %v1369 = vunpack.c.l.b16 %v397
  %v1370 = vunpack.c.l.b16 %v398
  %v1371 = vunpack.c.l.b16 %v399
  %v1372 = vunpack.c.l.b16 %v400
  %v1373 = vunpack.c.l.b16 %v401
  %v1374 = vunpack.c.l.b16 %v402
  %v1375 = vunpack.c.l.b16 %v403
  %v1376 = vunpack.c.l.b16 %v404
  %v1377 = vunpack.c.l.b16 %v405
  %v1378 = vunpack.c.l.b16 %v406
  %v1379 = vunpack.c.l.b16 %v407
  %v1380 = vunpack.c.l.b16 %v408
  %v1381 = vunpack.c.l.b16 %v409
  %v1382 = vunpack.c.l.b16 %v410
  %v1383 = vunpack.c.l.b16 %v411
  %v1384 = vunpack.c.l.b16 %v412
  %v1385 = vunpack.c.l.b16 %v413
  %v1386 = vunpack.c.l.b16 %v414
  %v1387 = vunpack.c.l.b16 %v415
  %v1388 = vunpack.c.l.b16 %v416
  %v1389 = vunpack.c.l.b16 %v417
  %v1390 = vunpack.c.l.b16 %v418
  %v1391 = vunpack.c.l.b16 %v419
  %v1392 = vunpack.c.l.b16 %v420
  %v1393 = vunpack.c.l.b16 %v421
  %v1394 = vunpack.c.l.b16 %v422
  %v1395 = vunpack.c.l.b16 %v423
  %v1396 = vunpack.c.l.b16 %v424
  %v1397 = vunpack.c.l.b16 %v425
  %v1398 = vunpack.c.l.b16 %v426
  %v1399 = vunpack.c.l.b16 %v427
  %v1400 = vunpack.c.l.b16 %v428
  %v1401 = vunpack.c.l.b16 %v429
  %v1402 = vunpack.c.l.b16 %v430
  %v1403 = vunpack.c.l.b16 %v431
  %v1404 = vunpack.c.l.b16 %v432
  %v1405 = vunpack.c.l.b16 %v433
  %v1406 = vunpack.c.l.b16 %v434
  %v1407 = vunpack.c.l.b16 %v435
  %v1408 = vunpack.c.l.b16 %v436
  %v1409 = vunpack.c.l.b16 %v437
  %v1410 = vunpack.c.l.b16 %v438
  %v1411 = vunpack.c.l.b16 %v439
  %v1412 = vunpack.c.l.b16 %v440
  %v1413 = vunpack.c.l.b16 %v441
  %v1414 = vunpack.c.l.b16 %v442
  %v1415 = vunpack.c.l.b16 %v443
  %v1416 = vunpack.c.l.b16 %v444
  %v1417 = vunpack.c.l.b16 %v445
  %v1418 = vunpack.c.l.b16 %v446
  %v1419 = vunpack.c.l.b16 %v447
  %v1420 = vunpack.c.l.b16 %v448
  %v1421 = vunpack.c.l.b16 %v449
  %v1422 = vunpack.c.l.b16 %v450
  %v1423 = vunpack.c.l.b16 %v451
  %v1424 = vunpack.c.l.b16 %v452
  %v1425 = vunpack.c.l.b16 %v453
  %v1426 = vunpack.c.l.b16 %v454
  %v1427 = vunpack.c.l.b16 %v455
  %v1428 = vunpack.c.l.b16 %v456
  %v1429 = vunpack.c.l.b16 %v457
  %v1430 = vunpack.c.l.b16 %v458
  %v1431 = vunpack.c.l.b16 %v459
  %v1432 = vunpack.c.l.b16 %v460
  %v1433 = vunpack.c.l.b16 %v461
  %v1434 = vunpack.c.l.b16 %v462
  %v1435 = vunpack.c.l.b16 %v463
  %v1436 = vunpack.c.l.b16 %v464
  %v1437 = vunpack.c.l.b16 %v465
  %v1438 = vunpack.c.l.b16 %v466
  %v1439 = vunpack.c.l.b16 %v467
  %v1440 = vunpack.c.l.b16 %v468
  %v1441 = vunpack.c.l.b16 %v469
  %v1442 = vunpack.c.l.b16 %v470
  %v1443 = vunpack.c.l.b16 %v471
  %v1444 = vunpack.c.l.b16 %v472
  %v1445 = vunpack.c.l.b16 %v473
  %v1446 = vunpack.c.l.b16 %v474
  %v1447 = vunpack.c.l.b16 %v475
  %v1448 = vunpack.c.l.b16 %v476
  %v1449 = vunpack.c.l.b16 %v477
  %v1450 = vunpack.c.l.b16 %v478
  %v1451 = vunpack.c.l.b16 %v479
  %v1452 = vunpack.c.l.b16 %v480
  %v1453 = vunpack.c.l.b16 %v481
  %v1454 = vunpack.c.l.b16 %v482
  %v1455 = vunpack.c.l.b16 %v483
  %v1456 = vunpack.c.l.b16 %v484
  %v1457 = vunpack.c.l.b16 %v485
  %v1458 = vunpack.c.l.b16 %v486
  %v1459 = vunpack.c.l.b16 %v487
  %v1460 = vunpack.c.l.b16 %v488
  %v1461 = vunpack.c.l.b16 %v489
  %v1462 = vunpack.c.l.b16 %v490
  %v1463 = vunpack.c.l.b16 %v491
  %v1464 = vunpack.c.l.b16 %v492
  %v1465 = vunpack.c.l.b16 %v493
  %v1466 = vunpack.c.l.b16 %v494
  %v1467 = vunpack.c.l.b16 %v495
  %v1468 = vunpack.c.l.b16 %v496
  %v1469 = vunpack.c.l.b16 %v497
  %v1470 = vunpack.c.l.b16 %v498
  %v1471 = vpack.c.b16 %v988, %v987
  %v1472 = vpack.c.b16 %v990, %v989
  %v1473 = vpack.c.b16 %v992, %v991
  %v1474 = vpack.c.b16 %v994, %v993
  %v1475 = vpack.c.b16 %v996, %v995
  %v1476 = vpack.c.b16 %v998, %v997
  %v1477 = vpack.c.b16 %v1000, %v999
  %v1478 = vpack.c.b16 %v1002, %v1001
  %v1479 = vpack.c.b16 %v1004, %v1003
  %v1480 = vpack.c.b16 %v1006, %v1005
  %v1481 = vpack.c.b16 %v1008, %v1007
  %v1482 = vpack.c.b16 %v1010, %v1009
  %v1483 = vpack.c.b16 %v1012, %v1011
  %v1484 = vpack.c.b16 %v1014, %v1013
  %v1485 = vpack.c.b16 %v1016, %v1015
  %v1486 = vpack.c.b16 %v1018, %v1017
  %v1487 = vpack.c.b16 %v1020, %v1019
  %v1488 = vpack.c.b16 %v1022, %v1021
  %v1489 = vpack.c.b16 %v1024, %v1023
  %v1490 = vpack.c.b16 %v1026, %v1025
  %v1491 = vpack.c.b16 %v1028, %v1027
  %v1492 = vpack.c.b16 %v1030, %v1029
  %v1493 = vpack.c.b16 %v1032, %v1031
  %v1494 = vpack.c.b16 %v1034, %v1033
  %v1495 = vpack.c.b16 %v1036, %v1035
  %v1496 = vpack.c.b16 %v1038, %v1037
  %v1497 = vpack.c.b16 %v1040, %v1039
  %v1498 = vpack.c.b16 %v1042, %v1041
  %v1499 = vpack.c.b16 %v1044, %v1043
  %v1500 = vpack.c.b16 %v1046, %v1045
  %v1501 = vpack.c.b16 %v1048, %v1047
  %v1502 = vpack.c.b16 %v1050, %v1049
  %v1503 = vpack.c.b16 %v1052, %v1051
  %v1504 = vpack.c.b16 %v1054, %v1053
  %v1505 = vpack.c.b16 %v1056, %v1055
  %v1506 = vpack.c.b16 %v1058, %v1057
  %v1507 = vpack.c.b16 %v1060, %v1059
  %v1508 = vpack.c.b16 %v1062, %v1061
  %v1509 = vpack.c.b16 %v1064, %v1063
  %v1510 = vpack.c.b16 %v1066, %v1065
  %v1511 = vpack.c.b16 %v1068, %v1067
  %v1512 = vpack.c.b16 %v1070, %v1069
  %v1513 = vpack.c.b16 %v1072, %v1071
  %v1514 = vpack.c.b16 %v1074, %v1073
  %v1515 = vpack.c.b16 %v1076, %v1075
  %v1516 = vpack.c.b16 %v1078, %v1077
  %v1517 = vpack.c.b16 %v1080, %v1079
  %v1518 = vpack.c.b16 %v1082, %v1081
  %v1519 = vpack.c.b16 %v1084, %v1083
  %v1520 = vpack.c.b16 %v1086, %v1085
  %v1521 = vpack.c.b16 %v1088, %v1087
  %v1522 = vpack.c.b16 %v1090, %v1089
  %v1523 = vpack.c.b16 %v1092, %v1091
  %v1524 = vpack.c.b16 %v1094, %v1093
  %v1525 = vpack.c.b16 %v1096, %v1095
  %v1526 = vpack.c.b16 %v1098, %v1097
  %v1527 = vpack.c.b16 %v1100, %v1099
  %v1528 = vpack.c.b16 %v1102, %v1101
  %v1529 = vpack.c.b16 %v1104, %v1103
  %v1530 = vpack.c.b16 %v1106, %v1105
  %v1531 = vpack.c.b16 %v1108, %v1107
  %v1532 = vpack.c.b16 %v1110, %v1109
  %v1533 = vpack.c.b16 %v1112, %v1111
  %v1534 = vpack.c.b16 %v1114, %v1113
  %v1535 = vpack.c.b16 %v1116, %v1115
  %v1536 = vpack.c.b16 %v1118, %v1117
  %v1537 = vpack.c.b16 %v1120, %v1119
  %v1538 = vpack.c.b16 %v1122, %v1121
  %v1539 = vpack.c.b16 %v1124, %v1123
  %v1540 = vpack.c.b16 %v1126, %v1125
  %v1541 = vpack.c.b16 %v1128, %v1127
  %v1542 = vpack.c.b16 %v1130, %v1129
  %v1543 = vpack.c.b16 %v1132, %v1131
  %v1544 = vpack.c.b16 %v1134, %v1133
  %v1545 = vpack.c.b16 %v1136, %v1135
  %v1546 = vpack.c.b16 %v1138, %v1137
  %v1547 = vpack.c.b16 %v1140, %v1139
  %v1548 = vpack.c.b16 %v1142, %v1141
  %v1549 = vpack.c.b16 %v1144, %v1143
  %v1550 = vpack.c.b16 %v1146, %v1145
  %v1551 = vpack.c.b16 %v1148, %v1147
  %v1552 = vpack.c.b16 %v1150, %v1149
  %v1553 = vpack.c.b16 %v1152, %v1151
  %v1554 = vpack.c.b16 %v1154, %v1153
  %v1555 = vpack.c.b16 %v1156, %v1155
  %v1556 = vpack.c.b16 %v1158, %v1157
  %v1557 = vpack.c.b16 %v1160, %v1159
  %v1558 = vpack.c.b16 %v1162, %v1161
  %v1559 = vpack.c.b16 %v1164, %v1163
  %v1560 = vpack.c.b16 %v1166, %v1165
  %v1561 = vpack.c.b16 %v1168, %v1167
  %v1562 = vpack.c.b16 %v1170, %v1169
  %v1563 = vpack.c.b16 %v1172, %v1171
  %v1564 = vpack.c.b16 %v1174, %v1173
  %v1565 = vpack.c.b16 %v1176, %v1175
  %v1566 = vpack.c.b16 %v1178, %v1177
  %v1567 = vpack.c.b16 %v1180, %v1179
  %v1568 = vpack.c.b16 %v1182, %v1181
  %v1569 = vpack.c.b16 %v1184, %v1183
  %v1570 = vpack.c.b16 %v1186, %v1185
  %v1571 = vpack.c.b16 %v1188, %v1187
  %v1572 = vpack.c.b16 %v1190, %v1189
  %v1573 = vpack.c.b16 %v1192, %v1191
  %v1574 = vpack.c.b16 %v1194, %v1193
  %v1575 = vpack.c.b16 %v1196, %v1195
  %v1576 = vpack.c.b16 %v1198, %v1197
  %v1577 = vpack.c.b16 %v1200, %v1199
  %v1578 = vpack.c.b16 %v1202, %v1201
  %v1579 = vpack.c.b16 %v1204, %v1203
  %v1580 = vpack.c.b16 %v1206, %v1205
  %v1581 = vpack.c.b16 %v1208, %v1207
  %v1582 = vpack.c.b16 %v1210, %v1209
  %v1583 = vpack.c.b16 %v1212, %v1211
  %v1584 = vpack.c.b16 %v1214, %v1213
  %v1585 = vpack.c.b16 %v1216, %v1215
  %v1586 = vpack.c.b16 %v1218, %v1217
  %v1587 = vpack.c.b16 %v1220, %v1219
  %v1588 = vpack.c.b16 %v1222, %v1221
  %v1589 = vpack.c.b16 %v1224, %v1223
  %v1590 = vpack.c.b16 %v1226, %v1225
  %v1591 = vpack.c.b16 %v1228, %v1227
  %v1592 = vpack.c.b16 %v1230, %v1229
  %v1593 = vpack.c.b16 %v1232, %v1231
  %v1594 = vpack.c.b16 %v1234, %v1233
  %v1595 = vpack.c.b16 %v1236, %v1235
  %v1596 = vpack.c.b16 %v1238, %v1237
  %v1597 = vpack.c.b16 %v1240, %v1239
  %v1598 = vpack.c.b16 %v1242, %v1241
  %v1599 = vpack.c.b16 %v1244, %v1243
  %v1600 = vpack.c.b16 %v1246, %v1245
  %v1601 = vpack.c.b16 %v1248, %v1247
  %v1602 = vpack.c.b16 %v1250, %v1249
  %v1603 = vpack.c.b16 %v1252, %v1251
  %v1604 = vpack.c.b16 %v1254, %v1253
  %v1605 = vpack.c.b16 %v1256, %v1255
  %v1606 = vpack.c.b16 %v1258, %v1257
  %v1607 = vpack.c.b16 %v1260, %v1259
  %v1608 = vpack.c.b16 %v1262, %v1261
  %v1609 = vpack.c.b16 %v1264, %v1263
  %v1610 = vpack.c.b16 %v1266, %v1265
  %v1611 = vpack.c.b16 %v1268, %v1267
  %v1612 = vpack.c.b16 %v1270, %v1269
  %v1613 = vpack.c.b16 %v1272, %v1271
  %v1614 = vpack.c.b16 %v1274, %v1273
  %v1615 = vpack.c.b16 %v1276, %v1275
  %v1616 = vpack.c.b16 %v1278, %v1277
  %v1617 = vpack.c.b16 %v1280, %v1279
  %v1618 = vpack.c.b16 %v1282, %v1281
  %v1619 = vpack.c.b16 %v1284, %v1283
  %v1620 = vpack.c.b16 %v1286, %v1285
  %v1621 = vpack.c.b16 %v1288, %v1287
  %v1622 = vpack.c.b16 %v1290, %v1289
  %v1623 = vpack.c.b16 %v1292, %v1291
  %v1624 = vpack.c.b16 %v1294, %v1293
  %v1625 = vpack.c.b16 %v1296, %v1295
  %v1626 = vpack.c.b16 %v1298, %v1297
  %v1627 = vpack.c.b16 %v1300, %v1299
  %v1628 = vpack.c.b16 %v1302, %v1301
  %v1629 = vpack.c.b16 %v1304, %v1303
  %v1630 = vpack.c.b16 %v1306, %v1305
  %v1631 = vpack.c.b16 %v1308, %v1307
  %v1632 = vpack.c.b16 %v1310, %v1309
  %v1633 = vpack.c.b16 %v1312, %v1311
  %v1634 = vpack.c.b16 %v1314, %v1313
  %v1635 = vpack.c.b16 %v1316, %v1315
  %v1636 = vpack.c.b16 %v1318, %v1317
  %v1637 = vpack.c.b16 %v1320, %v1319
  %v1638 = vpack.c.b16 %v1322, %v1321
  %v1639 = vpack.c.b16 %v1324, %v1323
  %v1640 = vpack.c.b16 %v1326, %v1325
  %v1641 = vpack.c.b16 %v1328, %v1327
  %v1642 = vpack.c.b16 %v1330, %v1329
  %v1643 = vpack.c.b16 %v1332, %v1331
  %v1644 = vpack.c.b16 %v1334, %v1333
  %v1645 = vpack.c.b16 %v1336, %v1335
  %v1646 = vpack.c.b16 %v1338, %v1337
  %v1647 = vpack.c.b16 %v1340, %v1339
  %v1648 = vpack.c.b16 %v1342, %v1341
  %v1649 = vpack.c.b16 %v1344, %v1343
  %v1650 = vpack.c.b16 %v1346, %v1345
  %v1651 = vpack.c.b16 %v1348, %v1347
  %v1652 = vpack.c.b16 %v1350, %v1349
  %v1653 = vpack.c.b16 %v1352, %v1351
  %v1654 = vpack.c.b16 %v1354, %v1353
  %v1655 = vpack.c.b16 %v1356, %v1355
  %v1656 = vpack.c.b16 %v1358, %v1357
  %v1657 = vpack.c.b16 %v1360, %v1359
  %v1658 = vpack.c.b16 %v1362, %v1361
  %v1659 = vpack.c.b16 %v1364, %v1363
  %v1660 = vpack.c.b16 %v1366, %v1365
  %v1661 = vpack.c.b16 %v1368, %v1367
  %v1662 = vpack.c.b16 %v1370, %v1369
  %v1663 = vpack.c.b16 %v1372, %v1371
  %v1664 = vpack.c.b16 %v1374, %v1373
  %v1665 = vpack.c.b16 %v1376, %v1375
  %v1666 = vpack.c.b16 %v1378, %v1377
  %v1667 = vpack.c.b16 %v1380, %v1379
  %v1668 = vpack.c.b16 %v1382, %v1381
  %v1669 = vpack.c.b16 %v1384, %v1383
  %v1670 = vpack.c.b16 %v1386, %v1385
  %v1671 = vpack.c.b16 %v1388, %v1387
  %v1672 = vpack.c.b16 %v1390, %v1389
  %v1673 = vpack.c.b16 %v1392, %v1391
  %v1674 = vpack.c.b16 %v1394, %v1393
  %v1675 = vpack.c.b16 %v1396, %v1395
  %v1676 = vpack.c.b16 %v1398, %v1397
  %v1677 = vpack.c.b16 %v1400, %v1399
  %v1678 = vpack.c.b16 %v1402, %v1401
  %v1679 = vpack.c.b16 %v1404, %v1403
  %v1680 = vpack.c.b16 %v1406, %v1405
  %v1681 = vpack.c.b16 %v1408, %v1407
  %v1682 = vpack.c.b16 %v1410, %v1409
  %v1683 = vpack.c.b16 %v1412, %v1411
  %v1684 = vpack.c.b16 %v1414, %v1413
  %v1685 = vpack.c.b16 %v1416, %v1415
  %v1686 = vpack.c.b16 %v1418, %v1417
  %v1687 = vpack.c.b16 %v1420, %v1419
  %v1688 = vpack.c.b16 %v1422, %v1421
  %v1689 = vpack.c.b16 %v1424, %v1423
  %v1690 = vpack.c.b16 %v1426, %v1425
  %v1691 = vpack.c.b16 %v1428, %v1427
  %v1692 = vpack.c.b16 %v1430, %v1429
  %v1693 = vpack.c.b16 %v1432, %v1431
  %v1694 = vpack.c.b16 %v1434, %v1433
  %v1695 = vpack.c.b16 %v1436, %v1435
  %v1696 = vpack.c.b16 %v1438, %v1437
  %v1697 = vpack.c.b16 %v1440, %v1439
  %v1698 = vpack.c.b16 %v1442, %v1441
  %v1699 = vpack.c.b16 %v1444, %v1443
  %v1700 = vpack.c.b16 %v1446, %v1445
  %v1701 = vpack.c.b16 %v1448, %v1447
  %v1702 = vpack.c.b16 %v1450, %v1449
  %v1703 = vpack.c.b16 %v1452, %v1451
  %v1704 = vpack.c.b16 %v1454, %v1453
  %v1705 = vpack.c.b16 %v1456, %v1455
  %v1706 = vpack.c.b16 %v1458, %v1457
  %v1707 = vpack.c.b16 %v1460, %v1459
  %v1708 = vpack.c.b16 %v1462, %v1461
  %v1709 = vpack.c.b16 %v1464, %v1463
  %v1710 = vpack.c.b16 %v1466, %v1465
  %v1711 = vpack.c.b16 %v1468, %v1467
  %v1712 = vpack.c.b16 %v1470, %v1469
  %v1717 = vunpack.c.l.b16 %v499
  %v1718 = vunpack.c.l.b16 %v500
  %v1719 = vunpack.c.l.b16 %v501
  %v1720 = vunpack.c.l.b16 %v502
  %v1721 = vpack.c.b16 %v1718, %v1717
  %v1722 = vpack.c.b16 %v1720, %v1719
  %vm1725 = vcmask 261120
  %v1727 = vsel %vm1725, %v1471, 0
  %v1730 = vsel %vm1725, %v1472, 0
  %v1733 = vsel %vm1725, %v1473, 0
  %v1736 = vsel %vm1725, %v1474, 0
  %v1739 = vsel %vm1725, %v1475, 0
  %v1742 = vsel %vm1725, %v1476, 0
  %v1745 = vsel %vm1725, %v1477, 0
  %v1748 = vsel %vm1725, %v1478, 0
  %v1751 = vsel %vm1725, %v1479, 0
  %v1754 = vsel %vm1725, %v1480, 0
  %v1757 = vsel %vm1725, %v1481, 0
  %v1760 = vsel %vm1725, %v1482, 0
  %v1763 = vsel %vm1725, %v1483, 0
  %v1766 = vsel %vm1725, %v1484, 0
  %v1769 = vsel %vm1725, %v1485, 0
  %v1772 = vsel %vm1725, %v1486, 0
  %v1775 = vsel %vm1725, %v1487, 0
  %v1778 = vsel %vm1725, %v1488, 0
  %v1781 = vsel %vm1725, %v1489, 0
  %v1784 = vsel %vm1725, %v1490, 0
  %v1787 = vsel %vm1725, %v1491, 0
  %v1790 = vsel %vm1725, %v1492, 0
  %v1793 = vsel %vm1725, %v1493, 0
  %v1796 = vsel %vm1725, %v1494, 0
  %v1799 = vsel %vm1725, %v1495, 0
  %v1802 = vsel %vm1725, %v1496, 0
  %v1805 = vsel %vm1725, %v1497, 0
  %v1808 = vsel %vm1725, %v1498, 0
  %v1811 = vsel %vm1725, %v1499, 0
  %v1814 = vsel %vm1725, %v1500, 0
  %v1817 = vsel %vm1725, %v1501, 0
  %v1820 = vsel %vm1725, %v1502, 0
  %v1823 = vsel %vm1725, %v1503, 0
  %v1826 = vsel %vm1725, %v1504, 0
  %v1829 = vsel %vm1725, %v1505, 0
  %v1832 = vsel %vm1725, %v1506, 0
  %v1835 = vsel %vm1725, %v1507, 0
  %v1838 = vsel %vm1725, %v1508, 0
  %v1841 = vsel %vm1725, %v1509, 0
  %v1844 = vsel %vm1725, %v1510, 0
  %v1847 = vsel %vm1725, %v1511, 0
  %v1850 = vsel %vm1725, %v1512, 0
  %v1853 = vsel %vm1725, %v1513, 0
  %v1856 = vsel %vm1725, %v1514, 0
  %v1859 = vsel %vm1725, %v1515, 0
  %v1862 = vsel %vm1725, %v1516, 0
  %v1865 = vsel %vm1725, %v1517, 0
  %v1868 = vsel %vm1725, %v1518, 0
  %v1871 = vsel %vm1725, %v1519, 0
  %v1874 = vsel %vm1725, %v1520, 0
  %v1877 = vsel %vm1725, %v1521, 0
  %v1880 = vsel %vm1725, %v1522, 0
  %v1883 = vsel %vm1725, %v1523, 0
  %v1886 = vsel %vm1725, %v1524, 0
  %v1889 = vsel %vm1725, %v1525, 0
  %v1892 = vsel %vm1725, %v1526, 0
  %v1895 = vsel %vm1725, %v1527, 0
  %v1898 = vsel %vm1725, %v1528, 0
  %v1901 = vsel %vm1725, %v1529, 0
  %v1904 = vsel %vm1725, %v1530, 0
  %v1907 = vsel %vm1725, %v1531, 0
  %v1910 = vsel %vm1725, %v1532, 0
  %v1913 = vsel %vm1725, %v1533, 0
  %v1916 = vsel %vm1725, %v1534, 0
  %v1919 = vsel %vm1725, %v1535, 0
  %v1922 = vsel %vm1725, %v1536, 0
  %v1925 = vsel %vm1725, %v1537, 0
  %v1928 = vsel %vm1725, %v1538, 0
  %v1931 = vsel %vm1725, %v1539, 0
  %v1934 = vsel %vm1725, %v1540, 0
  %v1937 = vsel %vm1725, %v1541, 0
  %v1940 = vsel %vm1725, %v1542, 0
  %v1943 = vsel %vm1725, %v1543, 0
  %v1946 = vsel %vm1725, %v1544, 0
  %v1949 = vsel %vm1725, %v1545, 0
  %v1952 = vsel %vm1725, %v1546, 0
  %v1955 = vsel %vm1725, %v1547, 0
  %v1958 = vsel %vm1725, %v1548, 0
  %v1961 = vsel %vm1725, %v1549, 0
  %v1964 = vsel %vm1725, %v1550, 0
  %v1967 = vsel %vm1725, %v1551, 0
  %v1970 = vsel %vm1725, %v1552, 0
  %v1973 = vsel %vm1725, %v1553, 0
  %v1976 = vsel %vm1725, %v1554, 0
  %v1979 = vsel %vm1725, %v1555, 0
  %v1982 = vsel %vm1725, %v1556, 0
  %v1985 = vsel %vm1725, %v1557, 0
  %v1988 = vsel %vm1725, %v1558, 0
  %v1991 = vsel %vm1725, %v1559, 0
  %v1994 = vsel %vm1725, %v1560, 0
  %v1997 = vsel %vm1725, %v1561, 0
  %v2000 = vsel %vm1725, %v1562, 0
  %v2003 = vsel %vm1725, %v1563, 0
  %v2006 = vsel %vm1725, %v1564, 0
  %v2009 = vsel %vm1725, %v1565, 0
  %v2012 = vsel %vm1725, %v1566, 0
  %v2015 = vsel %vm1725, %v1567, 0
  %v2018 = vsel %vm1725, %v1568, 0
  %v2021 = vsel %vm1725, %v1569, 0
  %v2024 = vsel %vm1725, %v1570, 0
  %v2027 = vsel %vm1725, %v1571, 0
  %v2030 = vsel %vm1725, %v1572, 0
  %v2033 = vsel %vm1725, %v1573, 0
  %v2036 = vsel %vm1725, %v1574, 0
  %v2039 = vsel %vm1725, %v1575, 0
  %v2042 = vsel %vm1725, %v1576, 0
  %v2045 = vsel %vm1725, %v1577, 0
  %v2048 = vsel %vm1725, %v1578, 0
  %v2051 = vsel %vm1725, %v1579, 0
  %v2054 = vsel %vm1725, %v1580, 0
  %v2057 = vsel %vm1725, %v1581, 0
  %v2060 = vsel %vm1725, %v1582, 0
  %v2063 = vsel %vm1725, %v1583, 0
  %v2066 = vsel %vm1725, %v1584, 0
  %v2069 = vsel %vm1725, %v1585, 0
  %v2072 = vsel %vm1725, %v1586, 0
  %v2075 = vsel %vm1725, %v1587, 0
  %v2078 = vsel %vm1725, %v1588, 0
  %v2081 = vsel %vm1725, %v1589, 0
  %v2084 = vsel %vm1725, %v1590, 0
  %v2087 = vsel %vm1725, %v1591, 0
  %v2090 = vsel %vm1725, %v1592, 0
  %v2093 = vsel %vm1725, %v1593, 0
  %v2096 = vsel %vm1725, %v1594, 0
  %v2099 = vsel %vm1725, %v1595, 0
  %v2102 = vsel %vm1725, %v1596, 0
  %v2105 = vsel %vm1725, %v1597, 0
  %v2108 = vsel %vm1725, %v1598, 0
  %v2111 = vsel %vm1725, %v1599, 0
  %v2114 = vsel %vm1725, %v1600, 0
  %v2117 = vsel %vm1725, %v1601, 0
  %v2120 = vsel %vm1725, %v1602, 0
  %v2123 = vsel %vm1725, %v1603, 0
  %v2126 = vsel %vm1725, %v1604, 0
  %v2129 = vsel %vm1725, %v1605, 0
  %v2132 = vsel %vm1725, %v1606, 0
  %v2135 = vsel %vm1725, %v1607, 0
  %v2138 = vsel %vm1725, %v1608, 0
  %v2141 = vsel %vm1725, %v1609, 0
  %v2144 = vsel %vm1725, %v1610, 0
  %v2147 = vsel %vm1725, %v1611, 0
  %v2150 = vsel %vm1725, %v1612, 0
  %v2153 = vsel %vm1725, %v1613, 0
  %v2156 = vsel %vm1725, %v1614, 0
  %v2159 = vsel %vm1725, %v1615, 0
  %v2162 = vsel %vm1725, %v1616, 0
  %v2165 = vsel %vm1725, %v1617, 0
  %v2168 = vsel %vm1725, %v1618, 0
  %v2171 = vsel %vm1725, %v1619, 0
  %v2174 = vsel %vm1725, %v1620, 0
  %v2177 = vsel %vm1725, %v1621, 0
  %v2180 = vsel %vm1725, %v1622, 0
  %v2183 = vsel %vm1725, %v1623, 0
  %v2186 = vsel %vm1725, %v1624, 0
  %v2189 = vsel %vm1725, %v1625, 0
  %v2192 = vsel %vm1725, %v1626, 0
  %v2195 = vsel %vm1725, %v1627, 0
  %v2198 = vsel %vm1725, %v1628, 0
  %v2201 = vsel %vm1725, %v1629, 0
  %v2204 = vsel %vm1725, %v1630, 0
  %v2207 = vsel %vm1725, %v1631, 0
  %v2210 = vsel %vm1725, %v1632, 0
  %v2213 = vsel %vm1725, %v1633, 0
  %v2216 = vsel %vm1725, %v1634, 0
  %v2219 = vsel %vm1725, %v1635, 0
  %v2222 = vsel %vm1725, %v1636, 0
  %v2225 = vsel %vm1725, %v1637, 0
  %v2228 = vsel %vm1725, %v1638, 0
  %v2231 = vsel %vm1725, %v1639, 0
  %v2234 = vsel %vm1725, %v1640, 0
  %v2237 = vsel %vm1725, %v1641, 0
  %v2240 = vsel %vm1725, %v1642, 0
  %v2243 = vsel %vm1725, %v1643, 0
  %v2246 = vsel %vm1725, %v1644, 0
  %v2249 = vsel %vm1725, %v1645, 0
  %v2252 = vsel %vm1725, %v1646, 0
  %v2255 = vsel %vm1725, %v1647, 0
  %v2258 = vsel %vm1725, %v1648, 0
  %v2261 = vsel %vm1725, %v1649, 0
  %v2264 = vsel %vm1725, %v1650, 0
  %v2267 = vsel %vm1725, %v1651, 0
  %v2270 = vsel %vm1725, %v1652, 0
  %v2273 = vsel %vm1725, %v1653, 0
  %v2276 = vsel %vm1725, %v1654, 0
  %v2279 = vsel %vm1725, %v1655, 0
  %v2282 = vsel %vm1725, %v1656, 0
  %v2285 = vsel %vm1725, %v1657, 0
  %v2288 = vsel %vm1725, %v1658, 0
  %v2291 = vsel %vm1725, %v1659, 0
  %v2294 = vsel %vm1725, %v1660, 0
  %v2297 = vsel %vm1725, %v1661, 0
  %v2300 = vsel %vm1725, %v1662, 0
  %v2303 = vsel %vm1725, %v1663, 0
  %v2306 = vsel %vm1725, %v1664, 0
  %v2309 = vsel %vm1725, %v1665, 0
  %v2312 = vsel %vm1725, %v1666, 0
  %v2315 = vsel %vm1725, %v1667, 0
  %v2318 = vsel %vm1725, %v1668, 0
  %v2321 = vsel %vm1725, %v1669, 0
  %v2324 = vsel %vm1725, %v1670, 0
  %v2327 = vsel %vm1725, %v1671, 0
  %v2330 = vsel %vm1725, %v1672, 0
  %v2333 = vsel %vm1725, %v1673, 0
  %v2336 = vsel %vm1725, %v1674, 0
  %v2339 = vsel %vm1725, %v1675, 0
  %v2342 = vsel %vm1725, %v1676, 0
  %v2345 = vsel %vm1725, %v1677, 0
  %v2348 = vsel %vm1725, %v1678, 0
  %v2351 = vsel %vm1725, %v1679, 0
  %v2354 = vsel %vm1725, %v1680, 0
  %v2357 = vsel %vm1725, %v1681, 0
  %v2360 = vsel %vm1725, %v1682, 0
  %v2363 = vsel %vm1725, %v1683, 0
  %v2366 = vsel %vm1725, %v1684, 0
  %v2369 = vsel %vm1725, %v1685, 0
  %v2372 = vsel %vm1725, %v1686, 0
  %v2375 = vsel %vm1725, %v1687, 0
  %v2378 = vsel %vm1725, %v1688, 0
  %v2381 = vsel %vm1725, %v1689, 0
  %v2384 = vsel %vm1725, %v1690, 0
  %v2387 = vsel %vm1725, %v1691, 0
  %v2390 = vsel %vm1725, %v1692, 0
  %v2393 = vsel %vm1725, %v1693, 0
  %v2396 = vsel %vm1725, %v1694, 0
  %v2399 = vsel %vm1725, %v1695, 0
  %v2402 = vsel %vm1725, %v1696, 0
  %v2405 = vsel %vm1725, %v1697, 0
  %v2408 = vsel %vm1725, %v1698, 0
  %v2411 = vsel %vm1725, %v1699, 0
  %v2414 = vsel %vm1725, %v1700, 0
  %v2417 = vsel %vm1725, %v1701, 0
  %v2420 = vsel %vm1725, %v1702, 0
  %v2423 = vsel %vm1725, %v1703, 0
  %v2426 = vsel %vm1725, %v1704, 0
  %v2429 = vsel %vm1725, %v1705, 0
  %v2432 = vsel %vm1725, %v1706, 0
  %v2435 = vsel %vm1725, %v1707, 0
  %v2438 = vsel %vm1725, %v1708, 0
  %v2441 = vsel %vm1725, %v1709, 0
  %v2444 = vsel %vm1725, %v1710, 0
  %v2447 = vsel %vm1725, %v1711, 0
  %v2450 = vsel %vm1725, %v1712, 0
  %2452 = vmatprep.subr.bf16.mxu0 0
  %2453 = vmatpush1.bf16.msra.mxu0 %v1721
  %2454 = vmatprep.subr.bf16.mxu0 0
  %2455 = vmatpush1.bf16.msra.mxu0 %v1722
  %2456 = vmatprep.subr.bf16.mxu0 0
  %2457 = vmatpush1.bf16.msra.mxu0 0
  %2458 = vmatprep.subr.bf16.mxu0 0
  %2459 = vmatpush1.bf16.msra.mxu0 0
  %2460 = vmatprep.subr.bf16.mxu0 0
  %2461 = vmatpush1.bf16.msra.mxu0 0
  %2462 = vmatprep.subr.bf16.mxu0 0
  %2463 = vmatpush1.bf16.msra.mxu0 0
  %2464 = vmatprep.subr.bf16.mxu0 0
  %2465 = vmatpush1.bf16.msra.mxu0 0
  %2466 = vmatprep.subr.bf16.mxu0 0
  %2467 = vmatpush1.bf16.msra.mxu0 0
  %2468 = vmatprep.subr.bf16.mxu0 0
  %2469 = vmatpush1.bf16.msra.mxu0 0
  %2470 = vmatprep.subr.bf16.mxu0 0
  %2471 = vmatpush1.bf16.msra.mxu0 0
  %2472 = vmatprep.subr.bf16.mxu0 0
  %2473 = vmatpush1.bf16.msra.mxu0 0
  %2474 = vmatprep.subr.bf16.mxu0 0
  %2475 = vmatpush1.bf16.msra.mxu0 0
  %2476 = vmatprep.subr.bf16.mxu0 0
  %2477 = vmatpush1.bf16.msra.mxu0 0
  %2478 = vmatprep.subr.bf16.mxu0 0
  %2479 = vmatpush1.bf16.msra.mxu0 0
  %2480 = vmatprep.subr.bf16.mxu0 0
  %2481 = vmatpush1.bf16.msra.mxu0 0
  %2482 = vmatprep.subr.bf16.mxu0 0
  %2483 = vmatpush1.bf16.msra.mxu0 0
  %2484 = vmatprep.mubr.bf16.mxu0 0
  %2485 = vmatmul.mubr.bf16.gmra.mrb[0].mxu0 %v1727
  %v2486 = vpop.f32.mrb[0].mxu0
  %v2487 = vadd.f32 0.0, %v2486
  %v2488 = vpop.f32.mrb[0].mxu0
  %v2489 = vpop.f32.mrb[0].mxu0
  %v2490 = vadd.f32 0.0, %v2489
  %v2491 = vpop.f32.mrb[0].mxu0
  %2492 = vmatprep.mubr.bf16.mxu0 0
  %2493 = vmatmul.mubr.bf16.gmra.mrb[0].mxu0 %v1730
  %v2494 = vpop.f32.mrb[0].mxu0
  %v2495 = vadd.f32 0.0, %v2494
  %v2496 = vpop.f32.mrb[0].mxu0
  %v2497 = vpop.f32.mrb[0].mxu0
  %v2498 = vadd.f32 0.0, %v2497
  %v2499 = vpop.f32.mrb[0].mxu0
  %2500 = vmatprep.mubr.bf16.mxu0 0
  %2501 = vmatmul.mubr.bf16.gmra.mrb[0].mxu0 %v1733
  %v2502 = vpop.f32.mrb[0].mxu0
  %v2503 = vadd.f32 0.0, %v2502
  %v2504 = vpop.f32.mrb[0].mxu0
  %v2505 = vpop.f32.mrb[0].mxu0
  %v2506 = vadd.f32 0.0, %v2505
  %v2507 = vpop.f32.mrb[0].mxu0
  %2508 = vmatprep.mubr.bf16.mxu0 0
  %2509 = vmatmul.mubr.bf16.gmra.mrb[0].mxu0 %v1736
  %v2510 = vpop.f32.mrb[0].mxu0
  %v2511 = vadd.f32 0.0, %v2510
  %v2512 = vpop.f32.mrb[0].mxu0
  %v2513 = vpop.f32.mrb[0].mxu0
  %v2514 = vadd.f32 0.0, %v2513
  %v2515 = vpop.f32.mrb[0].mxu0
  %2516 = vmatprep.mubr.bf16.mxu0 0
  %2517 = vmatmul.mubr.bf16.gmra.mrb[0].mxu0 %v1739
  %v2518 = vpop.f32.mrb[0].mxu0
  %v2519 = vadd.f32 0.0, %v2518
  %v2520 = vpop.f32.mrb[0].mxu0
  %v2521 = vpop.f32.mrb[0].mxu0
  %v2522 = vadd.f32 0.0, %v2521
  %v2523 = vpop.f32.mrb[0].mxu0
  %2524 = vmatprep.mubr.bf16.mxu0 0
  %2525 = vmatmul.mubr.bf16.gmra.mrb[0].mxu0 %v1742
  %v2526 = vpop.f32.mrb[0].mxu0
  %v2527 = vadd.f32 0.0, %v2526
  %v2528 = vpop.f32.mrb[0].mxu0
  %v2529 = vpop.f32.mrb[0].mxu0
  %v2530 = vadd.f32 0.0, %v2529
  %v2531 = vpop.f32.mrb[0].mxu0
  %2532 = vmatprep.mubr.bf16.mxu0 0
  %2533 = vmatmul.mubr.bf16.gmra.mrb[0].mxu0 %v1745
  %v2534 = vpop.f32.mrb[0].mxu0
  %v2535 = vadd.f32 0.0, %v2534
  %v2536 = vpop.f32.mrb[0].mxu0
  %v2537 = vpop.f32.mrb[0].mxu0
  %v2538 = vadd.f32 0.0, %v2537
  %v2539 = vpop.f32.mrb[0].mxu0
  %2540 = vmatprep.mubr.bf16.mxu0 0
  %2541 = vmatmul.mubr.bf16.gmra.mrb[0].mxu0 %v1748
  %v2542 = vpop.f32.mrb[0].mxu0
  %v2543 = vadd.f32 0.0, %v2542
  %v2544 = vpop.f32.mrb[0].mxu0
  %v2545 = vpop.f32.mrb[0].mxu0
  %v2546 = vadd.f32 0.0, %v2545
  %v2547 = vpop.f32.mrb[0].mxu0
  %2548 = vmatprep.mubr.bf16.mxu0 0
  %2549 = vmatmul.mubr.bf16.gmra.mrb[0].mxu0 %v1751
  %v2550 = vpop.f32.mrb[0].mxu0
  %v2551 = vadd.f32 0.0, %v2550
  %v2552 = vpop.f32.mrb[0].mxu0
  %v2553 = vpop.f32.mrb[0].mxu0
  %v2554 = vadd.f32 0.0, %v2553
  %v2555 = vpop.f32.mrb[0].mxu0
  %2556 = vmatprep.mubr.bf16.mxu0 0
  %2557 = vmatmul.mubr.bf16.gmra.mrb[0].mxu0 %v1754
  %v2558 = vpop.f32.mrb[0].mxu0
  %v2559 = vadd.f32 0.0, %v2558
  %v2560 = vpop.f32.mrb[0].mxu0
  %v2561 = vpop.f32.mrb[0].mxu0
  %v2562 = vadd.f32 0.0, %v2561
  %v2563 = vpop.f32.mrb[0].mxu0
  %2564 = vmatprep.mubr.bf16.mxu0 0
  %2565 = vmatmul.mubr.bf16.gmra.mrb[0].mxu0 %v1757
  %v2566 = vpop.f32.mrb[0].mxu0
  %v2567 = vadd.f32 0.0, %v2566
  %v2568 = vpop.f32.mrb[0].mxu0
  %v2569 = vpop.f32.mrb[0].mxu0
  %v2570 = vadd.f32 0.0, %v2569
  %v2571 = vpop.f32.mrb[0].mxu0
  %2572 = vmatprep.mubr.bf16.mxu0 0
  %2573 = vmatmul.mubr.bf16.gmra.mrb[0].mxu0 %v1760
  %v2574 = vpop.f32.mrb[0].mxu0
  %v2575 = vadd.f32 0.0, %v2574
  %v2576 = vpop.f32.mrb[0].mxu0
  %v2577 = vpop.f32.mrb[0].mxu0
  %v2578 = vadd.f32 0.0, %v2577
  %v2579 = vpop.f32.mrb[0].mxu0
  %2580 = vmatprep.mubr.bf16.mxu0 0
  %2581 = vmatmul.mubr.bf16.gmra.mrb[0].mxu0 %v1763
  %v2582 = vpop.f32.mrb[0].mxu0
  %v2583 = vadd.f32 0.0, %v2582
  %v2584 = vpop.f32.mrb[0].mxu0
  %v2585 = vpop.f32.mrb[0].mxu0
  %v2586 = vadd.f32 0.0, %v2585
  %v2587 = vpop.f32.mrb[0].mxu0
  %2588 = vmatprep.mubr.bf16.mxu0 0
  %2589 = vmatmul.mubr.bf16.gmra.mrb[0].mxu0 %v1766
  %v2590 = vpop.f32.mrb[0].mxu0
  %v2591 = vadd.f32 0.0, %v2590
  %v2592 = vpop.f32.mrb[0].mxu0
  %v2593 = vpop.f32.mrb[0].mxu0
  %v2594 = vadd.f32 0.0, %v2593
  %v2595 = vpop.f32.mrb[0].mxu0
  %2596 = vmatprep.mubr.bf16.mxu0 0
  %2597 = vmatmul.mubr.bf16.gmra.mrb[0].mxu0 %v1769
  %v2598 = vpop.f32.mrb[0].mxu0
  %v2599 = vadd.f32 0.0, %v2598
  %v2600 = vpop.f32.mrb[0].mxu0
  %v2601 = vpop.f32.mrb[0].mxu0
  %v2602 = vadd.f32 0.0, %v2601
  %v2603 = vpop.f32.mrb[0].mxu0
  %2604 = vmatprep.mubr.bf16.mxu0 0
  %2605 = vmatmul.mubr.bf16.gmra.mrb[0].mxu0 %v1772
  %v2606 = vpop.f32.mrb[0].mxu0
  %v2607 = vadd.f32 0.0, %v2606
  %v2608 = vpop.f32.mrb[0].mxu0
  %v2609 = vpop.f32.mrb[0].mxu0
  %v2610 = vadd.f32 0.0, %v2609
  %v2611 = vpop.f32.mrb[0].mxu0
  %2612 = vmatprep.mubr.bf16.mxu0 0
  %2613 = vmatmul.mubr.bf16.gmra.mrb[0].mxu0 %v1775
  %v2614 = vpop.f32.mrb[0].mxu0
  %v2615 = vadd.f32 0.0, %v2614
  %v2616 = vpop.f32.mrb[0].mxu0
  %v2617 = vpop.f32.mrb[0].mxu0
  %v2618 = vadd.f32 0.0, %v2617
  %v2619 = vpop.f32.mrb[0].mxu0
  %2620 = vmatprep.mubr.bf16.mxu0 0
  %2621 = vmatmul.mubr.bf16.gmra.mrb[0].mxu0 %v1778
  %v2622 = vpop.f32.mrb[0].mxu0
  %v2623 = vadd.f32 0.0, %v2622
  %v2624 = vpop.f32.mrb[0].mxu0
  %v2625 = vpop.f32.mrb[0].mxu0
  %v2626 = vadd.f32 0.0, %v2625
  %v2627 = vpop.f32.mrb[0].mxu0
  %2628 = vmatprep.mubr.bf16.mxu0 0
  %2629 = vmatmul.mubr.bf16.gmra.mrb[0].mxu0 %v1781
  %v2630 = vpop.f32.mrb[0].mxu0
  %v2631 = vadd.f32 0.0, %v2630
  %v2632 = vpop.f32.mrb[0].mxu0
  %v2633 = vpop.f32.mrb[0].mxu0
  %v2634 = vadd.f32 0.0, %v2633
  %v2635 = vpop.f32.mrb[0].mxu0
  %2636 = vmatprep.mubr.bf16.mxu0 0
  %2637 = vmatmul.mubr.bf16.gmra.mrb[0].mxu0 %v1784
  %v2638 = vpop.f32.mrb[0].mxu0
  %v2639 = vadd.f32 0.0, %v2638
  %v2640 = vpop.f32.mrb[0].mxu0
  %v2641 = vpop.f32.mrb[0].mxu0
  %v2642 = vadd.f32 0.0, %v2641
  %v2643 = vpop.f32.mrb[0].mxu0
  %2644 = vmatprep.mubr.bf16.mxu0 0
  %2645 = vmatmul.mubr.bf16.gmra.mrb[0].mxu0 %v1787
  %v2646 = vpop.f32.mrb[0].mxu0
  %v2647 = vadd.f32 0.0, %v2646
  %v2648 = vpop.f32.mrb[0].mxu0
  %v2649 = vpop.f32.mrb[0].mxu0
  %v2650 = vadd.f32 0.0, %v2649
  %v2651 = vpop.f32.mrb[0].mxu0
  %2652 = vmatprep.mubr.bf16.mxu0 0
  %2653 = vmatmul.mubr.bf16.gmra.mrb[0].mxu0 %v1790
  %v2654 = vpop.f32.mrb[0].mxu0
  %v2655 = vadd.f32 0.0, %v2654
  %v2656 = vpop.f32.mrb[0].mxu0
  %v2657 = vpop.f32.mrb[0].mxu0
  %v2658 = vadd.f32 0.0, %v2657
  %v2659 = vpop.f32.mrb[0].mxu0
  %2660 = vmatprep.mubr.bf16.mxu0 0
  %2661 = vmatmul.mubr.bf16.gmra.mrb[0].mxu0 %v1793
  %v2662 = vpop.f32.mrb[0].mxu0
  %v2663 = vadd.f32 0.0, %v2662
  %v2664 = vpop.f32.mrb[0].mxu0
  %v2665 = vpop.f32.mrb[0].mxu0
  %v2666 = vadd.f32 0.0, %v2665
  %v2667 = vpop.f32.mrb[0].mxu0
  %2668 = vmatprep.mubr.bf16.mxu0 0
  %2669 = vmatmul.mubr.bf16.gmra.mrb[0].mxu0 %v1796
  %v2670 = vpop.f32.mrb[0].mxu0
  %v2671 = vadd.f32 0.0, %v2670
  %v2672 = vpop.f32.mrb[0].mxu0
  %v2673 = vpop.f32.mrb[0].mxu0
  %v2674 = vadd.f32 0.0, %v2673
  %v2675 = vpop.f32.mrb[0].mxu0
  %2676 = vmatprep.mubr.bf16.mxu0 0
  %2677 = vmatmul.mubr.bf16.gmra.mrb[0].mxu0 %v1799
  %v2678 = vpop.f32.mrb[0].mxu0
  %v2679 = vadd.f32 0.0, %v2678
  %v2680 = vpop.f32.mrb[0].mxu0
  %v2681 = vpop.f32.mrb[0].mxu0
  %v2682 = vadd.f32 0.0, %v2681
  %v2683 = vpop.f32.mrb[0].mxu0
  %2684 = vmatprep.mubr.bf16.mxu0 0
  %2685 = vmatmul.mubr.bf16.gmra.mrb[0].mxu0 %v1802
  %v2686 = vpop.f32.mrb[0].mxu0
  %v2687 = vadd.f32 0.0, %v2686
  %v2688 = vpop.f32.mrb[0].mxu0
  %v2689 = vpop.f32.mrb[0].mxu0
  %v2690 = vadd.f32 0.0, %v2689
  %v2691 = vpop.f32.mrb[0].mxu0
  %2692 = vmatprep.mubr.bf16.mxu0 0
  %2693 = vmatmul.mubr.bf16.gmra.mrb[0].mxu0 %v1805
  %v2694 = vpop.f32.mrb[0].mxu0
  %v2695 = vadd.f32 0.0, %v2694
  %v2696 = vpop.f32.mrb[0].mxu0
  %v2697 = vpop.f32.mrb[0].mxu0
  %v2698 = vadd.f32 0.0, %v2697
  %v2699 = vpop.f32.mrb[0].mxu0
  %2700 = vmatprep.mubr.bf16.mxu0 0
  %2701 = vmatmul.mubr.bf16.gmra.mrb[0].mxu0 %v1808
  %v2702 = vpop.f32.mrb[0].mxu0
  %v2703 = vadd.f32 0.0, %v2702
  %v2704 = vpop.f32.mrb[0].mxu0
  %v2705 = vpop.f32.mrb[0].mxu0
  %v2706 = vadd.f32 0.0, %v2705
  %v2707 = vpop.f32.mrb[0].mxu0
  %2708 = vmatprep.mubr.bf16.mxu0 0
  %2709 = vmatmul.mubr.bf16.gmra.mrb[0].mxu0 %v1811
  %v2710 = vpop.f32.mrb[0].mxu0
  %v2711 = vadd.f32 0.0, %v2710
  %v2712 = vpop.f32.mrb[0].mxu0
  %v2713 = vpop.f32.mrb[0].mxu0
  %v2714 = vadd.f32 0.0, %v2713
  %v2715 = vpop.f32.mrb[0].mxu0
  %2716 = vmatprep.mubr.bf16.mxu0 0
  %2717 = vmatmul.mubr.bf16.gmra.mrb[0].mxu0 %v1814
  %v2718 = vpop.f32.mrb[0].mxu0
  %v2719 = vadd.f32 0.0, %v2718
  %v2720 = vpop.f32.mrb[0].mxu0
  %v2721 = vpop.f32.mrb[0].mxu0
  %v2722 = vadd.f32 0.0, %v2721
  %v2723 = vpop.f32.mrb[0].mxu0
  %2724 = vmatprep.mubr.bf16.mxu0 0
  %2725 = vmatmul.mubr.bf16.gmra.mrb[0].mxu0 %v1817
  %v2726 = vpop.f32.mrb[0].mxu0
  %v2727 = vadd.f32 0.0, %v2726
  %v2728 = vpop.f32.mrb[0].mxu0
  %v2729 = vpop.f32.mrb[0].mxu0
  %v2730 = vadd.f32 0.0, %v2729
  %v2731 = vpop.f32.mrb[0].mxu0
  %2732 = vmatprep.mubr.bf16.mxu0 0
  %2733 = vmatmul.mubr.bf16.gmra.mrb[0].mxu0 %v1820
  %v2734 = vpop.f32.mrb[0].mxu0
  %v2735 = vadd.f32 0.0, %v2734
  %v2736 = vpop.f32.mrb[0].mxu0
  %v2737 = vpop.f32.mrb[0].mxu0
  %v2738 = vadd.f32 0.0, %v2737
  %v2739 = vpop.f32.mrb[0].mxu0
  %2740 = vmatprep.mubr.bf16.mxu0 0
  %2741 = vmatmul.mubr.bf16.gmra.mrb[0].mxu0 %v1823
  %v2742 = vpop.f32.mrb[0].mxu0
  %v2743 = vadd.f32 0.0, %v2742
  %v2744 = vpop.f32.mrb[0].mxu0
  %v2745 = vpop.f32.mrb[0].mxu0
  %v2746 = vadd.f32 0.0, %v2745
  %v2747 = vpop.f32.mrb[0].mxu0
  %2748 = vmatprep.mubr.bf16.mxu0 0
  %2749 = vmatmul.mubr.bf16.gmra.mrb[0].mxu0 %v1826
  %v2750 = vpop.f32.mrb[0].mxu0
  %v2751 = vadd.f32 0.0, %v2750
  %v2752 = vpop.f32.mrb[0].mxu0
  %v2753 = vpop.f32.mrb[0].mxu0
  %v2754 = vadd.f32 0.0, %v2753
  %v2755 = vpop.f32.mrb[0].mxu0
  %2756 = vmatprep.mubr.bf16.mxu0 0
  %2757 = vmatmul.mubr.bf16.gmra.mrb[0].mxu0 %v1829
  %v2758 = vpop.f32.mrb[0].mxu0
  %v2759 = vadd.f32 0.0, %v2758
  %v2760 = vpop.f32.mrb[0].mxu0
  %v2761 = vpop.f32.mrb[0].mxu0
  %v2762 = vadd.f32 0.0, %v2761
  %v2763 = vpop.f32.mrb[0].mxu0
  %2764 = vmatprep.mubr.bf16.mxu0 0
  %2765 = vmatmul.mubr.bf16.gmra.mrb[0].mxu0 %v1832
  %v2766 = vpop.f32.mrb[0].mxu0
  %v2767 = vadd.f32 0.0, %v2766
  %v2768 = vpop.f32.mrb[0].mxu0
  %v2769 = vpop.f32.mrb[0].mxu0
  %v2770 = vadd.f32 0.0, %v2769
  %v2771 = vpop.f32.mrb[0].mxu0
  %2772 = vmatprep.mubr.bf16.mxu0 0
  %2773 = vmatmul.mubr.bf16.gmra.mrb[0].mxu0 %v1835
  %v2774 = vpop.f32.mrb[0].mxu0
  %v2775 = vadd.f32 0.0, %v2774
  %v2776 = vpop.f32.mrb[0].mxu0
  %v2777 = vpop.f32.mrb[0].mxu0
  %v2778 = vadd.f32 0.0, %v2777
  %v2779 = vpop.f32.mrb[0].mxu0
  %2780 = vmatprep.mubr.bf16.mxu0 0
  %2781 = vmatmul.mubr.bf16.gmra.mrb[0].mxu0 %v1838
  %v2782 = vpop.f32.mrb[0].mxu0
  %v2783 = vadd.f32 0.0, %v2782
  %v2784 = vpop.f32.mrb[0].mxu0
  %v2785 = vpop.f32.mrb[0].mxu0
  %v2786 = vadd.f32 0.0, %v2785
  %v2787 = vpop.f32.mrb[0].mxu0
  %2788 = vmatprep.mubr.bf16.mxu0 0
  %2789 = vmatmul.mubr.bf16.gmra.mrb[0].mxu0 %v1841
  %v2790 = vpop.f32.mrb[0].mxu0
  %v2791 = vadd.f32 0.0, %v2790
  %v2792 = vpop.f32.mrb[0].mxu0
  %v2793 = vpop.f32.mrb[0].mxu0
  %v2794 = vadd.f32 0.0, %v2793
  %v2795 = vpop.f32.mrb[0].mxu0
  %2796 = vmatprep.mubr.bf16.mxu0 0
  %2797 = vmatmul.mubr.bf16.gmra.mrb[0].mxu0 %v1844
  %v2798 = vpop.f32.mrb[0].mxu0
  %v2799 = vadd.f32 0.0, %v2798
  %v2800 = vpop.f32.mrb[0].mxu0
  %v2801 = vpop.f32.mrb[0].mxu0
  %v2802 = vadd.f32 0.0, %v2801
  %v2803 = vpop.f32.mrb[0].mxu0
  %2804 = vmatprep.mubr.bf16.mxu0 0
  %2805 = vmatmul.mubr.bf16.gmra.mrb[0].mxu0 %v1847
  %v2806 = vpop.f32.mrb[0].mxu0
  %v2807 = vadd.f32 0.0, %v2806
  %v2808 = vpop.f32.mrb[0].mxu0
  %v2809 = vpop.f32.mrb[0].mxu0
  %v2810 = vadd.f32 0.0, %v2809
  %v2811 = vpop.f32.mrb[0].mxu0
  %2812 = vmatprep.mubr.bf16.mxu0 0
  %2813 = vmatmul.mubr.bf16.gmra.mrb[0].mxu0 %v1850
  %v2814 = vpop.f32.mrb[0].mxu0
  %v2815 = vadd.f32 0.0, %v2814
  %v2816 = vpop.f32.mrb[0].mxu0
  %v2817 = vpop.f32.mrb[0].mxu0
  %v2818 = vadd.f32 0.0, %v2817
  %v2819 = vpop.f32.mrb[0].mxu0
  %2820 = vmatprep.mubr.bf16.mxu0 0
  %2821 = vmatmul.mubr.bf16.gmra.mrb[0].mxu0 %v1853
  %v2822 = vpop.f32.mrb[0].mxu0
  %v2823 = vadd.f32 0.0, %v2822
  %v2824 = vpop.f32.mrb[0].mxu0
  %v2825 = vpop.f32.mrb[0].mxu0
  %v2826 = vadd.f32 0.0, %v2825
  %v2827 = vpop.f32.mrb[0].mxu0
  %2828 = vmatprep.mubr.bf16.mxu0 0
  %2829 = vmatmul.mubr.bf16.gmra.mrb[0].mxu0 %v1856
  %v2830 = vpop.f32.mrb[0].mxu0
  %v2831 = vadd.f32 0.0, %v2830
  %v2832 = vpop.f32.mrb[0].mxu0
  %v2833 = vpop.f32.mrb[0].mxu0
  %v2834 = vadd.f32 0.0, %v2833
  %v2835 = vpop.f32.mrb[0].mxu0
  %2836 = vmatprep.mubr.bf16.mxu0 0
  %2837 = vmatmul.mubr.bf16.gmra.mrb[0].mxu0 %v1859
  %v2838 = vpop.f32.mrb[0].mxu0
  %v2839 = vadd.f32 0.0, %v2838
  %v2840 = vpop.f32.mrb[0].mxu0
  %v2841 = vpop.f32.mrb[0].mxu0
  %v2842 = vadd.f32 0.0, %v2841
  %v2843 = vpop.f32.mrb[0].mxu0
  %2844 = vmatprep.mubr.bf16.mxu0 0
  %2845 = vmatmul.mubr.bf16.gmra.mrb[0].mxu0 %v1862
  %v2846 = vpop.f32.mrb[0].mxu0
  %v2847 = vadd.f32 0.0, %v2846
  %v2848 = vpop.f32.mrb[0].mxu0
  %v2849 = vpop.f32.mrb[0].mxu0
  %v2850 = vadd.f32 0.0, %v2849
  %v2851 = vpop.f32.mrb[0].mxu0
  %2852 = vmatprep.mubr.bf16.mxu0 0
  %2853 = vmatmul.mubr.bf16.gmra.mrb[0].mxu0 %v1865
  %v2854 = vpop.f32.mrb[0].mxu0
  %v2855 = vadd.f32 0.0, %v2854
  %v2856 = vpop.f32.mrb[0].mxu0
  %v2857 = vpop.f32.mrb[0].mxu0
  %v2858 = vadd.f32 0.0, %v2857
  %v2859 = vpop.f32.mrb[0].mxu0
  %2860 = vmatprep.mubr.bf16.mxu0 0
  %2861 = vmatmul.mubr.bf16.gmra.mrb[0].mxu0 %v1868
  %v2862 = vpop.f32.mrb[0].mxu0
  %v2863 = vadd.f32 0.0, %v2862
  %v2864 = vpop.f32.mrb[0].mxu0
  %v2865 = vpop.f32.mrb[0].mxu0
  %v2866 = vadd.f32 0.0, %v2865
  %v2867 = vpop.f32.mrb[0].mxu0
  %2868 = vmatprep.mubr.bf16.mxu0 0
  %2869 = vmatmul.mubr.bf16.gmra.mrb[0].mxu0 %v1871
  %v2870 = vpop.f32.mrb[0].mxu0
  %v2871 = vadd.f32 0.0, %v2870
  %v2872 = vpop.f32.mrb[0].mxu0
  %v2873 = vpop.f32.mrb[0].mxu0
  %v2874 = vadd.f32 0.0, %v2873
  %v2875 = vpop.f32.mrb[0].mxu0
  %2876 = vmatprep.mubr.bf16.mxu0 0
  %2877 = vmatmul.mubr.bf16.gmra.mrb[0].mxu0 %v1874
  %v2878 = vpop.f32.mrb[0].mxu0
  %v2879 = vadd.f32 0.0, %v2878
  %v2880 = vpop.f32.mrb[0].mxu0
  %v2881 = vpop.f32.mrb[0].mxu0
  %v2882 = vadd.f32 0.0, %v2881
  %v2883 = vpop.f32.mrb[0].mxu0
  %2884 = vmatprep.mubr.bf16.mxu0 0
  %2885 = vmatmul.mubr.bf16.gmra.mrb[0].mxu0 %v1877
  %v2886 = vpop.f32.mrb[0].mxu0
  %v2887 = vadd.f32 0.0, %v2886
  %v2888 = vpop.f32.mrb[0].mxu0
  %v2889 = vpop.f32.mrb[0].mxu0
  %v2890 = vadd.f32 0.0, %v2889
  %v2891 = vpop.f32.mrb[0].mxu0
  %2892 = vmatprep.mubr.bf16.mxu0 0
  %2893 = vmatmul.mubr.bf16.gmra.mrb[0].mxu0 %v1880
  %v2894 = vpop.f32.mrb[0].mxu0
  %v2895 = vadd.f32 0.0, %v2894
  %v2896 = vpop.f32.mrb[0].mxu0
  %v2897 = vpop.f32.mrb[0].mxu0
  %v2898 = vadd.f32 0.0, %v2897
  %v2899 = vpop.f32.mrb[0].mxu0
  %2900 = vmatprep.mubr.bf16.mxu0 0
  %2901 = vmatmul.mubr.bf16.gmra.mrb[0].mxu0 %v1883
  %v2902 = vpop.f32.mrb[0].mxu0
  %v2903 = vadd.f32 0.0, %v2902
  %v2904 = vpop.f32.mrb[0].mxu0
  %v2905 = vpop.f32.mrb[0].mxu0
  %v2906 = vadd.f32 0.0, %v2905
  %v2907 = vpop.f32.mrb[0].mxu0
  %2908 = vmatprep.mubr.bf16.mxu0 0
  %2909 = vmatmul.mubr.bf16.gmra.mrb[0].mxu0 %v1886
  %v2910 = vpop.f32.mrb[0].mxu0
  %v2911 = vadd.f32 0.0, %v2910
  %v2912 = vpop.f32.mrb[0].mxu0
  %v2913 = vpop.f32.mrb[0].mxu0
  %v2914 = vadd.f32 0.0, %v2913
  %v2915 = vpop.f32.mrb[0].mxu0
  %2916 = vmatprep.mubr.bf16.mxu0 0
  %2917 = vmatmul.mubr.bf16.gmra.mrb[0].mxu0 %v1889
  %v2918 = vpop.f32.mrb[0].mxu0
  %v2919 = vadd.f32 0.0, %v2918
  %v2920 = vpop.f32.mrb[0].mxu0
  %v2921 = vpop.f32.mrb[0].mxu0
  %v2922 = vadd.f32 0.0, %v2921
  %v2923 = vpop.f32.mrb[0].mxu0
  %2924 = vmatprep.mubr.bf16.mxu0 0
  %2925 = vmatmul.mubr.bf16.gmra.mrb[0].mxu0 %v1892
  %v2926 = vpop.f32.mrb[0].mxu0
  %v2927 = vadd.f32 0.0, %v2926
  %v2928 = vpop.f32.mrb[0].mxu0
  %v2929 = vpop.f32.mrb[0].mxu0
  %v2930 = vadd.f32 0.0, %v2929
  %v2931 = vpop.f32.mrb[0].mxu0
  %2932 = vmatprep.mubr.bf16.mxu0 0
  %2933 = vmatmul.mubr.bf16.gmra.mrb[0].mxu0 %v1895
  %v2934 = vpop.f32.mrb[0].mxu0
  %v2935 = vadd.f32 0.0, %v2934
  %v2936 = vpop.f32.mrb[0].mxu0
  %v2937 = vpop.f32.mrb[0].mxu0
  %v2938 = vadd.f32 0.0, %v2937
  %v2939 = vpop.f32.mrb[0].mxu0
  %2940 = vmatprep.mubr.bf16.mxu0 0
  %2941 = vmatmul.mubr.bf16.gmra.mrb[0].mxu0 %v1898
  %v2942 = vpop.f32.mrb[0].mxu0
  %v2943 = vadd.f32 0.0, %v2942
  %v2944 = vpop.f32.mrb[0].mxu0
  %v2945 = vpop.f32.mrb[0].mxu0
  %v2946 = vadd.f32 0.0, %v2945
  %v2947 = vpop.f32.mrb[0].mxu0
  %2948 = vmatprep.mubr.bf16.mxu0 0
  %2949 = vmatmul.mubr.bf16.gmra.mrb[0].mxu0 %v1901
  %v2950 = vpop.f32.mrb[0].mxu0
  %v2951 = vadd.f32 0.0, %v2950
  %v2952 = vpop.f32.mrb[0].mxu0
  %v2953 = vpop.f32.mrb[0].mxu0
  %v2954 = vadd.f32 0.0, %v2953
  %v2955 = vpop.f32.mrb[0].mxu0
  %2956 = vmatprep.mubr.bf16.mxu0 0
  %2957 = vmatmul.mubr.bf16.gmra.mrb[0].mxu0 %v1904
  %v2958 = vpop.f32.mrb[0].mxu0
  %v2959 = vadd.f32 0.0, %v2958
  %v2960 = vpop.f32.mrb[0].mxu0
  %v2961 = vpop.f32.mrb[0].mxu0
  %v2962 = vadd.f32 0.0, %v2961
  %v2963 = vpop.f32.mrb[0].mxu0
  %2964 = vmatprep.mubr.bf16.mxu0 0
  %2965 = vmatmul.mubr.bf16.gmra.mrb[0].mxu0 %v1907
  %v2966 = vpop.f32.mrb[0].mxu0
  %v2967 = vadd.f32 0.0, %v2966
  %v2968 = vpop.f32.mrb[0].mxu0
  %v2969 = vpop.f32.mrb[0].mxu0
  %v2970 = vadd.f32 0.0, %v2969
  %v2971 = vpop.f32.mrb[0].mxu0
  %2972 = vmatprep.mubr.bf16.mxu0 0
  %2973 = vmatmul.mubr.bf16.gmra.mrb[0].mxu0 %v1910
  %v2974 = vpop.f32.mrb[0].mxu0
  %v2975 = vadd.f32 0.0, %v2974
  %v2976 = vpop.f32.mrb[0].mxu0
  %v2977 = vpop.f32.mrb[0].mxu0
  %v2978 = vadd.f32 0.0, %v2977
  %v2979 = vpop.f32.mrb[0].mxu0
  %2980 = vmatprep.mubr.bf16.mxu0 0
  %2981 = vmatmul.mubr.bf16.gmra.mrb[0].mxu0 %v1913
  %v2982 = vpop.f32.mrb[0].mxu0
  %v2983 = vadd.f32 0.0, %v2982
  %v2984 = vpop.f32.mrb[0].mxu0
  %v2985 = vpop.f32.mrb[0].mxu0
  %v2986 = vadd.f32 0.0, %v2985
  %v2987 = vpop.f32.mrb[0].mxu0
  %2988 = vmatprep.mubr.bf16.mxu0 0
  %2989 = vmatmul.mubr.bf16.gmra.mrb[0].mxu0 %v1916
  %v2990 = vpop.f32.mrb[0].mxu0
  %v2991 = vadd.f32 0.0, %v2990
  %v2992 = vpop.f32.mrb[0].mxu0
  %v2993 = vpop.f32.mrb[0].mxu0
  %v2994 = vadd.f32 0.0, %v2993
  %v2995 = vpop.f32.mrb[0].mxu0
  %2996 = vmatprep.mubr.bf16.mxu0 0
  %2997 = vmatmul.mubr.bf16.gmra.mrb[0].mxu0 %v1919
  %v2998 = vpop.f32.mrb[0].mxu0
  %v2999 = vadd.f32 0.0, %v2998
  %v3000 = vpop.f32.mrb[0].mxu0
  %v3001 = vpop.f32.mrb[0].mxu0
  %v3002 = vadd.f32 0.0, %v3001
  %v3003 = vpop.f32.mrb[0].mxu0
  %3004 = vmatprep.mubr.bf16.mxu0 0
  %3005 = vmatmul.mubr.bf16.gmra.mrb[0].mxu0 %v1922
  %v3006 = vpop.f32.mrb[0].mxu0
  %v3007 = vadd.f32 0.0, %v3006
  %v3008 = vpop.f32.mrb[0].mxu0
  %v3009 = vpop.f32.mrb[0].mxu0
  %v3010 = vadd.f32 0.0, %v3009
  %v3011 = vpop.f32.mrb[0].mxu0
  %3012 = vmatprep.mubr.bf16.mxu0 0
  %3013 = vmatmul.mubr.bf16.gmra.mrb[0].mxu0 %v1925
  %v3014 = vpop.f32.mrb[0].mxu0
  %v3015 = vadd.f32 0.0, %v3014
  %v3016 = vpop.f32.mrb[0].mxu0
  %v3017 = vpop.f32.mrb[0].mxu0
  %v3018 = vadd.f32 0.0, %v3017
  %v3019 = vpop.f32.mrb[0].mxu0
  %3020 = vmatprep.mubr.bf16.mxu0 0
  %3021 = vmatmul.mubr.bf16.gmra.mrb[0].mxu0 %v1928
  %v3022 = vpop.f32.mrb[0].mxu0
  %v3023 = vadd.f32 0.0, %v3022
  %v3024 = vpop.f32.mrb[0].mxu0
  %v3025 = vpop.f32.mrb[0].mxu0
  %v3026 = vadd.f32 0.0, %v3025
  %v3027 = vpop.f32.mrb[0].mxu0
  %3028 = vmatprep.mubr.bf16.mxu0 0
  %3029 = vmatmul.mubr.bf16.gmra.mrb[0].mxu0 %v1931
  %v3030 = vpop.f32.mrb[0].mxu0
  %v3031 = vadd.f32 0.0, %v3030
  %v3032 = vpop.f32.mrb[0].mxu0
  %v3033 = vpop.f32.mrb[0].mxu0
  %v3034 = vadd.f32 0.0, %v3033
  %v3035 = vpop.f32.mrb[0].mxu0
  %3036 = vmatprep.mubr.bf16.mxu0 0
  %3037 = vmatmul.mubr.bf16.gmra.mrb[0].mxu0 %v1934
  %v3038 = vpop.f32.mrb[0].mxu0
  %v3039 = vadd.f32 0.0, %v3038
  %v3040 = vpop.f32.mrb[0].mxu0
  %v3041 = vpop.f32.mrb[0].mxu0
  %v3042 = vadd.f32 0.0, %v3041
  %v3043 = vpop.f32.mrb[0].mxu0
  %3044 = vmatprep.mubr.bf16.mxu0 0
  %3045 = vmatmul.mubr.bf16.gmra.mrb[0].mxu0 %v1937
  %v3046 = vpop.f32.mrb[0].mxu0
  %v3047 = vadd.f32 0.0, %v3046
  %v3048 = vpop.f32.mrb[0].mxu0
  %v3049 = vpop.f32.mrb[0].mxu0
  %v3050 = vadd.f32 0.0, %v3049
  %v3051 = vpop.f32.mrb[0].mxu0
  %3052 = vmatprep.mubr.bf16.mxu0 0
  %3053 = vmatmul.mubr.bf16.gmra.mrb[0].mxu0 %v1940
  %v3054 = vpop.f32.mrb[0].mxu0
  %v3055 = vadd.f32 0.0, %v3054
  %v3056 = vpop.f32.mrb[0].mxu0
  %v3057 = vpop.f32.mrb[0].mxu0
  %v3058 = vadd.f32 0.0, %v3057
  %v3059 = vpop.f32.mrb[0].mxu0
  %3060 = vmatprep.mubr.bf16.mxu0 0
  %3061 = vmatmul.mubr.bf16.gmra.mrb[0].mxu0 %v1943
  %v3062 = vpop.f32.mrb[0].mxu0
  %v3063 = vadd.f32 0.0, %v3062
  %v3064 = vpop.f32.mrb[0].mxu0
  %v3065 = vpop.f32.mrb[0].mxu0
  %v3066 = vadd.f32 0.0, %v3065
  %v3067 = vpop.f32.mrb[0].mxu0
  %3068 = vmatprep.mubr.bf16.mxu0 0
  %3069 = vmatmul.mubr.bf16.gmra.mrb[0].mxu0 %v1946
  %v3070 = vpop.f32.mrb[0].mxu0
  %v3071 = vadd.f32 0.0, %v3070
  %v3072 = vpop.f32.mrb[0].mxu0
  %v3073 = vpop.f32.mrb[0].mxu0
  %v3074 = vadd.f32 0.0, %v3073
  %v3075 = vpop.f32.mrb[0].mxu0
  %3076 = vmatprep.mubr.bf16.mxu0 0
  %3077 = vmatmul.mubr.bf16.gmra.mrb[0].mxu0 %v1949
  %v3078 = vpop.f32.mrb[0].mxu0
  %v3079 = vadd.f32 0.0, %v3078
  %v3080 = vpop.f32.mrb[0].mxu0
  %v3081 = vpop.f32.mrb[0].mxu0
  %v3082 = vadd.f32 0.0, %v3081
  %v3083 = vpop.f32.mrb[0].mxu0
  %3084 = vmatprep.mubr.bf16.mxu0 0
  %3085 = vmatmul.mubr.bf16.gmra.mrb[0].mxu0 %v1952
  %v3086 = vpop.f32.mrb[0].mxu0
  %v3087 = vadd.f32 0.0, %v3086
  %v3088 = vpop.f32.mrb[0].mxu0
  %v3089 = vpop.f32.mrb[0].mxu0
  %v3090 = vadd.f32 0.0, %v3089
  %v3091 = vpop.f32.mrb[0].mxu0
  %3092 = vmatprep.mubr.bf16.mxu0 0
  %3093 = vmatmul.mubr.bf16.gmra.mrb[0].mxu0 %v1955
  %v3094 = vpop.f32.mrb[0].mxu0
  %v3095 = vadd.f32 0.0, %v3094
  %v3096 = vpop.f32.mrb[0].mxu0
  %v3097 = vpop.f32.mrb[0].mxu0
  %v3098 = vadd.f32 0.0, %v3097
  %v3099 = vpop.f32.mrb[0].mxu0
  %3100 = vmatprep.mubr.bf16.mxu0 0
  %3101 = vmatmul.mubr.bf16.gmra.mrb[0].mxu0 %v1958
  %v3102 = vpop.f32.mrb[0].mxu0
  %v3103 = vadd.f32 0.0, %v3102
  %v3104 = vpop.f32.mrb[0].mxu0
  %v3105 = vpop.f32.mrb[0].mxu0
  %v3106 = vadd.f32 0.0, %v3105
  %v3107 = vpop.f32.mrb[0].mxu0
  %3108 = vmatprep.mubr.bf16.mxu0 0
  %3109 = vmatmul.mubr.bf16.gmra.mrb[0].mxu0 %v1961
  %v3110 = vpop.f32.mrb[0].mxu0
  %v3111 = vadd.f32 0.0, %v3110
  %v3112 = vpop.f32.mrb[0].mxu0
  %v3113 = vpop.f32.mrb[0].mxu0
  %v3114 = vadd.f32 0.0, %v3113
  %v3115 = vpop.f32.mrb[0].mxu0
  %3116 = vmatprep.mubr.bf16.mxu0 0
  %3117 = vmatmul.mubr.bf16.gmra.mrb[0].mxu0 %v1964
  %v3118 = vpop.f32.mrb[0].mxu0
  %v3119 = vadd.f32 0.0, %v3118
  %v3120 = vpop.f32.mrb[0].mxu0
  %v3121 = vpop.f32.mrb[0].mxu0
  %v3122 = vadd.f32 0.0, %v3121
  %v3123 = vpop.f32.mrb[0].mxu0
  %3124 = vmatprep.mubr.bf16.mxu0 0
  %3125 = vmatmul.mubr.bf16.gmra.mrb[0].mxu0 %v1967
  %v3126 = vpop.f32.mrb[0].mxu0
  %v3127 = vadd.f32 0.0, %v3126
  %v3128 = vpop.f32.mrb[0].mxu0
  %v3129 = vpop.f32.mrb[0].mxu0
  %v3130 = vadd.f32 0.0, %v3129
  %v3131 = vpop.f32.mrb[0].mxu0
  %3132 = vmatprep.mubr.bf16.mxu0 0
  %3133 = vmatmul.mubr.bf16.gmra.mrb[0].mxu0 %v1970
  %v3134 = vpop.f32.mrb[0].mxu0
  %v3135 = vadd.f32 0.0, %v3134
  %v3136 = vpop.f32.mrb[0].mxu0
  %v3137 = vpop.f32.mrb[0].mxu0
  %v3138 = vadd.f32 0.0, %v3137
  %v3139 = vpop.f32.mrb[0].mxu0
  %3140 = vmatprep.mubr.bf16.mxu0 0
  %3141 = vmatmul.mubr.bf16.gmra.mrb[0].mxu0 %v1973
  %v3142 = vpop.f32.mrb[0].mxu0
  %v3143 = vadd.f32 0.0, %v3142
  %v3144 = vpop.f32.mrb[0].mxu0
  %v3145 = vpop.f32.mrb[0].mxu0
  %v3146 = vadd.f32 0.0, %v3145
  %v3147 = vpop.f32.mrb[0].mxu0
  %3148 = vmatprep.mubr.bf16.mxu0 0
  %3149 = vmatmul.mubr.bf16.gmra.mrb[0].mxu0 %v1976
  %v3150 = vpop.f32.mrb[0].mxu0
  %v3151 = vadd.f32 0.0, %v3150
  %v3152 = vpop.f32.mrb[0].mxu0
  %v3153 = vpop.f32.mrb[0].mxu0
  %v3154 = vadd.f32 0.0, %v3153
  %v3155 = vpop.f32.mrb[0].mxu0
  %3156 = vmatprep.mubr.bf16.mxu0 0
  %3157 = vmatmul.mubr.bf16.gmra.mrb[0].mxu0 %v1979
  %v3158 = vpop.f32.mrb[0].mxu0
  %v3159 = vadd.f32 0.0, %v3158
  %v3160 = vpop.f32.mrb[0].mxu0
  %v3161 = vpop.f32.mrb[0].mxu0
  %v3162 = vadd.f32 0.0, %v3161
  %v3163 = vpop.f32.mrb[0].mxu0
  %3164 = vmatprep.mubr.bf16.mxu0 0
  %3165 = vmatmul.mubr.bf16.gmra.mrb[0].mxu0 %v1982
  %v3166 = vpop.f32.mrb[0].mxu0
  %v3167 = vadd.f32 0.0, %v3166
  %v3168 = vpop.f32.mrb[0].mxu0
  %v3169 = vpop.f32.mrb[0].mxu0
  %v3170 = vadd.f32 0.0, %v3169
  %v3171 = vpop.f32.mrb[0].mxu0
  %3172 = vmatprep.mubr.bf16.mxu0 0
  %3173 = vmatmul.mubr.bf16.gmra.mrb[0].mxu0 %v1985
  %v3174 = vpop.f32.mrb[0].mxu0
  %v3175 = vadd.f32 0.0, %v3174
  %v3176 = vpop.f32.mrb[0].mxu0
  %v3177 = vpop.f32.mrb[0].mxu0
  %v3178 = vadd.f32 0.0, %v3177
  %v3179 = vpop.f32.mrb[0].mxu0
  %3180 = vmatprep.mubr.bf16.mxu0 0
  %3181 = vmatmul.mubr.bf16.gmra.mrb[0].mxu0 %v1988
  %v3182 = vpop.f32.mrb[0].mxu0
  %v3183 = vadd.f32 0.0, %v3182
  %v3184 = vpop.f32.mrb[0].mxu0
  %v3185 = vpop.f32.mrb[0].mxu0
  %v3186 = vadd.f32 0.0, %v3185
  %v3187 = vpop.f32.mrb[0].mxu0
  %3188 = vmatprep.mubr.bf16.mxu0 0
  %3189 = vmatmul.mubr.bf16.gmra.mrb[0].mxu0 %v1991
  %v3190 = vpop.f32.mrb[0].mxu0
  %v3191 = vadd.f32 0.0, %v3190
  %v3192 = vpop.f32.mrb[0].mxu0
  %v3193 = vpop.f32.mrb[0].mxu0
  %v3194 = vadd.f32 0.0, %v3193
  %v3195 = vpop.f32.mrb[0].mxu0
  %3196 = vmatprep.mubr.bf16.mxu0 0
  %3197 = vmatmul.mubr.bf16.gmra.mrb[0].mxu0 %v1994
  %v3198 = vpop.f32.mrb[0].mxu0
  %v3199 = vadd.f32 0.0, %v3198
  %v3200 = vpop.f32.mrb[0].mxu0
  %v3201 = vpop.f32.mrb[0].mxu0
  %v3202 = vadd.f32 0.0, %v3201
  %v3203 = vpop.f32.mrb[0].mxu0
  %3204 = vmatprep.mubr.bf16.mxu0 0
  %3205 = vmatmul.mubr.bf16.gmra.mrb[0].mxu0 %v1997
  %v3206 = vpop.f32.mrb[0].mxu0
  %v3207 = vadd.f32 0.0, %v3206
  %v3208 = vpop.f32.mrb[0].mxu0
  %v3209 = vpop.f32.mrb[0].mxu0
  %v3210 = vadd.f32 0.0, %v3209
  %v3211 = vpop.f32.mrb[0].mxu0
  %3212 = vmatprep.mubr.bf16.mxu0 0
  %3213 = vmatmul.mubr.bf16.gmra.mrb[0].mxu0 %v2000
  %v3214 = vpop.f32.mrb[0].mxu0
  %v3215 = vadd.f32 0.0, %v3214
  %v3216 = vpop.f32.mrb[0].mxu0
  %v3217 = vpop.f32.mrb[0].mxu0
  %v3218 = vadd.f32 0.0, %v3217
  %v3219 = vpop.f32.mrb[0].mxu0
  %3220 = vmatprep.mubr.bf16.mxu0 0
  %3221 = vmatmul.mubr.bf16.gmra.mrb[0].mxu0 %v2003
  %v3222 = vpop.f32.mrb[0].mxu0
  %v3223 = vadd.f32 0.0, %v3222
  %v3224 = vpop.f32.mrb[0].mxu0
  %v3225 = vpop.f32.mrb[0].mxu0
  %v3226 = vadd.f32 0.0, %v3225
  %v3227 = vpop.f32.mrb[0].mxu0
  %3228 = vmatprep.mubr.bf16.mxu0 0
  %3229 = vmatmul.mubr.bf16.gmra.mrb[0].mxu0 %v2006
  %v3230 = vpop.f32.mrb[0].mxu0
  %v3231 = vadd.f32 0.0, %v3230
  %v3232 = vpop.f32.mrb[0].mxu0
  %v3233 = vpop.f32.mrb[0].mxu0
  %v3234 = vadd.f32 0.0, %v3233
  %v3235 = vpop.f32.mrb[0].mxu0
  %3236 = vmatprep.mubr.bf16.mxu0 0
  %3237 = vmatmul.mubr.bf16.gmra.mrb[0].mxu0 %v2009
  %v3238 = vpop.f32.mrb[0].mxu0
  %v3239 = vadd.f32 0.0, %v3238
  %v3240 = vpop.f32.mrb[0].mxu0
  %v3241 = vpop.f32.mrb[0].mxu0
  %v3242 = vadd.f32 0.0, %v3241
  %v3243 = vpop.f32.mrb[0].mxu0
  %3244 = vmatprep.mubr.bf16.mxu0 0
  %3245 = vmatmul.mubr.bf16.gmra.mrb[0].mxu0 %v2012
  %v3246 = vpop.f32.mrb[0].mxu0
  %v3247 = vadd.f32 0.0, %v3246
  %v3248 = vpop.f32.mrb[0].mxu0
  %v3249 = vpop.f32.mrb[0].mxu0
  %v3250 = vadd.f32 0.0, %v3249
  %v3251 = vpop.f32.mrb[0].mxu0
  %3252 = vmatprep.mubr.bf16.mxu0 0
  %3253 = vmatmul.mubr.bf16.gmra.mrb[0].mxu0 %v2015
  %v3254 = vpop.f32.mrb[0].mxu0
  %v3255 = vadd.f32 0.0, %v3254
  %v3256 = vpop.f32.mrb[0].mxu0
  %v3257 = vpop.f32.mrb[0].mxu0
  %v3258 = vadd.f32 0.0, %v3257
  %v3259 = vpop.f32.mrb[0].mxu0
  %3260 = vmatprep.mubr.bf16.mxu0 0
  %3261 = vmatmul.mubr.bf16.gmra.mrb[0].mxu0 %v2018
  %v3262 = vpop.f32.mrb[0].mxu0
  %v3263 = vadd.f32 0.0, %v3262
  %v3264 = vpop.f32.mrb[0].mxu0
  %v3265 = vpop.f32.mrb[0].mxu0
  %v3266 = vadd.f32 0.0, %v3265
  %v3267 = vpop.f32.mrb[0].mxu0
  %3268 = vmatprep.mubr.bf16.mxu0 0
  %3269 = vmatmul.mubr.bf16.gmra.mrb[0].mxu0 %v2021
  %v3270 = vpop.f32.mrb[0].mxu0
  %v3271 = vadd.f32 0.0, %v3270
  %v3272 = vpop.f32.mrb[0].mxu0
  %v3273 = vpop.f32.mrb[0].mxu0
  %v3274 = vadd.f32 0.0, %v3273
  %v3275 = vpop.f32.mrb[0].mxu0
  %3276 = vmatprep.mubr.bf16.mxu0 0
  %3277 = vmatmul.mubr.bf16.gmra.mrb[0].mxu0 %v2024
  %v3278 = vpop.f32.mrb[0].mxu0
  %v3279 = vadd.f32 0.0, %v3278
  %v3280 = vpop.f32.mrb[0].mxu0
  %v3281 = vpop.f32.mrb[0].mxu0
  %v3282 = vadd.f32 0.0, %v3281
  %v3283 = vpop.f32.mrb[0].mxu0
  %3284 = vmatprep.mubr.bf16.mxu0 0
  %3285 = vmatmul.mubr.bf16.gmra.mrb[0].mxu0 %v2027
  %v3286 = vpop.f32.mrb[0].mxu0
  %v3287 = vadd.f32 0.0, %v3286
  %v3288 = vpop.f32.mrb[0].mxu0
  %v3289 = vpop.f32.mrb[0].mxu0
  %v3290 = vadd.f32 0.0, %v3289
  %v3291 = vpop.f32.mrb[0].mxu0
  %3292 = vmatprep.mubr.bf16.mxu0 0
  %3293 = vmatmul.mubr.bf16.gmra.mrb[0].mxu0 %v2030
  %v3294 = vpop.f32.mrb[0].mxu0
  %v3295 = vadd.f32 0.0, %v3294
  %v3296 = vpop.f32.mrb[0].mxu0
  %v3297 = vpop.f32.mrb[0].mxu0
  %v3298 = vadd.f32 0.0, %v3297
  %v3299 = vpop.f32.mrb[0].mxu0
  %3300 = vmatprep.mubr.bf16.mxu0 0
  %3301 = vmatmul.mubr.bf16.gmra.mrb[0].mxu0 %v2033
  %v3302 = vpop.f32.mrb[0].mxu0
  %v3303 = vadd.f32 0.0, %v3302
  %v3304 = vpop.f32.mrb[0].mxu0
  %v3305 = vpop.f32.mrb[0].mxu0
  %v3306 = vadd.f32 0.0, %v3305
  %v3307 = vpop.f32.mrb[0].mxu0
  %3308 = vmatprep.mubr.bf16.mxu0 0
  %3309 = vmatmul.mubr.bf16.gmra.mrb[0].mxu0 %v2036
  %v3310 = vpop.f32.mrb[0].mxu0
  %v3311 = vadd.f32 0.0, %v3310
  %v3312 = vpop.f32.mrb[0].mxu0
  %v3313 = vpop.f32.mrb[0].mxu0
  %v3314 = vadd.f32 0.0, %v3313
  %v3315 = vpop.f32.mrb[0].mxu0
  %3316 = vmatprep.mubr.bf16.mxu0 0
  %3317 = vmatmul.mubr.bf16.gmra.mrb[0].mxu0 %v2039
  %v3318 = vpop.f32.mrb[0].mxu0
  %v3319 = vadd.f32 0.0, %v3318
  %v3320 = vpop.f32.mrb[0].mxu0
  %v3321 = vpop.f32.mrb[0].mxu0
  %v3322 = vadd.f32 0.0, %v3321
  %v3323 = vpop.f32.mrb[0].mxu0
  %3324 = vmatprep.mubr.bf16.mxu0 0
  %3325 = vmatmul.mubr.bf16.gmra.mrb[0].mxu0 %v2042
  %v3326 = vpop.f32.mrb[0].mxu0
  %v3327 = vadd.f32 0.0, %v3326
  %v3328 = vpop.f32.mrb[0].mxu0
  %v3329 = vpop.f32.mrb[0].mxu0
  %v3330 = vadd.f32 0.0, %v3329
  %v3331 = vpop.f32.mrb[0].mxu0
  %3332 = vmatprep.mubr.bf16.mxu0 0
  %3333 = vmatmul.mubr.bf16.gmra.mrb[0].mxu0 %v2045
  %v3334 = vpop.f32.mrb[0].mxu0
  %v3335 = vadd.f32 0.0, %v3334
  %v3336 = vpop.f32.mrb[0].mxu0
  %v3337 = vpop.f32.mrb[0].mxu0
  %v3338 = vadd.f32 0.0, %v3337
  %v3339 = vpop.f32.mrb[0].mxu0
  %3340 = vmatprep.mubr.bf16.mxu0 0
  %3341 = vmatmul.mubr.bf16.gmra.mrb[0].mxu0 %v2048
  %v3342 = vpop.f32.mrb[0].mxu0
  %v3343 = vadd.f32 0.0, %v3342
  %v3344 = vpop.f32.mrb[0].mxu0
  %v3345 = vpop.f32.mrb[0].mxu0
  %v3346 = vadd.f32 0.0, %v3345
  %v3347 = vpop.f32.mrb[0].mxu0
  %3348 = vmatprep.mubr.bf16.mxu0 0
  %3349 = vmatmul.mubr.bf16.gmra.mrb[0].mxu0 %v2051
  %v3350 = vpop.f32.mrb[0].mxu0
  %v3351 = vadd.f32 0.0, %v3350
  %v3352 = vpop.f32.mrb[0].mxu0
  %v3353 = vpop.f32.mrb[0].mxu0
  %v3354 = vadd.f32 0.0, %v3353
  %v3355 = vpop.f32.mrb[0].mxu0
  %3356 = vmatprep.mubr.bf16.mxu0 0
  %3357 = vmatmul.mubr.bf16.gmra.mrb[0].mxu0 %v2054
  %v3358 = vpop.f32.mrb[0].mxu0
  %v3359 = vadd.f32 0.0, %v3358
  %v3360 = vpop.f32.mrb[0].mxu0
  %v3361 = vpop.f32.mrb[0].mxu0
  %v3362 = vadd.f32 0.0, %v3361
  %v3363 = vpop.f32.mrb[0].mxu0
  %3364 = vmatprep.mubr.bf16.mxu0 0
  %3365 = vmatmul.mubr.bf16.gmra.mrb[0].mxu0 %v2057
  %v3366 = vpop.f32.mrb[0].mxu0
  %v3367 = vadd.f32 0.0, %v3366
  %v3368 = vpop.f32.mrb[0].mxu0
  %v3369 = vpop.f32.mrb[0].mxu0
  %v3370 = vadd.f32 0.0, %v3369
  %v3371 = vpop.f32.mrb[0].mxu0
  %3372 = vmatprep.mubr.bf16.mxu0 0
  %3373 = vmatmul.mubr.bf16.gmra.mrb[0].mxu0 %v2060
  %v3374 = vpop.f32.mrb[0].mxu0
  %v3375 = vadd.f32 0.0, %v3374
  %v3376 = vpop.f32.mrb[0].mxu0
  %v3377 = vpop.f32.mrb[0].mxu0
  %v3378 = vadd.f32 0.0, %v3377
  %v3379 = vpop.f32.mrb[0].mxu0
  %3380 = vmatprep.mubr.bf16.mxu0 0
  %3381 = vmatmul.mubr.bf16.gmra.mrb[0].mxu0 %v2063
  %v3382 = vpop.f32.mrb[0].mxu0
  %v3383 = vadd.f32 0.0, %v3382
  %v3384 = vpop.f32.mrb[0].mxu0
  %v3385 = vpop.f32.mrb[0].mxu0
  %v3386 = vadd.f32 0.0, %v3385
  %v3387 = vpop.f32.mrb[0].mxu0
  %3388 = vmatprep.mubr.bf16.mxu0 0
  %3389 = vmatmul.mubr.bf16.gmra.mrb[0].mxu0 %v2066
  %v3390 = vpop.f32.mrb[0].mxu0
  %v3391 = vadd.f32 0.0, %v3390
  %v3392 = vpop.f32.mrb[0].mxu0
  %v3393 = vpop.f32.mrb[0].mxu0
  %v3394 = vadd.f32 0.0, %v3393
  %v3395 = vpop.f32.mrb[0].mxu0
  %3396 = vmatprep.mubr.bf16.mxu0 0
  %3397 = vmatmul.mubr.bf16.gmra.mrb[0].mxu0 %v2069
  %v3398 = vpop.f32.mrb[0].mxu0
  %v3399 = vadd.f32 0.0, %v3398
  %v3400 = vpop.f32.mrb[0].mxu0
  %v3401 = vpop.f32.mrb[0].mxu0
  %v3402 = vadd.f32 0.0, %v3401
  %v3403 = vpop.f32.mrb[0].mxu0
  %3404 = vmatprep.mubr.bf16.mxu0 0
  %3405 = vmatmul.mubr.bf16.gmra.mrb[0].mxu0 %v2072
  %v3406 = vpop.f32.mrb[0].mxu0
  %v3407 = vadd.f32 0.0, %v3406
  %v3408 = vpop.f32.mrb[0].mxu0
  %v3409 = vpop.f32.mrb[0].mxu0
  %v3410 = vadd.f32 0.0, %v3409
  %v3411 = vpop.f32.mrb[0].mxu0
  %3412 = vmatprep.mubr.bf16.mxu0 0
  %3413 = vmatmul.mubr.bf16.gmra.mrb[0].mxu0 %v2075
  %v3414 = vpop.f32.mrb[0].mxu0
  %v3415 = vadd.f32 0.0, %v3414
  %v3416 = vpop.f32.mrb[0].mxu0
  %v3417 = vpop.f32.mrb[0].mxu0
  %v3418 = vadd.f32 0.0, %v3417
  %v3419 = vpop.f32.mrb[0].mxu0
  %3420 = vmatprep.mubr.bf16.mxu0 0
  %3421 = vmatmul.mubr.bf16.gmra.mrb[0].mxu0 %v2078
  %v3422 = vpop.f32.mrb[0].mxu0
  %v3423 = vadd.f32 0.0, %v3422
  %v3424 = vpop.f32.mrb[0].mxu0
  %v3425 = vpop.f32.mrb[0].mxu0
  %v3426 = vadd.f32 0.0, %v3425
  %v3427 = vpop.f32.mrb[0].mxu0
  %3428 = vmatprep.mubr.bf16.mxu0 0
  %3429 = vmatmul.mubr.bf16.gmra.mrb[0].mxu0 %v2081
  %v3430 = vpop.f32.mrb[0].mxu0
  %v3431 = vadd.f32 0.0, %v3430
  %v3432 = vpop.f32.mrb[0].mxu0
  %v3433 = vpop.f32.mrb[0].mxu0
  %v3434 = vadd.f32 0.0, %v3433
  %v3435 = vpop.f32.mrb[0].mxu0
  %3436 = vmatprep.mubr.bf16.mxu0 0
  %3437 = vmatmul.mubr.bf16.gmra.mrb[0].mxu0 %v2084
  %v3438 = vpop.f32.mrb[0].mxu0
  %v3439 = vadd.f32 0.0, %v3438
  %v3440 = vpop.f32.mrb[0].mxu0
  %v3441 = vpop.f32.mrb[0].mxu0
  %v3442 = vadd.f32 0.0, %v3441
  %v3443 = vpop.f32.mrb[0].mxu0
  %3444 = vmatprep.mubr.bf16.mxu0 0
  %3445 = vmatmul.mubr.bf16.gmra.mrb[0].mxu0 %v2087
  %v3446 = vpop.f32.mrb[0].mxu0
  %v3447 = vadd.f32 0.0, %v3446
  %v3448 = vpop.f32.mrb[0].mxu0
  %v3449 = vpop.f32.mrb[0].mxu0
  %v3450 = vadd.f32 0.0, %v3449
  %v3451 = vpop.f32.mrb[0].mxu0
  %3452 = vmatprep.mubr.bf16.mxu0 0
  %3453 = vmatmul.mubr.bf16.gmra.mrb[0].mxu0 %v2090
  %v3454 = vpop.f32.mrb[0].mxu0
  %v3455 = vadd.f32 0.0, %v3454
  %v3456 = vpop.f32.mrb[0].mxu0
  %v3457 = vpop.f32.mrb[0].mxu0
  %v3458 = vadd.f32 0.0, %v3457
  %v3459 = vpop.f32.mrb[0].mxu0
  %3460 = vmatprep.mubr.bf16.mxu0 0
  %3461 = vmatmul.mubr.bf16.gmra.mrb[0].mxu0 %v2093
  %v3462 = vpop.f32.mrb[0].mxu0
  %v3463 = vadd.f32 0.0, %v3462
  %v3464 = vpop.f32.mrb[0].mxu0
  %v3465 = vpop.f32.mrb[0].mxu0
  %v3466 = vadd.f32 0.0, %v3465
  %v3467 = vpop.f32.mrb[0].mxu0
  %3468 = vmatprep.mubr.bf16.mxu0 0
  %3469 = vmatmul.mubr.bf16.gmra.mrb[0].mxu0 %v2096
  %v3470 = vpop.f32.mrb[0].mxu0
  %v3471 = vadd.f32 0.0, %v3470
  %v3472 = vpop.f32.mrb[0].mxu0
  %v3473 = vpop.f32.mrb[0].mxu0
  %v3474 = vadd.f32 0.0, %v3473
  %v3475 = vpop.f32.mrb[0].mxu0
  %3476 = vmatprep.mubr.bf16.mxu0 0
  %3477 = vmatmul.mubr.bf16.gmra.mrb[0].mxu0 %v2099
  %v3478 = vpop.f32.mrb[0].mxu0
  %v3479 = vadd.f32 0.0, %v3478
  %v3480 = vpop.f32.mrb[0].mxu0
  %v3481 = vpop.f32.mrb[0].mxu0
  %v3482 = vadd.f32 0.0, %v3481
  %v3483 = vpop.f32.mrb[0].mxu0
  %3484 = vmatprep.mubr.bf16.mxu0 0
  %3485 = vmatmul.mubr.bf16.gmra.mrb[0].mxu0 %v2102
  %v3486 = vpop.f32.mrb[0].mxu0
  %v3487 = vadd.f32 0.0, %v3486
  %v3488 = vpop.f32.mrb[0].mxu0
  %v3489 = vpop.f32.mrb[0].mxu0
  %v3490 = vadd.f32 0.0, %v3489
  %v3491 = vpop.f32.mrb[0].mxu0
  %3492 = vmatprep.mubr.bf16.mxu0 0
  %3493 = vmatmul.mubr.bf16.gmra.mrb[0].mxu0 %v2105
  %v3494 = vpop.f32.mrb[0].mxu0
  %v3495 = vadd.f32 0.0, %v3494
  %v3496 = vpop.f32.mrb[0].mxu0
  %v3497 = vpop.f32.mrb[0].mxu0
  %v3498 = vadd.f32 0.0, %v3497
  %v3499 = vpop.f32.mrb[0].mxu0
  %3500 = vmatprep.mubr.bf16.mxu0 0
  %3501 = vmatmul.mubr.bf16.gmra.mrb[0].mxu0 %v2108
  %v3502 = vpop.f32.mrb[0].mxu0
  %v3503 = vadd.f32 0.0, %v3502
  %v3504 = vpop.f32.mrb[0].mxu0
  %v3505 = vpop.f32.mrb[0].mxu0
  %v3506 = vadd.f32 0.0, %v3505
  %v3507 = vpop.f32.mrb[0].mxu0
  %3508 = vmatprep.mubr.bf16.mxu0 0
  %3509 = vmatmul.mubr.bf16.gmra.mrb[0].mxu0 %v2111
  %v3510 = vpop.f32.mrb[0].mxu0
  %v3511 = vadd.f32 0.0, %v3510
  %v3512 = vpop.f32.mrb[0].mxu0
  %v3513 = vpop.f32.mrb[0].mxu0
  %v3514 = vadd.f32 0.0, %v3513
  %v3515 = vpop.f32.mrb[0].mxu0
  %3516 = vmatprep.mubr.bf16.mxu0 0
  %3517 = vmatmul.mubr.bf16.gmra.mrb[0].mxu0 %v2114
  %v3518 = vpop.f32.mrb[0].mxu0
  %v3519 = vadd.f32 0.0, %v3518
  %v3520 = vpop.f32.mrb[0].mxu0
  %v3521 = vpop.f32.mrb[0].mxu0
  %v3522 = vadd.f32 0.0, %v3521
  %v3523 = vpop.f32.mrb[0].mxu0
  %3524 = vmatprep.mubr.bf16.mxu0 0
  %3525 = vmatmul.mubr.bf16.gmra.mrb[0].mxu0 %v2117
  %v3526 = vpop.f32.mrb[0].mxu0
  %v3527 = vadd.f32 0.0, %v3526
  %v3528 = vpop.f32.mrb[0].mxu0
  %v3529 = vpop.f32.mrb[0].mxu0
  %v3530 = vadd.f32 0.0, %v3529
  %v3531 = vpop.f32.mrb[0].mxu0
  %3532 = vmatprep.mubr.bf16.mxu0 0
  %3533 = vmatmul.mubr.bf16.gmra.mrb[0].mxu0 %v2120
  %v3534 = vpop.f32.mrb[0].mxu0
  %v3535 = vadd.f32 0.0, %v3534
  %v3536 = vpop.f32.mrb[0].mxu0
  %v3537 = vpop.f32.mrb[0].mxu0
  %v3538 = vadd.f32 0.0, %v3537
  %v3539 = vpop.f32.mrb[0].mxu0
  %3540 = vmatprep.mubr.bf16.mxu0 0
  %3541 = vmatmul.mubr.bf16.gmra.mrb[0].mxu0 %v2123
  %v3542 = vpop.f32.mrb[0].mxu0
  %v3543 = vadd.f32 0.0, %v3542
  %v3544 = vpop.f32.mrb[0].mxu0
  %v3545 = vpop.f32.mrb[0].mxu0
  %v3546 = vadd.f32 0.0, %v3545
  %v3547 = vpop.f32.mrb[0].mxu0
  %3548 = vmatprep.mubr.bf16.mxu0 0
  %3549 = vmatmul.mubr.bf16.gmra.mrb[0].mxu0 %v2126
  %v3550 = vpop.f32.mrb[0].mxu0
  %v3551 = vadd.f32 0.0, %v3550
  %v3552 = vpop.f32.mrb[0].mxu0
  %v3553 = vpop.f32.mrb[0].mxu0
  %v3554 = vadd.f32 0.0, %v3553
  %v3555 = vpop.f32.mrb[0].mxu0
  %3556 = vmatprep.mubr.bf16.mxu0 0
  %3557 = vmatmul.mubr.bf16.gmra.mrb[0].mxu0 %v2129
  %v3558 = vpop.f32.mrb[0].mxu0
  %v3559 = vadd.f32 0.0, %v3558
  %v3560 = vpop.f32.mrb[0].mxu0
  %v3561 = vpop.f32.mrb[0].mxu0
  %v3562 = vadd.f32 0.0, %v3561
  %v3563 = vpop.f32.mrb[0].mxu0
  %3564 = vmatprep.mubr.bf16.mxu0 0
  %3565 = vmatmul.mubr.bf16.gmra.mrb[0].mxu0 %v2132
  %v3566 = vpop.f32.mrb[0].mxu0
  %v3567 = vadd.f32 0.0, %v3566
  %v3568 = vpop.f32.mrb[0].mxu0
  %v3569 = vpop.f32.mrb[0].mxu0
  %v3570 = vadd.f32 0.0, %v3569
  %v3571 = vpop.f32.mrb[0].mxu0
  %3572 = vmatprep.mubr.bf16.mxu0 0
  %3573 = vmatmul.mubr.bf16.gmra.mrb[0].mxu0 %v2135
  %v3574 = vpop.f32.mrb[0].mxu0
  %v3575 = vadd.f32 0.0, %v3574
  %v3576 = vpop.f32.mrb[0].mxu0
  %v3577 = vpop.f32.mrb[0].mxu0
  %v3578 = vadd.f32 0.0, %v3577
  %v3579 = vpop.f32.mrb[0].mxu0
  %3580 = vmatprep.mubr.bf16.mxu0 0
  %3581 = vmatmul.mubr.bf16.gmra.mrb[0].mxu0 %v2138
  %v3582 = vpop.f32.mrb[0].mxu0
  %v3583 = vadd.f32 0.0, %v3582
  %v3584 = vpop.f32.mrb[0].mxu0
  %v3585 = vpop.f32.mrb[0].mxu0
  %v3586 = vadd.f32 0.0, %v3585
  %v3587 = vpop.f32.mrb[0].mxu0
  %3588 = vmatprep.mubr.bf16.mxu0 0
  %3589 = vmatmul.mubr.bf16.gmra.mrb[0].mxu0 %v2141
  %v3590 = vpop.f32.mrb[0].mxu0
  %v3591 = vadd.f32 0.0, %v3590
  %v3592 = vpop.f32.mrb[0].mxu0
  %v3593 = vpop.f32.mrb[0].mxu0
  %v3594 = vadd.f32 0.0, %v3593
  %v3595 = vpop.f32.mrb[0].mxu0
  %3596 = vmatprep.mubr.bf16.mxu0 0
  %3597 = vmatmul.mubr.bf16.gmra.mrb[0].mxu0 %v2144
  %v3598 = vpop.f32.mrb[0].mxu0
  %v3599 = vadd.f32 0.0, %v3598
  %v3600 = vpop.f32.mrb[0].mxu0
  %v3601 = vpop.f32.mrb[0].mxu0
  %v3602 = vadd.f32 0.0, %v3601
  %v3603 = vpop.f32.mrb[0].mxu0
  %3604 = vmatprep.mubr.bf16.mxu0 0
  %3605 = vmatmul.mubr.bf16.gmra.mrb[0].mxu0 %v2147
  %v3606 = vpop.f32.mrb[0].mxu0
  %v3607 = vadd.f32 0.0, %v3606
  %v3608 = vpop.f32.mrb[0].mxu0
  %v3609 = vpop.f32.mrb[0].mxu0
  %v3610 = vadd.f32 0.0, %v3609
  %v3611 = vpop.f32.mrb[0].mxu0
  %3612 = vmatprep.mubr.bf16.mxu0 0
  %3613 = vmatmul.mubr.bf16.gmra.mrb[0].mxu0 %v2150
  %v3614 = vpop.f32.mrb[0].mxu0
  %v3615 = vadd.f32 0.0, %v3614
  %v3616 = vpop.f32.mrb[0].mxu0
  %v3617 = vpop.f32.mrb[0].mxu0
  %v3618 = vadd.f32 0.0, %v3617
  %v3619 = vpop.f32.mrb[0].mxu0
  %3620 = vmatprep.mubr.bf16.mxu0 0
  %3621 = vmatmul.mubr.bf16.gmra.mrb[0].mxu0 %v2153
  %v3622 = vpop.f32.mrb[0].mxu0
  %v3623 = vadd.f32 0.0, %v3622
  %v3624 = vpop.f32.mrb[0].mxu0
  %v3625 = vpop.f32.mrb[0].mxu0
  %v3626 = vadd.f32 0.0, %v3625
  %v3627 = vpop.f32.mrb[0].mxu0
  %3628 = vmatprep.mubr.bf16.mxu0 0
  %3629 = vmatmul.mubr.bf16.gmra.mrb[0].mxu0 %v2156
  %v3630 = vpop.f32.mrb[0].mxu0
  %v3631 = vadd.f32 0.0, %v3630
  %v3632 = vpop.f32.mrb[0].mxu0
  %v3633 = vpop.f32.mrb[0].mxu0
  %v3634 = vadd.f32 0.0, %v3633
  %v3635 = vpop.f32.mrb[0].mxu0
  %3636 = vmatprep.mubr.bf16.mxu0 0
  %3637 = vmatmul.mubr.bf16.gmra.mrb[0].mxu0 %v2159
  %v3638 = vpop.f32.mrb[0].mxu0
  %v3639 = vadd.f32 0.0, %v3638
  %v3640 = vpop.f32.mrb[0].mxu0
  %v3641 = vpop.f32.mrb[0].mxu0
  %v3642 = vadd.f32 0.0, %v3641
  %v3643 = vpop.f32.mrb[0].mxu0
  %3644 = vmatprep.mubr.bf16.mxu0 0
  %3645 = vmatmul.mubr.bf16.gmra.mrb[0].mxu0 %v2162
  %v3646 = vpop.f32.mrb[0].mxu0
  %v3647 = vadd.f32 0.0, %v3646
  %v3648 = vpop.f32.mrb[0].mxu0
  %v3649 = vpop.f32.mrb[0].mxu0
  %v3650 = vadd.f32 0.0, %v3649
  %v3651 = vpop.f32.mrb[0].mxu0
  %3652 = vmatprep.mubr.bf16.mxu0 0
  %3653 = vmatmul.mubr.bf16.gmra.mrb[0].mxu0 %v2165
  %v3654 = vpop.f32.mrb[0].mxu0
  %v3655 = vadd.f32 0.0, %v3654
  %v3656 = vpop.f32.mrb[0].mxu0
  %v3657 = vpop.f32.mrb[0].mxu0
  %v3658 = vadd.f32 0.0, %v3657
  %v3659 = vpop.f32.mrb[0].mxu0
  %3660 = vmatprep.mubr.bf16.mxu0 0
  %3661 = vmatmul.mubr.bf16.gmra.mrb[0].mxu0 %v2168
  %v3662 = vpop.f32.mrb[0].mxu0
  %v3663 = vadd.f32 0.0, %v3662
  %v3664 = vpop.f32.mrb[0].mxu0
  %v3665 = vpop.f32.mrb[0].mxu0
  %v3666 = vadd.f32 0.0, %v3665
  %v3667 = vpop.f32.mrb[0].mxu0
  %3668 = vmatprep.mubr.bf16.mxu0 0
  %3669 = vmatmul.mubr.bf16.gmra.mrb[0].mxu0 %v2171
  %v3670 = vpop.f32.mrb[0].mxu0
  %v3671 = vadd.f32 0.0, %v3670
  %v3672 = vpop.f32.mrb[0].mxu0
  %v3673 = vpop.f32.mrb[0].mxu0
  %v3674 = vadd.f32 0.0, %v3673
  %v3675 = vpop.f32.mrb[0].mxu0
  %3676 = vmatprep.mubr.bf16.mxu0 0
  %3677 = vmatmul.mubr.bf16.gmra.mrb[0].mxu0 %v2174
  %v3678 = vpop.f32.mrb[0].mxu0
  %v3679 = vadd.f32 0.0, %v3678
  %v3680 = vpop.f32.mrb[0].mxu0
  %v3681 = vpop.f32.mrb[0].mxu0
  %v3682 = vadd.f32 0.0, %v3681
  %v3683 = vpop.f32.mrb[0].mxu0
  %3684 = vmatprep.mubr.bf16.mxu0 0
  %3685 = vmatmul.mubr.bf16.gmra.mrb[0].mxu0 %v2177
  %v3686 = vpop.f32.mrb[0].mxu0
  %v3687 = vadd.f32 0.0, %v3686
  %v3688 = vpop.f32.mrb[0].mxu0
  %v3689 = vpop.f32.mrb[0].mxu0
  %v3690 = vadd.f32 0.0, %v3689
  %v3691 = vpop.f32.mrb[0].mxu0
  %3692 = vmatprep.mubr.bf16.mxu0 0
  %3693 = vmatmul.mubr.bf16.gmra.mrb[0].mxu0 %v2180
  %v3694 = vpop.f32.mrb[0].mxu0
  %v3695 = vadd.f32 0.0, %v3694
  %v3696 = vpop.f32.mrb[0].mxu0
  %v3697 = vpop.f32.mrb[0].mxu0
  %v3698 = vadd.f32 0.0, %v3697
  %v3699 = vpop.f32.mrb[0].mxu0
  %3700 = vmatprep.mubr.bf16.mxu0 0
  %3701 = vmatmul.mubr.bf16.gmra.mrb[0].mxu0 %v2183
  %v3702 = vpop.f32.mrb[0].mxu0
  %v3703 = vadd.f32 0.0, %v3702
  %v3704 = vpop.f32.mrb[0].mxu0
  %v3705 = vpop.f32.mrb[0].mxu0
  %v3706 = vadd.f32 0.0, %v3705
  %v3707 = vpop.f32.mrb[0].mxu0
  %3708 = vmatprep.mubr.bf16.mxu0 0
  %3709 = vmatmul.mubr.bf16.gmra.mrb[0].mxu0 %v2186
  %v3710 = vpop.f32.mrb[0].mxu0
  %v3711 = vadd.f32 0.0, %v3710
  %v3712 = vpop.f32.mrb[0].mxu0
  %v3713 = vpop.f32.mrb[0].mxu0
  %v3714 = vadd.f32 0.0, %v3713
  %v3715 = vpop.f32.mrb[0].mxu0
  %3716 = vmatprep.mubr.bf16.mxu0 0
  %3717 = vmatmul.mubr.bf16.gmra.mrb[0].mxu0 %v2189
  %v3718 = vpop.f32.mrb[0].mxu0
  %v3719 = vadd.f32 0.0, %v3718
  %v3720 = vpop.f32.mrb[0].mxu0
  %v3721 = vpop.f32.mrb[0].mxu0
  %v3722 = vadd.f32 0.0, %v3721
  %v3723 = vpop.f32.mrb[0].mxu0
  %3724 = vmatprep.mubr.bf16.mxu0 0
  %3725 = vmatmul.mubr.bf16.gmra.mrb[0].mxu0 %v2192
  %v3726 = vpop.f32.mrb[0].mxu0
  %v3727 = vadd.f32 0.0, %v3726
  %v3728 = vpop.f32.mrb[0].mxu0
  %v3729 = vpop.f32.mrb[0].mxu0
  %v3730 = vadd.f32 0.0, %v3729
  %v3731 = vpop.f32.mrb[0].mxu0
  %3732 = vmatprep.mubr.bf16.mxu0 0
  %3733 = vmatmul.mubr.bf16.gmra.mrb[0].mxu0 %v2195
  %v3734 = vpop.f32.mrb[0].mxu0
  %v3735 = vadd.f32 0.0, %v3734
  %v3736 = vpop.f32.mrb[0].mxu0
  %v3737 = vpop.f32.mrb[0].mxu0
  %v3738 = vadd.f32 0.0, %v3737
  %v3739 = vpop.f32.mrb[0].mxu0
  %3740 = vmatprep.mubr.bf16.mxu0 0
  %3741 = vmatmul.mubr.bf16.gmra.mrb[0].mxu0 %v2198
  %v3742 = vpop.f32.mrb[0].mxu0
  %v3743 = vadd.f32 0.0, %v3742
  %v3744 = vpop.f32.mrb[0].mxu0
  %v3745 = vpop.f32.mrb[0].mxu0
  %v3746 = vadd.f32 0.0, %v3745
  %v3747 = vpop.f32.mrb[0].mxu0
  %3748 = vmatprep.mubr.bf16.mxu0 0
  %3749 = vmatmul.mubr.bf16.gmra.mrb[0].mxu0 %v2201
  %v3750 = vpop.f32.mrb[0].mxu0
  %v3751 = vadd.f32 0.0, %v3750
  %v3752 = vpop.f32.mrb[0].mxu0
  %v3753 = vpop.f32.mrb[0].mxu0
  %v3754 = vadd.f32 0.0, %v3753
  %v3755 = vpop.f32.mrb[0].mxu0
  %3756 = vmatprep.mubr.bf16.mxu0 0
  %3757 = vmatmul.mubr.bf16.gmra.mrb[0].mxu0 %v2204
  %v3758 = vpop.f32.mrb[0].mxu0
  %v3759 = vadd.f32 0.0, %v3758
  %v3760 = vpop.f32.mrb[0].mxu0
  %v3761 = vpop.f32.mrb[0].mxu0
  %v3762 = vadd.f32 0.0, %v3761
  %v3763 = vpop.f32.mrb[0].mxu0
  %3764 = vmatprep.mubr.bf16.mxu0 0
  %3765 = vmatmul.mubr.bf16.gmra.mrb[0].mxu0 %v2207
  %v3766 = vpop.f32.mrb[0].mxu0
  %v3767 = vadd.f32 0.0, %v3766
  %v3768 = vpop.f32.mrb[0].mxu0
  %v3769 = vpop.f32.mrb[0].mxu0
  %v3770 = vadd.f32 0.0, %v3769
  %v3771 = vpop.f32.mrb[0].mxu0
  %3772 = vmatprep.mubr.bf16.mxu0 0
  %3773 = vmatmul.mubr.bf16.gmra.mrb[0].mxu0 %v2210
  %v3774 = vpop.f32.mrb[0].mxu0
  %v3775 = vadd.f32 0.0, %v3774
  %v3776 = vpop.f32.mrb[0].mxu0
  %v3777 = vpop.f32.mrb[0].mxu0
  %v3778 = vadd.f32 0.0, %v3777
  %v3779 = vpop.f32.mrb[0].mxu0
  %3780 = vmatprep.mubr.bf16.mxu0 0
  %3781 = vmatmul.mubr.bf16.gmra.mrb[0].mxu0 %v2213
  %v3782 = vpop.f32.mrb[0].mxu0
  %v3783 = vadd.f32 0.0, %v3782
  %v3784 = vpop.f32.mrb[0].mxu0
  %v3785 = vpop.f32.mrb[0].mxu0
  %v3786 = vadd.f32 0.0, %v3785
  %v3787 = vpop.f32.mrb[0].mxu0
  %3788 = vmatprep.mubr.bf16.mxu0 0
  %3789 = vmatmul.mubr.bf16.gmra.mrb[0].mxu0 %v2216
  %v3790 = vpop.f32.mrb[0].mxu0
  %v3791 = vadd.f32 0.0, %v3790
  %v3792 = vpop.f32.mrb[0].mxu0
  %v3793 = vpop.f32.mrb[0].mxu0
  %v3794 = vadd.f32 0.0, %v3793
  %v3795 = vpop.f32.mrb[0].mxu0
  %3796 = vmatprep.mubr.bf16.mxu0 0
  %3797 = vmatmul.mubr.bf16.gmra.mrb[0].mxu0 %v2219
  %v3798 = vpop.f32.mrb[0].mxu0
  %v3799 = vadd.f32 0.0, %v3798
  %v3800 = vpop.f32.mrb[0].mxu0
  %v3801 = vpop.f32.mrb[0].mxu0
  %v3802 = vadd.f32 0.0, %v3801
  %v3803 = vpop.f32.mrb[0].mxu0
  %3804 = vmatprep.mubr.bf16.mxu0 0
  %3805 = vmatmul.mubr.bf16.gmra.mrb[0].mxu0 %v2222
  %v3806 = vpop.f32.mrb[0].mxu0
  %v3807 = vadd.f32 0.0, %v3806
  %v3808 = vpop.f32.mrb[0].mxu0
  %v3809 = vpop.f32.mrb[0].mxu0
  %v3810 = vadd.f32 0.0, %v3809
  %v3811 = vpop.f32.mrb[0].mxu0
  %3812 = vmatprep.mubr.bf16.mxu0 0
  %3813 = vmatmul.mubr.bf16.gmra.mrb[0].mxu0 %v2225
  %v3814 = vpop.f32.mrb[0].mxu0
  %v3815 = vadd.f32 0.0, %v3814
  %v3816 = vpop.f32.mrb[0].mxu0
  %v3817 = vpop.f32.mrb[0].mxu0
  %v3818 = vadd.f32 0.0, %v3817
  %v3819 = vpop.f32.mrb[0].mxu0
  %3820 = vmatprep.mubr.bf16.mxu0 0
  %3821 = vmatmul.mubr.bf16.gmra.mrb[0].mxu0 %v2228
  %v3822 = vpop.f32.mrb[0].mxu0
  %v3823 = vadd.f32 0.0, %v3822
  %v3824 = vpop.f32.mrb[0].mxu0
  %v3825 = vpop.f32.mrb[0].mxu0
  %v3826 = vadd.f32 0.0, %v3825
  %v3827 = vpop.f32.mrb[0].mxu0
  %3828 = vmatprep.mubr.bf16.mxu0 0
  %3829 = vmatmul.mubr.bf16.gmra.mrb[0].mxu0 %v2231
  %v3830 = vpop.f32.mrb[0].mxu0
  %v3831 = vadd.f32 0.0, %v3830
  %v3832 = vpop.f32.mrb[0].mxu0
  %v3833 = vpop.f32.mrb[0].mxu0
  %v3834 = vadd.f32 0.0, %v3833
  %v3835 = vpop.f32.mrb[0].mxu0
  %3836 = vmatprep.mubr.bf16.mxu0 0
  %3837 = vmatmul.mubr.bf16.gmra.mrb[0].mxu0 %v2234
  %v3838 = vpop.f32.mrb[0].mxu0
  %v3839 = vadd.f32 0.0, %v3838
  %v3840 = vpop.f32.mrb[0].mxu0
  %v3841 = vpop.f32.mrb[0].mxu0
  %v3842 = vadd.f32 0.0, %v3841
  %v3843 = vpop.f32.mrb[0].mxu0
  %3844 = vmatprep.mubr.bf16.mxu0 0
  %3845 = vmatmul.mubr.bf16.gmra.mrb[0].mxu0 %v2237
  %v3846 = vpop.f32.mrb[0].mxu0
  %v3847 = vadd.f32 0.0, %v3846
  %v3848 = vpop.f32.mrb[0].mxu0
  %v3849 = vpop.f32.mrb[0].mxu0
  %v3850 = vadd.f32 0.0, %v3849
  %v3851 = vpop.f32.mrb[0].mxu0
  %3852 = vmatprep.mubr.bf16.mxu0 0
  %3853 = vmatmul.mubr.bf16.gmra.mrb[0].mxu0 %v2240
  %v3854 = vpop.f32.mrb[0].mxu0
  %v3855 = vadd.f32 0.0, %v3854
  %v3856 = vpop.f32.mrb[0].mxu0
  %v3857 = vpop.f32.mrb[0].mxu0
  %v3858 = vadd.f32 0.0, %v3857
  %v3859 = vpop.f32.mrb[0].mxu0
  %3860 = vmatprep.mubr.bf16.mxu0 0
  %3861 = vmatmul.mubr.bf16.gmra.mrb[0].mxu0 %v2243
  %v3862 = vpop.f32.mrb[0].mxu0
  %v3863 = vadd.f32 0.0, %v3862
  %v3864 = vpop.f32.mrb[0].mxu0
  %v3865 = vpop.f32.mrb[0].mxu0
  %v3866 = vadd.f32 0.0, %v3865
  %v3867 = vpop.f32.mrb[0].mxu0
  %3868 = vmatprep.mubr.bf16.mxu0 0
  %3869 = vmatmul.mubr.bf16.gmra.mrb[0].mxu0 %v2246
  %v3870 = vpop.f32.mrb[0].mxu0
  %v3871 = vadd.f32 0.0, %v3870
  %v3872 = vpop.f32.mrb[0].mxu0
  %v3873 = vpop.f32.mrb[0].mxu0
  %v3874 = vadd.f32 0.0, %v3873
  %v3875 = vpop.f32.mrb[0].mxu0
  %3876 = vmatprep.mubr.bf16.mxu0 0
  %3877 = vmatmul.mubr.bf16.gmra.mrb[0].mxu0 %v2249
  %v3878 = vpop.f32.mrb[0].mxu0
  %v3879 = vadd.f32 0.0, %v3878
  %v3880 = vpop.f32.mrb[0].mxu0
  %v3881 = vpop.f32.mrb[0].mxu0
  %v3882 = vadd.f32 0.0, %v3881
  %v3883 = vpop.f32.mrb[0].mxu0
  %3884 = vmatprep.mubr.bf16.mxu0 0
  %3885 = vmatmul.mubr.bf16.gmra.mrb[0].mxu0 %v2252
  %v3886 = vpop.f32.mrb[0].mxu0
  %v3887 = vadd.f32 0.0, %v3886
  %v3888 = vpop.f32.mrb[0].mxu0
  %v3889 = vpop.f32.mrb[0].mxu0
  %v3890 = vadd.f32 0.0, %v3889
  %v3891 = vpop.f32.mrb[0].mxu0
  %3892 = vmatprep.mubr.bf16.mxu0 0
  %3893 = vmatmul.mubr.bf16.gmra.mrb[0].mxu0 %v2255
  %v3894 = vpop.f32.mrb[0].mxu0
  %v3895 = vadd.f32 0.0, %v3894
  %v3896 = vpop.f32.mrb[0].mxu0
  %v3897 = vpop.f32.mrb[0].mxu0
  %v3898 = vadd.f32 0.0, %v3897
  %v3899 = vpop.f32.mrb[0].mxu0
  %3900 = vmatprep.mubr.bf16.mxu0 0
  %3901 = vmatmul.mubr.bf16.gmra.mrb[0].mxu0 %v2258
  %v3902 = vpop.f32.mrb[0].mxu0
  %v3903 = vadd.f32 0.0, %v3902
  %v3904 = vpop.f32.mrb[0].mxu0
  %v3905 = vpop.f32.mrb[0].mxu0
  %v3906 = vadd.f32 0.0, %v3905
  %v3907 = vpop.f32.mrb[0].mxu0
  %3908 = vmatprep.mubr.bf16.mxu0 0
  %3909 = vmatmul.mubr.bf16.gmra.mrb[0].mxu0 %v2261
  %v3910 = vpop.f32.mrb[0].mxu0
  %v3911 = vadd.f32 0.0, %v3910
  %v3912 = vpop.f32.mrb[0].mxu0
  %v3913 = vpop.f32.mrb[0].mxu0
  %v3914 = vadd.f32 0.0, %v3913
  %v3915 = vpop.f32.mrb[0].mxu0
  %3916 = vmatprep.mubr.bf16.mxu0 0
  %3917 = vmatmul.mubr.bf16.gmra.mrb[0].mxu0 %v2264
  %v3918 = vpop.f32.mrb[0].mxu0
  %v3919 = vadd.f32 0.0, %v3918
  %v3920 = vpop.f32.mrb[0].mxu0
  %v3921 = vpop.f32.mrb[0].mxu0
  %v3922 = vadd.f32 0.0, %v3921
  %v3923 = vpop.f32.mrb[0].mxu0
  %3924 = vmatprep.mubr.bf16.mxu0 0
  %3925 = vmatmul.mubr.bf16.gmra.mrb[0].mxu0 %v2267
  %v3926 = vpop.f32.mrb[0].mxu0
  %v3927 = vadd.f32 0.0, %v3926
  %v3928 = vpop.f32.mrb[0].mxu0
  %v3929 = vpop.f32.mrb[0].mxu0
  %v3930 = vadd.f32 0.0, %v3929
  %v3931 = vpop.f32.mrb[0].mxu0
  %3932 = vmatprep.mubr.bf16.mxu0 0
  %3933 = vmatmul.mubr.bf16.gmra.mrb[0].mxu0 %v2270
  %v3934 = vpop.f32.mrb[0].mxu0
  %v3935 = vadd.f32 0.0, %v3934
  %v3936 = vpop.f32.mrb[0].mxu0
  %v3937 = vpop.f32.mrb[0].mxu0
  %v3938 = vadd.f32 0.0, %v3937
  %v3939 = vpop.f32.mrb[0].mxu0
  %3940 = vmatprep.mubr.bf16.mxu0 0
  %3941 = vmatmul.mubr.bf16.gmra.mrb[0].mxu0 %v2273
  %v3942 = vpop.f32.mrb[0].mxu0
  %v3943 = vadd.f32 0.0, %v3942
  %v3944 = vpop.f32.mrb[0].mxu0
  %v3945 = vpop.f32.mrb[0].mxu0
  %v3946 = vadd.f32 0.0, %v3945
  %v3947 = vpop.f32.mrb[0].mxu0
  %3948 = vmatprep.mubr.bf16.mxu0 0
  %3949 = vmatmul.mubr.bf16.gmra.mrb[0].mxu0 %v2276
  %v3950 = vpop.f32.mrb[0].mxu0
  %v3951 = vadd.f32 0.0, %v3950
  %v3952 = vpop.f32.mrb[0].mxu0
  %v3953 = vpop.f32.mrb[0].mxu0
  %v3954 = vadd.f32 0.0, %v3953
  %v3955 = vpop.f32.mrb[0].mxu0
  %3956 = vmatprep.mubr.bf16.mxu0 0
  %3957 = vmatmul.mubr.bf16.gmra.mrb[0].mxu0 %v2279
  %v3958 = vpop.f32.mrb[0].mxu0
  %v3959 = vadd.f32 0.0, %v3958
  %v3960 = vpop.f32.mrb[0].mxu0
  %v3961 = vpop.f32.mrb[0].mxu0
  %v3962 = vadd.f32 0.0, %v3961
  %v3963 = vpop.f32.mrb[0].mxu0
  %3964 = vmatprep.mubr.bf16.mxu0 0
  %3965 = vmatmul.mubr.bf16.gmra.mrb[0].mxu0 %v2282
  %v3966 = vpop.f32.mrb[0].mxu0
  %v3967 = vadd.f32 0.0, %v3966
  %v3968 = vpop.f32.mrb[0].mxu0
  %v3969 = vpop.f32.mrb[0].mxu0
  %v3970 = vadd.f32 0.0, %v3969
  %v3971 = vpop.f32.mrb[0].mxu0
  %3972 = vmatprep.mubr.bf16.mxu0 0
  %3973 = vmatmul.mubr.bf16.gmra.mrb[0].mxu0 %v2285
  %v3974 = vpop.f32.mrb[0].mxu0
  %v3975 = vadd.f32 0.0, %v3974
  %v3976 = vpop.f32.mrb[0].mxu0
  %v3977 = vpop.f32.mrb[0].mxu0
  %v3978 = vadd.f32 0.0, %v3977
  %v3979 = vpop.f32.mrb[0].mxu0
  %3980 = vmatprep.mubr.bf16.mxu0 0
  %3981 = vmatmul.mubr.bf16.gmra.mrb[0].mxu0 %v2288
  %v3982 = vpop.f32.mrb[0].mxu0
  %v3983 = vadd.f32 0.0, %v3982
  %v3984 = vpop.f32.mrb[0].mxu0
  %v3985 = vpop.f32.mrb[0].mxu0
  %v3986 = vadd.f32 0.0, %v3985
  %v3987 = vpop.f32.mrb[0].mxu0
  %3988 = vmatprep.mubr.bf16.mxu0 0
  %3989 = vmatmul.mubr.bf16.gmra.mrb[0].mxu0 %v2291
  %v3990 = vpop.f32.mrb[0].mxu0
  %v3991 = vadd.f32 0.0, %v3990
  %v3992 = vpop.f32.mrb[0].mxu0
  %v3993 = vpop.f32.mrb[0].mxu0
  %v3994 = vadd.f32 0.0, %v3993
  %v3995 = vpop.f32.mrb[0].mxu0
  %3996 = vmatprep.mubr.bf16.mxu0 0
  %3997 = vmatmul.mubr.bf16.gmra.mrb[0].mxu0 %v2294
  %v3998 = vpop.f32.mrb[0].mxu0
  %v3999 = vadd.f32 0.0, %v3998
  %v4000 = vpop.f32.mrb[0].mxu0
  %v4001 = vpop.f32.mrb[0].mxu0
  %v4002 = vadd.f32 0.0, %v4001
  %v4003 = vpop.f32.mrb[0].mxu0
  %4004 = vmatprep.mubr.bf16.mxu0 0
  %4005 = vmatmul.mubr.bf16.gmra.mrb[0].mxu0 %v2297
  %v4006 = vpop.f32.mrb[0].mxu0
  %v4007 = vadd.f32 0.0, %v4006
  %v4008 = vpop.f32.mrb[0].mxu0
  %v4009 = vpop.f32.mrb[0].mxu0
  %v4010 = vadd.f32 0.0, %v4009
  %v4011 = vpop.f32.mrb[0].mxu0
  %4012 = vmatprep.mubr.bf16.mxu0 0
  %4013 = vmatmul.mubr.bf16.gmra.mrb[0].mxu0 %v2300
  %v4014 = vpop.f32.mrb[0].mxu0
  %v4015 = vadd.f32 0.0, %v4014
  %v4016 = vpop.f32.mrb[0].mxu0
  %v4017 = vpop.f32.mrb[0].mxu0
  %v4018 = vadd.f32 0.0, %v4017
  %v4019 = vpop.f32.mrb[0].mxu0
  %4020 = vmatprep.mubr.bf16.mxu0 0
  %4021 = vmatmul.mubr.bf16.gmra.mrb[0].mxu0 %v2303
  %v4022 = vpop.f32.mrb[0].mxu0
  %v4023 = vadd.f32 0.0, %v4022
  %v4024 = vpop.f32.mrb[0].mxu0
  %v4025 = vpop.f32.mrb[0].mxu0
  %v4026 = vadd.f32 0.0, %v4025
  %v4027 = vpop.f32.mrb[0].mxu0
  %4028 = vmatprep.mubr.bf16.mxu0 0
  %4029 = vmatmul.mubr.bf16.gmra.mrb[0].mxu0 %v2306
  %v4030 = vpop.f32.mrb[0].mxu0
  %v4031 = vadd.f32 0.0, %v4030
  %v4032 = vpop.f32.mrb[0].mxu0
  %v4033 = vpop.f32.mrb[0].mxu0
  %v4034 = vadd.f32 0.0, %v4033
  %v4035 = vpop.f32.mrb[0].mxu0
  %4036 = vmatprep.mubr.bf16.mxu0 0
  %4037 = vmatmul.mubr.bf16.gmra.mrb[0].mxu0 %v2309
  %v4038 = vpop.f32.mrb[0].mxu0
  %v4039 = vadd.f32 0.0, %v4038
  %v4040 = vpop.f32.mrb[0].mxu0
  %v4041 = vpop.f32.mrb[0].mxu0
  %v4042 = vadd.f32 0.0, %v4041
  %v4043 = vpop.f32.mrb[0].mxu0
  %4044 = vmatprep.mubr.bf16.mxu0 0
  %4045 = vmatmul.mubr.bf16.gmra.mrb[0].mxu0 %v2312
  %v4046 = vpop.f32.mrb[0].mxu0
  %v4047 = vadd.f32 0.0, %v4046
  %v4048 = vpop.f32.mrb[0].mxu0
  %v4049 = vpop.f32.mrb[0].mxu0
  %v4050 = vadd.f32 0.0, %v4049
  %v4051 = vpop.f32.mrb[0].mxu0
  %4052 = vmatprep.mubr.bf16.mxu0 0
  %4053 = vmatmul.mubr.bf16.gmra.mrb[0].mxu0 %v2315
  %v4054 = vpop.f32.mrb[0].mxu0
  %v4055 = vadd.f32 0.0, %v4054
  %v4056 = vpop.f32.mrb[0].mxu0
  %v4057 = vpop.f32.mrb[0].mxu0
  %v4058 = vadd.f32 0.0, %v4057
  %v4059 = vpop.f32.mrb[0].mxu0
  %4060 = vmatprep.mubr.bf16.mxu0 0
  %4061 = vmatmul.mubr.bf16.gmra.mrb[0].mxu0 %v2318
  %v4062 = vpop.f32.mrb[0].mxu0
  %v4063 = vadd.f32 0.0, %v4062
  %v4064 = vpop.f32.mrb[0].mxu0
  %v4065 = vpop.f32.mrb[0].mxu0
  %v4066 = vadd.f32 0.0, %v4065
  %v4067 = vpop.f32.mrb[0].mxu0
  %4068 = vmatprep.mubr.bf16.mxu0 0
  %4069 = vmatmul.mubr.bf16.gmra.mrb[0].mxu0 %v2321
  %v4070 = vpop.f32.mrb[0].mxu0
  %v4071 = vadd.f32 0.0, %v4070
  %v4072 = vpop.f32.mrb[0].mxu0
  %v4073 = vpop.f32.mrb[0].mxu0
  %v4074 = vadd.f32 0.0, %v4073
  %v4075 = vpop.f32.mrb[0].mxu0
  %4076 = vmatprep.mubr.bf16.mxu0 0
  %4077 = vmatmul.mubr.bf16.gmra.mrb[0].mxu0 %v2324
  %v4078 = vpop.f32.mrb[0].mxu0
  %v4079 = vadd.f32 0.0, %v4078
  %v4080 = vpop.f32.mrb[0].mxu0
  %v4081 = vpop.f32.mrb[0].mxu0
  %v4082 = vadd.f32 0.0, %v4081
  %v4083 = vpop.f32.mrb[0].mxu0
  %4084 = vmatprep.mubr.bf16.mxu0 0
  %4085 = vmatmul.mubr.bf16.gmra.mrb[0].mxu0 %v2327
  %v4086 = vpop.f32.mrb[0].mxu0
  %v4087 = vadd.f32 0.0, %v4086
  %v4088 = vpop.f32.mrb[0].mxu0
  %v4089 = vpop.f32.mrb[0].mxu0
  %v4090 = vadd.f32 0.0, %v4089
  %v4091 = vpop.f32.mrb[0].mxu0
  %4092 = vmatprep.mubr.bf16.mxu0 0
  %4093 = vmatmul.mubr.bf16.gmra.mrb[0].mxu0 %v2330
  %v4094 = vpop.f32.mrb[0].mxu0
  %v4095 = vadd.f32 0.0, %v4094
  %v4096 = vpop.f32.mrb[0].mxu0
  %v4097 = vpop.f32.mrb[0].mxu0
  %v4098 = vadd.f32 0.0, %v4097
  %v4099 = vpop.f32.mrb[0].mxu0
  %4100 = vmatprep.mubr.bf16.mxu0 0
  %4101 = vmatmul.mubr.bf16.gmra.mrb[0].mxu0 %v2333
  %v4102 = vpop.f32.mrb[0].mxu0
  %v4103 = vadd.f32 0.0, %v4102
  %v4104 = vpop.f32.mrb[0].mxu0
  %v4105 = vpop.f32.mrb[0].mxu0
  %v4106 = vadd.f32 0.0, %v4105
  %v4107 = vpop.f32.mrb[0].mxu0
  %4108 = vmatprep.mubr.bf16.mxu0 0
  %4109 = vmatmul.mubr.bf16.gmra.mrb[0].mxu0 %v2336
  %v4110 = vpop.f32.mrb[0].mxu0
  %v4111 = vadd.f32 0.0, %v4110
  %v4112 = vpop.f32.mrb[0].mxu0
  %v4113 = vpop.f32.mrb[0].mxu0
  %v4114 = vadd.f32 0.0, %v4113
  %v4115 = vpop.f32.mrb[0].mxu0
  %4116 = vmatprep.mubr.bf16.mxu0 0
  %4117 = vmatmul.mubr.bf16.gmra.mrb[0].mxu0 %v2339
  %v4118 = vpop.f32.mrb[0].mxu0
  %v4119 = vadd.f32 0.0, %v4118
  %v4120 = vpop.f32.mrb[0].mxu0
  %v4121 = vpop.f32.mrb[0].mxu0
  %v4122 = vadd.f32 0.0, %v4121
  %v4123 = vpop.f32.mrb[0].mxu0
  %4124 = vmatprep.mubr.bf16.mxu0 0
  %4125 = vmatmul.mubr.bf16.gmra.mrb[0].mxu0 %v2342
  %v4126 = vpop.f32.mrb[0].mxu0
  %v4127 = vadd.f32 0.0, %v4126
  %v4128 = vpop.f32.mrb[0].mxu0
  %v4129 = vpop.f32.mrb[0].mxu0
  %v4130 = vadd.f32 0.0, %v4129
  %v4131 = vpop.f32.mrb[0].mxu0
  %4132 = vmatprep.mubr.bf16.mxu0 0
  %4133 = vmatmul.mubr.bf16.gmra.mrb[0].mxu0 %v2345
  %v4134 = vpop.f32.mrb[0].mxu0
  %v4135 = vadd.f32 0.0, %v4134
  %v4136 = vpop.f32.mrb[0].mxu0
  %v4137 = vpop.f32.mrb[0].mxu0
  %v4138 = vadd.f32 0.0, %v4137
  %v4139 = vpop.f32.mrb[0].mxu0
  %4140 = vmatprep.mubr.bf16.mxu0 0
  %4141 = vmatmul.mubr.bf16.gmra.mrb[0].mxu0 %v2348
  %v4142 = vpop.f32.mrb[0].mxu0
  %v4143 = vadd.f32 0.0, %v4142
  %v4144 = vpop.f32.mrb[0].mxu0
  %v4145 = vpop.f32.mrb[0].mxu0
  %v4146 = vadd.f32 0.0, %v4145
  %v4147 = vpop.f32.mrb[0].mxu0
  %4148 = vmatprep.mubr.bf16.mxu0 0
  %4149 = vmatmul.mubr.bf16.gmra.mrb[0].mxu0 %v2351
  %v4150 = vpop.f32.mrb[0].mxu0
  %v4151 = vadd.f32 0.0, %v4150
  %v4152 = vpop.f32.mrb[0].mxu0
  %v4153 = vpop.f32.mrb[0].mxu0
  %v4154 = vadd.f32 0.0, %v4153
  %v4155 = vpop.f32.mrb[0].mxu0
  %4156 = vmatprep.mubr.bf16.mxu0 0
  %4157 = vmatmul.mubr.bf16.gmra.mrb[0].mxu0 %v2354
  %v4158 = vpop.f32.mrb[0].mxu0
  %v4159 = vadd.f32 0.0, %v4158
  %v4160 = vpop.f32.mrb[0].mxu0
  %v4161 = vpop.f32.mrb[0].mxu0
  %v4162 = vadd.f32 0.0, %v4161
  %v4163 = vpop.f32.mrb[0].mxu0
  %4164 = vmatprep.mubr.bf16.mxu0 0
  %4165 = vmatmul.mubr.bf16.gmra.mrb[0].mxu0 %v2357
  %v4166 = vpop.f32.mrb[0].mxu0
  %v4167 = vadd.f32 0.0, %v4166
  %v4168 = vpop.f32.mrb[0].mxu0
  %v4169 = vpop.f32.mrb[0].mxu0
  %v4170 = vadd.f32 0.0, %v4169
  %v4171 = vpop.f32.mrb[0].mxu0
  %4172 = vmatprep.mubr.bf16.mxu0 0
  %4173 = vmatmul.mubr.bf16.gmra.mrb[0].mxu0 %v2360
  %v4174 = vpop.f32.mrb[0].mxu0
  %v4175 = vadd.f32 0.0, %v4174
  %v4176 = vpop.f32.mrb[0].mxu0
  %v4177 = vpop.f32.mrb[0].mxu0
  %v4178 = vadd.f32 0.0, %v4177
  %v4179 = vpop.f32.mrb[0].mxu0
  %4180 = vmatprep.mubr.bf16.mxu0 0
  %4181 = vmatmul.mubr.bf16.gmra.mrb[0].mxu0 %v2363
  %v4182 = vpop.f32.mrb[0].mxu0
  %v4183 = vadd.f32 0.0, %v4182
  %v4184 = vpop.f32.mrb[0].mxu0
  %v4185 = vpop.f32.mrb[0].mxu0
  %v4186 = vadd.f32 0.0, %v4185
  %v4187 = vpop.f32.mrb[0].mxu0
  %4188 = vmatprep.mubr.bf16.mxu0 0
  %4189 = vmatmul.mubr.bf16.gmra.mrb[0].mxu0 %v2366
  %v4190 = vpop.f32.mrb[0].mxu0
  %v4191 = vadd.f32 0.0, %v4190
  %v4192 = vpop.f32.mrb[0].mxu0
  %v4193 = vpop.f32.mrb[0].mxu0
  %v4194 = vadd.f32 0.0, %v4193
  %v4195 = vpop.f32.mrb[0].mxu0
  %4196 = vmatprep.mubr.bf16.mxu0 0
  %4197 = vmatmul.mubr.bf16.gmra.mrb[0].mxu0 %v2369
  %v4198 = vpop.f32.mrb[0].mxu0
  %v4199 = vadd.f32 0.0, %v4198
  %v4200 = vpop.f32.mrb[0].mxu0
  %v4201 = vpop.f32.mrb[0].mxu0
  %v4202 = vadd.f32 0.0, %v4201
  %v4203 = vpop.f32.mrb[0].mxu0
  %4204 = vmatprep.mubr.bf16.mxu0 0
  %4205 = vmatmul.mubr.bf16.gmra.mrb[0].mxu0 %v2372
  %v4206 = vpop.f32.mrb[0].mxu0
  %v4207 = vadd.f32 0.0, %v4206
  %v4208 = vpop.f32.mrb[0].mxu0
  %v4209 = vpop.f32.mrb[0].mxu0
  %v4210 = vadd.f32 0.0, %v4209
  %v4211 = vpop.f32.mrb[0].mxu0
  %4212 = vmatprep.mubr.bf16.mxu0 0
  %4213 = vmatmul.mubr.bf16.gmra.mrb[0].mxu0 %v2375
  %v4214 = vpop.f32.mrb[0].mxu0
  %v4215 = vadd.f32 0.0, %v4214
  %v4216 = vpop.f32.mrb[0].mxu0
  %v4217 = vpop.f32.mrb[0].mxu0
  %v4218 = vadd.f32 0.0, %v4217
  %v4219 = vpop.f32.mrb[0].mxu0
  %4220 = vmatprep.mubr.bf16.mxu0 0
  %4221 = vmatmul.mubr.bf16.gmra.mrb[0].mxu0 %v2378
  %v4222 = vpop.f32.mrb[0].mxu0
  %v4223 = vadd.f32 0.0, %v4222
  %v4224 = vpop.f32.mrb[0].mxu0
  %v4225 = vpop.f32.mrb[0].mxu0
  %v4226 = vadd.f32 0.0, %v4225
  %v4227 = vpop.f32.mrb[0].mxu0
  %4228 = vmatprep.mubr.bf16.mxu0 0
  %4229 = vmatmul.mubr.bf16.gmra.mrb[0].mxu0 %v2381
  %v4230 = vpop.f32.mrb[0].mxu0
  %v4231 = vadd.f32 0.0, %v4230
  %v4232 = vpop.f32.mrb[0].mxu0
  %v4233 = vpop.f32.mrb[0].mxu0
  %v4234 = vadd.f32 0.0, %v4233
  %v4235 = vpop.f32.mrb[0].mxu0
  %4236 = vmatprep.mubr.bf16.mxu0 0
  %4237 = vmatmul.mubr.bf16.gmra.mrb[0].mxu0 %v2384
  %v4238 = vpop.f32.mrb[0].mxu0
  %v4239 = vadd.f32 0.0, %v4238
  %v4240 = vpop.f32.mrb[0].mxu0
  %v4241 = vpop.f32.mrb[0].mxu0
  %v4242 = vadd.f32 0.0, %v4241
  %v4243 = vpop.f32.mrb[0].mxu0
  %4244 = vmatprep.mubr.bf16.mxu0 0
  %4245 = vmatmul.mubr.bf16.gmra.mrb[0].mxu0 %v2387
  %v4246 = vpop.f32.mrb[0].mxu0
  %v4247 = vadd.f32 0.0, %v4246
  %v4248 = vpop.f32.mrb[0].mxu0
  %v4249 = vpop.f32.mrb[0].mxu0
  %v4250 = vadd.f32 0.0, %v4249
  %v4251 = vpop.f32.mrb[0].mxu0
  %4252 = vmatprep.mubr.bf16.mxu0 0
  %4253 = vmatmul.mubr.bf16.gmra.mrb[0].mxu0 %v2390
  %v4254 = vpop.f32.mrb[0].mxu0
  %v4255 = vadd.f32 0.0, %v4254
  %v4256 = vpop.f32.mrb[0].mxu0
  %v4257 = vpop.f32.mrb[0].mxu0
  %v4258 = vadd.f32 0.0, %v4257
  %v4259 = vpop.f32.mrb[0].mxu0
  %4260 = vmatprep.mubr.bf16.mxu0 0
  %4261 = vmatmul.mubr.bf16.gmra.mrb[0].mxu0 %v2393
  %v4262 = vpop.f32.mrb[0].mxu0
  %v4263 = vadd.f32 0.0, %v4262
  %v4264 = vpop.f32.mrb[0].mxu0
  %v4265 = vpop.f32.mrb[0].mxu0
  %v4266 = vadd.f32 0.0, %v4265
  %v4267 = vpop.f32.mrb[0].mxu0
  %4268 = vmatprep.mubr.bf16.mxu0 0
  %4269 = vmatmul.mubr.bf16.gmra.mrb[0].mxu0 %v2396
  %v4270 = vpop.f32.mrb[0].mxu0
  %v4271 = vadd.f32 0.0, %v4270
  %v4272 = vpop.f32.mrb[0].mxu0
  %v4273 = vpop.f32.mrb[0].mxu0
  %v4274 = vadd.f32 0.0, %v4273
  %v4275 = vpop.f32.mrb[0].mxu0
  %4276 = vmatprep.mubr.bf16.mxu0 0
  %4277 = vmatmul.mubr.bf16.gmra.mrb[0].mxu0 %v2399
  %v4278 = vpop.f32.mrb[0].mxu0
  %v4279 = vadd.f32 0.0, %v4278
  %v4280 = vpop.f32.mrb[0].mxu0
  %v4281 = vpop.f32.mrb[0].mxu0
  %v4282 = vadd.f32 0.0, %v4281
  %v4283 = vpop.f32.mrb[0].mxu0
  %4284 = vmatprep.mubr.bf16.mxu0 0
  %4285 = vmatmul.mubr.bf16.gmra.mrb[0].mxu0 %v2402
  %v4286 = vpop.f32.mrb[0].mxu0
  %v4287 = vadd.f32 0.0, %v4286
  %v4288 = vpop.f32.mrb[0].mxu0
  %v4289 = vpop.f32.mrb[0].mxu0
  %v4290 = vadd.f32 0.0, %v4289
  %v4291 = vpop.f32.mrb[0].mxu0
  %4292 = vmatprep.mubr.bf16.mxu0 0
  %4293 = vmatmul.mubr.bf16.gmra.mrb[0].mxu0 %v2405
  %v4294 = vpop.f32.mrb[0].mxu0
  %v4295 = vadd.f32 0.0, %v4294
  %v4296 = vpop.f32.mrb[0].mxu0
  %v4297 = vpop.f32.mrb[0].mxu0
  %v4298 = vadd.f32 0.0, %v4297
  %v4299 = vpop.f32.mrb[0].mxu0
  %4300 = vmatprep.mubr.bf16.mxu0 0
  %4301 = vmatmul.mubr.bf16.gmra.mrb[0].mxu0 %v2408
  %v4302 = vpop.f32.mrb[0].mxu0
  %v4303 = vadd.f32 0.0, %v4302
  %v4304 = vpop.f32.mrb[0].mxu0
  %v4305 = vpop.f32.mrb[0].mxu0
  %v4306 = vadd.f32 0.0, %v4305
  %v4307 = vpop.f32.mrb[0].mxu0
  %4308 = vmatprep.mubr.bf16.mxu0 0
  %4309 = vmatmul.mubr.bf16.gmra.mrb[0].mxu0 %v2411
  %v4310 = vpop.f32.mrb[0].mxu0
  %v4311 = vadd.f32 0.0, %v4310
  %v4312 = vpop.f32.mrb[0].mxu0
  %v4313 = vpop.f32.mrb[0].mxu0
  %v4314 = vadd.f32 0.0, %v4313
  %v4315 = vpop.f32.mrb[0].mxu0
  %4316 = vmatprep.mubr.bf16.mxu0 0
  %4317 = vmatmul.mubr.bf16.gmra.mrb[0].mxu0 %v2414
  %v4318 = vpop.f32.mrb[0].mxu0
  %v4319 = vadd.f32 0.0, %v4318
  %v4320 = vpop.f32.mrb[0].mxu0
  %v4321 = vpop.f32.mrb[0].mxu0
  %v4322 = vadd.f32 0.0, %v4321
  %v4323 = vpop.f32.mrb[0].mxu0
  %4324 = vmatprep.mubr.bf16.mxu0 0
  %4325 = vmatmul.mubr.bf16.gmra.mrb[0].mxu0 %v2417
  %v4326 = vpop.f32.mrb[0].mxu0
  %v4327 = vadd.f32 0.0, %v4326
  %v4328 = vpop.f32.mrb[0].mxu0
  %v4329 = vpop.f32.mrb[0].mxu0
  %v4330 = vadd.f32 0.0, %v4329
  %v4331 = vpop.f32.mrb[0].mxu0
  %4332 = vmatprep.mubr.bf16.mxu0 0
  %4333 = vmatmul.mubr.bf16.gmra.mrb[0].mxu0 %v2420
  %v4334 = vpop.f32.mrb[0].mxu0
  %v4335 = vadd.f32 0.0, %v4334
  %v4336 = vpop.f32.mrb[0].mxu0
  %v4337 = vpop.f32.mrb[0].mxu0
  %v4338 = vadd.f32 0.0, %v4337
  %v4339 = vpop.f32.mrb[0].mxu0
  %4340 = vmatprep.mubr.bf16.mxu0 0
  %4341 = vmatmul.mubr.bf16.gmra.mrb[0].mxu0 %v2423
  %v4342 = vpop.f32.mrb[0].mxu0
  %v4343 = vadd.f32 0.0, %v4342
  %v4344 = vpop.f32.mrb[0].mxu0
  %v4345 = vpop.f32.mrb[0].mxu0
  %v4346 = vadd.f32 0.0, %v4345
  %v4347 = vpop.f32.mrb[0].mxu0
  %4348 = vmatprep.mubr.bf16.mxu0 0
  %4349 = vmatmul.mubr.bf16.gmra.mrb[0].mxu0 %v2426
  %v4350 = vpop.f32.mrb[0].mxu0
  %v4351 = vadd.f32 0.0, %v4350
  %v4352 = vpop.f32.mrb[0].mxu0
  %v4353 = vpop.f32.mrb[0].mxu0
  %v4354 = vadd.f32 0.0, %v4353
  %v4355 = vpop.f32.mrb[0].mxu0
  %4356 = vmatprep.mubr.bf16.mxu0 0
  %4357 = vmatmul.mubr.bf16.gmra.mrb[0].mxu0 %v2429
  %v4358 = vpop.f32.mrb[0].mxu0
  %v4359 = vadd.f32 0.0, %v4358
  %v4360 = vpop.f32.mrb[0].mxu0
  %v4361 = vpop.f32.mrb[0].mxu0
  %v4362 = vadd.f32 0.0, %v4361
  %v4363 = vpop.f32.mrb[0].mxu0
  %4364 = vmatprep.mubr.bf16.mxu0 0
  %4365 = vmatmul.mubr.bf16.gmra.mrb[0].mxu0 %v2432
  %v4366 = vpop.f32.mrb[0].mxu0
  %v4367 = vadd.f32 0.0, %v4366
  %v4368 = vpop.f32.mrb[0].mxu0
  %v4369 = vpop.f32.mrb[0].mxu0
  %v4370 = vadd.f32 0.0, %v4369
  %v4371 = vpop.f32.mrb[0].mxu0
  %4372 = vmatprep.mubr.bf16.mxu0 0
  %4373 = vmatmul.mubr.bf16.gmra.mrb[0].mxu0 %v2435
  %v4374 = vpop.f32.mrb[0].mxu0
  %v4375 = vadd.f32 0.0, %v4374
  %v4376 = vpop.f32.mrb[0].mxu0
  %v4377 = vpop.f32.mrb[0].mxu0
  %v4378 = vadd.f32 0.0, %v4377
  %v4379 = vpop.f32.mrb[0].mxu0
  %4380 = vmatprep.mubr.bf16.mxu0 0
  %4381 = vmatmul.mubr.bf16.gmra.mrb[0].mxu0 %v2438
  %v4382 = vpop.f32.mrb[0].mxu0
  %v4383 = vadd.f32 0.0, %v4382
  %v4384 = vpop.f32.mrb[0].mxu0
  %v4385 = vpop.f32.mrb[0].mxu0
  %v4386 = vadd.f32 0.0, %v4385
  %v4387 = vpop.f32.mrb[0].mxu0
  %4388 = vmatprep.mubr.bf16.mxu0 0
  %4389 = vmatmul.mubr.bf16.gmra.mrb[0].mxu0 %v2441
  %v4390 = vpop.f32.mrb[0].mxu0
  %v4391 = vadd.f32 0.0, %v4390
  %v4392 = vpop.f32.mrb[0].mxu0
  %v4393 = vpop.f32.mrb[0].mxu0
  %v4394 = vadd.f32 0.0, %v4393
  %v4395 = vpop.f32.mrb[0].mxu0
  %4396 = vmatprep.mubr.bf16.mxu0 0
  %4397 = vmatmul.mubr.bf16.gmra.mrb[0].mxu0 %v2444
  %v4398 = vpop.f32.mrb[0].mxu0
  %v4399 = vadd.f32 0.0, %v4398
  %v4400 = vpop.f32.mrb[0].mxu0
  %v4401 = vpop.f32.mrb[0].mxu0
  %v4402 = vadd.f32 0.0, %v4401
  %v4403 = vpop.f32.mrb[0].mxu0
  %4404 = vmatprep.mubr.bf16.mxu0 0
  %4405 = vmatmul.mubr.bf16.gmra.mrb[0].mxu0 %v2447
  %v4406 = vpop.f32.mrb[0].mxu0
  %v4407 = vadd.f32 0.0, %v4406
  %v4408 = vpop.f32.mrb[0].mxu0
  %v4409 = vpop.f32.mrb[0].mxu0
  %v4410 = vadd.f32 0.0, %v4409
  %v4411 = vpop.f32.mrb[0].mxu0
  %4412 = vmatprep.mubr.bf16.mxu0 0
  %4413 = vmatmul.mubr.bf16.gmra.mrb[0].mxu0 %v2450
  %v4414 = vpop.f32.mrb[0].mxu0
  %v4415 = vadd.f32 0.0, %v4414
  %v4416 = vpop.f32.mrb[0].mxu0
  %v4417 = vpop.f32.mrb[0].mxu0
  %v4418 = vadd.f32 0.0, %v4417
  %v4419 = vpop.f32.mrb[0].mxu0
  %4420 = vdwg.mxu0
  %v4421 = vmax.f32 %v2487, %v2970
  %v4422 = vmax.f32 %v2490, %v2975
  %v4423 = vmax.f32 %v2495, %v2978
  %v4424 = vmax.f32 %v2498, %v2983
  %v4425 = vmax.f32 %v2503, %v2986
  %v4426 = vmax.f32 %v2506, %v2991
  %v4427 = vmax.f32 %v2511, %v2994
  %v4428 = vmax.f32 %v2514, %v2999
  %v4429 = vmax.f32 %v2519, %v3002
  %v4430 = vmax.f32 %v2522, %v3007
  %v4431 = vmax.f32 %v2527, %v3010
  %v4432 = vmax.f32 %v2530, %v3015
  %v4433 = vmax.f32 %v2535, %v3018
  %v4434 = vmax.f32 %v2538, %v3023
  %v4435 = vmax.f32 %v2543, %v3026
  %v4436 = vmax.f32 %v2546, %v3031
  %v4437 = vmax.f32 %v2551, %v3034
  %v4438 = vmax.f32 %v2554, %v3039
  %v4439 = vmax.f32 %v2559, %v3042
  %v4440 = vmax.f32 %v2562, %v3047
  %v4441 = vmax.f32 %v2567, %v3050
  %v4442 = vmax.f32 %v2570, %v3055
  %v4443 = vmax.f32 %v2575, %v3058
  %v4444 = vmax.f32 %v2578, %v3063
  %v4445 = vmax.f32 %v2583, %v3066
  %v4446 = vmax.f32 %v2586, %v3071
  %v4447 = vmax.f32 %v2591, %v3074
  %v4448 = vmax.f32 %v2594, %v3079
  %v4449 = vmax.f32 %v2599, %v3082
  %v4450 = vmax.f32 %v2602, %v3087
  %v4451 = vmax.f32 %v2607, %v3090
  %v4452 = vmax.f32 %v2610, %v3095
  %v4453 = vmax.f32 %v2615, %v3098
  %v4454 = vmax.f32 %v2618, %v3103
  %v4455 = vmax.f32 %v2623, %v3106
  %v4456 = vmax.f32 %v2626, %v3111
  %v4457 = vmax.f32 %v2631, %v3114
  %v4458 = vmax.f32 %v2634, %v3119
  %v4459 = vmax.f32 %v2639, %v3122
  %v4460 = vmax.f32 %v2642, %v3127
  %v4461 = vmax.f32 %v2647, %v3130
  %v4462 = vmax.f32 %v2650, %v3135
  %v4463 = vmax.f32 %v2655, %v3138
  %v4464 = vmax.f32 %v2658, %v3143
  %v4465 = vmax.f32 %v2663, %v3146
  %v4466 = vmax.f32 %v2666, %v3151
  %v4467 = vmax.f32 %v2671, %v3154
  %v4468 = vmax.f32 %v2674, %v3159
  %v4469 = vmax.f32 %v2679, %v3162
  %v4470 = vmax.f32 %v2682, %v3167
  %v4471 = vmax.f32 %v2687, %v3170
  %v4472 = vmax.f32 %v2690, %v3175
  %v4473 = vmax.f32 %v2695, %v3178
  %v4474 = vmax.f32 %v2698, %v3183
  %v4475 = vmax.f32 %v2703, %v3186
  %v4476 = vmax.f32 %v2706, %v3191
  %v4477 = vmax.f32 %v2711, %v3194
  %v4478 = vmax.f32 %v2714, %v3199
  %v4479 = vmax.f32 %v2719, %v3202
  %v4480 = vmax.f32 %v2722, %v3207
  %v4481 = vmax.f32 %v2727, %v3210
  %v4482 = vmax.f32 %v2730, %v3215
  %v4483 = vmax.f32 %v2735, %v3218
  %v4484 = vmax.f32 %v2738, %v3223
  %v4485 = vmax.f32 %v2743, %v3226
  %v4486 = vmax.f32 %v2746, %v3231
  %v4487 = vmax.f32 %v2751, %v3234
  %v4488 = vmax.f32 %v2754, %v3239
  %v4489 = vmax.f32 %v2759, %v3242
  %v4490 = vmax.f32 %v2762, %v3247
  %v4491 = vmax.f32 %v2767, %v3250
  %v4492 = vmax.f32 %v2770, %v3255
  %v4493 = vmax.f32 %v2775, %v3258
  %v4494 = vmax.f32 %v2778, %v3263
  %v4495 = vmax.f32 %v2783, %v3266
  %v4496 = vmax.f32 %v2786, %v3271
  %v4497 = vmax.f32 %v2791, %v3274
  %v4498 = vmax.f32 %v2794, %v3279
  %v4499 = vmax.f32 %v2799, %v3282
  %v4500 = vmax.f32 %v2802, %v3287
  %v4501 = vmax.f32 %v2807, %v3290
  %v4502 = vmax.f32 %v2810, %v3295
  %v4503 = vmax.f32 %v2815, %v3298
  %v4504 = vmax.f32 %v2818, %v3303
  %v4505 = vmax.f32 %v2823, %v3306
  %v4506 = vmax.f32 %v2826, %v3311
  %v4507 = vmax.f32 %v2831, %v3314
  %v4508 = vmax.f32 %v2834, %v3319
  %v4509 = vmax.f32 %v2839, %v3322
  %v4510 = vmax.f32 %v2842, %v3327
  %v4511 = vmax.f32 %v2847, %v3330
  %v4512 = vmax.f32 %v2850, %v3335
  %v4513 = vmax.f32 %v2855, %v3338
  %v4514 = vmax.f32 %v2858, %v3343
  %v4515 = vmax.f32 %v2863, %v3346
  %v4516 = vmax.f32 %v2866, %v3351
  %v4517 = vmax.f32 %v2871, %v3354
  %v4518 = vmax.f32 %v2874, %v3359
  %v4519 = vmax.f32 %v2879, %v3362
  %v4520 = vmax.f32 %v2882, %v3367
  %v4521 = vmax.f32 %v2887, %v3370
  %v4522 = vmax.f32 %v2890, %v3375
  %v4523 = vmax.f32 %v2895, %v3378
  %v4524 = vmax.f32 %v2898, %v3383
  %v4525 = vmax.f32 %v2903, %v3386
  %v4526 = vmax.f32 %v2906, %v3391
  %v4527 = vmax.f32 %v2911, %v3394
  %v4528 = vmax.f32 %v2914, %v3399
  %v4529 = vmax.f32 %v2919, %v3402
  %v4530 = vmax.f32 %v2922, %v3407
  %v4531 = vmax.f32 %v2927, %v3410
  %v4532 = vmax.f32 %v2930, %v3415
  %v4533 = vmax.f32 %v2935, %v3418
  %v4534 = vmax.f32 %v2938, %v3423
  %v4535 = vmax.f32 %v2943, %v3426
  %v4536 = vmax.f32 %v2946, %v3431
  %v4537 = vmax.f32 %v2951, %v3434
  %v4538 = vmax.f32 %v2954, %v3439
  %v4539 = vmax.f32 %v2959, %v3442
  %v4540 = vmax.f32 %v2962, %v3447
  %v4541 = vmax.f32 %v2967, %v3450
  %v4542 = vmax.f32 %v3455, %v3938
  %v4543 = vmax.f32 %v3458, %v3943
  %v4544 = vmax.f32 %v3463, %v3946
  %v4545 = vmax.f32 %v3466, %v3951
  %v4546 = vmax.f32 %v3471, %v3954
  %v4547 = vmax.f32 %v3474, %v3959
  %v4548 = vmax.f32 %v3479, %v3962
  %v4549 = vmax.f32 %v3482, %v3967
  %v4550 = vmax.f32 %v3487, %v3970
  %v4551 = vmax.f32 %v3490, %v3975
  %v4552 = vmax.f32 %v3495, %v3978
  %v4553 = vmax.f32 %v3498, %v3983
  %v4554 = vmax.f32 %v3503, %v3986
  %v4555 = vmax.f32 %v3506, %v3991
  %v4556 = vmax.f32 %v3511, %v3994
  %v4557 = vmax.f32 %v3514, %v3999
  %v4558 = vmax.f32 %v3519, %v4002
  %v4559 = vmax.f32 %v3522, %v4007
  %v4560 = vmax.f32 %v3527, %v4010
  %v4561 = vmax.f32 %v3530, %v4015
  %v4562 = vmax.f32 %v3535, %v4018
  %v4563 = vmax.f32 %v3538, %v4023
  %v4564 = vmax.f32 %v3543, %v4026
  %v4565 = vmax.f32 %v3546, %v4031
  %v4566 = vmax.f32 %v3551, %v4034
  %v4567 = vmax.f32 %v3554, %v4039
  %v4568 = vmax.f32 %v3559, %v4042
  %v4569 = vmax.f32 %v3562, %v4047
  %v4570 = vmax.f32 %v3567, %v4050
  %v4571 = vmax.f32 %v3570, %v4055
  %v4572 = vmax.f32 %v3575, %v4058
  %v4573 = vmax.f32 %v3578, %v4063
  %v4574 = vmax.f32 %v3583, %v4066
  %v4575 = vmax.f32 %v3586, %v4071
  %v4576 = vmax.f32 %v3591, %v4074
  %v4577 = vmax.f32 %v3594, %v4079
  %v4578 = vmax.f32 %v3599, %v4082
  %v4579 = vmax.f32 %v3602, %v4087
  %v4580 = vmax.f32 %v3607, %v4090
  %v4581 = vmax.f32 %v3610, %v4095
  %v4582 = vmax.f32 %v3615, %v4098
  %v4583 = vmax.f32 %v3618, %v4103
  %v4584 = vmax.f32 %v3623, %v4106
  %v4585 = vmax.f32 %v3626, %v4111
  %v4586 = vmax.f32 %v3631, %v4114
  %v4587 = vmax.f32 %v3634, %v4119
  %v4588 = vmax.f32 %v3639, %v4122
  %v4589 = vmax.f32 %v3642, %v4127
  %v4590 = vmax.f32 %v3647, %v4130
  %v4591 = vmax.f32 %v3650, %v4135
  %v4592 = vmax.f32 %v3655, %v4138
  %v4593 = vmax.f32 %v3658, %v4143
  %v4594 = vmax.f32 %v3663, %v4146
  %v4595 = vmax.f32 %v3666, %v4151
  %v4596 = vmax.f32 %v3671, %v4154
  %v4597 = vmax.f32 %v3674, %v4159
  %v4598 = vmax.f32 %v3679, %v4162
  %v4599 = vmax.f32 %v3682, %v4167
  %v4600 = vmax.f32 %v3687, %v4170
  %v4601 = vmax.f32 %v3690, %v4175
  %v4602 = vmax.f32 %v3695, %v4178
  %v4603 = vmax.f32 %v3698, %v4183
  %v4604 = vmax.f32 %v3703, %v4186
  %v4605 = vmax.f32 %v3706, %v4191
  %v4606 = vmax.f32 %v3711, %v4194
  %v4607 = vmax.f32 %v3714, %v4199
  %v4608 = vmax.f32 %v3719, %v4202
  %v4609 = vmax.f32 %v3722, %v4207
  %v4610 = vmax.f32 %v3727, %v4210
  %v4611 = vmax.f32 %v3730, %v4215
  %v4612 = vmax.f32 %v3735, %v4218
  %v4613 = vmax.f32 %v3738, %v4223
  %v4614 = vmax.f32 %v3743, %v4226
  %v4615 = vmax.f32 %v3746, %v4231
  %v4616 = vmax.f32 %v3751, %v4234
  %v4617 = vmax.f32 %v3754, %v4239
  %v4618 = vmax.f32 %v3759, %v4242
  %v4619 = vmax.f32 %v3762, %v4247
  %v4620 = vmax.f32 %v3767, %v4250
  %v4621 = vmax.f32 %v3770, %v4255
  %v4622 = vmax.f32 %v3775, %v4258
  %v4623 = vmax.f32 %v3778, %v4263
  %v4624 = vmax.f32 %v3783, %v4266
  %v4625 = vmax.f32 %v3786, %v4271
  %v4626 = vmax.f32 %v3791, %v4274
  %v4627 = vmax.f32 %v3794, %v4279
  %v4628 = vmax.f32 %v3799, %v4282
  %v4629 = vmax.f32 %v3802, %v4287
  %v4630 = vmax.f32 %v3807, %v4290
  %v4631 = vmax.f32 %v3810, %v4295
  %v4632 = vmax.f32 %v3815, %v4298
  %v4633 = vmax.f32 %v3818, %v4303
  %v4634 = vmax.f32 %v3823, %v4306
  %v4635 = vmax.f32 %v3826, %v4311
  %v4636 = vmax.f32 %v3831, %v4314
  %v4637 = vmax.f32 %v3834, %v4319
  %v4638 = vmax.f32 %v3839, %v4322
  %v4639 = vmax.f32 %v3842, %v4327
  %v4640 = vmax.f32 %v3847, %v4330
  %v4641 = vmax.f32 %v3850, %v4335
  %v4642 = vmax.f32 %v3855, %v4338
  %v4643 = vmax.f32 %v3858, %v4343
  %v4644 = vmax.f32 %v3863, %v4346
  %v4645 = vmax.f32 %v3866, %v4351
  %v4646 = vmax.f32 %v3871, %v4354
  %v4647 = vmax.f32 %v3874, %v4359
  %v4648 = vmax.f32 %v3879, %v4362
  %v4649 = vmax.f32 %v3882, %v4367
  %v4650 = vmax.f32 %v3887, %v4370
  %v4651 = vmax.f32 %v3890, %v4375
  %v4652 = vmax.f32 %v3895, %v4378
  %v4653 = vmax.f32 %v3898, %v4383
  %v4654 = vmax.f32 %v3903, %v4386
  %v4655 = vmax.f32 %v3906, %v4391
  %v4656 = vmax.f32 %v3911, %v4394
  %v4657 = vmax.f32 %v3914, %v4399
  %v4658 = vmax.f32 %v3919, %v4402
  %v4659 = vmax.f32 %v3922, %v4407
  %v4660 = vmax.f32 %v3927, %v4410
  %v4661 = vmax.f32 %v3930, %v4415
  %v4662 = vmax.f32 %v3935, %v4418
  %v4663 = vmax.f32 %v4421, %v4542
  %v4664 = vmax.f32 %v4422, %v4543
  %v4665 = vmax.f32 %v4423, %v4544
  %v4666 = vmax.f32 %v4424, %v4545
  %v4667 = vmax.f32 %v4425, %v4546
  %v4668 = vmax.f32 %v4426, %v4547
  %v4669 = vmax.f32 %v4427, %v4548
  %v4670 = vmax.f32 %v4428, %v4549
  %v4671 = vmax.f32 %v4429, %v4550
  %v4672 = vmax.f32 %v4430, %v4551
  %v4673 = vmax.f32 %v4431, %v4552
  %v4674 = vmax.f32 %v4432, %v4553
  %v4675 = vmax.f32 %v4433, %v4554
  %v4676 = vmax.f32 %v4434, %v4555
  %v4677 = vmax.f32 %v4435, %v4556
  %v4678 = vmax.f32 %v4436, %v4557
  %v4679 = vmax.f32 %v4437, %v4558
  %v4680 = vmax.f32 %v4438, %v4559
  %v4681 = vmax.f32 %v4439, %v4560
  %v4682 = vmax.f32 %v4440, %v4561
  %v4683 = vmax.f32 %v4441, %v4562
  %v4684 = vmax.f32 %v4442, %v4563
  %v4685 = vmax.f32 %v4443, %v4564
  %v4686 = vmax.f32 %v4444, %v4565
  %v4687 = vmax.f32 %v4445, %v4566
  %v4688 = vmax.f32 %v4446, %v4567
  %v4689 = vmax.f32 %v4447, %v4568
  %v4690 = vmax.f32 %v4448, %v4569
  %v4691 = vmax.f32 %v4449, %v4570
  %v4692 = vmax.f32 %v4450, %v4571
  %v4693 = vmax.f32 %v4451, %v4572
  %v4694 = vmax.f32 %v4452, %v4573
  %v4695 = vmax.f32 %v4453, %v4574
  %v4696 = vmax.f32 %v4454, %v4575
  %v4697 = vmax.f32 %v4455, %v4576
  %v4698 = vmax.f32 %v4456, %v4577
  %v4699 = vmax.f32 %v4457, %v4578
  %v4700 = vmax.f32 %v4458, %v4579
  %v4701 = vmax.f32 %v4459, %v4580
  %v4702 = vmax.f32 %v4460, %v4581
  %v4703 = vmax.f32 %v4461, %v4582
  %v4704 = vmax.f32 %v4462, %v4583
  %v4705 = vmax.f32 %v4463, %v4584
  %v4706 = vmax.f32 %v4464, %v4585
  %v4707 = vmax.f32 %v4465, %v4586
  %v4708 = vmax.f32 %v4466, %v4587
  %v4709 = vmax.f32 %v4467, %v4588
  %v4710 = vmax.f32 %v4468, %v4589
  %v4711 = vmax.f32 %v4469, %v4590
  %v4712 = vmax.f32 %v4470, %v4591
  %v4713 = vmax.f32 %v4471, %v4592
  %v4714 = vmax.f32 %v4472, %v4593
  %v4715 = vmax.f32 %v4473, %v4594
  %v4716 = vmax.f32 %v4474, %v4595
  %v4717 = vmax.f32 %v4475, %v4596
  %v4718 = vmax.f32 %v4476, %v4597
  %v4719 = vmax.f32 %v4477, %v4598
  %v4720 = vmax.f32 %v4478, %v4599
  %v4721 = vmax.f32 %v4479, %v4600
  %v4722 = vmax.f32 %v4480, %v4601
  %v4723 = vmax.f32 %v4481, %v4602
  %v4724 = vmax.f32 %v4482, %v4603
  %v4725 = vmax.f32 %v4483, %v4604
  %v4726 = vmax.f32 %v4484, %v4605
  %v4727 = vmax.f32 %v4485, %v4606
  %v4728 = vmax.f32 %v4486, %v4607
  %v4729 = vmax.f32 %v4487, %v4608
  %v4730 = vmax.f32 %v4488, %v4609
  %v4731 = vmax.f32 %v4489, %v4610
  %v4732 = vmax.f32 %v4490, %v4611
  %v4733 = vmax.f32 %v4491, %v4612
  %v4734 = vmax.f32 %v4492, %v4613
  %v4735 = vmax.f32 %v4493, %v4614
  %v4736 = vmax.f32 %v4494, %v4615
  %v4737 = vmax.f32 %v4495, %v4616
  %v4738 = vmax.f32 %v4496, %v4617
  %v4739 = vmax.f32 %v4497, %v4618
  %v4740 = vmax.f32 %v4498, %v4619
  %v4741 = vmax.f32 %v4499, %v4620
  %v4742 = vmax.f32 %v4500, %v4621
  %v4743 = vmax.f32 %v4501, %v4622
  %v4744 = vmax.f32 %v4502, %v4623
  %v4745 = vmax.f32 %v4503, %v4624
  %v4746 = vmax.f32 %v4504, %v4625
  %v4747 = vmax.f32 %v4505, %v4626
  %v4748 = vmax.f32 %v4506, %v4627
  %v4749 = vmax.f32 %v4507, %v4628
  %v4750 = vmax.f32 %v4508, %v4629
  %v4751 = vmax.f32 %v4509, %v4630
  %v4752 = vmax.f32 %v4510, %v4631
  %v4753 = vmax.f32 %v4511, %v4632
  %v4754 = vmax.f32 %v4512, %v4633
  %v4755 = vmax.f32 %v4513, %v4634
  %v4756 = vmax.f32 %v4514, %v4635
  %v4757 = vmax.f32 %v4515, %v4636
  %v4758 = vmax.f32 %v4516, %v4637
  %v4759 = vmax.f32 %v4517, %v4638
  %v4760 = vmax.f32 %v4518, %v4639
  %v4761 = vmax.f32 %v4519, %v4640
  %v4762 = vmax.f32 %v4520, %v4641
  %v4763 = vmax.f32 %v4521, %v4642
  %v4764 = vmax.f32 %v4522, %v4643
  %v4765 = vmax.f32 %v4523, %v4644
  %v4766 = vmax.f32 %v4524, %v4645
  %v4767 = vmax.f32 %v4525, %v4646
  %v4768 = vmax.f32 %v4526, %v4647
  %v4769 = vmax.f32 %v4527, %v4648
  %v4770 = vmax.f32 %v4528, %v4649
  %v4771 = vmax.f32 %v4529, %v4650
  %v4772 = vmax.f32 %v4530, %v4651
  %v4773 = vmax.f32 %v4531, %v4652
  %v4774 = vmax.f32 %v4532, %v4653
  %v4775 = vmax.f32 %v4533, %v4654
  %v4776 = vmax.f32 %v4534, %v4655
  %v4777 = vmax.f32 %v4535, %v4656
  %v4778 = vmax.f32 %v4536, %v4657
  %v4779 = vmax.f32 %v4537, %v4658
  %v4780 = vmax.f32 %v4538, %v4659
  %v4781 = vmax.f32 %v4539, %v4660
  %v4782 = vmax.f32 %v4540, %v4661
  %v4783 = vmax.f32 %v4541, %v4662
  %v4784 = vld [vmem:[%s2] sm:$0x1]
  %v4786 = vlaneseq
  %v4787 = vshrl.u32 %v4786, 7
  %v4788 = vsub.s32 0, %v4787
  %v4789 = vrot.slane %v4784, %v4788
  %v4791 = vadd.f32 %v4663, %v4789
  %v4792 = vadd.f32 %v4664, %v4789
  %v4793 = vadd.f32 %v4665, %v4789
  %v4794 = vadd.f32 %v4666, %v4789
  %v4795 = vadd.f32 %v4667, %v4789
  %v4796 = vadd.f32 %v4668, %v4789
  %v4797 = vadd.f32 %v4669, %v4789
  %v4798 = vadd.f32 %v4670, %v4789
  %v4799 = vadd.f32 %v4671, %v4789
  %v4800 = vadd.f32 %v4672, %v4789
  %v4801 = vadd.f32 %v4673, %v4789
  %v4802 = vadd.f32 %v4674, %v4789
  %v4803 = vadd.f32 %v4675, %v4789
  %v4804 = vadd.f32 %v4676, %v4789
  %v4805 = vadd.f32 %v4677, %v4789
  %v4806 = vadd.f32 %v4678, %v4789
  %v4807 = vadd.f32 %v4679, %v4789
  %v4808 = vadd.f32 %v4680, %v4789
  %v4809 = vadd.f32 %v4681, %v4789
  %v4810 = vadd.f32 %v4682, %v4789
  %v4811 = vadd.f32 %v4683, %v4789
  %v4812 = vadd.f32 %v4684, %v4789
  %v4813 = vadd.f32 %v4685, %v4789
  %v4814 = vadd.f32 %v4686, %v4789
  %v4815 = vadd.f32 %v4687, %v4789
  %v4816 = vadd.f32 %v4688, %v4789
  %v4817 = vadd.f32 %v4689, %v4789
  %v4818 = vadd.f32 %v4690, %v4789
  %v4819 = vadd.f32 %v4691, %v4789
  %v4820 = vadd.f32 %v4692, %v4789
  %v4821 = vadd.f32 %v4693, %v4789
  %v4822 = vadd.f32 %v4694, %v4789
  %v4823 = vadd.f32 %v4695, %v4789
  %v4824 = vadd.f32 %v4696, %v4789
  %v4825 = vadd.f32 %v4697, %v4789
  %v4826 = vadd.f32 %v4698, %v4789
  %v4827 = vadd.f32 %v4699, %v4789
  %v4828 = vadd.f32 %v4700, %v4789
  %v4829 = vadd.f32 %v4701, %v4789
  %v4830 = vadd.f32 %v4702, %v4789
  %v4831 = vadd.f32 %v4703, %v4789
  %v4832 = vadd.f32 %v4704, %v4789
  %v4833 = vadd.f32 %v4705, %v4789
  %v4834 = vadd.f32 %v4706, %v4789
  %v4835 = vadd.f32 %v4707, %v4789
  %v4836 = vadd.f32 %v4708, %v4789
  %v4837 = vadd.f32 %v4709, %v4789
  %v4838 = vadd.f32 %v4710, %v4789
  %v4839 = vadd.f32 %v4711, %v4789
  %v4840 = vadd.f32 %v4712, %v4789
  %v4841 = vadd.f32 %v4713, %v4789
  %v4842 = vadd.f32 %v4714, %v4789
  %v4843 = vadd.f32 %v4715, %v4789
  %v4844 = vadd.f32 %v4716, %v4789
  %v4845 = vadd.f32 %v4717, %v4789
  %v4846 = vadd.f32 %v4718, %v4789
  %v4847 = vadd.f32 %v4719, %v4789
  %v4848 = vadd.f32 %v4720, %v4789
  %v4849 = vadd.f32 %v4721, %v4789
  %v4850 = vadd.f32 %v4722, %v4789
  %v4851 = vadd.f32 %v4723, %v4789
  %v4852 = vadd.f32 %v4724, %v4789
  %v4853 = vadd.f32 %v4725, %v4789
  %v4854 = vadd.f32 %v4726, %v4789
  %v4855 = vadd.f32 %v4727, %v4789
  %v4856 = vadd.f32 %v4728, %v4789
  %v4857 = vadd.f32 %v4729, %v4789
  %v4858 = vadd.f32 %v4730, %v4789
  %v4859 = vadd.f32 %v4731, %v4789
  %v4860 = vadd.f32 %v4732, %v4789
  %v4861 = vadd.f32 %v4733, %v4789
  %v4862 = vadd.f32 %v4734, %v4789
  %v4863 = vadd.f32 %v4735, %v4789
  %v4864 = vadd.f32 %v4736, %v4789
  %v4865 = vadd.f32 %v4737, %v4789
  %v4866 = vadd.f32 %v4738, %v4789
  %v4867 = vadd.f32 %v4739, %v4789
  %v4868 = vadd.f32 %v4740, %v4789
  %v4869 = vadd.f32 %v4741, %v4789
  %v4870 = vadd.f32 %v4742, %v4789
  %v4871 = vadd.f32 %v4743, %v4789
  %v4872 = vadd.f32 %v4744, %v4789
  %v4873 = vadd.f32 %v4745, %v4789
  %v4874 = vadd.f32 %v4746, %v4789
  %v4875 = vadd.f32 %v4747, %v4789
  %v4876 = vadd.f32 %v4748, %v4789
  %v4877 = vadd.f32 %v4749, %v4789
  %v4878 = vadd.f32 %v4750, %v4789
  %v4879 = vadd.f32 %v4751, %v4789
  %v4880 = vadd.f32 %v4752, %v4789
  %v4881 = vadd.f32 %v4753, %v4789
  %v4882 = vadd.f32 %v4754, %v4789
  %v4883 = vadd.f32 %v4755, %v4789
  %v4884 = vadd.f32 %v4756, %v4789
  %v4885 = vadd.f32 %v4757, %v4789
  %v4886 = vadd.f32 %v4758, %v4789
  %v4887 = vadd.f32 %v4759, %v4789
  %v4888 = vadd.f32 %v4760, %v4789
  %v4889 = vadd.f32 %v4761, %v4789
  %v4890 = vadd.f32 %v4762, %v4789
  %v4891 = vadd.f32 %v4763, %v4789
  %v4892 = vadd.f32 %v4764, %v4789
  %v4893 = vadd.f32 %v4765, %v4789
  %v4894 = vadd.f32 %v4766, %v4789
  %v4895 = vadd.f32 %v4767, %v4789
  %v4896 = vadd.f32 %v4768, %v4789
  %v4897 = vadd.f32 %v4769, %v4789
  %v4898 = vadd.f32 %v4770, %v4789
  %v4899 = vadd.f32 %v4771, %v4789
  %v4900 = vadd.f32 %v4772, %v4789
  %v4901 = vadd.f32 %v4773, %v4789
  %v4902 = vadd.f32 %v4774, %v4789
  %v4903 = vadd.f32 %v4775, %v4789
  %v4904 = vadd.f32 %v4776, %v4789
  %v4905 = vadd.f32 %v4777, %v4789
  %v4906 = vadd.f32 %v4778, %v4789
  %v4907 = vadd.f32 %v4779, %v4789
  %v4908 = vadd.f32 %v4780, %v4789
  %v4909 = vadd.f32 %v4781, %v4789
  %v4910 = vadd.f32 %v4782, %v4789
  %v4911 = vadd.f32 %v4783, %v4789
  %v4912 = vmax.f32 %v4791, 0.0
  %v4913 = vmax.f32 %v4792, 0.0
  %v4914 = vmax.f32 %v4793, 0.0
  %v4915 = vmax.f32 %v4794, 0.0
  %v4916 = vmax.f32 %v4795, 0.0
  %v4917 = vmax.f32 %v4796, 0.0
  %v4918 = vmax.f32 %v4797, 0.0
  %v4919 = vmax.f32 %v4798, 0.0
  %v4920 = vmax.f32 %v4799, 0.0
  %v4921 = vmax.f32 %v4800, 0.0
  %v4922 = vmax.f32 %v4801, 0.0
  %v4923 = vmax.f32 %v4802, 0.0
  %v4924 = vmax.f32 %v4803, 0.0
  %v4925 = vmax.f32 %v4804, 0.0
  %v4926 = vmax.f32 %v4805, 0.0
  %v4927 = vmax.f32 %v4806, 0.0
  %v4928 = vmax.f32 %v4807, 0.0
  %v4929 = vmax.f32 %v4808, 0.0
  %v4930 = vmax.f32 %v4809, 0.0
  %v4931 = vmax.f32 %v4810, 0.0
  %v4932 = vmax.f32 %v4811, 0.0
  %v4933 = vmax.f32 %v4812, 0.0
  %v4934 = vmax.f32 %v4813, 0.0
  %v4935 = vmax.f32 %v4814, 0.0
  %v4936 = vmax.f32 %v4815, 0.0
  %v4937 = vmax.f32 %v4816, 0.0
  %v4938 = vmax.f32 %v4817, 0.0
  %v4939 = vmax.f32 %v4818, 0.0
  %v4940 = vmax.f32 %v4819, 0.0
  %v4941 = vmax.f32 %v4820, 0.0
  %v4942 = vmax.f32 %v4821, 0.0
  %v4943 = vmax.f32 %v4822, 0.0
  %v4944 = vmax.f32 %v4823, 0.0
  %v4945 = vmax.f32 %v4824, 0.0
  %v4946 = vmax.f32 %v4825, 0.0
  %v4947 = vmax.f32 %v4826, 0.0
  %v4948 = vmax.f32 %v4827, 0.0
  %v4949 = vmax.f32 %v4828, 0.0
  %v4950 = vmax.f32 %v4829, 0.0
  %v4951 = vmax.f32 %v4830, 0.0
  %v4952 = vmax.f32 %v4831, 0.0
  %v4953 = vmax.f32 %v4832, 0.0
  %v4954 = vmax.f32 %v4833, 0.0
  %v4955 = vmax.f32 %v4834, 0.0
  %v4956 = vmax.f32 %v4835, 0.0
  %v4957 = vmax.f32 %v4836, 0.0
  %v4958 = vmax.f32 %v4837, 0.0
  %v4959 = vmax.f32 %v4838, 0.0
  %v4960 = vmax.f32 %v4839, 0.0
  %v4961 = vmax.f32 %v4840, 0.0
  %v4962 = vmax.f32 %v4841, 0.0
  %v4963 = vmax.f32 %v4842, 0.0
  %v4964 = vmax.f32 %v4843, 0.0
  %v4965 = vmax.f32 %v4844, 0.0
  %v4966 = vmax.f32 %v4845, 0.0
  %v4967 = vmax.f32 %v4846, 0.0
  %v4968 = vmax.f32 %v4847, 0.0
  %v4969 = vmax.f32 %v4848, 0.0
  %v4970 = vmax.f32 %v4849, 0.0
  %v4971 = vmax.f32 %v4850, 0.0
  %v4972 = vmax.f32 %v4851, 0.0
  %v4973 = vmax.f32 %v4852, 0.0
  %v4974 = vmax.f32 %v4853, 0.0
  %v4975 = vmax.f32 %v4854, 0.0
  %v4976 = vmax.f32 %v4855, 0.0
  %v4977 = vmax.f32 %v4856, 0.0
  %v4978 = vmax.f32 %v4857, 0.0
  %v4979 = vmax.f32 %v4858, 0.0
  %v4980 = vmax.f32 %v4859, 0.0
  %v4981 = vmax.f32 %v4860, 0.0
  %v4982 = vmax.f32 %v4861, 0.0
  %v4983 = vmax.f32 %v4862, 0.0
  %v4984 = vmax.f32 %v4863, 0.0
  %v4985 = vmax.f32 %v4864, 0.0
  %v4986 = vmax.f32 %v4865, 0.0
  %v4987 = vmax.f32 %v4866, 0.0
  %v4988 = vmax.f32 %v4867, 0.0
  %v4989 = vmax.f32 %v4868, 0.0
  %v4990 = vmax.f32 %v4869, 0.0
  %v4991 = vmax.f32 %v4870, 0.0
  %v4992 = vmax.f32 %v4871, 0.0
  %v4993 = vmax.f32 %v4872, 0.0
  %v4994 = vmax.f32 %v4873, 0.0
  %v4995 = vmax.f32 %v4874, 0.0
  %v4996 = vmax.f32 %v4875, 0.0
  %v4997 = vmax.f32 %v4876, 0.0
  %v4998 = vmax.f32 %v4877, 0.0
  %v4999 = vmax.f32 %v4878, 0.0
  %v5000 = vmax.f32 %v4879, 0.0
  %v5001 = vmax.f32 %v4880, 0.0
  %v5002 = vmax.f32 %v4881, 0.0
  %v5003 = vmax.f32 %v4882, 0.0
  %v5004 = vmax.f32 %v4883, 0.0
  %v5005 = vmax.f32 %v4884, 0.0
  %v5006 = vmax.f32 %v4885, 0.0
  %v5007 = vmax.f32 %v4886, 0.0
  %v5008 = vmax.f32 %v4887, 0.0
  %v5009 = vmax.f32 %v4888, 0.0
  %v5010 = vmax.f32 %v4889, 0.0
  %v5011 = vmax.f32 %v4890, 0.0
  %v5012 = vmax.f32 %v4891, 0.0
  %v5013 = vmax.f32 %v4892, 0.0
  %v5014 = vmax.f32 %v4893, 0.0
  %v5015 = vmax.f32 %v4894, 0.0
  %v5016 = vmax.f32 %v4895, 0.0
  %v5017 = vmax.f32 %v4896, 0.0
  %v5018 = vmax.f32 %v4897, 0.0
  %v5019 = vmax.f32 %v4898, 0.0
  %v5020 = vmax.f32 %v4899, 0.0
  %v5021 = vmax.f32 %v4900, 0.0
  %v5022 = vmax.f32 %v4901, 0.0
  %v5023 = vmax.f32 %v4902, 0.0
  %v5024 = vmax.f32 %v4903, 0.0
  %v5025 = vmax.f32 %v4904, 0.0
  %v5026 = vmax.f32 %v4905, 0.0
  %v5027 = vmax.f32 %v4906, 0.0
  %v5028 = vmax.f32 %v4907, 0.0
  %v5029 = vmax.f32 %v4908, 0.0
  %v5030 = vmax.f32 %v4909, 0.0
  %v5031 = vmax.f32 %v4910, 0.0
  %v5032 = vmax.f32 %v4911, 0.0
  %v5033 = vpack.c.bf16 %v4913, %v4912
  %v5034 = vpack.c.bf16 %v4915, %v4914
  %v5035 = vpack.c.bf16 %v4917, %v4916
  %v5036 = vpack.c.bf16 %v4919, %v4918
  %v5037 = vpack.c.bf16 %v4921, %v4920
  %v5038 = vpack.c.bf16 %v4923, %v4922
  %v5039 = vpack.c.bf16 %v4925, %v4924
  %v5040 = vpack.c.bf16 %v4927, %v4926
  %v5041 = vpack.c.bf16 %v4929, %v4928
  %v5042 = vpack.c.bf16 %v4931, %v4930
  %v5043 = vpack.c.bf16 %v4933, %v4932
  %v5044 = vpack.c.bf16 %v4935, %v4934
  %v5045 = vpack.c.bf16 %v4937, %v4936
  %v5046 = vpack.c.bf16 %v4939, %v4938
  %v5047 = vpack.c.bf16 %v4941, %v4940
  %v5048 = vpack.c.bf16 %v4943, %v4942
  %v5049 = vpack.c.bf16 %v4945, %v4944
  %v5050 = vpack.c.bf16 %v4947, %v4946
  %v5051 = vpack.c.bf16 %v4949, %v4948
  %v5052 = vpack.c.bf16 %v4951, %v4950
  %v5053 = vpack.c.bf16 %v4953, %v4952
  %v5054 = vpack.c.bf16 %v4955, %v4954
  %v5055 = vpack.c.bf16 %v4957, %v4956
  %v5056 = vpack.c.bf16 %v4959, %v4958
  %v5057 = vpack.c.bf16 %v4961, %v4960
  %v5058 = vpack.c.bf16 %v4963, %v4962
  %v5059 = vpack.c.bf16 %v4965, %v4964
  %v5060 = vpack.c.bf16 %v4967, %v4966
  %v5061 = vpack.c.bf16 %v4969, %v4968
  %v5062 = vpack.c.bf16 %v4971, %v4970
  %v5063 = vpack.c.bf16 %v4973, %v4972
  %v5064 = vpack.c.bf16 %v4975, %v4974
  %v5065 = vpack.c.bf16 %v4977, %v4976
  %v5066 = vpack.c.bf16 %v4979, %v4978
  %v5067 = vpack.c.bf16 %v4981, %v4980
  %v5068 = vpack.c.bf16 %v4983, %v4982
  %v5069 = vpack.c.bf16 %v4985, %v4984
  %v5070 = vpack.c.bf16 %v4987, %v4986
  %v5071 = vpack.c.bf16 %v4989, %v4988
  %v5072 = vpack.c.bf16 %v4991, %v4990
  %v5073 = vpack.c.bf16 %v4993, %v4992
  %v5074 = vpack.c.bf16 %v4995, %v4994
  %v5075 = vpack.c.bf16 %v4997, %v4996
  %v5076 = vpack.c.bf16 %v4999, %v4998
  %v5077 = vpack.c.bf16 %v5001, %v5000
  %v5078 = vpack.c.bf16 %v5003, %v5002
  %v5079 = vpack.c.bf16 %v5005, %v5004
  %v5080 = vpack.c.bf16 %v5007, %v5006
  %v5081 = vpack.c.bf16 %v5009, %v5008
  %v5082 = vpack.c.bf16 %v5011, %v5010
  %v5083 = vpack.c.bf16 %v5013, %v5012
  %v5084 = vpack.c.bf16 %v5015, %v5014
  %v5085 = vpack.c.bf16 %v5017, %v5016
  %v5086 = vpack.c.bf16 %v5019, %v5018
  %v5087 = vpack.c.bf16 %v5021, %v5020
  %v5088 = vpack.c.bf16 %v5023, %v5022
  %v5089 = vpack.c.bf16 %v5025, %v5024
  %v5090 = vpack.c.bf16 %v5027, %v5026
  %v5091 = vpack.c.bf16 %v5029, %v5028
  %v5092 = vpack.c.bf16 %v5031, %v5030
  %v5093 = vpack.c.bf16 %v5032, %v5032
  %v5155 = vunpack.c.l.b16 %v5033
  %v5156 = vunpack.c.h.b16 %v5033
  %v5157 = vunpack.c.l.b16 %v5034
  %v5158 = vunpack.c.h.b16 %v5034
  %v5159 = vunpack.c.l.b16 %v5035
  %v5160 = vunpack.c.h.b16 %v5035
  %v5161 = vunpack.c.l.b16 %v5036
  %v5162 = vunpack.c.h.b16 %v5036
  %v5163 = vunpack.c.l.b16 %v5037
  %v5164 = vunpack.c.h.b16 %v5037
  %v5165 = vunpack.c.l.b16 %v5038
  %v5166 = vunpack.c.h.b16 %v5038
  %v5167 = vunpack.c.l.b16 %v5039
  %v5168 = vunpack.c.h.b16 %v5039
  %v5169 = vunpack.c.l.b16 %v5040
  %v5170 = vunpack.c.h.b16 %v5040
  %v5171 = vunpack.c.l.b16 %v5041
  %v5172 = vunpack.c.h.b16 %v5041
  %v5173 = vunpack.c.l.b16 %v5042
  %v5174 = vunpack.c.h.b16 %v5042
  %v5175 = vunpack.c.l.b16 %v5043
  %v5176 = vunpack.c.h.b16 %v5043
  %v5177 = vunpack.c.l.b16 %v5044
  %v5178 = vunpack.c.h.b16 %v5044
  %v5179 = vunpack.c.l.b16 %v5045
  %v5180 = vunpack.c.h.b16 %v5045
  %v5181 = vunpack.c.l.b16 %v5046
  %v5182 = vunpack.c.h.b16 %v5046
  %v5183 = vunpack.c.l.b16 %v5047
  %v5184 = vunpack.c.h.b16 %v5047
  %v5185 = vunpack.c.l.b16 %v5048
  %v5186 = vunpack.c.h.b16 %v5048
  %v5187 = vunpack.c.l.b16 %v5049
  %v5188 = vunpack.c.h.b16 %v5049
  %v5189 = vunpack.c.l.b16 %v5050
  %v5190 = vunpack.c.h.b16 %v5050
  %v5191 = vunpack.c.l.b16 %v5051
  %v5192 = vunpack.c.h.b16 %v5051
  %v5193 = vunpack.c.l.b16 %v5052
  %v5194 = vunpack.c.h.b16 %v5052
  %v5195 = vunpack.c.l.b16 %v5053
  %v5196 = vunpack.c.h.b16 %v5053
  %v5197 = vunpack.c.l.b16 %v5054
  %v5198 = vunpack.c.h.b16 %v5054
  %v5199 = vunpack.c.l.b16 %v5055
  %v5200 = vunpack.c.h.b16 %v5055
  %v5201 = vunpack.c.l.b16 %v5056
  %v5202 = vunpack.c.h.b16 %v5056
  %v5203 = vunpack.c.l.b16 %v5057
  %v5204 = vunpack.c.h.b16 %v5057
  %v5205 = vunpack.c.l.b16 %v5058
  %v5206 = vunpack.c.h.b16 %v5058
  %v5207 = vunpack.c.l.b16 %v5059
  %v5208 = vunpack.c.h.b16 %v5059
  %v5209 = vunpack.c.l.b16 %v5060
  %v5210 = vunpack.c.h.b16 %v5060
  %v5211 = vunpack.c.l.b16 %v5061
  %v5212 = vunpack.c.h.b16 %v5061
  %v5213 = vunpack.c.l.b16 %v5062
  %v5214 = vunpack.c.h.b16 %v5062
  %v5215 = vunpack.c.l.b16 %v5063
  %v5216 = vunpack.c.h.b16 %v5063
  %v5217 = vunpack.c.l.b16 %v5064
  %v5218 = vunpack.c.h.b16 %v5064
  %v5219 = vunpack.c.l.b16 %v5065
  %v5220 = vunpack.c.h.b16 %v5065
  %v5221 = vunpack.c.l.b16 %v5066
  %v5222 = vunpack.c.h.b16 %v5066
  %v5223 = vunpack.c.l.b16 %v5067
  %v5224 = vunpack.c.h.b16 %v5067
  %v5225 = vunpack.c.l.b16 %v5068
  %v5226 = vunpack.c.h.b16 %v5068
  %v5227 = vunpack.c.l.b16 %v5069
  %v5228 = vunpack.c.h.b16 %v5069
  %v5229 = vunpack.c.l.b16 %v5070
  %v5230 = vunpack.c.h.b16 %v5070
  %v5231 = vunpack.c.l.b16 %v5071
  %v5232 = vunpack.c.h.b16 %v5071
  %v5233 = vunpack.c.l.b16 %v5072
  %v5234 = vunpack.c.h.b16 %v5072
  %v5235 = vunpack.c.l.b16 %v5073
  %v5236 = vunpack.c.h.b16 %v5073
  %v5237 = vunpack.c.l.b16 %v5074
  %v5238 = vunpack.c.h.b16 %v5074
  %v5239 = vunpack.c.l.b16 %v5075
  %v5240 = vunpack.c.h.b16 %v5075
  %v5241 = vunpack.c.l.b16 %v5076
  %v5242 = vunpack.c.h.b16 %v5076
  %v5243 = vunpack.c.l.b16 %v5077
  %v5244 = vunpack.c.h.b16 %v5077
  %v5245 = vunpack.c.l.b16 %v5078
  %v5246 = vunpack.c.h.b16 %v5078
  %v5247 = vunpack.c.l.b16 %v5079
  %v5248 = vunpack.c.h.b16 %v5079
  %v5249 = vunpack.c.l.b16 %v5080
  %v5250 = vunpack.c.h.b16 %v5080
  %v5251 = vunpack.c.l.b16 %v5081
  %v5252 = vunpack.c.h.b16 %v5081
  %v5253 = vunpack.c.l.b16 %v5082
  %v5254 = vunpack.c.h.b16 %v5082
  %v5255 = vunpack.c.l.b16 %v5083
  %v5256 = vunpack.c.h.b16 %v5083
  %v5257 = vunpack.c.l.b16 %v5084
  %v5258 = vunpack.c.h.b16 %v5084
  %v5259 = vunpack.c.l.b16 %v5085
  %v5260 = vunpack.c.h.b16 %v5085
  %v5261 = vunpack.c.l.b16 %v5086
  %v5262 = vunpack.c.h.b16 %v5086
  %v5263 = vunpack.c.l.b16 %v5087
  %v5264 = vunpack.c.h.b16 %v5087
  %v5265 = vunpack.c.l.b16 %v5088
  %v5266 = vunpack.c.h.b16 %v5088
  %v5267 = vunpack.c.l.b16 %v5089
  %v5268 = vunpack.c.h.b16 %v5089
  %v5269 = vunpack.c.l.b16 %v5090
  %v5270 = vunpack.c.h.b16 %v5090
  %v5271 = vunpack.c.l.b16 %v5091
  %v5272 = vunpack.c.h.b16 %v5091
  %v5273 = vunpack.c.l.b16 %v5092
  %v5274 = vunpack.c.h.b16 %v5092
  %v5275 = vunpack.c.l.b16 %v5093
  %v5276 = vpack.c.b16 %v5155, %v5155
  %v5277 = vpack.c.b16 %v5156, %v5156
  %v5278 = vpack.c.b16 %v5157, %v5157
  %v5279 = vpack.c.b16 %v5158, %v5158
  %v5280 = vpack.c.b16 %v5159, %v5159
  %v5281 = vpack.c.b16 %v5160, %v5160
  %v5282 = vpack.c.b16 %v5161, %v5161
  %v5283 = vpack.c.b16 %v5162, %v5162
  %v5284 = vpack.c.b16 %v5163, %v5163
  %v5285 = vpack.c.b16 %v5164, %v5164
  %v5286 = vpack.c.b16 %v5165, %v5165
  %v5287 = vpack.c.b16 %v5166, %v5166
  %v5288 = vpack.c.b16 %v5167, %v5167
  %v5289 = vpack.c.b16 %v5168, %v5168
  %v5290 = vpack.c.b16 %v5169, %v5169
  %v5291 = vpack.c.b16 %v5170, %v5170
  %v5292 = vpack.c.b16 %v5171, %v5171
  %v5293 = vpack.c.b16 %v5172, %v5172
  %v5294 = vpack.c.b16 %v5173, %v5173
  %v5295 = vpack.c.b16 %v5174, %v5174
  %v5296 = vpack.c.b16 %v5175, %v5175
  %v5297 = vpack.c.b16 %v5176, %v5176
  %v5298 = vpack.c.b16 %v5177, %v5177
  %v5299 = vpack.c.b16 %v5178, %v5178
  %v5300 = vpack.c.b16 %v5179, %v5179
  %v5301 = vpack.c.b16 %v5180, %v5180
  %v5302 = vpack.c.b16 %v5181, %v5181
  %v5303 = vpack.c.b16 %v5182, %v5182
  %v5304 = vpack.c.b16 %v5183, %v5183
  %v5305 = vpack.c.b16 %v5184, %v5184
  %v5306 = vpack.c.b16 %v5185, %v5185
  %v5307 = vpack.c.b16 %v5186, %v5186
  %v5308 = vpack.c.b16 %v5187, %v5187
  %v5309 = vpack.c.b16 %v5188, %v5188
  %v5310 = vpack.c.b16 %v5189, %v5189
  %v5311 = vpack.c.b16 %v5190, %v5190
  %v5312 = vpack.c.b16 %v5191, %v5191
  %v5313 = vpack.c.b16 %v5192, %v5192
  %v5314 = vpack.c.b16 %v5193, %v5193
  %v5315 = vpack.c.b16 %v5194, %v5194
  %v5316 = vpack.c.b16 %v5195, %v5195
  %v5317 = vpack.c.b16 %v5196, %v5196
  %v5318 = vpack.c.b16 %v5197, %v5197
  %v5319 = vpack.c.b16 %v5198, %v5198
  %v5320 = vpack.c.b16 %v5199, %v5199
  %v5321 = vpack.c.b16 %v5200, %v5200
  %v5322 = vpack.c.b16 %v5201, %v5201
  %v5323 = vpack.c.b16 %v5202, %v5202
  %v5324 = vpack.c.b16 %v5203, %v5203
  %v5325 = vpack.c.b16 %v5204, %v5204
  %v5326 = vpack.c.b16 %v5205, %v5205
  %v5327 = vpack.c.b16 %v5206, %v5206
  %v5328 = vpack.c.b16 %v5207, %v5207
  %v5329 = vpack.c.b16 %v5208, %v5208
  %v5330 = vpack.c.b16 %v5209, %v5209
  %v5331 = vpack.c.b16 %v5210, %v5210
  %v5332 = vpack.c.b16 %v5211, %v5211
  %v5333 = vpack.c.b16 %v5212, %v5212
  %v5334 = vpack.c.b16 %v5213, %v5213
  %v5335 = vpack.c.b16 %v5214, %v5214
  %v5336 = vpack.c.b16 %v5215, %v5215
  %v5337 = vpack.c.b16 %v5216, %v5216
  %v5338 = vpack.c.b16 %v5217, %v5217
  %v5339 = vpack.c.b16 %v5218, %v5218
  %v5340 = vpack.c.b16 %v5219, %v5219
  %v5341 = vpack.c.b16 %v5220, %v5220
  %v5342 = vpack.c.b16 %v5221, %v5221
  %v5343 = vpack.c.b16 %v5222, %v5222
  %v5344 = vpack.c.b16 %v5223, %v5223
  %v5345 = vpack.c.b16 %v5224, %v5224
  %v5346 = vpack.c.b16 %v5225, %v5225
  %v5347 = vpack.c.b16 %v5226, %v5226
  %v5348 = vpack.c.b16 %v5227, %v5227
  %v5349 = vpack.c.b16 %v5228, %v5228
  %v5350 = vpack.c.b16 %v5229, %v5229
  %v5351 = vpack.c.b16 %v5230, %v5230
  %v5352 = vpack.c.b16 %v5231, %v5231
  %v5353 = vpack.c.b16 %v5232, %v5232
  %v5354 = vpack.c.b16 %v5233, %v5233
  %v5355 = vpack.c.b16 %v5234, %v5234
  %v5356 = vpack.c.b16 %v5235, %v5235
  %v5357 = vpack.c.b16 %v5236, %v5236
  %v5358 = vpack.c.b16 %v5237, %v5237
  %v5359 = vpack.c.b16 %v5238, %v5238
  %v5360 = vpack.c.b16 %v5239, %v5239
  %v5361 = vpack.c.b16 %v5240, %v5240
  %v5362 = vpack.c.b16 %v5241, %v5241
  %v5363 = vpack.c.b16 %v5242, %v5242
  %v5364 = vpack.c.b16 %v5243, %v5243
  %v5365 = vpack.c.b16 %v5244, %v5244
  %v5366 = vpack.c.b16 %v5245, %v5245
  %v5367 = vpack.c.b16 %v5246, %v5246
  %v5368 = vpack.c.b16 %v5247, %v5247
  %v5369 = vpack.c.b16 %v5248, %v5248
  %v5370 = vpack.c.b16 %v5249, %v5249
  %v5371 = vpack.c.b16 %v5250, %v5250
  %v5372 = vpack.c.b16 %v5251, %v5251
  %v5373 = vpack.c.b16 %v5252, %v5252
  %v5374 = vpack.c.b16 %v5253, %v5253
  %v5375 = vpack.c.b16 %v5254, %v5254
  %v5376 = vpack.c.b16 %v5255, %v5255
  %v5377 = vpack.c.b16 %v5256, %v5256
  %v5378 = vpack.c.b16 %v5257, %v5257
  %v5379 = vpack.c.b16 %v5258, %v5258
  %v5380 = vpack.c.b16 %v5259, %v5259
  %v5381 = vpack.c.b16 %v5260, %v5260
  %v5382 = vpack.c.b16 %v5261, %v5261
  %v5383 = vpack.c.b16 %v5262, %v5262
  %v5384 = vpack.c.b16 %v5263, %v5263
  %v5385 = vpack.c.b16 %v5264, %v5264
  %v5386 = vpack.c.b16 %v5265, %v5265
  %v5387 = vpack.c.b16 %v5266, %v5266
  %v5388 = vpack.c.b16 %v5267, %v5267
  %v5389 = vpack.c.b16 %v5268, %v5268
  %v5390 = vpack.c.b16 %v5269, %v5269
  %v5391 = vpack.c.b16 %v5270, %v5270
  %v5392 = vpack.c.b16 %v5271, %v5271
  %v5393 = vpack.c.b16 %v5272, %v5272
  %v5394 = vpack.c.b16 %v5273, %v5273
  %v5395 = vpack.c.b16 %v5274, %v5274
  %v5396 = vpack.c.b16 %v5275, %v5275
  %vm5518 = vcmask 257024
  %5519 = vst.msk [vmem:[%s3] sm:$0xf] %vm5518, %v5276
  %5520 = vst.msk [vmem:[%s3 + $0x4] sm:$0xf] %vm5518, %v5277
  %5521 = vst.msk [vmem:[%s3 + $0x8] sm:$0xf] %vm5518, %v5278
  %5522 = vst.msk [vmem:[%s3 + $0xc] sm:$0xf] %vm5518, %v5279
  %5523 = vst.msk [vmem:[%s3 + $0x10] sm:$0xf] %vm5518, %v5280
  %5524 = vst.msk [vmem:[%s3 + $0x14] sm:$0xf] %vm5518, %v5281
  %5525 = vst.msk [vmem:[%s3 + $0x18] sm:$0xf] %vm5518, %v5282
  %5526 = vst.msk [vmem:[%s3 + $0x1c] sm:$0xf] %vm5518, %v5283
  %5527 = vst.msk [vmem:[%s3 + $0x20] sm:$0xf] %vm5518, %v5284
  %5528 = vst.msk [vmem:[%s3 + $0x24] sm:$0xf] %vm5518, %v5285
  %5529 = vst.msk [vmem:[%s3 + $0x28] sm:$0xf] %vm5518, %v5286
  %5530 = vst.msk [vmem:[%s3 + $0x2c] sm:$0xf] %vm5518, %v5287
  %5531 = vst.msk [vmem:[%s3 + $0x30] sm:$0xf] %vm5518, %v5288
  %5532 = vst.msk [vmem:[%s3 + $0x34] sm:$0xf] %vm5518, %v5289
  %5533 = vst.msk [vmem:[%s3 + $0x38] sm:$0xf] %vm5518, %v5290
  %5534 = vst.msk [vmem:[%s3 + $0x3c] sm:$0xf] %vm5518, %v5291
  %5535 = vst.msk [vmem:[%s3 + $0x40] sm:$0xf] %vm5518, %v5292
  %5536 = vst.msk [vmem:[%s3 + $0x44] sm:$0xf] %vm5518, %v5293
  %5537 = vst.msk [vmem:[%s3 + $0x48] sm:$0xf] %vm5518, %v5294
  %5538 = vst.msk [vmem:[%s3 + $0x4c] sm:$0xf] %vm5518, %v5295
  %5539 = vst.msk [vmem:[%s3 + $0x50] sm:$0xf] %vm5518, %v5296
  %5540 = vst.msk [vmem:[%s3 + $0x54] sm:$0xf] %vm5518, %v5297
  %5541 = vst.msk [vmem:[%s3 + $0x58] sm:$0xf] %vm5518, %v5298
  %5542 = vst.msk [vmem:[%s3 + $0x5c] sm:$0xf] %vm5518, %v5299
  %5543 = vst.msk [vmem:[%s3 + $0x60] sm:$0xf] %vm5518, %v5300
  %5544 = vst.msk [vmem:[%s3 + $0x64] sm:$0xf] %vm5518, %v5301
  %5545 = vst.msk [vmem:[%s3 + $0x68] sm:$0xf] %vm5518, %v5302
  %5546 = vst.msk [vmem:[%s3 + $0x6c] sm:$0xf] %vm5518, %v5303
  %5547 = vst.msk [vmem:[%s3 + $0x70] sm:$0xf] %vm5518, %v5304
  %5548 = vst.msk [vmem:[%s3 + $0x74] sm:$0xf] %vm5518, %v5305
  %5549 = vst.msk [vmem:[%s3 + $0x78] sm:$0xf] %vm5518, %v5306
  %5550 = vst.msk [vmem:[%s3 + $0x7c] sm:$0xf] %vm5518, %v5307
  %5551 = vst.msk [vmem:[%s3 + $0x80] sm:$0xf] %vm5518, %v5308
  %5552 = vst.msk [vmem:[%s3 + $0x84] sm:$0xf] %vm5518, %v5309
  %5553 = vst.msk [vmem:[%s3 + $0x88] sm:$0xf] %vm5518, %v5310
  %5554 = vst.msk [vmem:[%s3 + $0x8c] sm:$0xf] %vm5518, %v5311
  %5555 = vst.msk [vmem:[%s3 + $0x90] sm:$0xf] %vm5518, %v5312
  %5556 = vst.msk [vmem:[%s3 + $0x94] sm:$0xf] %vm5518, %v5313
  %5557 = vst.msk [vmem:[%s3 + $0x98] sm:$0xf] %vm5518, %v5314
  %5558 = vst.msk [vmem:[%s3 + $0x9c] sm:$0xf] %vm5518, %v5315
  %5559 = vst.msk [vmem:[%s3 + $0xa0] sm:$0xf] %vm5518, %v5316
  %5560 = vst.msk [vmem:[%s3 + $0xa4] sm:$0xf] %vm5518, %v5317
  %5561 = vst.msk [vmem:[%s3 + $0xa8] sm:$0xf] %vm5518, %v5318
  %5562 = vst.msk [vmem:[%s3 + $0xac] sm:$0xf] %vm5518, %v5319
  %5563 = vst.msk [vmem:[%s3 + $0xb0] sm:$0xf] %vm5518, %v5320
  %5564 = vst.msk [vmem:[%s3 + $0xb4] sm:$0xf] %vm5518, %v5321
  %5565 = vst.msk [vmem:[%s3 + $0xb8] sm:$0xf] %vm5518, %v5322
  %5566 = vst.msk [vmem:[%s3 + $0xbc] sm:$0xf] %vm5518, %v5323
  %5567 = vst.msk [vmem:[%s3 + $0xc0] sm:$0xf] %vm5518, %v5324
  %5568 = vst.msk [vmem:[%s3 + $0xc4] sm:$0xf] %vm5518, %v5325
  %5569 = vst.msk [vmem:[%s3 + $0xc8] sm:$0xf] %vm5518, %v5326
  %5570 = vst.msk [vmem:[%s3 + $0xcc] sm:$0xf] %vm5518, %v5327
  %5571 = vst.msk [vmem:[%s3 + $0xd0] sm:$0xf] %vm5518, %v5328
  %5572 = vst.msk [vmem:[%s3 + $0xd4] sm:$0xf] %vm5518, %v5329
  %5573 = vst.msk [vmem:[%s3 + $0xd8] sm:$0xf] %vm5518, %v5330
  %5574 = vst.msk [vmem:[%s3 + $0xdc] sm:$0xf] %vm5518, %v5331
  %5575 = vst.msk [vmem:[%s3 + $0xe0] sm:$0xf] %vm5518, %v5332
  %5576 = vst.msk [vmem:[%s3 + $0xe4] sm:$0xf] %vm5518, %v5333
  %5577 = vst.msk [vmem:[%s3 + $0xe8] sm:$0xf] %vm5518, %v5334
  %5578 = vst.msk [vmem:[%s3 + $0xec] sm:$0xf] %vm5518, %v5335
  %5579 = vst.msk [vmem:[%s3 + $0xf0] sm:$0xf] %vm5518, %v5336
  %5580 = vst.msk [vmem:[%s3 + $0xf4] sm:$0xf] %vm5518, %v5337
  %5581 = vst.msk [vmem:[%s3 + $0xf8] sm:$0xf] %vm5518, %v5338
  %5582 = vst.msk [vmem:[%s3 + $0xfc] sm:$0xf] %vm5518, %v5339
  %5583 = vst.msk [vmem:[%s3 + $0x100] sm:$0xf] %vm5518, %v5340
  %5584 = vst.msk [vmem:[%s3 + $0x104] sm:$0xf] %vm5518, %v5341
  %5585 = vst.msk [vmem:[%s3 + $0x108] sm:$0xf] %vm5518, %v5342
  %5586 = vst.msk [vmem:[%s3 + $0x10c] sm:$0xf] %vm5518, %v5343
  %5587 = vst.msk [vmem:[%s3 + $0x110] sm:$0xf] %vm5518, %v5344
  %5588 = vst.msk [vmem:[%s3 + $0x114] sm:$0xf] %vm5518, %v5345
  %5589 = vst.msk [vmem:[%s3 + $0x118] sm:$0xf] %vm5518, %v5346
  %5590 = vst.msk [vmem:[%s3 + $0x11c] sm:$0xf] %vm5518, %v5347
  %5591 = vst.msk [vmem:[%s3 + $0x120] sm:$0xf] %vm5518, %v5348
  %5592 = vst.msk [vmem:[%s3 + $0x124] sm:$0xf] %vm5518, %v5349
  %5593 = vst.msk [vmem:[%s3 + $0x128] sm:$0xf] %vm5518, %v5350
  %5594 = vst.msk [vmem:[%s3 + $0x12c] sm:$0xf] %vm5518, %v5351
  %5595 = vst.msk [vmem:[%s3 + $0x130] sm:$0xf] %vm5518, %v5352
  %5596 = vst.msk [vmem:[%s3 + $0x134] sm:$0xf] %vm5518, %v5353
  %5597 = vst.msk [vmem:[%s3 + $0x138] sm:$0xf] %vm5518, %v5354
  %5598 = vst.msk [vmem:[%s3 + $0x13c] sm:$0xf] %vm5518, %v5355
  %5599 = vst.msk [vmem:[%s3 + $0x140] sm:$0xf] %vm5518, %v5356
  %5600 = vst.msk [vmem:[%s3 + $0x144] sm:$0xf] %vm5518, %v5357
  %5601 = vst.msk [vmem:[%s3 + $0x148] sm:$0xf] %vm5518, %v5358
  %5602 = vst.msk [vmem:[%s3 + $0x14c] sm:$0xf] %vm5518, %v5359
  %5603 = vst.msk [vmem:[%s3 + $0x150] sm:$0xf] %vm5518, %v5360
  %5604 = vst.msk [vmem:[%s3 + $0x154] sm:$0xf] %vm5518, %v5361
  %5605 = vst.msk [vmem:[%s3 + $0x158] sm:$0xf] %vm5518, %v5362
  %5606 = vst.msk [vmem:[%s3 + $0x15c] sm:$0xf] %vm5518, %v5363
  %5607 = vst.msk [vmem:[%s3 + $0x160] sm:$0xf] %vm5518, %v5364
  %5608 = vst.msk [vmem:[%s3 + $0x164] sm:$0xf] %vm5518, %v5365
  %5609 = vst.msk [vmem:[%s3 + $0x168] sm:$0xf] %vm5518, %v5366
  %5610 = vst.msk [vmem:[%s3 + $0x16c] sm:$0xf] %vm5518, %v5367
  %5611 = vst.msk [vmem:[%s3 + $0x170] sm:$0xf] %vm5518, %v5368
  %5612 = vst.msk [vmem:[%s3 + $0x174] sm:$0xf] %vm5518, %v5369
  %5613 = vst.msk [vmem:[%s3 + $0x178] sm:$0xf] %vm5518, %v5370
  %5614 = vst.msk [vmem:[%s3 + $0x17c] sm:$0xf] %vm5518, %v5371
  %5615 = vst.msk [vmem:[%s3 + $0x180] sm:$0xf] %vm5518, %v5372
  %5616 = vst.msk [vmem:[%s3 + $0x184] sm:$0xf] %vm5518, %v5373
  %5617 = vst.msk [vmem:[%s3 + $0x188] sm:$0xf] %vm5518, %v5374
  %5618 = vst.msk [vmem:[%s3 + $0x18c] sm:$0xf] %vm5518, %v5375
  %5619 = vst.msk [vmem:[%s3 + $0x190] sm:$0xf] %vm5518, %v5376
  %5620 = vst.msk [vmem:[%s3 + $0x194] sm:$0xf] %vm5518, %v5377
  %5621 = vst.msk [vmem:[%s3 + $0x198] sm:$0xf] %vm5518, %v5378
  %5622 = vst.msk [vmem:[%s3 + $0x19c] sm:$0xf] %vm5518, %v5379
  %5623 = vst.msk [vmem:[%s3 + $0x1a0] sm:$0xf] %vm5518, %v5380
  %5624 = vst.msk [vmem:[%s3 + $0x1a4] sm:$0xf] %vm5518, %v5381
  %5625 = vst.msk [vmem:[%s3 + $0x1a8] sm:$0xf] %vm5518, %v5382
  %5626 = vst.msk [vmem:[%s3 + $0x1ac] sm:$0xf] %vm5518, %v5383
  %5627 = vst.msk [vmem:[%s3 + $0x1b0] sm:$0xf] %vm5518, %v5384
  %5628 = vst.msk [vmem:[%s3 + $0x1b4] sm:$0xf] %vm5518, %v5385
  %5629 = vst.msk [vmem:[%s3 + $0x1b8] sm:$0xf] %vm5518, %v5386
  %5630 = vst.msk [vmem:[%s3 + $0x1bc] sm:$0xf] %vm5518, %v5387
  %5631 = vst.msk [vmem:[%s3 + $0x1c0] sm:$0xf] %vm5518, %v5388
  %5632 = vst.msk [vmem:[%s3 + $0x1c4] sm:$0xf] %vm5518, %v5389
  %5633 = vst.msk [vmem:[%s3 + $0x1c8] sm:$0xf] %vm5518, %v5390
  %5634 = vst.msk [vmem:[%s3 + $0x1cc] sm:$0xf] %vm5518, %v5391
  %5635 = vst.msk [vmem:[%s3 + $0x1d0] sm:$0xf] %vm5518, %v5392
  %5636 = vst.msk [vmem:[%s3 + $0x1d4] sm:$0xf] %vm5518, %v5393
  %5637 = vst.msk [vmem:[%s3 + $0x1d8] sm:$0xf] %vm5518, %v5394
  %5638 = vst.msk [vmem:[%s3 + $0x1dc] sm:$0xf] %vm5518, %v5395
  %5639 = vst.msk [vmem:[%s3 + $0x1e0] sm:$0xf] %vm5518, %v5396
  // Predicated region
  $region14: #{convnet_forward.3} parent=0 // pred_check
    _
  $region15: #{convnet_forward.3} parent=0 // pred_check_branch
    %5641 = sbr.rel (0) target = $region17
  $region16: #{convnet_forward.3} parent=0 // pred_region
    _
  $region17: #{convnet_forward.3} parent=0 // pred_fallthru
    _
  // Predicated region
  $region18: #{convnet_forward.3} parent=0 // pred_check
    _
  $region19: #{convnet_forward.3} parent=0 // pred_check_branch
    %5643 = sbr.rel (0) target = $region21
  $region20: #{convnet_forward.3} parent=0 // pred_region
    _
  $region21: #{convnet_forward.3} parent=0 // pred_fallthru
    _

// kernel: convnet_forward.4
$region0: #{convnet_forward.4}
  #allocation0 [shape = 'u32[]', space=smem, size = 0x4, offset = 0x4, fixed_abs, tag = 'smem constant byte address 0x4 - core index']
  #allocation1 [shape = 'u32[144,128]{1,0:T(1,128)}', space=vmem, size = 0x12000, scoped, tag = 'internal scratch']
  %s0 = inlined_call_operand.vmem [shape: bf16[992,288], index: 0, kind: input, shape index: {}]
  %s1 = inlined_call_operand.vmem [shape: bf16[288,32], index: 1, kind: input, shape index: {}]
  %s2 = inlined_call_operand.vmem [shape: f32[1,32], index: 2, kind: input, shape index: {}]
  %s3 = inlined_call_operand.vmem [shape: bf16[248,32], index: 3, kind: output, shape index: {}]
  %s4 = sld [smem:[#allocation0]]
  $region22: #{convnet_forward.4} parent=0
    _
  %s6 = ssub.s32 1, %s4
  %s7 = scalar_select 0, %s6, %s4
  // Predicated region
  $region2: #{convnet_forward.4} parent=0 // pred_check
    _
  $region3: #{convnet_forward.4} parent=0 // pred_check_branch
    %9 = sbr.rel (0) target = $region5
  $region4: #{convnet_forward.4} parent=0 // pred_region
    _
  $region5: #{convnet_forward.4} parent=0 // pred_fallthru
    _
  // Predicated region
  $region6: #{convnet_forward.4} parent=0 // pred_check
    _
  $region7: #{convnet_forward.4} parent=0 // pred_check_branch
    %11 = sbr.rel (0) target = $region9
  $region8: #{convnet_forward.4} parent=0 // pred_region
    _
  $region9: #{convnet_forward.4} parent=0 // pred_fallthru
    _
  // Predicated region
  $region10: #{convnet_forward.4} parent=0 // pred_check
    _
  $region11: #{convnet_forward.4} parent=0 // pred_check_branch
    %13 = sbr.rel (0) target = $region13
  $region12: #{convnet_forward.4} parent=0 // pred_region
    _
  $region13: #{convnet_forward.4} parent=0 // pred_fallthru
    _
  %v15 = vld [vmem:[%s0] sm:$0xff]
  %v16 = vld [vmem:[%s0 + $0x8] sm:$0xf]
  %v17 = vld [vmem:[%s0 + $0xc] sm:$0xff]
  %v18 = vld [vmem:[%s0 + $0x14] sm:$0xf]
  %v19 = vld [vmem:[%s0 + $0x18] sm:$0xff]
  %v20 = vld [vmem:[%s0 + $0x20] sm:$0xf]
  %v21 = vld [vmem:[%s0 + $0x24] sm:$0xff]
  %v22 = vld [vmem:[%s0 + $0x2c] sm:$0xf]
  %v23 = vld [vmem:[%s0 + $0x30] sm:$0xff]
  %v24 = vld [vmem:[%s0 + $0x38] sm:$0xf]
  %v25 = vld [vmem:[%s0 + $0x3c] sm:$0xff]
  %v26 = vld [vmem:[%s0 + $0x44] sm:$0xf]
  %v27 = vld [vmem:[%s0 + $0x48] sm:$0xff]
  %v28 = vld [vmem:[%s0 + $0x50] sm:$0xf]
  %v29 = vld [vmem:[%s0 + $0x54] sm:$0xff]
  %v30 = vld [vmem:[%s0 + $0x5c] sm:$0xf]
  %v31 = vld [vmem:[%s0 + $0x60] sm:$0xff]
  %v32 = vld [vmem:[%s0 + $0x68] sm:$0xf]
  %v33 = vld [vmem:[%s0 + $0x6c] sm:$0xff]
  %v34 = vld [vmem:[%s0 + $0x74] sm:$0xf]
  %v35 = vld [vmem:[%s0 + $0x78] sm:$0xff]
  %v36 = vld [vmem:[%s0 + $0x80] sm:$0xf]
  %v37 = vld [vmem:[%s0 + $0x84] sm:$0xff]
  %v38 = vld [vmem:[%s0 + $0x8c] sm:$0xf]
  %v39 = vld [vmem:[%s0 + $0x90] sm:$0xff]
  %v40 = vld [vmem:[%s0 + $0x98] sm:$0xf]
  %v41 = vld [vmem:[%s0 + $0x9c] sm:$0xff]
  %v42 = vld [vmem:[%s0 + $0xa4] sm:$0xf]
  %v43 = vld [vmem:[%s0 + $0xa8] sm:$0xff]
  %v44 = vld [vmem:[%s0 + $0xb0] sm:$0xf]
  %v45 = vld [vmem:[%s0 + $0xb4] sm:$0xff]
  %v46 = vld [vmem:[%s0 + $0xbc] sm:$0xf]
  %v47 = vld [vmem:[%s0 + $0xc0] sm:$0xff]
  %v48 = vld [vmem:[%s0 + $0xc8] sm:$0xf]
  %v49 = vld [vmem:[%s0 + $0xcc] sm:$0xff]
  %v50 = vld [vmem:[%s0 + $0xd4] sm:$0xf]
  %v51 = vld [vmem:[%s0 + $0xd8] sm:$0xff]
  %v52 = vld [vmem:[%s0 + $0xe0] sm:$0xf]
  %v53 = vld [vmem:[%s0 + $0xe4] sm:$0xff]
  %v54 = vld [vmem:[%s0 + $0xec] sm:$0xf]
  %v55 = vld [vmem:[%s0 + $0xf0] sm:$0xff]
  %v56 = vld [vmem:[%s0 + $0xf8] sm:$0xf]
  %v57 = vld [vmem:[%s0 + $0xfc] sm:$0xff]
  %v58 = vld [vmem:[%s0 + $0x104] sm:$0xf]
  %v59 = vld [vmem:[%s0 + $0x108] sm:$0xff]
  %v60 = vld [vmem:[%s0 + $0x110] sm:$0xf]
  %v61 = vld [vmem:[%s0 + $0x114] sm:$0xff]
  %v62 = vld [vmem:[%s0 + $0x11c] sm:$0xf]
  %v63 = vld [vmem:[%s0 + $0x120] sm:$0xff]
  %v64 = vld [vmem:[%s0 + $0x128] sm:$0xf]
  %v65 = vld [vmem:[%s0 + $0x12c] sm:$0xff]
  %v66 = vld [vmem:[%s0 + $0x134] sm:$0xf]
  %v67 = vld [vmem:[%s0 + $0x138] sm:$0xff]
  %v68 = vld [vmem:[%s0 + $0x140] sm:$0xf]
  %v69 = vld [vmem:[%s0 + $0x144] sm:$0xff]
  %v70 = vld [vmem:[%s0 + $0x14c] sm:$0xf]
  %v71 = vld [vmem:[%s0 + $0x150] sm:$0xff]
  %v72 = vld [vmem:[%s0 + $0x158] sm:$0xf]
  %v73 = vld [vmem:[%s0 + $0x15c] sm:$0xff]
  %v74 = vld [vmem:[%s0 + $0x164] sm:$0xf]
  %v75 = vld [vmem:[%s0 + $0x168] sm:$0xff]
  %v76 = vld [vmem:[%s0 + $0x170] sm:$0xf]
  %v77 = vld [vmem:[%s0 + $0x174] sm:$0xff]
  %v78 = vld [vmem:[%s0 + $0x17c] sm:$0xf]
  %v79 = vld [vmem:[%s0 + $0x180] sm:$0xff]
  %v80 = vld [vmem:[%s0 + $0x188] sm:$0xf]
  %v81 = vld [vmem:[%s0 + $0x18c] sm:$0xff]
  %v82 = vld [vmem:[%s0 + $0x194] sm:$0xf]
  %v83 = vld [vmem:[%s0 + $0x198] sm:$0xff]
  %v84 = vld [vmem:[%s0 + $0x1a0] sm:$0xf]
  %v85 = vld [vmem:[%s0 + $0x1a4] sm:$0xff]
  %v86 = vld [vmem:[%s0 + $0x1ac] sm:$0xf]
  %v87 = vld [vmem:[%s0 + $0x1b0] sm:$0xff]
  %v88 = vld [vmem:[%s0 + $0x1b8] sm:$0xf]
  %v89 = vld [vmem:[%s0 + $0x1bc] sm:$0xff]
  %v90 = vld [vmem:[%s0 + $0x1c4] sm:$0xf]
  %v91 = vld [vmem:[%s0 + $0x1c8] sm:$0xff]
  %v92 = vld [vmem:[%s0 + $0x1d0] sm:$0xf]
  %v93 = vld [vmem:[%s0 + $0x1d4] sm:$0xff]
  %v94 = vld [vmem:[%s0 + $0x1dc] sm:$0xf]
  %v95 = vld [vmem:[%s0 + $0x1e0] sm:$0xff]
  %v96 = vld [vmem:[%s0 + $0x1e8] sm:$0xf]
  %v97 = vld [vmem:[%s0 + $0x1ec] sm:$0xff]
  %v98 = vld [vmem:[%s0 + $0x1f4] sm:$0xf]
  %v99 = vld [vmem:[%s0 + $0x1f8] sm:$0xff]
  %v100 = vld [vmem:[%s0 + $0x200] sm:$0xf]
  %v101 = vld [vmem:[%s0 + $0x204] sm:$0xff]
  %v102 = vld [vmem:[%s0 + $0x20c] sm:$0xf]
  %v103 = vld [vmem:[%s0 + $0x210] sm:$0xff]
  %v104 = vld [vmem:[%s0 + $0x218] sm:$0xf]
  %v105 = vld [vmem:[%s0 + $0x21c] sm:$0xff]
  %v106 = vld [vmem:[%s0 + $0x224] sm:$0xf]
  %v107 = vld [vmem:[%s0 + $0x228] sm:$0xff]
  %v108 = vld [vmem:[%s0 + $0x230] sm:$0xf]
  %v109 = vld [vmem:[%s0 + $0x234] sm:$0xff]
  %v110 = vld [vmem:[%s0 + $0x23c] sm:$0xf]
  %v111 = vld [vmem:[%s0 + $0x240] sm:$0xff]
  %v112 = vld [vmem:[%s0 + $0x248] sm:$0xf]
  %v113 = vld [vmem:[%s0 + $0x24c] sm:$0xff]
  %v114 = vld [vmem:[%s0 + $0x254] sm:$0xf]
  %v115 = vld [vmem:[%s0 + $0x258] sm:$0xff]
  %v116 = vld [vmem:[%s0 + $0x260] sm:$0xf]
  %v117 = vld [vmem:[%s0 + $0x264] sm:$0xff]
  %v118 = vld [vmem:[%s0 + $0x26c] sm:$0xf]
  %v119 = vld [vmem:[%s0 + $0x270] sm:$0xff]
  %v120 = vld [vmem:[%s0 + $0x278] sm:$0xf]
  %v121 = vld [vmem:[%s0 + $0x27c] sm:$0xff]
  %v122 = vld [vmem:[%s0 + $0x284] sm:$0xf]
  %v123 = vld [vmem:[%s0 + $0x288] sm:$0xff]
  %v124 = vld [vmem:[%s0 + $0x290] sm:$0xf]
  %v125 = vld [vmem:[%s0 + $0x294] sm:$0xff]
  %v126 = vld [vmem:[%s0 + $0x29c] sm:$0xf]
  %v127 = vld [vmem:[%s0 + $0x2a0] sm:$0xff]
  %v128 = vld [vmem:[%s0 + $0x2a8] sm:$0xf]
  %v129 = vld [vmem:[%s0 + $0x2ac] sm:$0xff]
  %v130 = vld [vmem:[%s0 + $0x2b4] sm:$0xf]
  %v131 = vld [vmem:[%s0 + $0x2b8] sm:$0xff]
  %v132 = vld [vmem:[%s0 + $0x2c0] sm:$0xf]
  %v133 = vld [vmem:[%s0 + $0x2c4] sm:$0xff]
  %v134 = vld [vmem:[%s0 + $0x2cc] sm:$0xf]
  %v135 = vld [vmem:[%s0 + $0x2d0] sm:$0xff]
  %v136 = vld [vmem:[%s0 + $0x2d8] sm:$0xf]
  %v137 = vld [vmem:[%s0 + $0x2dc] sm:$0xff]
  %v138 = vld [vmem:[%s0 + $0x2e4] sm:$0xf]
  %v139 = vld [vmem:[%s0 + $0x2e8] sm:$0xff]
  %v140 = vld [vmem:[%s0 + $0x2f0] sm:$0xf]
  %v141 = vld [vmem:[%s0 + $0x2f4] sm:$0xff]
  %v142 = vld [vmem:[%s0 + $0x2fc] sm:$0xf]
  %v143 = vld [vmem:[%s0 + $0x300] sm:$0xff]
  %v144 = vld [vmem:[%s0 + $0x308] sm:$0xf]
  %v145 = vld [vmem:[%s0 + $0x30c] sm:$0xff]
  %v146 = vld [vmem:[%s0 + $0x314] sm:$0xf]
  %v147 = vld [vmem:[%s0 + $0x318] sm:$0xff]
  %v148 = vld [vmem:[%s0 + $0x320] sm:$0xf]
  %v149 = vld [vmem:[%s0 + $0x324] sm:$0xff]
  %v150 = vld [vmem:[%s0 + $0x32c] sm:$0xf]
  %v151 = vld [vmem:[%s0 + $0x330] sm:$0xff]
  %v152 = vld [vmem:[%s0 + $0x338] sm:$0xf]
  %v153 = vld [vmem:[%s0 + $0x33c] sm:$0xff]
  %v154 = vld [vmem:[%s0 + $0x344] sm:$0xf]
  %v155 = vld [vmem:[%s0 + $0x348] sm:$0xff]
  %v156 = vld [vmem:[%s0 + $0x350] sm:$0xf]
  %v157 = vld [vmem:[%s0 + $0x354] sm:$0xff]
  %v158 = vld [vmem:[%s0 + $0x35c] sm:$0xf]
  %v159 = vld [vmem:[%s0 + $0x360] sm:$0xff]
  %v160 = vld [vmem:[%s0 + $0x368] sm:$0xf]
  %v161 = vld [vmem:[%s0 + $0x36c] sm:$0xff]
  %v162 = vld [vmem:[%s0 + $0x374] sm:$0xf]
  %v163 = vld [vmem:[%s0 + $0x378] sm:$0xff]
  %v164 = vld [vmem:[%s0 + $0x380] sm:$0xf]
  %v165 = vld [vmem:[%s0 + $0x384] sm:$0xff]
  %v166 = vld [vmem:[%s0 + $0x38c] sm:$0xf]
  %v167 = vld [vmem:[%s0 + $0x390] sm:$0xff]
  %v168 = vld [vmem:[%s0 + $0x398] sm:$0xf]
  %v169 = vld [vmem:[%s0 + $0x39c] sm:$0xff]
  %v170 = vld [vmem:[%s0 + $0x3a4] sm:$0xf]
  %v171 = vld [vmem:[%s0 + $0x3a8] sm:$0xff]
  %v172 = vld [vmem:[%s0 + $0x3b0] sm:$0xf]
  %v173 = vld [vmem:[%s0 + $0x3b4] sm:$0xff]
  %v174 = vld [vmem:[%s0 + $0x3bc] sm:$0xf]
  %v175 = vld [vmem:[%s0 + $0x3c0] sm:$0xff]
  %v176 = vld [vmem:[%s0 + $0x3c8] sm:$0xf]
  %v177 = vld [vmem:[%s0 + $0x3cc] sm:$0xff]
  %v178 = vld [vmem:[%s0 + $0x3d4] sm:$0xf]
  %v179 = vld [vmem:[%s0 + $0x3d8] sm:$0xff]
  %v180 = vld [vmem:[%s0 + $0x3e0] sm:$0xf]
  %v181 = vld [vmem:[%s0 + $0x3e4] sm:$0xff]
  %v182 = vld [vmem:[%s0 + $0x3ec] sm:$0xf]
  %v183 = vld [vmem:[%s0 + $0x3f0] sm:$0xff]
  %v184 = vld [vmem:[%s0 + $0x3f8] sm:$0xf]
  %v185 = vld [vmem:[%s0 + $0x3fc] sm:$0xff]
  %v186 = vld [vmem:[%s0 + $0x404] sm:$0xf]
  %v187 = vld [vmem:[%s0 + $0x408] sm:$0xff]
  %v188 = vld [vmem:[%s0 + $0x410] sm:$0xf]
  %v189 = vld [vmem:[%s0 + $0x414] sm:$0xff]
  %v190 = vld [vmem:[%s0 + $0x41c] sm:$0xf]
  %v191 = vld [vmem:[%s0 + $0x420] sm:$0xff]
  %v192 = vld [vmem:[%s0 + $0x428] sm:$0xf]
  %v193 = vld [vmem:[%s0 + $0x42c] sm:$0xff]
  %v194 = vld [vmem:[%s0 + $0x434] sm:$0xf]
  %v195 = vld [vmem:[%s0 + $0x438] sm:$0xff]
  %v196 = vld [vmem:[%s0 + $0x440] sm:$0xf]
  %v197 = vld [vmem:[%s0 + $0x444] sm:$0xff]
  %v198 = vld [vmem:[%s0 + $0x44c] sm:$0xf]
  %v199 = vld [vmem:[%s0 + $0x450] sm:$0xff]
  %v200 = vld [vmem:[%s0 + $0x458] sm:$0xf]
  %v201 = vld [vmem:[%s0 + $0x45c] sm:$0xff]
  %v202 = vld [vmem:[%s0 + $0x464] sm:$0xf]
  %v203 = vld [vmem:[%s0 + $0x468] sm:$0xff]
  %v204 = vld [vmem:[%s0 + $0x470] sm:$0xf]
  %v205 = vld [vmem:[%s0 + $0x474] sm:$0xff]
  %v206 = vld [vmem:[%s0 + $0x47c] sm:$0xf]
  %v207 = vld [vmem:[%s0 + $0x480] sm:$0xff]
  %v208 = vld [vmem:[%s0 + $0x488] sm:$0xf]
  %v209 = vld [vmem:[%s0 + $0x48c] sm:$0xff]
  %v210 = vld [vmem:[%s0 + $0x494] sm:$0xf]
  %v211 = vld [vmem:[%s0 + $0x498] sm:$0xff]
  %v212 = vld [vmem:[%s0 + $0x4a0] sm:$0xf]
  %v213 = vld [vmem:[%s0 + $0x4a4] sm:$0xff]
  %v214 = vld [vmem:[%s0 + $0x4ac] sm:$0xf]
  %v215 = vld [vmem:[%s0 + $0x4b0] sm:$0xff]
  %v216 = vld [vmem:[%s0 + $0x4b8] sm:$0xf]
  %v217 = vld [vmem:[%s0 + $0x4bc] sm:$0xff]
  %v218 = vld [vmem:[%s0 + $0x4c4] sm:$0xf]
  %v219 = vld [vmem:[%s0 + $0x4c8] sm:$0xff]
  %v220 = vld [vmem:[%s0 + $0x4d0] sm:$0xf]
  %v221 = vld [vmem:[%s0 + $0x4d4] sm:$0xff]
  %v222 = vld [vmem:[%s0 + $0x4dc] sm:$0xf]
  %v223 = vld [vmem:[%s0 + $0x4e0] sm:$0xff]
  %v224 = vld [vmem:[%s0 + $0x4e8] sm:$0xf]
  %v225 = vld [vmem:[%s0 + $0x4ec] sm:$0xff]
  %v226 = vld [vmem:[%s0 + $0x4f4] sm:$0xf]
  %v227 = vld [vmem:[%s0 + $0x4f8] sm:$0xff]
  %v228 = vld [vmem:[%s0 + $0x500] sm:$0xf]
  %v229 = vld [vmem:[%s0 + $0x504] sm:$0xff]
  %v230 = vld [vmem:[%s0 + $0x50c] sm:$0xf]
  %v231 = vld [vmem:[%s0 + $0x510] sm:$0xff]
  %v232 = vld [vmem:[%s0 + $0x518] sm:$0xf]
  %v233 = vld [vmem:[%s0 + $0x51c] sm:$0xff]
  %v234 = vld [vmem:[%s0 + $0x524] sm:$0xf]
  %v235 = vld [vmem:[%s0 + $0x528] sm:$0xff]
  %v236 = vld [vmem:[%s0 + $0x530] sm:$0xf]
  %v237 = vld [vmem:[%s0 + $0x534] sm:$0xff]
  %v238 = vld [vmem:[%s0 + $0x53c] sm:$0xf]
  %v239 = vld [vmem:[%s0 + $0x540] sm:$0xff]
  %v240 = vld [vmem:[%s0 + $0x548] sm:$0xf]
  %v241 = vld [vmem:[%s0 + $0x54c] sm:$0xff]
  %v242 = vld [vmem:[%s0 + $0x554] sm:$0xf]
  %v243 = vld [vmem:[%s0 + $0x558] sm:$0xff]
  %v244 = vld [vmem:[%s0 + $0x560] sm:$0xf]
  %v245 = vld [vmem:[%s0 + $0x564] sm:$0xff]
  %v246 = vld [vmem:[%s0 + $0x56c] sm:$0xf]
  %v247 = vld [vmem:[%s0 + $0x570] sm:$0xff]
  %v248 = vld [vmem:[%s0 + $0x578] sm:$0xf]
  %v249 = vld [vmem:[%s0 + $0x57c] sm:$0xff]
  %v250 = vld [vmem:[%s0 + $0x584] sm:$0xf]
  %v251 = vld [vmem:[%s0 + $0x588] sm:$0xff]
  %v252 = vld [vmem:[%s0 + $0x590] sm:$0xf]
  %v253 = vld [vmem:[%s0 + $0x594] sm:$0xff]
  %v254 = vld [vmem:[%s0 + $0x59c] sm:$0xf]
  %v255 = vld [vmem:[%s0 + $0x5a0] sm:$0xff]
  %v256 = vld [vmem:[%s0 + $0x5a8] sm:$0xf]
  %v257 = vld [vmem:[%s0 + $0x5ac] sm:$0xff]
  %v258 = vld [vmem:[%s0 + $0x5b4] sm:$0xf]
  %v259 = vld [vmem:[%s0 + $0x5b8] sm:$0xff]
  %v260 = vld [vmem:[%s0 + $0x5c0] sm:$0xf]
  %v261 = vld [vmem:[%s0 + $0x5c4] sm:$0xff]
  %v262 = vld [vmem:[%s0 + $0x5cc] sm:$0xf]
  %v263 = vld [vmem:[%s1] sm:$0xf]
  %v264 = vld [vmem:[%s1 + $0x4] sm:$0xf]
  %v265 = vld [vmem:[%s1 + $0x8] sm:$0xf]
  %v266 = vld [vmem:[%s1 + $0xc] sm:$0xf]
  %v267 = vld [vmem:[%s1 + $0x10] sm:$0xf]
  %v268 = vld [vmem:[%s1 + $0x14] sm:$0xf]
  %v269 = vld [vmem:[%s1 + $0x18] sm:$0xf]
  %v270 = vld [vmem:[%s1 + $0x1c] sm:$0xf]
  %v271 = vld [vmem:[%s1 + $0x20] sm:$0xf]
  %v272 = vld [vmem:[%s1 + $0x24] sm:$0xf]
  %v273 = vld [vmem:[%s1 + $0x28] sm:$0xf]
  %v274 = vld [vmem:[%s1 + $0x2c] sm:$0xf]
  %v275 = vld [vmem:[%s1 + $0x30] sm:$0xf]
  %v276 = vld [vmem:[%s1 + $0x34] sm:$0xf]
  %v277 = vld [vmem:[%s1 + $0x38] sm:$0xf]
  %v278 = vld [vmem:[%s1 + $0x3c] sm:$0xf]
  %v279 = vld [vmem:[%s1 + $0x40] sm:$0xf]
  %v280 = vld [vmem:[%s1 + $0x44] sm:$0xf]
  %v281 = vld [vmem:[%s1 + $0x48] sm:$0xf]
  %v282 = vld [vmem:[%s1 + $0x4c] sm:$0xf]
  %v283 = vld [vmem:[%s1 + $0x50] sm:$0xf]
  %v284 = vld [vmem:[%s1 + $0x54] sm:$0xf]
  %v285 = vld [vmem:[%s1 + $0x58] sm:$0xf]
  %v286 = vld [vmem:[%s1 + $0x5c] sm:$0xf]
  %v287 = vld [vmem:[%s1 + $0x60] sm:$0xf]
  %v288 = vld [vmem:[%s1 + $0x64] sm:$0xf]
  %v289 = vld [vmem:[%s1 + $0x68] sm:$0xf]
  %v290 = vld [vmem:[%s1 + $0x6c] sm:$0xf]
  %v291 = vld [vmem:[%s1 + $0x70] sm:$0xf]
  %v292 = vld [vmem:[%s1 + $0x74] sm:$0xf]
  %v293 = vld [vmem:[%s1 + $0x78] sm:$0xf]
  %v294 = vld [vmem:[%s1 + $0x7c] sm:$0xf]
  %v295 = vld [vmem:[%s1 + $0x80] sm:$0xf]
  %v296 = vld [vmem:[%s1 + $0x84] sm:$0xf]
  %v297 = vld [vmem:[%s1 + $0x88] sm:$0xf]
  %v298 = vld [vmem:[%s1 + $0x8c] sm:$0xf]
  %v547 = vunpack.c.l.b16 %v15
  %v548 = vunpack.c.h.b16 %v15
  %v549 = vunpack.c.l.b16 %v16
  %v550 = vunpack.c.l.b16 %v17
  %v551 = vunpack.c.h.b16 %v17
  %v552 = vunpack.c.l.b16 %v18
  %v553 = vunpack.c.l.b16 %v19
  %v554 = vunpack.c.h.b16 %v19
  %v555 = vunpack.c.l.b16 %v20
  %v556 = vunpack.c.l.b16 %v21
  %v557 = vunpack.c.h.b16 %v21
  %v558 = vunpack.c.l.b16 %v22
  %v559 = vunpack.c.l.b16 %v23
  %v560 = vunpack.c.h.b16 %v23
  %v561 = vunpack.c.l.b16 %v24
  %v562 = vunpack.c.l.b16 %v25
  %v563 = vunpack.c.h.b16 %v25
  %v564 = vunpack.c.l.b16 %v26
  %v565 = vunpack.c.l.b16 %v27
  %v566 = vunpack.c.h.b16 %v27
  %v567 = vunpack.c.l.b16 %v28
  %v568 = vunpack.c.l.b16 %v29
  %v569 = vunpack.c.h.b16 %v29
  %v570 = vunpack.c.l.b16 %v30
  %v571 = vunpack.c.l.b16 %v31
  %v572 = vunpack.c.h.b16 %v31
  %v573 = vunpack.c.l.b16 %v32
  %v574 = vunpack.c.l.b16 %v33
  %v575 = vunpack.c.h.b16 %v33
  %v576 = vunpack.c.l.b16 %v34
  %v577 = vunpack.c.l.b16 %v35
  %v578 = vunpack.c.h.b16 %v35
  %v579 = vunpack.c.l.b16 %v36
  %v580 = vunpack.c.l.b16 %v37
  %v581 = vunpack.c.h.b16 %v37
  %v582 = vunpack.c.l.b16 %v38
  %v583 = vunpack.c.l.b16 %v39
  %v584 = vunpack.c.h.b16 %v39
  %v585 = vunpack.c.l.b16 %v40
  %v586 = vunpack.c.l.b16 %v41
  %v587 = vunpack.c.h.b16 %v41
  %v588 = vunpack.c.l.b16 %v42
  %v589 = vunpack.c.l.b16 %v43
  %v590 = vunpack.c.h.b16 %v43
  %v591 = vunpack.c.l.b16 %v44
  %v592 = vunpack.c.l.b16 %v45
  %v593 = vunpack.c.h.b16 %v45
  %v594 = vunpack.c.l.b16 %v46
  %v595 = vunpack.c.l.b16 %v47
  %v596 = vunpack.c.h.b16 %v47
  %v597 = vunpack.c.l.b16 %v48
  %v598 = vunpack.c.l.b16 %v49
  %v599 = vunpack.c.h.b16 %v49
  %v600 = vunpack.c.l.b16 %v50
  %v601 = vunpack.c.l.b16 %v51
  %v602 = vunpack.c.h.b16 %v51
  %v603 = vunpack.c.l.b16 %v52
  %v604 = vunpack.c.l.b16 %v53
  %v605 = vunpack.c.h.b16 %v53
  %v606 = vunpack.c.l.b16 %v54
  %v607 = vunpack.c.l.b16 %v55
  %v608 = vunpack.c.h.b16 %v55
  %v609 = vunpack.c.l.b16 %v56
  %v610 = vunpack.c.l.b16 %v57
  %v611 = vunpack.c.h.b16 %v57
  %v612 = vunpack.c.l.b16 %v58
  %v613 = vunpack.c.l.b16 %v59
  %v614 = vunpack.c.h.b16 %v59
  %v615 = vunpack.c.l.b16 %v60
  %v616 = vunpack.c.l.b16 %v61
  %v617 = vunpack.c.h.b16 %v61
  %v618 = vunpack.c.l.b16 %v62
  %v619 = vunpack.c.l.b16 %v63
  %v620 = vunpack.c.h.b16 %v63
  %v621 = vunpack.c.l.b16 %v64
  %v622 = vunpack.c.l.b16 %v65
  %v623 = vunpack.c.h.b16 %v65
  %v624 = vunpack.c.l.b16 %v66
  %v625 = vunpack.c.l.b16 %v67
  %v626 = vunpack.c.h.b16 %v67
  %v627 = vunpack.c.l.b16 %v68
  %v628 = vunpack.c.l.b16 %v69
  %v629 = vunpack.c.h.b16 %v69
  %v630 = vunpack.c.l.b16 %v70
  %v631 = vunpack.c.l.b16 %v71
  %v632 = vunpack.c.h.b16 %v71
  %v633 = vunpack.c.l.b16 %v72
  %v634 = vunpack.c.l.b16 %v73
  %v635 = vunpack.c.h.b16 %v73
  %v636 = vunpack.c.l.b16 %v74
  %v637 = vunpack.c.l.b16 %v75
  %v638 = vunpack.c.h.b16 %v75
  %v639 = vunpack.c.l.b16 %v76
  %v640 = vunpack.c.l.b16 %v77
  %v641 = vunpack.c.h.b16 %v77
  %v642 = vunpack.c.l.b16 %v78
  %v643 = vunpack.c.l.b16 %v79
  %v644 = vunpack.c.h.b16 %v79
  %v645 = vunpack.c.l.b16 %v80
  %v646 = vunpack.c.l.b16 %v81
  %v647 = vunpack.c.h.b16 %v81
  %v648 = vunpack.c.l.b16 %v82
  %v649 = vunpack.c.l.b16 %v83
  %v650 = vunpack.c.h.b16 %v83
  %v651 = vunpack.c.l.b16 %v84
  %v652 = vunpack.c.l.b16 %v85
  %v653 = vunpack.c.h.b16 %v85
  %v654 = vunpack.c.l.b16 %v86
  %v655 = vunpack.c.l.b16 %v87
  %v656 = vunpack.c.h.b16 %v87
  %v657 = vunpack.c.l.b16 %v88
  %v658 = vunpack.c.l.b16 %v89
  %v659 = vunpack.c.h.b16 %v89
  %v660 = vunpack.c.l.b16 %v90
  %v661 = vunpack.c.l.b16 %v91
  %v662 = vunpack.c.h.b16 %v91
  %v663 = vunpack.c.l.b16 %v92
  %v664 = vunpack.c.l.b16 %v93
  %v665 = vunpack.c.h.b16 %v93
  %v666 = vunpack.c.l.b16 %v94
  %v667 = vunpack.c.l.b16 %v95
  %v668 = vunpack.c.h.b16 %v95
  %v669 = vunpack.c.l.b16 %v96
  %v670 = vunpack.c.l.b16 %v97
  %v671 = vunpack.c.h.b16 %v97
  %v672 = vunpack.c.l.b16 %v98
  %v673 = vunpack.c.l.b16 %v99
  %v674 = vunpack.c.h.b16 %v99
  %v675 = vunpack.c.l.b16 %v100
  %v676 = vunpack.c.l.b16 %v101
  %v677 = vunpack.c.h.b16 %v101
  %v678 = vunpack.c.l.b16 %v102
  %v679 = vunpack.c.l.b16 %v103
  %v680 = vunpack.c.h.b16 %v103
  %v681 = vunpack.c.l.b16 %v104
  %v682 = vunpack.c.l.b16 %v105
  %v683 = vunpack.c.h.b16 %v105
  %v684 = vunpack.c.l.b16 %v106
  %v685 = vunpack.c.l.b16 %v107
  %v686 = vunpack.c.h.b16 %v107
  %v687 = vunpack.c.l.b16 %v108
  %v688 = vunpack.c.l.b16 %v109
  %v689 = vunpack.c.h.b16 %v109
  %v690 = vunpack.c.l.b16 %v110
  %v691 = vunpack.c.l.b16 %v111
  %v692 = vunpack.c.h.b16 %v111
  %v693 = vunpack.c.l.b16 %v112
  %v694 = vunpack.c.l.b16 %v113
  %v695 = vunpack.c.h.b16 %v113
  %v696 = vunpack.c.l.b16 %v114
  %v697 = vunpack.c.l.b16 %v115
  %v698 = vunpack.c.h.b16 %v115
  %v699 = vunpack.c.l.b16 %v116
  %v700 = vunpack.c.l.b16 %v117
  %v701 = vunpack.c.h.b16 %v117
  %v702 = vunpack.c.l.b16 %v118
  %v703 = vunpack.c.l.b16 %v119
  %v704 = vunpack.c.h.b16 %v119
  %v705 = vunpack.c.l.b16 %v120
  %v706 = vunpack.c.l.b16 %v121
  %v707 = vunpack.c.h.b16 %v121
  %v708 = vunpack.c.l.b16 %v122
  %v709 = vunpack.c.l.b16 %v123
  %v710 = vunpack.c.h.b16 %v123
  %v711 = vunpack.c.l.b16 %v124
  %v712 = vunpack.c.l.b16 %v125
  %v713 = vunpack.c.h.b16 %v125
  %v714 = vunpack.c.l.b16 %v126
  %v715 = vunpack.c.l.b16 %v127
  %v716 = vunpack.c.h.b16 %v127
  %v717 = vunpack.c.l.b16 %v128
  %v718 = vunpack.c.l.b16 %v129
  %v719 = vunpack.c.h.b16 %v129
  %v720 = vunpack.c.l.b16 %v130
  %v721 = vunpack.c.l.b16 %v131
  %v722 = vunpack.c.h.b16 %v131
  %v723 = vunpack.c.l.b16 %v132
  %v724 = vunpack.c.l.b16 %v133
  %v725 = vunpack.c.h.b16 %v133
  %v726 = vunpack.c.l.b16 %v134
  %v727 = vunpack.c.l.b16 %v135
  %v728 = vunpack.c.h.b16 %v135
  %v729 = vunpack.c.l.b16 %v136
  %v730 = vunpack.c.l.b16 %v137
  %v731 = vunpack.c.h.b16 %v137
  %v732 = vunpack.c.l.b16 %v138
  %v733 = vunpack.c.l.b16 %v139
  %v734 = vunpack.c.h.b16 %v139
  %v735 = vunpack.c.l.b16 %v140
  %v736 = vunpack.c.l.b16 %v141
  %v737 = vunpack.c.h.b16 %v141
  %v738 = vunpack.c.l.b16 %v142
  %v739 = vunpack.c.l.b16 %v143
  %v740 = vunpack.c.h.b16 %v143
  %v741 = vunpack.c.l.b16 %v144
  %v742 = vunpack.c.l.b16 %v145
  %v743 = vunpack.c.h.b16 %v145
  %v744 = vunpack.c.l.b16 %v146
  %v745 = vunpack.c.l.b16 %v147
  %v746 = vunpack.c.h.b16 %v147
  %v747 = vunpack.c.l.b16 %v148
  %v748 = vunpack.c.l.b16 %v149
  %v749 = vunpack.c.h.b16 %v149
  %v750 = vunpack.c.l.b16 %v150
  %v751 = vunpack.c.l.b16 %v151
  %v752 = vunpack.c.h.b16 %v151
  %v753 = vunpack.c.l.b16 %v152
  %v754 = vunpack.c.l.b16 %v153
  %v755 = vunpack.c.h.b16 %v153
  %v756 = vunpack.c.l.b16 %v154
  %v757 = vunpack.c.l.b16 %v155
  %v758 = vunpack.c.h.b16 %v155
  %v759 = vunpack.c.l.b16 %v156
  %v760 = vunpack.c.l.b16 %v157
  %v761 = vunpack.c.h.b16 %v157
  %v762 = vunpack.c.l.b16 %v158
  %v763 = vunpack.c.l.b16 %v159
  %v764 = vunpack.c.h.b16 %v159
  %v765 = vunpack.c.l.b16 %v160
  %v766 = vunpack.c.l.b16 %v161
  %v767 = vunpack.c.h.b16 %v161
  %v768 = vunpack.c.l.b16 %v162
  %v769 = vunpack.c.l.b16 %v163
  %v770 = vunpack.c.h.b16 %v163
  %v771 = vunpack.c.l.b16 %v164
  %v772 = vunpack.c.l.b16 %v165
  %v773 = vunpack.c.h.b16 %v165
  %v774 = vunpack.c.l.b16 %v166
  %v775 = vunpack.c.l.b16 %v167
  %v776 = vunpack.c.h.b16 %v167
  %v777 = vunpack.c.l.b16 %v168
  %v778 = vunpack.c.l.b16 %v169
  %v779 = vunpack.c.h.b16 %v169
  %v780 = vunpack.c.l.b16 %v170
  %v781 = vunpack.c.l.b16 %v171
  %v782 = vunpack.c.h.b16 %v171
  %v783 = vunpack.c.l.b16 %v172
  %v784 = vunpack.c.l.b16 %v173
  %v785 = vunpack.c.h.b16 %v173
  %v786 = vunpack.c.l.b16 %v174
  %v787 = vunpack.c.l.b16 %v175
  %v788 = vunpack.c.h.b16 %v175
  %v789 = vunpack.c.l.b16 %v176
  %v790 = vunpack.c.l.b16 %v177
  %v791 = vunpack.c.h.b16 %v177
  %v792 = vunpack.c.l.b16 %v178
  %v793 = vunpack.c.l.b16 %v179
  %v794 = vunpack.c.h.b16 %v179
  %v795 = vunpack.c.l.b16 %v180
  %v796 = vunpack.c.l.b16 %v181
  %v797 = vunpack.c.h.b16 %v181
  %v798 = vunpack.c.l.b16 %v182
  %v799 = vunpack.c.l.b16 %v183
  %v800 = vunpack.c.h.b16 %v183
  %v801 = vunpack.c.l.b16 %v184
  %v802 = vunpack.c.l.b16 %v185
  %v803 = vunpack.c.h.b16 %v185
  %v804 = vunpack.c.l.b16 %v186
  %v805 = vunpack.c.l.b16 %v187
  %v806 = vunpack.c.h.b16 %v187
  %v807 = vunpack.c.l.b16 %v188
  %v808 = vunpack.c.l.b16 %v189
  %v809 = vunpack.c.h.b16 %v189
  %v810 = vunpack.c.l.b16 %v190
  %v811 = vunpack.c.l.b16 %v191
  %v812 = vunpack.c.h.b16 %v191
  %v813 = vunpack.c.l.b16 %v192
  %v814 = vunpack.c.l.b16 %v193
  %v815 = vunpack.c.h.b16 %v193
  %v816 = vunpack.c.l.b16 %v194
  %v817 = vunpack.c.l.b16 %v195
  %v818 = vunpack.c.h.b16 %v195
  %v819 = vunpack.c.l.b16 %v196
  %v820 = vunpack.c.l.b16 %v197
  %v821 = vunpack.c.h.b16 %v197
  %v822 = vunpack.c.l.b16 %v198
  %v823 = vunpack.c.l.b16 %v199
  %v824 = vunpack.c.h.b16 %v199
  %v825 = vunpack.c.l.b16 %v200
  %v826 = vunpack.c.l.b16 %v201
  %v827 = vunpack.c.h.b16 %v201
  %v828 = vunpack.c.l.b16 %v202
  %v829 = vunpack.c.l.b16 %v203
  %v830 = vunpack.c.h.b16 %v203
  %v831 = vunpack.c.l.b16 %v204
  %v832 = vunpack.c.l.b16 %v205
  %v833 = vunpack.c.h.b16 %v205
  %v834 = vunpack.c.l.b16 %v206
  %v835 = vunpack.c.l.b16 %v207
  %v836 = vunpack.c.h.b16 %v207
  %v837 = vunpack.c.l.b16 %v208
  %v838 = vunpack.c.l.b16 %v209
  %v839 = vunpack.c.h.b16 %v209
  %v840 = vunpack.c.l.b16 %v210
  %v841 = vunpack.c.l.b16 %v211
  %v842 = vunpack.c.h.b16 %v211
  %v843 = vunpack.c.l.b16 %v212
  %v844 = vunpack.c.l.b16 %v213
  %v845 = vunpack.c.h.b16 %v213
  %v846 = vunpack.c.l.b16 %v214
  %v847 = vunpack.c.l.b16 %v215
  %v848 = vunpack.c.h.b16 %v215
  %v849 = vunpack.c.l.b16 %v216
  %v850 = vunpack.c.l.b16 %v217
  %v851 = vunpack.c.h.b16 %v217
  %v852 = vunpack.c.l.b16 %v218
  %v853 = vunpack.c.l.b16 %v219
  %v854 = vunpack.c.h.b16 %v219
  %v855 = vunpack.c.l.b16 %v220
  %v856 = vunpack.c.l.b16 %v221
  %v857 = vunpack.c.h.b16 %v221
  %v858 = vunpack.c.l.b16 %v222
  %v859 = vunpack.c.l.b16 %v223
  %v860 = vunpack.c.h.b16 %v223
  %v861 = vunpack.c.l.b16 %v224
  %v862 = vunpack.c.l.b16 %v225
  %v863 = vunpack.c.h.b16 %v225
  %v864 = vunpack.c.l.b16 %v226
  %v865 = vunpack.c.l.b16 %v227
  %v866 = vunpack.c.h.b16 %v227
  %v867 = vunpack.c.l.b16 %v228
  %v868 = vunpack.c.l.b16 %v229
  %v869 = vunpack.c.h.b16 %v229
  %v870 = vunpack.c.l.b16 %v230
  %v871 = vunpack.c.l.b16 %v231
  %v872 = vunpack.c.h.b16 %v231
  %v873 = vunpack.c.l.b16 %v232
  %v874 = vunpack.c.l.b16 %v233
  %v875 = vunpack.c.h.b16 %v233
  %v876 = vunpack.c.l.b16 %v234
  %v877 = vunpack.c.l.b16 %v235
  %v878 = vunpack.c.h.b16 %v235
  %v879 = vunpack.c.l.b16 %v236
  %v880 = vunpack.c.l.b16 %v237
  %v881 = vunpack.c.h.b16 %v237
  %v882 = vunpack.c.l.b16 %v238
  %v883 = vunpack.c.l.b16 %v239
  %v884 = vunpack.c.h.b16 %v239
  %v885 = vunpack.c.l.b16 %v240
  %v886 = vunpack.c.l.b16 %v241
  %v887 = vunpack.c.h.b16 %v241
  %v888 = vunpack.c.l.b16 %v242
  %v889 = vunpack.c.l.b16 %v243
  %v890 = vunpack.c.h.b16 %v243
  %v891 = vunpack.c.l.b16 %v244
  %v892 = vunpack.c.l.b16 %v245
  %v893 = vunpack.c.h.b16 %v245
  %v894 = vunpack.c.l.b16 %v246
  %v895 = vunpack.c.l.b16 %v247
  %v896 = vunpack.c.h.b16 %v247
  %v897 = vunpack.c.l.b16 %v248
  %v898 = vunpack.c.l.b16 %v249
  %v899 = vunpack.c.h.b16 %v249
  %v900 = vunpack.c.l.b16 %v250
  %v901 = vunpack.c.l.b16 %v251
  %v902 = vunpack.c.h.b16 %v251
  %v903 = vunpack.c.l.b16 %v252
  %v904 = vunpack.c.l.b16 %v253
  %v905 = vunpack.c.h.b16 %v253
  %v906 = vunpack.c.l.b16 %v254
  %v907 = vunpack.c.l.b16 %v255
  %v908 = vunpack.c.h.b16 %v255
  %v909 = vunpack.c.l.b16 %v256
  %v910 = vunpack.c.l.b16 %v257
  %v911 = vunpack.c.h.b16 %v257
  %v912 = vunpack.c.l.b16 %v258
  %v913 = vunpack.c.l.b16 %v259
  %v914 = vunpack.c.h.b16 %v259
  %v915 = vunpack.c.l.b16 %v260
  %v916 = vunpack.c.l.b16 %v261
  %v917 = vunpack.c.h.b16 %v261
  %v918 = vunpack.c.l.b16 %v262
  %v919 = vpack.c.b16 %v550, %v547
  %v920 = vpack.c.b16 %v551, %v548
  %v921 = vpack.c.b16 %v552, %v549
  %v922 = vpack.c.b16 %v556, %v553
  %v923 = vpack.c.b16 %v557, %v554
  %v924 = vpack.c.b16 %v558, %v555
  %v925 = vpack.c.b16 %v562, %v559
  %v926 = vpack.c.b16 %v563, %v560
  %v927 = vpack.c.b16 %v564, %v561
  %v928 = vpack.c.b16 %v568, %v565
  %v929 = vpack.c.b16 %v569, %v566
  %v930 = vpack.c.b16 %v570, %v567
  %v931 = vpack.c.b16 %v574, %v571
  %v932 = vpack.c.b16 %v575, %v572
  %v933 = vpack.c.b16 %v576, %v573
  %v934 = vpack.c.b16 %v580, %v577
  %v935 = vpack.c.b16 %v581, %v578
  %v936 = vpack.c.b16 %v582, %v579
  %v937 = vpack.c.b16 %v586, %v583
  %v938 = vpack.c.b16 %v587, %v584
  %v939 = vpack.c.b16 %v588, %v585
  %v940 = vpack.c.b16 %v592, %v589
  %v941 = vpack.c.b16 %v593, %v590
  %v942 = vpack.c.b16 %v594, %v591
  %v943 = vpack.c.b16 %v598, %v595
  %v944 = vpack.c.b16 %v599, %v596
  %v945 = vpack.c.b16 %v600, %v597
  %v946 = vpack.c.b16 %v604, %v601
  %v947 = vpack.c.b16 %v605, %v602
  %v948 = vpack.c.b16 %v606, %v603
  %v949 = vpack.c.b16 %v610, %v607
  %v950 = vpack.c.b16 %v611, %v608
  %v951 = vpack.c.b16 %v612, %v609
  %v952 = vpack.c.b16 %v616, %v613
  %v953 = vpack.c.b16 %v617, %v614
  %v954 = vpack.c.b16 %v618, %v615
  %v955 = vpack.c.b16 %v622, %v619
  %v956 = vpack.c.b16 %v623, %v620
  %v957 = vpack.c.b16 %v624, %v621
  %v958 = vpack.c.b16 %v628, %v625
  %v959 = vpack.c.b16 %v629, %v626
  %v960 = vpack.c.b16 %v630, %v627
  %v961 = vpack.c.b16 %v634, %v631
  %v962 = vpack.c.b16 %v635, %v632
  %v963 = vpack.c.b16 %v636, %v633
  %v964 = vpack.c.b16 %v640, %v637
  %v965 = vpack.c.b16 %v641, %v638
  %v966 = vpack.c.b16 %v642, %v639
  %v967 = vpack.c.b16 %v646, %v643
  %v968 = vpack.c.b16 %v647, %v644
  %v969 = vpack.c.b16 %v648, %v645
  %v970 = vpack.c.b16 %v652, %v649
  %v971 = vpack.c.b16 %v653, %v650
  %v972 = vpack.c.b16 %v654, %v651
  %v973 = vpack.c.b16 %v658, %v655
  %v974 = vpack.c.b16 %v659, %v656
  %v975 = vpack.c.b16 %v660, %v657
  %v976 = vpack.c.b16 %v664, %v661
  %v977 = vpack.c.b16 %v665, %v662
  %v978 = vpack.c.b16 %v666, %v663
  %v979 = vpack.c.b16 %v670, %v667
  %v980 = vpack.c.b16 %v671, %v668
  %v981 = vpack.c.b16 %v672, %v669
  %v982 = vpack.c.b16 %v676, %v673
  %v983 = vpack.c.b16 %v677, %v674
  %v984 = vpack.c.b16 %v678, %v675
  %v985 = vpack.c.b16 %v682, %v679
  %v986 = vpack.c.b16 %v683, %v680
  %v987 = vpack.c.b16 %v684, %v681
  %v988 = vpack.c.b16 %v688, %v685
  %v989 = vpack.c.b16 %v689, %v686
  %v990 = vpack.c.b16 %v690, %v687
  %v991 = vpack.c.b16 %v694, %v691
  %v992 = vpack.c.b16 %v695, %v692
  %v993 = vpack.c.b16 %v696, %v693
  %v994 = vpack.c.b16 %v700, %v697
  %v995 = vpack.c.b16 %v701, %v698
  %v996 = vpack.c.b16 %v702, %v699
  %v997 = vpack.c.b16 %v706, %v703
  %v998 = vpack.c.b16 %v707, %v704
  %v999 = vpack.c.b16 %v708, %v705
  %v1000 = vpack.c.b16 %v712, %v709
  %v1001 = vpack.c.b16 %v713, %v710
  %v1002 = vpack.c.b16 %v714, %v711
  %v1003 = vpack.c.b16 %v718, %v715
  %v1004 = vpack.c.b16 %v719, %v716
  %v1005 = vpack.c.b16 %v720, %v717
  %v1006 = vpack.c.b16 %v724, %v721
  %v1007 = vpack.c.b16 %v725, %v722
  %v1008 = vpack.c.b16 %v726, %v723
  %v1009 = vpack.c.b16 %v730, %v727
  %v1010 = vpack.c.b16 %v731, %v728
  %v1011 = vpack.c.b16 %v732, %v729
  %v1012 = vpack.c.b16 %v736, %v733
  %v1013 = vpack.c.b16 %v737, %v734
  %v1014 = vpack.c.b16 %v738, %v735
  %v1015 = vpack.c.b16 %v742, %v739
  %v1016 = vpack.c.b16 %v743, %v740
  %v1017 = vpack.c.b16 %v744, %v741
  %v1018 = vpack.c.b16 %v748, %v745
  %v1019 = vpack.c.b16 %v749, %v746
  %v1020 = vpack.c.b16 %v750, %v747
  %v1021 = vpack.c.b16 %v754, %v751
  %v1022 = vpack.c.b16 %v755, %v752
  %v1023 = vpack.c.b16 %v756, %v753
  %v1024 = vpack.c.b16 %v760, %v757
  %v1025 = vpack.c.b16 %v761, %v758
  %v1026 = vpack.c.b16 %v762, %v759
  %v1027 = vpack.c.b16 %v766, %v763
  %v1028 = vpack.c.b16 %v767, %v764
  %v1029 = vpack.c.b16 %v768, %v765
  %v1030 = vpack.c.b16 %v772, %v769
  %v1031 = vpack.c.b16 %v773, %v770
  %v1032 = vpack.c.b16 %v774, %v771
  %v1033 = vpack.c.b16 %v778, %v775
  %v1034 = vpack.c.b16 %v779, %v776
  %v1035 = vpack.c.b16 %v780, %v777
  %v1036 = vpack.c.b16 %v784, %v781
  %v1037 = vpack.c.b16 %v785, %v782
  %v1038 = vpack.c.b16 %v786, %v783
  %v1039 = vpack.c.b16 %v790, %v787
  %v1040 = vpack.c.b16 %v791, %v788
  %v1041 = vpack.c.b16 %v792, %v789
  %v1042 = vpack.c.b16 %v796, %v793
  %v1043 = vpack.c.b16 %v797, %v794
  %v1044 = vpack.c.b16 %v798, %v795
  %v1045 = vpack.c.b16 %v802, %v799
  %v1046 = vpack.c.b16 %v803, %v800
  %v1047 = vpack.c.b16 %v804, %v801
  %v1048 = vpack.c.b16 %v808, %v805
  %v1049 = vpack.c.b16 %v809, %v806
  %v1050 = vpack.c.b16 %v810, %v807
  %v1051 = vpack.c.b16 %v814, %v811
  %v1052 = vpack.c.b16 %v815, %v812
  %v1053 = vpack.c.b16 %v816, %v813
  %v1054 = vpack.c.b16 %v820, %v817
  %v1055 = vpack.c.b16 %v821, %v818
  %v1056 = vpack.c.b16 %v822, %v819
  %v1057 = vpack.c.b16 %v826, %v823
  %v1058 = vpack.c.b16 %v827, %v824
  %v1059 = vpack.c.b16 %v828, %v825
  %v1060 = vpack.c.b16 %v832, %v829
  %v1061 = vpack.c.b16 %v833, %v830
  %v1062 = vpack.c.b16 %v834, %v831
  %v1063 = vpack.c.b16 %v838, %v835
  %v1064 = vpack.c.b16 %v839, %v836
  %v1065 = vpack.c.b16 %v840, %v837
  %v1066 = vpack.c.b16 %v844, %v841
  %v1067 = vpack.c.b16 %v845, %v842
  %v1068 = vpack.c.b16 %v846, %v843
  %v1069 = vpack.c.b16 %v850, %v847
  %v1070 = vpack.c.b16 %v851, %v848
  %v1071 = vpack.c.b16 %v852, %v849
  %v1072 = vpack.c.b16 %v856, %v853
  %v1073 = vpack.c.b16 %v857, %v854
  %v1074 = vpack.c.b16 %v858, %v855
  %v1075 = vpack.c.b16 %v862, %v859
  %v1076 = vpack.c.b16 %v863, %v860
  %v1077 = vpack.c.b16 %v864, %v861
  %v1078 = vpack.c.b16 %v868, %v865
  %v1079 = vpack.c.b16 %v869, %v866
  %v1080 = vpack.c.b16 %v870, %v867
  %v1081 = vpack.c.b16 %v874, %v871
  %v1082 = vpack.c.b16 %v875, %v872
  %v1083 = vpack.c.b16 %v876, %v873
  %v1084 = vpack.c.b16 %v880, %v877
  %v1085 = vpack.c.b16 %v881, %v878
  %v1086 = vpack.c.b16 %v882, %v879
  %v1087 = vpack.c.b16 %v886, %v883
  %v1088 = vpack.c.b16 %v887, %v884
  %v1089 = vpack.c.b16 %v888, %v885
  %v1090 = vpack.c.b16 %v892, %v889
  %v1091 = vpack.c.b16 %v893, %v890
  %v1092 = vpack.c.b16 %v894, %v891
  %v1093 = vpack.c.b16 %v898, %v895
  %v1094 = vpack.c.b16 %v899, %v896
  %v1095 = vpack.c.b16 %v900, %v897
  %v1096 = vpack.c.b16 %v904, %v901
  %v1097 = vpack.c.b16 %v905, %v902
  %v1098 = vpack.c.b16 %v906, %v903
  %v1099 = vpack.c.b16 %v910, %v907
  %v1100 = vpack.c.b16 %v911, %v908
  %v1101 = vpack.c.b16 %v912, %v909
  %v1102 = vpack.c.b16 %v916, %v913
  %v1103 = vpack.c.b16 %v917, %v914
  %v1104 = vpack.c.b16 %v918, %v915
  %v1265 = vunpack.c.l.b16 %v263
  %v1266 = vunpack.c.l.b16 %v264
  %v1267 = vunpack.c.l.b16 %v265
  %v1268 = vunpack.c.l.b16 %v266
  %v1269 = vunpack.c.l.b16 %v267
  %v1270 = vunpack.c.l.b16 %v268
  %v1271 = vunpack.c.l.b16 %v269
  %v1272 = vunpack.c.l.b16 %v270
  %v1273 = vunpack.c.l.b16 %v271
  %v1274 = vunpack.c.l.b16 %v272
  %v1275 = vunpack.c.l.b16 %v273
  %v1276 = vunpack.c.l.b16 %v274
  %v1277 = vunpack.c.l.b16 %v275
  %v1278 = vunpack.c.l.b16 %v276
  %v1279 = vunpack.c.l.b16 %v277
  %v1280 = vunpack.c.l.b16 %v278
  %v1281 = vunpack.c.l.b16 %v279
  %v1282 = vunpack.c.l.b16 %v280
  %v1283 = vunpack.c.l.b16 %v281
  %v1284 = vunpack.c.l.b16 %v282
  %v1285 = vunpack.c.l.b16 %v283
  %v1286 = vunpack.c.l.b16 %v284
  %v1287 = vunpack.c.l.b16 %v285
  %v1288 = vunpack.c.l.b16 %v286
  %v1289 = vunpack.c.l.b16 %v287
  %v1290 = vunpack.c.l.b16 %v288
  %v1291 = vunpack.c.l.b16 %v289
  %v1292 = vunpack.c.l.b16 %v290
  %v1293 = vunpack.c.l.b16 %v291
  %v1294 = vunpack.c.l.b16 %v292
  %v1295 = vunpack.c.l.b16 %v293
  %v1296 = vunpack.c.l.b16 %v294
  %v1297 = vunpack.c.l.b16 %v295
  %v1298 = vunpack.c.l.b16 %v296
  %v1299 = vunpack.c.l.b16 %v297
  %v1300 = vunpack.c.l.b16 %v298
  %v1301 = vpack.c.b16 %v1266, %v1265
  %v1302 = vpack.c.b16 %v1268, %v1267
  %v1303 = vpack.c.b16 %v1270, %v1269
  %v1304 = vpack.c.b16 %v1272, %v1271
  %v1305 = vpack.c.b16 %v1274, %v1273
  %v1306 = vpack.c.b16 %v1276, %v1275
  %v1307 = vpack.c.b16 %v1278, %v1277
  %v1308 = vpack.c.b16 %v1280, %v1279
  %v1309 = vpack.c.b16 %v1282, %v1281
  %v1310 = vpack.c.b16 %v1284, %v1283
  %v1311 = vpack.c.b16 %v1286, %v1285
  %v1312 = vpack.c.b16 %v1288, %v1287
  %v1313 = vpack.c.b16 %v1290, %v1289
  %v1314 = vpack.c.b16 %v1292, %v1291
  %v1315 = vpack.c.b16 %v1294, %v1293
  %v1316 = vpack.c.b16 %v1296, %v1295
  %v1317 = vpack.c.b16 %v1298, %v1297
  %v1318 = vpack.c.b16 %v1300, %v1299
  %vm1337 = vcmask 261120
  %v1339 = vsel %vm1337, %v921, 0
  %v1342 = vsel %vm1337, %v924, 0
  %v1345 = vsel %vm1337, %v927, 0
  %v1348 = vsel %vm1337, %v930, 0
  %v1351 = vsel %vm1337, %v933, 0
  %v1354 = vsel %vm1337, %v936, 0
  %v1357 = vsel %vm1337, %v939, 0
  %v1360 = vsel %vm1337, %v942, 0
  %v1363 = vsel %vm1337, %v945, 0
  %v1366 = vsel %vm1337, %v948, 0
  %v1369 = vsel %vm1337, %v951, 0
  %v1372 = vsel %vm1337, %v954, 0
  %v1375 = vsel %vm1337, %v957, 0
  %v1378 = vsel %vm1337, %v960, 0
  %v1381 = vsel %vm1337, %v963, 0
  %v1384 = vsel %vm1337, %v966, 0
  %v1387 = vsel %vm1337, %v969, 0
  %v1390 = vsel %vm1337, %v972, 0
  %v1393 = vsel %vm1337, %v975, 0
  %v1396 = vsel %vm1337, %v978, 0
  %v1399 = vsel %vm1337, %v981, 0
  %v1402 = vsel %vm1337, %v984, 0
  %v1405 = vsel %vm1337, %v987, 0
  %v1408 = vsel %vm1337, %v990, 0
  %v1411 = vsel %vm1337, %v993, 0
  %v1414 = vsel %vm1337, %v996, 0
  %v1417 = vsel %vm1337, %v999, 0
  %v1420 = vsel %vm1337, %v1002, 0
  %v1423 = vsel %vm1337, %v1005, 0
  %v1426 = vsel %vm1337, %v1008, 0
  %v1429 = vsel %vm1337, %v1011, 0
  %v1432 = vsel %vm1337, %v1014, 0
  %v1435 = vsel %vm1337, %v1017, 0
  %v1438 = vsel %vm1337, %v1020, 0
  %v1441 = vsel %vm1337, %v1023, 0
  %v1444 = vsel %vm1337, %v1026, 0
  %v1447 = vsel %vm1337, %v1029, 0
  %v1450 = vsel %vm1337, %v1032, 0
  %v1453 = vsel %vm1337, %v1035, 0
  %v1456 = vsel %vm1337, %v1038, 0
  %v1459 = vsel %vm1337, %v1041, 0
  %v1462 = vsel %vm1337, %v1044, 0
  %v1465 = vsel %vm1337, %v1047, 0
  %v1468 = vsel %vm1337, %v1050, 0
  %v1471 = vsel %vm1337, %v1053, 0
  %v1474 = vsel %vm1337, %v1056, 0
  %v1477 = vsel %vm1337, %v1059, 0
  %v1480 = vsel %vm1337, %v1062, 0
  %v1483 = vsel %vm1337, %v1065, 0
  %v1486 = vsel %vm1337, %v1068, 0
  %v1489 = vsel %vm1337, %v1071, 0
  %v1492 = vsel %vm1337, %v1074, 0
  %v1495 = vsel %vm1337, %v1077, 0
  %v1498 = vsel %vm1337, %v1080, 0
  %v1501 = vsel %vm1337, %v1083, 0
  %v1504 = vsel %vm1337, %v1086, 0
  %v1507 = vsel %vm1337, %v1089, 0
  %v1510 = vsel %vm1337, %v1092, 0
  %v1513 = vsel %vm1337, %v1095, 0
  %v1516 = vsel %vm1337, %v1098, 0
  %v1519 = vsel %vm1337, %v1101, 0
  %v1522 = vsel %vm1337, %v1104, 0
  %1524 = vmatprep.subr.bf16.mxu0 0
  %1525 = vmatpush1.bf16.msra.mxu0 %v1301
  %1526 = vmatprep.subr.bf16.mxu0 0
  %1527 = vmatpush1.bf16.msra.mxu0 %v1302
  %1528 = vmatprep.subr.bf16.mxu0 0
  %1529 = vmatpush1.bf16.msra.mxu0 %v1303
  %1530 = vmatprep.subr.bf16.mxu0 0
  %1531 = vmatpush1.bf16.msra.mxu0 %v1304
  %1532 = vmatprep.subr.bf16.mxu0 0
  %1533 = vmatpush1.bf16.msra.mxu0 %v1305
  %1534 = vmatprep.subr.bf16.mxu0 0
  %1535 = vmatpush1.bf16.msra.mxu0 %v1306
  %1536 = vmatprep.subr.bf16.mxu0 0
  %1537 = vmatpush1.bf16.msra.mxu0 %v1307
  %1538 = vmatprep.subr.bf16.mxu0 0
  %1539 = vmatpush1.bf16.msra.mxu0 %v1308
  %1540 = vmatprep.subr.bf16.mxu0 0
  %1541 = vmatpush1.bf16.msra.mxu0 %v1309
  %1542 = vmatprep.subr.bf16.mxu0 0
  %1543 = vmatpush1.bf16.msra.mxu0 %v1310
  %1544 = vmatprep.subr.bf16.mxu0 0
  %1545 = vmatpush1.bf16.msra.mxu0 %v1311
  %1546 = vmatprep.subr.bf16.mxu0 0
  %1547 = vmatpush1.bf16.msra.mxu0 %v1312
  %1548 = vmatprep.subr.bf16.mxu0 0
  %1549 = vmatpush1.bf16.msra.mxu0 %v1313
  %1550 = vmatprep.subr.bf16.mxu0 0
  %1551 = vmatpush1.bf16.msra.mxu0 %v1314
  %1552 = vmatprep.subr.bf16.mxu0 0
  %1553 = vmatpush1.bf16.msra.mxu0 %v1315
  %1554 = vmatprep.subr.bf16.mxu0 0
  %1555 = vmatpush1.bf16.msra.mxu0 %v1316
  %1556 = vmatprep.mubr.bf16.mxu0 %v920
  %1557 = vmatmul.mubr.bf16.gmra.mrb[0].mxu0 %v919
  %v1558 = vpop.f32.mrb[0].mxu0
  %v1559 = vadd.f32 0.0, %v1558
  %v1560 = vpop.f32.mrb[0].mxu0
  %v1561 = vpop.f32.mrb[0].mxu0
  %v1562 = vadd.f32 0.0, %v1561
  %v1563 = vpop.f32.mrb[0].mxu0
  %1564 = vmatprep.mubr.bf16.mxu0 %v923
  %1565 = vmatmul.mubr.bf16.gmra.mrb[0].mxu0 %v922
  %v1566 = vpop.f32.mrb[0].mxu0
  %v1567 = vadd.f32 0.0, %v1566
  %v1568 = vpop.f32.mrb[0].mxu0
  %v1569 = vpop.f32.mrb[0].mxu0
  %v1570 = vadd.f32 0.0, %v1569
  %v1571 = vpop.f32.mrb[0].mxu0
  %1572 = vmatprep.mubr.bf16.mxu0 %v926
  %1573 = vmatmul.mubr.bf16.gmra.mrb[0].mxu0 %v925
  %v1574 = vpop.f32.mrb[0].mxu0
  %v1575 = vadd.f32 0.0, %v1574
  %v1576 = vpop.f32.mrb[0].mxu0
  %v1577 = vpop.f32.mrb[0].mxu0
  %v1578 = vadd.f32 0.0, %v1577
  %v1579 = vpop.f32.mrb[0].mxu0
  %1580 = vmatprep.mubr.bf16.mxu0 %v929
  %1581 = vmatmul.mubr.bf16.gmra.mrb[0].mxu0 %v928
  %v1582 = vpop.f32.mrb[0].mxu0
  %v1583 = vadd.f32 0.0, %v1582
  %v1584 = vpop.f32.mrb[0].mxu0
  %v1585 = vpop.f32.mrb[0].mxu0
  %v1586 = vadd.f32 0.0, %v1585
  %v1587 = vpop.f32.mrb[0].mxu0
  %1588 = vmatprep.mubr.bf16.mxu0 %v932
  %1589 = vmatmul.mubr.bf16.gmra.mrb[0].mxu0 %v931
  %v1590 = vpop.f32.mrb[0].mxu0
  %v1591 = vadd.f32 0.0, %v1590
  %v1592 = vpop.f32.mrb[0].mxu0
  %v1593 = vpop.f32.mrb[0].mxu0
  %v1594 = vadd.f32 0.0, %v1593
  %v1595 = vpop.f32.mrb[0].mxu0
  %1596 = vmatprep.mubr.bf16.mxu0 %v935
  %1597 = vmatmul.mubr.bf16.gmra.mrb[0].mxu0 %v934
  %v1598 = vpop.f32.mrb[0].mxu0
  %v1599 = vadd.f32 0.0, %v1598
  %v1600 = vpop.f32.mrb[0].mxu0
  %v1601 = vpop.f32.mrb[0].mxu0
  %v1602 = vadd.f32 0.0, %v1601
  %v1603 = vpop.f32.mrb[0].mxu0
  %1604 = vmatprep.mubr.bf16.mxu0 %v938
  %1605 = vmatmul.mubr.bf16.gmra.mrb[0].mxu0 %v937
  %v1606 = vpop.f32.mrb[0].mxu0
  %v1607 = vadd.f32 0.0, %v1606
  %v1608 = vpop.f32.mrb[0].mxu0
  %v1609 = vpop.f32.mrb[0].mxu0
  %v1610 = vadd.f32 0.0, %v1609
  %v1611 = vpop.f32.mrb[0].mxu0
  %1612 = vmatprep.mubr.bf16.mxu0 %v941
  %1613 = vmatmul.mubr.bf16.gmra.mrb[0].mxu0 %v940
  %v1614 = vpop.f32.mrb[0].mxu0
  %v1615 = vadd.f32 0.0, %v1614
  %v1616 = vpop.f32.mrb[0].mxu0
  %v1617 = vpop.f32.mrb[0].mxu0
  %v1618 = vadd.f32 0.0, %v1617
  %v1619 = vpop.f32.mrb[0].mxu0
  %1620 = vmatprep.mubr.bf16.mxu0 %v944
  %1621 = vmatmul.mubr.bf16.gmra.mrb[0].mxu0 %v943
  %v1622 = vpop.f32.mrb[0].mxu0
  %v1623 = vadd.f32 0.0, %v1622
  %v1624 = vpop.f32.mrb[0].mxu0
  %v1625 = vpop.f32.mrb[0].mxu0
  %v1626 = vadd.f32 0.0, %v1625
  %v1627 = vpop.f32.mrb[0].mxu0
  %1628 = vmatprep.mubr.bf16.mxu0 %v947
  %1629 = vmatmul.mubr.bf16.gmra.mrb[0].mxu0 %v946
  %v1630 = vpop.f32.mrb[0].mxu0
  %v1631 = vadd.f32 0.0, %v1630
  %v1632 = vpop.f32.mrb[0].mxu0
  %v1633 = vpop.f32.mrb[0].mxu0
  %v1634 = vadd.f32 0.0, %v1633
  %v1635 = vpop.f32.mrb[0].mxu0
  %1636 = vmatprep.mubr.bf16.mxu0 %v950
  %1637 = vmatmul.mubr.bf16.gmra.mrb[0].mxu0 %v949
  %v1638 = vpop.f32.mrb[0].mxu0
  %v1639 = vadd.f32 0.0, %v1638
  %v1640 = vpop.f32.mrb[0].mxu0
  %v1641 = vpop.f32.mrb[0].mxu0
  %v1642 = vadd.f32 0.0, %v1641
  %v1643 = vpop.f32.mrb[0].mxu0
  %1644 = vmatprep.mubr.bf16.mxu0 %v953
  %1645 = vmatmul.mubr.bf16.gmra.mrb[0].mxu0 %v952
  %v1646 = vpop.f32.mrb[0].mxu0
  %v1647 = vadd.f32 0.0, %v1646
  %v1648 = vpop.f32.mrb[0].mxu0
  %v1649 = vpop.f32.mrb[0].mxu0
  %v1650 = vadd.f32 0.0, %v1649
  %v1651 = vpop.f32.mrb[0].mxu0
  %1652 = vmatprep.mubr.bf16.mxu0 %v956
  %1653 = vmatmul.mubr.bf16.gmra.mrb[0].mxu0 %v955
  %v1654 = vpop.f32.mrb[0].mxu0
  %v1655 = vadd.f32 0.0, %v1654
  %v1656 = vpop.f32.mrb[0].mxu0
  %v1657 = vpop.f32.mrb[0].mxu0
  %v1658 = vadd.f32 0.0, %v1657
  %v1659 = vpop.f32.mrb[0].mxu0
  %1660 = vmatprep.mubr.bf16.mxu0 %v959
  %1661 = vmatmul.mubr.bf16.gmra.mrb[0].mxu0 %v958
  %v1662 = vpop.f32.mrb[0].mxu0
  %v1663 = vadd.f32 0.0, %v1662
  %v1664 = vpop.f32.mrb[0].mxu0
  %v1665 = vpop.f32.mrb[0].mxu0
  %v1666 = vadd.f32 0.0, %v1665
  %v1667 = vpop.f32.mrb[0].mxu0
  %1668 = vmatprep.mubr.bf16.mxu0 %v962
  %1669 = vmatmul.mubr.bf16.gmra.mrb[0].mxu0 %v961
  %v1670 = vpop.f32.mrb[0].mxu0
  %v1671 = vadd.f32 0.0, %v1670
  %v1672 = vpop.f32.mrb[0].mxu0
  %v1673 = vpop.f32.mrb[0].mxu0
  %v1674 = vadd.f32 0.0, %v1673
  %v1675 = vpop.f32.mrb[0].mxu0
  %1676 = vmatprep.mubr.bf16.mxu0 %v965
  %1677 = vmatmul.mubr.bf16.gmra.mrb[0].mxu0 %v964
  %v1678 = vpop.f32.mrb[0].mxu0
  %v1679 = vadd.f32 0.0, %v1678
  %v1680 = vpop.f32.mrb[0].mxu0
  %v1681 = vpop.f32.mrb[0].mxu0
  %v1682 = vadd.f32 0.0, %v1681
  %v1683 = vpop.f32.mrb[0].mxu0
  %1684 = vmatprep.mubr.bf16.mxu0 %v968
  %1685 = vmatmul.mubr.bf16.gmra.mrb[0].mxu0 %v967
  %v1686 = vpop.f32.mrb[0].mxu0
  %v1687 = vadd.f32 0.0, %v1686
  %v1688 = vpop.f32.mrb[0].mxu0
  %v1689 = vpop.f32.mrb[0].mxu0
  %v1690 = vadd.f32 0.0, %v1689
  %v1691 = vpop.f32.mrb[0].mxu0
  %1692 = vmatprep.mubr.bf16.mxu0 %v971
  %1693 = vmatmul.mubr.bf16.gmra.mrb[0].mxu0 %v970
  %v1694 = vpop.f32.mrb[0].mxu0
  %v1695 = vadd.f32 0.0, %v1694
  %v1696 = vpop.f32.mrb[0].mxu0
  %v1697 = vpop.f32.mrb[0].mxu0
  %v1698 = vadd.f32 0.0, %v1697
  %v1699 = vpop.f32.mrb[0].mxu0
  %1700 = vmatprep.mubr.bf16.mxu0 %v974
  %1701 = vmatmul.mubr.bf16.gmra.mrb[0].mxu0 %v973
  %v1702 = vpop.f32.mrb[0].mxu0
  %v1703 = vadd.f32 0.0, %v1702
  %v1704 = vpop.f32.mrb[0].mxu0
  %v1705 = vpop.f32.mrb[0].mxu0
  %v1706 = vadd.f32 0.0, %v1705
  %v1707 = vpop.f32.mrb[0].mxu0
  %1708 = vmatprep.mubr.bf16.mxu0 %v977
  %1709 = vmatmul.mubr.bf16.gmra.mrb[0].mxu0 %v976
  %v1710 = vpop.f32.mrb[0].mxu0
  %v1711 = vadd.f32 0.0, %v1710
  %v1712 = vpop.f32.mrb[0].mxu0
  %v1713 = vpop.f32.mrb[0].mxu0
  %v1714 = vadd.f32 0.0, %v1713
  %v1715 = vpop.f32.mrb[0].mxu0
  %1716 = vmatprep.mubr.bf16.mxu0 %v980
  %1717 = vmatmul.mubr.bf16.gmra.mrb[0].mxu0 %v979
  %v1718 = vpop.f32.mrb[0].mxu0
  %v1719 = vadd.f32 0.0, %v1718
  %v1720 = vpop.f32.mrb[0].mxu0
  %v1721 = vpop.f32.mrb[0].mxu0
  %v1722 = vadd.f32 0.0, %v1721
  %v1723 = vpop.f32.mrb[0].mxu0
  %1724 = vmatprep.mubr.bf16.mxu0 %v983
  %1725 = vmatmul.mubr.bf16.gmra.mrb[0].mxu0 %v982
  %v1726 = vpop.f32.mrb[0].mxu0
  %v1727 = vadd.f32 0.0, %v1726
  %v1728 = vpop.f32.mrb[0].mxu0
  %v1729 = vpop.f32.mrb[0].mxu0
  %v1730 = vadd.f32 0.0, %v1729
  %v1731 = vpop.f32.mrb[0].mxu0
  %1732 = vmatprep.mubr.bf16.mxu0 %v986
  %1733 = vmatmul.mubr.bf16.gmra.mrb[0].mxu0 %v985
  %v1734 = vpop.f32.mrb[0].mxu0
  %v1735 = vadd.f32 0.0, %v1734
  %v1736 = vpop.f32.mrb[0].mxu0
  %v1737 = vpop.f32.mrb[0].mxu0
  %v1738 = vadd.f32 0.0, %v1737
  %v1739 = vpop.f32.mrb[0].mxu0
  %1740 = vmatprep.mubr.bf16.mxu0 %v989
  %1741 = vmatmul.mubr.bf16.gmra.mrb[0].mxu0 %v988
  %v1742 = vpop.f32.mrb[0].mxu0
  %v1743 = vadd.f32 0.0, %v1742
  %v1744 = vpop.f32.mrb[0].mxu0
  %v1745 = vpop.f32.mrb[0].mxu0
  %v1746 = vadd.f32 0.0, %v1745
  %v1747 = vpop.f32.mrb[0].mxu0
  %1748 = vmatprep.mubr.bf16.mxu0 %v992
  %1749 = vmatmul.mubr.bf16.gmra.mrb[0].mxu0 %v991
  %v1750 = vpop.f32.mrb[0].mxu0
  %v1751 = vadd.f32 0.0, %v1750
  %v1752 = vpop.f32.mrb[0].mxu0
  %v1753 = vpop.f32.mrb[0].mxu0
  %v1754 = vadd.f32 0.0, %v1753
  %v1755 = vpop.f32.mrb[0].mxu0
  %1756 = vmatprep.mubr.bf16.mxu0 %v995
  %1757 = vmatmul.mubr.bf16.gmra.mrb[0].mxu0 %v994
  %v1758 = vpop.f32.mrb[0].mxu0
  %v1759 = vadd.f32 0.0, %v1758
  %v1760 = vpop.f32.mrb[0].mxu0
  %v1761 = vpop.f32.mrb[0].mxu0
  %v1762 = vadd.f32 0.0, %v1761
  %v1763 = vpop.f32.mrb[0].mxu0
  %1764 = vmatprep.mubr.bf16.mxu0 %v998
  %1765 = vmatmul.mubr.bf16.gmra.mrb[0].mxu0 %v997
  %v1766 = vpop.f32.mrb[0].mxu0
  %v1767 = vadd.f32 0.0, %v1766
  %v1768 = vpop.f32.mrb[0].mxu0
  %v1769 = vpop.f32.mrb[0].mxu0
  %v1770 = vadd.f32 0.0, %v1769
  %v1771 = vpop.f32.mrb[0].mxu0
  %1772 = vmatprep.mubr.bf16.mxu0 %v1001
  %1773 = vmatmul.mubr.bf16.gmra.mrb[0].mxu0 %v1000
  %v1774 = vpop.f32.mrb[0].mxu0
  %v1775 = vadd.f32 0.0, %v1774
  %v1776 = vpop.f32.mrb[0].mxu0
  %v1777 = vpop.f32.mrb[0].mxu0
  %v1778 = vadd.f32 0.0, %v1777
  %v1779 = vpop.f32.mrb[0].mxu0
  %1780 = vmatprep.mubr.bf16.mxu0 %v1004
  %1781 = vmatmul.mubr.bf16.gmra.mrb[0].mxu0 %v1003
  %v1782 = vpop.f32.mrb[0].mxu0
  %v1783 = vadd.f32 0.0, %v1782
  %v1784 = vpop.f32.mrb[0].mxu0
  %v1785 = vpop.f32.mrb[0].mxu0
  %v1786 = vadd.f32 0.0, %v1785
  %v1787 = vpop.f32.mrb[0].mxu0
  %1788 = vmatprep.mubr.bf16.mxu0 %v1007
  %1789 = vmatmul.mubr.bf16.gmra.mrb[0].mxu0 %v1006
  %v1790 = vpop.f32.mrb[0].mxu0
  %v1791 = vadd.f32 0.0, %v1790
  %v1792 = vpop.f32.mrb[0].mxu0
  %v1793 = vpop.f32.mrb[0].mxu0
  %v1794 = vadd.f32 0.0, %v1793
  %v1795 = vpop.f32.mrb[0].mxu0
  %1796 = vmatprep.mubr.bf16.mxu0 %v1010
  %1797 = vmatmul.mubr.bf16.gmra.mrb[0].mxu0 %v1009
  %v1798 = vpop.f32.mrb[0].mxu0
  %v1799 = vadd.f32 0.0, %v1798
  %v1800 = vpop.f32.mrb[0].mxu0
  %v1801 = vpop.f32.mrb[0].mxu0
  %v1802 = vadd.f32 0.0, %v1801
  %v1803 = vpop.f32.mrb[0].mxu0
  %1804 = vmatprep.mubr.bf16.mxu0 %v1013
  %1805 = vmatmul.mubr.bf16.gmra.mrb[0].mxu0 %v1012
  %v1806 = vpop.f32.mrb[0].mxu0
  %v1807 = vadd.f32 0.0, %v1806
  %v1808 = vpop.f32.mrb[0].mxu0
  %v1809 = vpop.f32.mrb[0].mxu0
  %v1810 = vadd.f32 0.0, %v1809
  %v1811 = vpop.f32.mrb[0].mxu0
  %1812 = vmatprep.mubr.bf16.mxu0 %v1016
  %1813 = vmatmul.mubr.bf16.gmra.mrb[0].mxu0 %v1015
  %v1814 = vpop.f32.mrb[0].mxu0
  %v1815 = vadd.f32 0.0, %v1814
  %v1816 = vpop.f32.mrb[0].mxu0
  %v1817 = vpop.f32.mrb[0].mxu0
  %v1818 = vadd.f32 0.0, %v1817
  %v1819 = vpop.f32.mrb[0].mxu0
  %1820 = vmatprep.mubr.bf16.mxu0 %v1019
  %1821 = vmatmul.mubr.bf16.gmra.mrb[0].mxu0 %v1018
  %v1822 = vpop.f32.mrb[0].mxu0
  %v1823 = vadd.f32 0.0, %v1822
  %v1824 = vpop.f32.mrb[0].mxu0
  %v1825 = vpop.f32.mrb[0].mxu0
  %v1826 = vadd.f32 0.0, %v1825
  %v1827 = vpop.f32.mrb[0].mxu0
  %1828 = vmatprep.mubr.bf16.mxu0 %v1022
  %1829 = vmatmul.mubr.bf16.gmra.mrb[0].mxu0 %v1021
  %v1830 = vpop.f32.mrb[0].mxu0
  %v1831 = vadd.f32 0.0, %v1830
  %v1832 = vpop.f32.mrb[0].mxu0
  %v1833 = vpop.f32.mrb[0].mxu0
  %v1834 = vadd.f32 0.0, %v1833
  %v1835 = vpop.f32.mrb[0].mxu0
  %1836 = vmatprep.mubr.bf16.mxu0 %v1025
  %1837 = vmatmul.mubr.bf16.gmra.mrb[0].mxu0 %v1024
  %v1838 = vpop.f32.mrb[0].mxu0
  %v1839 = vadd.f32 0.0, %v1838
  %v1840 = vpop.f32.mrb[0].mxu0
  %v1841 = vpop.f32.mrb[0].mxu0
  %v1842 = vadd.f32 0.0, %v1841
  %v1843 = vpop.f32.mrb[0].mxu0
  %1844 = vmatprep.mubr.bf16.mxu0 %v1028
  %1845 = vmatmul.mubr.bf16.gmra.mrb[0].mxu0 %v1027
  %v1846 = vpop.f32.mrb[0].mxu0
  %v1847 = vadd.f32 0.0, %v1846
  %v1848 = vpop.f32.mrb[0].mxu0
  %v1849 = vpop.f32.mrb[0].mxu0
  %v1850 = vadd.f32 0.0, %v1849
  %v1851 = vpop.f32.mrb[0].mxu0
  %1852 = vmatprep.mubr.bf16.mxu0 %v1031
  %1853 = vmatmul.mubr.bf16.gmra.mrb[0].mxu0 %v1030
  %v1854 = vpop.f32.mrb[0].mxu0
  %v1855 = vadd.f32 0.0, %v1854
  %v1856 = vpop.f32.mrb[0].mxu0
  %v1857 = vpop.f32.mrb[0].mxu0
  %v1858 = vadd.f32 0.0, %v1857
  %v1859 = vpop.f32.mrb[0].mxu0
  %1860 = vmatprep.mubr.bf16.mxu0 %v1034
  %1861 = vmatmul.mubr.bf16.gmra.mrb[0].mxu0 %v1033
  %v1862 = vpop.f32.mrb[0].mxu0
  %v1863 = vadd.f32 0.0, %v1862
  %v1864 = vpop.f32.mrb[0].mxu0
  %v1865 = vpop.f32.mrb[0].mxu0
  %v1866 = vadd.f32 0.0, %v1865
  %v1867 = vpop.f32.mrb[0].mxu0
  %1868 = vmatprep.mubr.bf16.mxu0 %v1037
  %1869 = vmatmul.mubr.bf16.gmra.mrb[0].mxu0 %v1036
  %v1870 = vpop.f32.mrb[0].mxu0
  %v1871 = vadd.f32 0.0, %v1870
  %v1872 = vpop.f32.mrb[0].mxu0
  %v1873 = vpop.f32.mrb[0].mxu0
  %v1874 = vadd.f32 0.0, %v1873
  %v1875 = vpop.f32.mrb[0].mxu0
  %1876 = vmatprep.mubr.bf16.mxu0 %v1040
  %1877 = vmatmul.mubr.bf16.gmra.mrb[0].mxu0 %v1039
  %v1878 = vpop.f32.mrb[0].mxu0
  %v1879 = vadd.f32 0.0, %v1878
  %v1880 = vpop.f32.mrb[0].mxu0
  %v1881 = vpop.f32.mrb[0].mxu0
  %v1882 = vadd.f32 0.0, %v1881
  %v1883 = vpop.f32.mrb[0].mxu0
  %1884 = vmatprep.mubr.bf16.mxu0 %v1043
  %1885 = vmatmul.mubr.bf16.gmra.mrb[0].mxu0 %v1042
  %v1886 = vpop.f32.mrb[0].mxu0
  %v1887 = vadd.f32 0.0, %v1886
  %v1888 = vpop.f32.mrb[0].mxu0
  %v1889 = vpop.f32.mrb[0].mxu0
  %v1890 = vadd.f32 0.0, %v1889
  %v1891 = vpop.f32.mrb[0].mxu0
  %1892 = vmatprep.mubr.bf16.mxu0 %v1046
  %1893 = vmatmul.mubr.bf16.gmra.mrb[0].mxu0 %v1045
  %v1894 = vpop.f32.mrb[0].mxu0
  %v1895 = vadd.f32 0.0, %v1894
  %v1896 = vpop.f32.mrb[0].mxu0
  %v1897 = vpop.f32.mrb[0].mxu0
  %v1898 = vadd.f32 0.0, %v1897
  %v1899 = vpop.f32.mrb[0].mxu0
  %1900 = vmatprep.mubr.bf16.mxu0 %v1049
  %1901 = vmatmul.mubr.bf16.gmra.mrb[0].mxu0 %v1048
  %v1902 = vpop.f32.mrb[0].mxu0
  %v1903 = vadd.f32 0.0, %v1902
  %v1904 = vpop.f32.mrb[0].mxu0
  %v1905 = vpop.f32.mrb[0].mxu0
  %v1906 = vadd.f32 0.0, %v1905
  %v1907 = vpop.f32.mrb[0].mxu0
  %1908 = vmatprep.mubr.bf16.mxu0 %v1052
  %1909 = vmatmul.mubr.bf16.gmra.mrb[0].mxu0 %v1051
  %v1910 = vpop.f32.mrb[0].mxu0
  %v1911 = vadd.f32 0.0, %v1910
  %v1912 = vpop.f32.mrb[0].mxu0
  %v1913 = vpop.f32.mrb[0].mxu0
  %v1914 = vadd.f32 0.0, %v1913
  %v1915 = vpop.f32.mrb[0].mxu0
  %1916 = vmatprep.mubr.bf16.mxu0 %v1055
  %1917 = vmatmul.mubr.bf16.gmra.mrb[0].mxu0 %v1054
  %v1918 = vpop.f32.mrb[0].mxu0
  %v1919 = vadd.f32 0.0, %v1918
  %v1920 = vpop.f32.mrb[0].mxu0
  %v1921 = vpop.f32.mrb[0].mxu0
  %v1922 = vadd.f32 0.0, %v1921
  %v1923 = vpop.f32.mrb[0].mxu0
  %1924 = vmatprep.mubr.bf16.mxu0 %v1058
  %1925 = vmatmul.mubr.bf16.gmra.mrb[0].mxu0 %v1057
  %v1926 = vpop.f32.mrb[0].mxu0
  %v1927 = vadd.f32 0.0, %v1926
  %v1928 = vpop.f32.mrb[0].mxu0
  %v1929 = vpop.f32.mrb[0].mxu0
  %v1930 = vadd.f32 0.0, %v1929
  %v1931 = vpop.f32.mrb[0].mxu0
  %1932 = vmatprep.mubr.bf16.mxu0 %v1061
  %1933 = vmatmul.mubr.bf16.gmra.mrb[0].mxu0 %v1060
  %v1934 = vpop.f32.mrb[0].mxu0
  %v1935 = vadd.f32 0.0, %v1934
  %v1936 = vpop.f32.mrb[0].mxu0
  %v1937 = vpop.f32.mrb[0].mxu0
  %v1938 = vadd.f32 0.0, %v1937
  %v1939 = vpop.f32.mrb[0].mxu0
  %1940 = vmatprep.mubr.bf16.mxu0 %v1064
  %1941 = vmatmul.mubr.bf16.gmra.mrb[0].mxu0 %v1063
  %v1942 = vpop.f32.mrb[0].mxu0
  %v1943 = vadd.f32 0.0, %v1942
  %v1944 = vpop.f32.mrb[0].mxu0
  %v1945 = vpop.f32.mrb[0].mxu0
  %v1946 = vadd.f32 0.0, %v1945
  %v1947 = vpop.f32.mrb[0].mxu0
  %1948 = vmatprep.mubr.bf16.mxu0 %v1067
  %1949 = vmatmul.mubr.bf16.gmra.mrb[0].mxu0 %v1066
  %v1950 = vpop.f32.mrb[0].mxu0
  %v1951 = vadd.f32 0.0, %v1950
  %v1952 = vpop.f32.mrb[0].mxu0
  %v1953 = vpop.f32.mrb[0].mxu0
  %v1954 = vadd.f32 0.0, %v1953
  %v1955 = vpop.f32.mrb[0].mxu0
  %1956 = vmatprep.mubr.bf16.mxu0 %v1070
  %1957 = vmatmul.mubr.bf16.gmra.mrb[0].mxu0 %v1069
  %v1958 = vpop.f32.mrb[0].mxu0
  %v1959 = vadd.f32 0.0, %v1958
  %v1960 = vpop.f32.mrb[0].mxu0
  %v1961 = vpop.f32.mrb[0].mxu0
  %v1962 = vadd.f32 0.0, %v1961
  %v1963 = vpop.f32.mrb[0].mxu0
  %1964 = vmatprep.mubr.bf16.mxu0 %v1073
  %1965 = vmatmul.mubr.bf16.gmra.mrb[0].mxu0 %v1072
  %v1966 = vpop.f32.mrb[0].mxu0
  %v1967 = vadd.f32 0.0, %v1966
  %v1968 = vpop.f32.mrb[0].mxu0
  %v1969 = vpop.f32.mrb[0].mxu0
  %v1970 = vadd.f32 0.0, %v1969
  %v1971 = vpop.f32.mrb[0].mxu0
  %1972 = vmatprep.mubr.bf16.mxu0 %v1076
  %1973 = vmatmul.mubr.bf16.gmra.mrb[0].mxu0 %v1075
  %v1974 = vpop.f32.mrb[0].mxu0
  %v1975 = vadd.f32 0.0, %v1974
  %v1976 = vpop.f32.mrb[0].mxu0
  %v1977 = vpop.f32.mrb[0].mxu0
  %v1978 = vadd.f32 0.0, %v1977
  %v1979 = vpop.f32.mrb[0].mxu0
  %1980 = vmatprep.mubr.bf16.mxu0 %v1079
  %1981 = vmatmul.mubr.bf16.gmra.mrb[0].mxu0 %v1078
  %v1982 = vpop.f32.mrb[0].mxu0
  %v1983 = vadd.f32 0.0, %v1982
  %v1984 = vpop.f32.mrb[0].mxu0
  %v1985 = vpop.f32.mrb[0].mxu0
  %v1986 = vadd.f32 0.0, %v1985
  %v1987 = vpop.f32.mrb[0].mxu0
  %1988 = vmatprep.mubr.bf16.mxu0 %v1082
  %1989 = vmatmul.mubr.bf16.gmra.mrb[0].mxu0 %v1081
  %v1990 = vpop.f32.mrb[0].mxu0
  %v1991 = vadd.f32 0.0, %v1990
  %v1992 = vpop.f32.mrb[0].mxu0
  %v1993 = vpop.f32.mrb[0].mxu0
  %v1994 = vadd.f32 0.0, %v1993
  %v1995 = vpop.f32.mrb[0].mxu0
  %1996 = vmatprep.mubr.bf16.mxu0 %v1085
  %1997 = vmatmul.mubr.bf16.gmra.mrb[0].mxu0 %v1084
  %v1998 = vpop.f32.mrb[0].mxu0
  %v1999 = vadd.f32 0.0, %v1998
  %v2000 = vpop.f32.mrb[0].mxu0
  %v2001 = vpop.f32.mrb[0].mxu0
  %v2002 = vadd.f32 0.0, %v2001
  %v2003 = vpop.f32.mrb[0].mxu0
  %2004 = vmatprep.mubr.bf16.mxu0 %v1088
  %2005 = vmatmul.mubr.bf16.gmra.mrb[0].mxu0 %v1087
  %v2006 = vpop.f32.mrb[0].mxu0
  %v2007 = vadd.f32 0.0, %v2006
  %v2008 = vpop.f32.mrb[0].mxu0
  %v2009 = vpop.f32.mrb[0].mxu0
  %v2010 = vadd.f32 0.0, %v2009
  %v2011 = vpop.f32.mrb[0].mxu0
  %2012 = vmatprep.mubr.bf16.mxu0 %v1091
  %2013 = vmatmul.mubr.bf16.gmra.mrb[0].mxu0 %v1090
  %v2014 = vpop.f32.mrb[0].mxu0
  %v2015 = vadd.f32 0.0, %v2014
  %v2016 = vpop.f32.mrb[0].mxu0
  %v2017 = vpop.f32.mrb[0].mxu0
  %v2018 = vadd.f32 0.0, %v2017
  %v2019 = vpop.f32.mrb[0].mxu0
  %2020 = vmatprep.mubr.bf16.mxu0 %v1094
  %2021 = vmatmul.mubr.bf16.gmra.mrb[0].mxu0 %v1093
  %v2022 = vpop.f32.mrb[0].mxu0
  %v2023 = vadd.f32 0.0, %v2022
  %v2024 = vpop.f32.mrb[0].mxu0
  %v2025 = vpop.f32.mrb[0].mxu0
  %v2026 = vadd.f32 0.0, %v2025
  %v2027 = vpop.f32.mrb[0].mxu0
  %2028 = vmatprep.mubr.bf16.mxu0 %v1097
  %2029 = vmatmul.mubr.bf16.gmra.mrb[0].mxu0 %v1096
  %v2030 = vpop.f32.mrb[0].mxu0
  %v2031 = vadd.f32 0.0, %v2030
  %v2032 = vpop.f32.mrb[0].mxu0
  %v2033 = vpop.f32.mrb[0].mxu0
  %v2034 = vadd.f32 0.0, %v2033
  %v2035 = vpop.f32.mrb[0].mxu0
  %2036 = vmatprep.mubr.bf16.mxu0 %v1100
  %2037 = vmatmul.mubr.bf16.gmra.mrb[0].mxu0 %v1099
  %v2038 = vpop.f32.mrb[0].mxu0
  %v2039 = vadd.f32 0.0, %v2038
  %v2040 = vpop.f32.mrb[0].mxu0
  %v2041 = vpop.f32.mrb[0].mxu0
  %v2042 = vadd.f32 0.0, %v2041
  %v2043 = vpop.f32.mrb[0].mxu0
  %2044 = vmatprep.mubr.bf16.mxu0 %v1103
  %2045 = vmatmul.mubr.bf16.gmra.mrb[0].mxu0 %v1102
  %v2046 = vpop.f32.mrb[0].mxu0
  %v2047 = vadd.f32 0.0, %v2046
  %v2048 = vpop.f32.mrb[0].mxu0
  %v2049 = vpop.f32.mrb[0].mxu0
  %v2050 = vadd.f32 0.0, %v2049
  %v2051 = vpop.f32.mrb[0].mxu0
  %2052 = vdwg.mxu0
  %2053 = vmatprep.subr.bf16.mxu0 0
  %2054 = vmatpush1.bf16.msra.mxu0 %v1317
  %2055 = vmatprep.subr.bf16.mxu0 0
  %2056 = vmatpush1.bf16.msra.mxu0 %v1318
  %2057 = vmatprep.subr.bf16.mxu0 0
  %2058 = vmatpush1.bf16.msra.mxu0 0
  %2059 = vmatprep.subr.bf16.mxu0 0
  %2060 = vmatpush1.bf16.msra.mxu0 0
  %2061 = vmatprep.subr.bf16.mxu0 0
  %2062 = vmatpush1.bf16.msra.mxu0 0
  %2063 = vmatprep.subr.bf16.mxu0 0
  %2064 = vmatpush1.bf16.msra.mxu0 0
  %2065 = vmatprep.subr.bf16.mxu0 0
  %2066 = vmatpush1.bf16.msra.mxu0 0
  %2067 = vmatprep.subr.bf16.mxu0 0
  %2068 = vmatpush1.bf16.msra.mxu0 0
  %2069 = vmatprep.subr.bf16.mxu0 0
  %2070 = vmatpush1.bf16.msra.mxu0 0
  %2071 = vmatprep.subr.bf16.mxu0 0
  %2072 = vmatpush1.bf16.msra.mxu0 0
  %2073 = vmatprep.subr.bf16.mxu0 0
  %2074 = vmatpush1.bf16.msra.mxu0 0
  %2075 = vmatprep.subr.bf16.mxu0 0
  %2076 = vmatpush1.bf16.msra.mxu0 0
  %2077 = vmatprep.subr.bf16.mxu0 0
  %2078 = vmatpush1.bf16.msra.mxu0 0
  %2079 = vmatprep.subr.bf16.mxu0 0
  %2080 = vmatpush1.bf16.msra.mxu0 0
  %2081 = vmatprep.subr.bf16.mxu0 0
  %2082 = vmatpush1.bf16.msra.mxu0 0
  %2083 = vmatprep.subr.bf16.mxu0 0
  %2084 = vmatpush1.bf16.msra.mxu0 0
  %2085 = vmatprep.mubr.bf16.mxu0 0
  %2086 = vmatmul.mubr.bf16.gmra.mrb[0].mxu0 %v1339
  %v2087 = vpop.f32.mrb[0].mxu0
  %v2088 = vadd.f32 %v1559, %v2087
  %v2089 = vpop.f32.mrb[0].mxu0
  %v2090 = vpop.f32.mrb[0].mxu0
  %v2091 = vadd.f32 %v1562, %v2090
  %v2092 = vpop.f32.mrb[0].mxu0
  %2093 = vmatprep.mubr.bf16.mxu0 0
  %2094 = vmatmul.mubr.bf16.gmra.mrb[0].mxu0 %v1342
  %v2095 = vpop.f32.mrb[0].mxu0
  %v2096 = vadd.f32 %v1567, %v2095
  %v2097 = vpop.f32.mrb[0].mxu0
  %v2098 = vpop.f32.mrb[0].mxu0
  %v2099 = vadd.f32 %v1570, %v2098
  %v2100 = vpop.f32.mrb[0].mxu0
  %2101 = vmatprep.mubr.bf16.mxu0 0
  %2102 = vmatmul.mubr.bf16.gmra.mrb[0].mxu0 %v1345
  %v2103 = vpop.f32.mrb[0].mxu0
  %v2104 = vadd.f32 %v1575, %v2103
  %v2105 = vpop.f32.mrb[0].mxu0
  %v2106 = vpop.f32.mrb[0].mxu0
  %v2107 = vadd.f32 %v1578, %v2106
  %v2108 = vpop.f32.mrb[0].mxu0
  %2109 = vmatprep.mubr.bf16.mxu0 0
  %2110 = vmatmul.mubr.bf16.gmra.mrb[0].mxu0 %v1348
  %v2111 = vpop.f32.mrb[0].mxu0
  %v2112 = vadd.f32 %v1583, %v2111
  %v2113 = vpop.f32.mrb[0].mxu0
  %v2114 = vpop.f32.mrb[0].mxu0
  %v2115 = vadd.f32 %v1586, %v2114
  %v2116 = vpop.f32.mrb[0].mxu0
  %2117 = vmatprep.mubr.bf16.mxu0 0
  %2118 = vmatmul.mubr.bf16.gmra.mrb[0].mxu0 %v1351
  %v2119 = vpop.f32.mrb[0].mxu0
  %v2120 = vadd.f32 %v1591, %v2119
  %v2121 = vpop.f32.mrb[0].mxu0
  %v2122 = vpop.f32.mrb[0].mxu0
  %v2123 = vadd.f32 %v1594, %v2122
  %v2124 = vpop.f32.mrb[0].mxu0
  %2125 = vmatprep.mubr.bf16.mxu0 0
  %2126 = vmatmul.mubr.bf16.gmra.mrb[0].mxu0 %v1354
  %v2127 = vpop.f32.mrb[0].mxu0
  %v2128 = vadd.f32 %v1599, %v2127
  %v2129 = vpop.f32.mrb[0].mxu0
  %v2130 = vpop.f32.mrb[0].mxu0
  %v2131 = vadd.f32 %v1602, %v2130
  %v2132 = vpop.f32.mrb[0].mxu0
  %2133 = vmatprep.mubr.bf16.mxu0 0
  %2134 = vmatmul.mubr.bf16.gmra.mrb[0].mxu0 %v1357
  %v2135 = vpop.f32.mrb[0].mxu0
  %v2136 = vadd.f32 %v1607, %v2135
  %v2137 = vpop.f32.mrb[0].mxu0
  %v2138 = vpop.f32.mrb[0].mxu0
  %v2139 = vadd.f32 %v1610, %v2138
  %v2140 = vpop.f32.mrb[0].mxu0
  %2141 = vmatprep.mubr.bf16.mxu0 0
  %2142 = vmatmul.mubr.bf16.gmra.mrb[0].mxu0 %v1360
  %v2143 = vpop.f32.mrb[0].mxu0
  %v2144 = vadd.f32 %v1615, %v2143
  %v2145 = vpop.f32.mrb[0].mxu0
  %v2146 = vpop.f32.mrb[0].mxu0
  %v2147 = vadd.f32 %v1618, %v2146
  %v2148 = vpop.f32.mrb[0].mxu0
  %2149 = vmatprep.mubr.bf16.mxu0 0
  %2150 = vmatmul.mubr.bf16.gmra.mrb[0].mxu0 %v1363
  %v2151 = vpop.f32.mrb[0].mxu0
  %v2152 = vadd.f32 %v1623, %v2151
  %v2153 = vpop.f32.mrb[0].mxu0
  %v2154 = vpop.f32.mrb[0].mxu0
  %v2155 = vadd.f32 %v1626, %v2154
  %v2156 = vpop.f32.mrb[0].mxu0
  %2157 = vmatprep.mubr.bf16.mxu0 0
  %2158 = vmatmul.mubr.bf16.gmra.mrb[0].mxu0 %v1366
  %v2159 = vpop.f32.mrb[0].mxu0
  %v2160 = vadd.f32 %v1631, %v2159
  %v2161 = vpop.f32.mrb[0].mxu0
  %v2162 = vpop.f32.mrb[0].mxu0
  %v2163 = vadd.f32 %v1634, %v2162
  %v2164 = vpop.f32.mrb[0].mxu0
  %2165 = vmatprep.mubr.bf16.mxu0 0
  %2166 = vmatmul.mubr.bf16.gmra.mrb[0].mxu0 %v1369
  %v2167 = vpop.f32.mrb[0].mxu0
  %v2168 = vadd.f32 %v1639, %v2167
  %v2169 = vpop.f32.mrb[0].mxu0
  %v2170 = vpop.f32.mrb[0].mxu0
  %v2171 = vadd.f32 %v1642, %v2170
  %v2172 = vpop.f32.mrb[0].mxu0
  %2173 = vmatprep.mubr.bf16.mxu0 0
  %2174 = vmatmul.mubr.bf16.gmra.mrb[0].mxu0 %v1372
  %v2175 = vpop.f32.mrb[0].mxu0
  %v2176 = vadd.f32 %v1647, %v2175
  %v2177 = vpop.f32.mrb[0].mxu0
  %v2178 = vpop.f32.mrb[0].mxu0
  %v2179 = vadd.f32 %v1650, %v2178
  %v2180 = vpop.f32.mrb[0].mxu0
  %2181 = vmatprep.mubr.bf16.mxu0 0
  %2182 = vmatmul.mubr.bf16.gmra.mrb[0].mxu0 %v1375
  %v2183 = vpop.f32.mrb[0].mxu0
  %v2184 = vadd.f32 %v1655, %v2183
  %v2185 = vpop.f32.mrb[0].mxu0
  %v2186 = vpop.f32.mrb[0].mxu0
  %v2187 = vadd.f32 %v1658, %v2186
  %v2188 = vpop.f32.mrb[0].mxu0
  %2189 = vmatprep.mubr.bf16.mxu0 0
  %2190 = vmatmul.mubr.bf16.gmra.mrb[0].mxu0 %v1378
  %v2191 = vpop.f32.mrb[0].mxu0
  %v2192 = vadd.f32 %v1663, %v2191
  %v2193 = vpop.f32.mrb[0].mxu0
  %v2194 = vpop.f32.mrb[0].mxu0
  %v2195 = vadd.f32 %v1666, %v2194
  %v2196 = vpop.f32.mrb[0].mxu0
  %2197 = vmatprep.mubr.bf16.mxu0 0
  %2198 = vmatmul.mubr.bf16.gmra.mrb[0].mxu0 %v1381
  %v2199 = vpop.f32.mrb[0].mxu0
  %v2200 = vadd.f32 %v1671, %v2199
  %v2201 = vpop.f32.mrb[0].mxu0
  %v2202 = vpop.f32.mrb[0].mxu0
  %v2203 = vadd.f32 %v1674, %v2202
  %v2204 = vpop.f32.mrb[0].mxu0
  %2205 = vmatprep.mubr.bf16.mxu0 0
  %2206 = vmatmul.mubr.bf16.gmra.mrb[0].mxu0 %v1384
  %v2207 = vpop.f32.mrb[0].mxu0
  %v2208 = vadd.f32 %v1679, %v2207
  %v2209 = vpop.f32.mrb[0].mxu0
  %v2210 = vpop.f32.mrb[0].mxu0
  %v2211 = vadd.f32 %v1682, %v2210
  %v2212 = vpop.f32.mrb[0].mxu0
  %2213 = vmatprep.mubr.bf16.mxu0 0
  %2214 = vmatmul.mubr.bf16.gmra.mrb[0].mxu0 %v1387
  %v2215 = vpop.f32.mrb[0].mxu0
  %v2216 = vadd.f32 %v1687, %v2215
  %v2217 = vpop.f32.mrb[0].mxu0
  %v2218 = vpop.f32.mrb[0].mxu0
  %v2219 = vadd.f32 %v1690, %v2218
  %v2220 = vpop.f32.mrb[0].mxu0
  %2221 = vmatprep.mubr.bf16.mxu0 0
  %2222 = vmatmul.mubr.bf16.gmra.mrb[0].mxu0 %v1390
  %v2223 = vpop.f32.mrb[0].mxu0
  %v2224 = vadd.f32 %v1695, %v2223
  %v2225 = vpop.f32.mrb[0].mxu0
  %v2226 = vpop.f32.mrb[0].mxu0
  %v2227 = vadd.f32 %v1698, %v2226
  %v2228 = vpop.f32.mrb[0].mxu0
  %2229 = vmatprep.mubr.bf16.mxu0 0
  %2230 = vmatmul.mubr.bf16.gmra.mrb[0].mxu0 %v1393
  %v2231 = vpop.f32.mrb[0].mxu0
  %v2232 = vadd.f32 %v1703, %v2231
  %v2233 = vpop.f32.mrb[0].mxu0
  %v2234 = vpop.f32.mrb[0].mxu0
  %v2235 = vadd.f32 %v1706, %v2234
  %v2236 = vpop.f32.mrb[0].mxu0
  %2237 = vmatprep.mubr.bf16.mxu0 0
  %2238 = vmatmul.mubr.bf16.gmra.mrb[0].mxu0 %v1396
  %v2239 = vpop.f32.mrb[0].mxu0
  %v2240 = vadd.f32 %v1711, %v2239
  %v2241 = vpop.f32.mrb[0].mxu0
  %v2242 = vpop.f32.mrb[0].mxu0
  %v2243 = vadd.f32 %v1714, %v2242
  %v2244 = vpop.f32.mrb[0].mxu0
  %2245 = vmatprep.mubr.bf16.mxu0 0
  %2246 = vmatmul.mubr.bf16.gmra.mrb[0].mxu0 %v1399
  %v2247 = vpop.f32.mrb[0].mxu0
  %v2248 = vadd.f32 %v1719, %v2247
  %v2249 = vpop.f32.mrb[0].mxu0
  %v2250 = vpop.f32.mrb[0].mxu0
  %v2251 = vadd.f32 %v1722, %v2250
  %v2252 = vpop.f32.mrb[0].mxu0
  %2253 = vmatprep.mubr.bf16.mxu0 0
  %2254 = vmatmul.mubr.bf16.gmra.mrb[0].mxu0 %v1402
  %v2255 = vpop.f32.mrb[0].mxu0
  %v2256 = vadd.f32 %v1727, %v2255
  %v2257 = vpop.f32.mrb[0].mxu0
  %v2258 = vpop.f32.mrb[0].mxu0
  %v2259 = vadd.f32 %v1730, %v2258
  %v2260 = vpop.f32.mrb[0].mxu0
  %2261 = vmatprep.mubr.bf16.mxu0 0
  %2262 = vmatmul.mubr.bf16.gmra.mrb[0].mxu0 %v1405
  %v2263 = vpop.f32.mrb[0].mxu0
  %v2264 = vadd.f32 %v1735, %v2263
  %v2265 = vpop.f32.mrb[0].mxu0
  %v2266 = vpop.f32.mrb[0].mxu0
  %v2267 = vadd.f32 %v1738, %v2266
  %v2268 = vpop.f32.mrb[0].mxu0
  %2269 = vmatprep.mubr.bf16.mxu0 0
  %2270 = vmatmul.mubr.bf16.gmra.mrb[0].mxu0 %v1408
  %v2271 = vpop.f32.mrb[0].mxu0
  %v2272 = vadd.f32 %v1743, %v2271
  %v2273 = vpop.f32.mrb[0].mxu0
  %v2274 = vpop.f32.mrb[0].mxu0
  %v2275 = vadd.f32 %v1746, %v2274
  %v2276 = vpop.f32.mrb[0].mxu0
  %2277 = vmatprep.mubr.bf16.mxu0 0
  %2278 = vmatmul.mubr.bf16.gmra.mrb[0].mxu0 %v1411
  %v2279 = vpop.f32.mrb[0].mxu0
  %v2280 = vadd.f32 %v1751, %v2279
  %v2281 = vpop.f32.mrb[0].mxu0
  %v2282 = vpop.f32.mrb[0].mxu0
  %v2283 = vadd.f32 %v1754, %v2282
  %v2284 = vpop.f32.mrb[0].mxu0
  %2285 = vmatprep.mubr.bf16.mxu0 0
  %2286 = vmatmul.mubr.bf16.gmra.mrb[0].mxu0 %v1414
  %v2287 = vpop.f32.mrb[0].mxu0
  %v2288 = vadd.f32 %v1759, %v2287
  %v2289 = vpop.f32.mrb[0].mxu0
  %v2290 = vpop.f32.mrb[0].mxu0
  %v2291 = vadd.f32 %v1762, %v2290
  %v2292 = vpop.f32.mrb[0].mxu0
  %2293 = vmatprep.mubr.bf16.mxu0 0
  %2294 = vmatmul.mubr.bf16.gmra.mrb[0].mxu0 %v1417
  %v2295 = vpop.f32.mrb[0].mxu0
  %v2296 = vadd.f32 %v1767, %v2295
  %v2297 = vpop.f32.mrb[0].mxu0
  %v2298 = vpop.f32.mrb[0].mxu0
  %v2299 = vadd.f32 %v1770, %v2298
  %v2300 = vpop.f32.mrb[0].mxu0
  %2301 = vmatprep.mubr.bf16.mxu0 0
  %2302 = vmatmul.mubr.bf16.gmra.mrb[0].mxu0 %v1420
  %v2303 = vpop.f32.mrb[0].mxu0
  %v2304 = vadd.f32 %v1775, %v2303
  %v2305 = vpop.f32.mrb[0].mxu0
  %v2306 = vpop.f32.mrb[0].mxu0
  %v2307 = vadd.f32 %v1778, %v2306
  %v2308 = vpop.f32.mrb[0].mxu0
  %2309 = vmatprep.mubr.bf16.mxu0 0
  %2310 = vmatmul.mubr.bf16.gmra.mrb[0].mxu0 %v1423
  %v2311 = vpop.f32.mrb[0].mxu0
  %v2312 = vadd.f32 %v1783, %v2311
  %v2313 = vpop.f32.mrb[0].mxu0
  %v2314 = vpop.f32.mrb[0].mxu0
  %v2315 = vadd.f32 %v1786, %v2314
  %v2316 = vpop.f32.mrb[0].mxu0
  %2317 = vmatprep.mubr.bf16.mxu0 0
  %2318 = vmatmul.mubr.bf16.gmra.mrb[0].mxu0 %v1426
  %v2319 = vpop.f32.mrb[0].mxu0
  %v2320 = vadd.f32 %v1791, %v2319
  %v2321 = vpop.f32.mrb[0].mxu0
  %v2322 = vpop.f32.mrb[0].mxu0
  %v2323 = vadd.f32 %v1794, %v2322
  %v2324 = vpop.f32.mrb[0].mxu0
  %2325 = vmatprep.mubr.bf16.mxu0 0
  %2326 = vmatmul.mubr.bf16.gmra.mrb[0].mxu0 %v1429
  %v2327 = vpop.f32.mrb[0].mxu0
  %v2328 = vadd.f32 %v1799, %v2327
  %v2329 = vpop.f32.mrb[0].mxu0
  %v2330 = vpop.f32.mrb[0].mxu0
  %v2331 = vadd.f32 %v1802, %v2330
  %v2332 = vpop.f32.mrb[0].mxu0
  %2333 = vmatprep.mubr.bf16.mxu0 0
  %2334 = vmatmul.mubr.bf16.gmra.mrb[0].mxu0 %v1432
  %v2335 = vpop.f32.mrb[0].mxu0
  %v2336 = vadd.f32 %v1807, %v2335
  %v2337 = vpop.f32.mrb[0].mxu0
  %v2338 = vpop.f32.mrb[0].mxu0
  %v2339 = vadd.f32 %v1810, %v2338
  %v2340 = vpop.f32.mrb[0].mxu0
  %2341 = vmatprep.mubr.bf16.mxu0 0
  %2342 = vmatmul.mubr.bf16.gmra.mrb[0].mxu0 %v1435
  %v2343 = vpop.f32.mrb[0].mxu0
  %v2344 = vadd.f32 %v1815, %v2343
  %v2345 = vpop.f32.mrb[0].mxu0
  %v2346 = vpop.f32.mrb[0].mxu0
  %v2347 = vadd.f32 %v1818, %v2346
  %v2348 = vpop.f32.mrb[0].mxu0
  %2349 = vmatprep.mubr.bf16.mxu0 0
  %2350 = vmatmul.mubr.bf16.gmra.mrb[0].mxu0 %v1438
  %v2351 = vpop.f32.mrb[0].mxu0
  %v2352 = vadd.f32 %v1823, %v2351
  %v2353 = vpop.f32.mrb[0].mxu0
  %v2354 = vpop.f32.mrb[0].mxu0
  %v2355 = vadd.f32 %v1826, %v2354
  %v2356 = vpop.f32.mrb[0].mxu0
  %2357 = vmatprep.mubr.bf16.mxu0 0
  %2358 = vmatmul.mubr.bf16.gmra.mrb[0].mxu0 %v1441
  %v2359 = vpop.f32.mrb[0].mxu0
  %v2360 = vadd.f32 %v1831, %v2359
  %v2361 = vpop.f32.mrb[0].mxu0
  %v2362 = vpop.f32.mrb[0].mxu0
  %v2363 = vadd.f32 %v1834, %v2362
  %v2364 = vpop.f32.mrb[0].mxu0
  %2365 = vmatprep.mubr.bf16.mxu0 0
  %2366 = vmatmul.mubr.bf16.gmra.mrb[0].mxu0 %v1444
  %v2367 = vpop.f32.mrb[0].mxu0
  %v2368 = vadd.f32 %v1839, %v2367
  %v2369 = vpop.f32.mrb[0].mxu0
  %v2370 = vpop.f32.mrb[0].mxu0
  %v2371 = vadd.f32 %v1842, %v2370
  %v2372 = vpop.f32.mrb[0].mxu0
  %2373 = vmatprep.mubr.bf16.mxu0 0
  %2374 = vmatmul.mubr.bf16.gmra.mrb[0].mxu0 %v1447
  %v2375 = vpop.f32.mrb[0].mxu0
  %v2376 = vadd.f32 %v1847, %v2375
  %v2377 = vpop.f32.mrb[0].mxu0
  %v2378 = vpop.f32.mrb[0].mxu0
  %v2379 = vadd.f32 %v1850, %v2378
  %v2380 = vpop.f32.mrb[0].mxu0
  %2381 = vmatprep.mubr.bf16.mxu0 0
  %2382 = vmatmul.mubr.bf16.gmra.mrb[0].mxu0 %v1450
  %v2383 = vpop.f32.mrb[0].mxu0
  %v2384 = vadd.f32 %v1855, %v2383
  %v2385 = vpop.f32.mrb[0].mxu0
  %v2386 = vpop.f32.mrb[0].mxu0
  %v2387 = vadd.f32 %v1858, %v2386
  %v2388 = vpop.f32.mrb[0].mxu0
  %2389 = vmatprep.mubr.bf16.mxu0 0
  %2390 = vmatmul.mubr.bf16.gmra.mrb[0].mxu0 %v1453
  %v2391 = vpop.f32.mrb[0].mxu0
  %v2392 = vadd.f32 %v1863, %v2391
  %v2393 = vpop.f32.mrb[0].mxu0
  %v2394 = vpop.f32.mrb[0].mxu0
  %v2395 = vadd.f32 %v1866, %v2394
  %v2396 = vpop.f32.mrb[0].mxu0
  %2397 = vmatprep.mubr.bf16.mxu0 0
  %2398 = vmatmul.mubr.bf16.gmra.mrb[0].mxu0 %v1456
  %v2399 = vpop.f32.mrb[0].mxu0
  %v2400 = vadd.f32 %v1871, %v2399
  %v2401 = vpop.f32.mrb[0].mxu0
  %v2402 = vpop.f32.mrb[0].mxu0
  %v2403 = vadd.f32 %v1874, %v2402
  %v2404 = vpop.f32.mrb[0].mxu0
  %2405 = vmatprep.mubr.bf16.mxu0 0
  %2406 = vmatmul.mubr.bf16.gmra.mrb[0].mxu0 %v1459
  %v2407 = vpop.f32.mrb[0].mxu0
  %v2408 = vadd.f32 %v1879, %v2407
  %v2409 = vpop.f32.mrb[0].mxu0
  %v2410 = vpop.f32.mrb[0].mxu0
  %v2411 = vadd.f32 %v1882, %v2410
  %v2412 = vpop.f32.mrb[0].mxu0
  %2413 = vmatprep.mubr.bf16.mxu0 0
  %2414 = vmatmul.mubr.bf16.gmra.mrb[0].mxu0 %v1462
  %v2415 = vpop.f32.mrb[0].mxu0
  %v2416 = vadd.f32 %v1887, %v2415
  %v2417 = vpop.f32.mrb[0].mxu0
  %v2418 = vpop.f32.mrb[0].mxu0
  %v2419 = vadd.f32 %v1890, %v2418
  %v2420 = vpop.f32.mrb[0].mxu0
  %2421 = vmatprep.mubr.bf16.mxu0 0
  %2422 = vmatmul.mubr.bf16.gmra.mrb[0].mxu0 %v1465
  %v2423 = vpop.f32.mrb[0].mxu0
  %v2424 = vadd.f32 %v1895, %v2423
  %v2425 = vpop.f32.mrb[0].mxu0
  %v2426 = vpop.f32.mrb[0].mxu0
  %v2427 = vadd.f32 %v1898, %v2426
  %v2428 = vpop.f32.mrb[0].mxu0
  %2429 = vmatprep.mubr.bf16.mxu0 0
  %2430 = vmatmul.mubr.bf16.gmra.mrb[0].mxu0 %v1468
  %v2431 = vpop.f32.mrb[0].mxu0
  %v2432 = vadd.f32 %v1903, %v2431
  %v2433 = vpop.f32.mrb[0].mxu0
  %v2434 = vpop.f32.mrb[0].mxu0
  %v2435 = vadd.f32 %v1906, %v2434
  %v2436 = vpop.f32.mrb[0].mxu0
  %2437 = vmatprep.mubr.bf16.mxu0 0
  %2438 = vmatmul.mubr.bf16.gmra.mrb[0].mxu0 %v1471
  %v2439 = vpop.f32.mrb[0].mxu0
  %v2440 = vadd.f32 %v1911, %v2439
  %v2441 = vpop.f32.mrb[0].mxu0
  %v2442 = vpop.f32.mrb[0].mxu0
  %v2443 = vadd.f32 %v1914, %v2442
  %v2444 = vpop.f32.mrb[0].mxu0
  %2445 = vmatprep.mubr.bf16.mxu0 0
  %2446 = vmatmul.mubr.bf16.gmra.mrb[0].mxu0 %v1474
  %v2447 = vpop.f32.mrb[0].mxu0
  %v2448 = vadd.f32 %v1919, %v2447
  %v2449 = vpop.f32.mrb[0].mxu0
  %v2450 = vpop.f32.mrb[0].mxu0
  %v2451 = vadd.f32 %v1922, %v2450
  %v2452 = vpop.f32.mrb[0].mxu0
  %2453 = vmatprep.mubr.bf16.mxu0 0
  %2454 = vmatmul.mubr.bf16.gmra.mrb[0].mxu0 %v1477
  %v2455 = vpop.f32.mrb[0].mxu0
  %v2456 = vadd.f32 %v1927, %v2455
  %v2457 = vpop.f32.mrb[0].mxu0
  %v2458 = vpop.f32.mrb[0].mxu0
  %v2459 = vadd.f32 %v1930, %v2458
  %v2460 = vpop.f32.mrb[0].mxu0
  %2461 = vmatprep.mubr.bf16.mxu0 0
  %2462 = vmatmul.mubr.bf16.gmra.mrb[0].mxu0 %v1480
  %v2463 = vpop.f32.mrb[0].mxu0
  %v2464 = vadd.f32 %v1935, %v2463
  %v2465 = vpop.f32.mrb[0].mxu0
  %v2466 = vpop.f32.mrb[0].mxu0
  %v2467 = vadd.f32 %v1938, %v2466
  %v2468 = vpop.f32.mrb[0].mxu0
  %2469 = vmatprep.mubr.bf16.mxu0 0
  %2470 = vmatmul.mubr.bf16.gmra.mrb[0].mxu0 %v1483
  %v2471 = vpop.f32.mrb[0].mxu0
  %v2472 = vadd.f32 %v1943, %v2471
  %v2473 = vpop.f32.mrb[0].mxu0
  %v2474 = vpop.f32.mrb[0].mxu0
  %v2475 = vadd.f32 %v1946, %v2474
  %v2476 = vpop.f32.mrb[0].mxu0
  %2477 = vmatprep.mubr.bf16.mxu0 0
  %2478 = vmatmul.mubr.bf16.gmra.mrb[0].mxu0 %v1486
  %v2479 = vpop.f32.mrb[0].mxu0
  %v2480 = vadd.f32 %v1951, %v2479
  %v2481 = vpop.f32.mrb[0].mxu0
  %v2482 = vpop.f32.mrb[0].mxu0
  %v2483 = vadd.f32 %v1954, %v2482
  %v2484 = vpop.f32.mrb[0].mxu0
  %2485 = vmatprep.mubr.bf16.mxu0 0
  %2486 = vmatmul.mubr.bf16.gmra.mrb[0].mxu0 %v1489
  %v2487 = vpop.f32.mrb[0].mxu0
  %v2488 = vadd.f32 %v1959, %v2487
  %v2489 = vpop.f32.mrb[0].mxu0
  %v2490 = vpop.f32.mrb[0].mxu0
  %v2491 = vadd.f32 %v1962, %v2490
  %v2492 = vpop.f32.mrb[0].mxu0
  %2493 = vmatprep.mubr.bf16.mxu0 0
  %2494 = vmatmul.mubr.bf16.gmra.mrb[0].mxu0 %v1492
  %v2495 = vpop.f32.mrb[0].mxu0
  %v2496 = vadd.f32 %v1967, %v2495
  %v2497 = vpop.f32.mrb[0].mxu0
  %v2498 = vpop.f32.mrb[0].mxu0
  %v2499 = vadd.f32 %v1970, %v2498
  %v2500 = vpop.f32.mrb[0].mxu0
  %2501 = vmatprep.mubr.bf16.mxu0 0
  %2502 = vmatmul.mubr.bf16.gmra.mrb[0].mxu0 %v1495
  %v2503 = vpop.f32.mrb[0].mxu0
  %v2504 = vadd.f32 %v1975, %v2503
  %v2505 = vpop.f32.mrb[0].mxu0
  %v2506 = vpop.f32.mrb[0].mxu0
  %v2507 = vadd.f32 %v1978, %v2506
  %v2508 = vpop.f32.mrb[0].mxu0
  %2509 = vmatprep.mubr.bf16.mxu0 0
  %2510 = vmatmul.mubr.bf16.gmra.mrb[0].mxu0 %v1498
  %v2511 = vpop.f32.mrb[0].mxu0
  %v2512 = vadd.f32 %v1983, %v2511
  %v2513 = vpop.f32.mrb[0].mxu0
  %v2514 = vpop.f32.mrb[0].mxu0
  %v2515 = vadd.f32 %v1986, %v2514
  %v2516 = vpop.f32.mrb[0].mxu0
  %2517 = vmatprep.mubr.bf16.mxu0 0
  %2518 = vmatmul.mubr.bf16.gmra.mrb[0].mxu0 %v1501
  %v2519 = vpop.f32.mrb[0].mxu0
  %v2520 = vadd.f32 %v1991, %v2519
  %v2521 = vpop.f32.mrb[0].mxu0
  %v2522 = vpop.f32.mrb[0].mxu0
  %v2523 = vadd.f32 %v1994, %v2522
  %v2524 = vpop.f32.mrb[0].mxu0
  %2525 = vmatprep.mubr.bf16.mxu0 0
  %2526 = vmatmul.mubr.bf16.gmra.mrb[0].mxu0 %v1504
  %v2527 = vpop.f32.mrb[0].mxu0
  %v2528 = vadd.f32 %v1999, %v2527
  %v2529 = vpop.f32.mrb[0].mxu0
  %v2530 = vpop.f32.mrb[0].mxu0
  %v2531 = vadd.f32 %v2002, %v2530
  %v2532 = vpop.f32.mrb[0].mxu0
  %2533 = vmatprep.mubr.bf16.mxu0 0
  %2534 = vmatmul.mubr.bf16.gmra.mrb[0].mxu0 %v1507
  %v2535 = vpop.f32.mrb[0].mxu0
  %v2536 = vadd.f32 %v2007, %v2535
  %v2537 = vpop.f32.mrb[0].mxu0
  %v2538 = vpop.f32.mrb[0].mxu0
  %v2539 = vadd.f32 %v2010, %v2538
  %v2540 = vpop.f32.mrb[0].mxu0
  %2541 = vmatprep.mubr.bf16.mxu0 0
  %2542 = vmatmul.mubr.bf16.gmra.mrb[0].mxu0 %v1510
  %v2543 = vpop.f32.mrb[0].mxu0
  %v2544 = vadd.f32 %v2015, %v2543
  %v2545 = vpop.f32.mrb[0].mxu0
  %v2546 = vpop.f32.mrb[0].mxu0
  %v2547 = vadd.f32 %v2018, %v2546
  %v2548 = vpop.f32.mrb[0].mxu0
  %2549 = vmatprep.mubr.bf16.mxu0 0
  %2550 = vmatmul.mubr.bf16.gmra.mrb[0].mxu0 %v1513
  %v2551 = vpop.f32.mrb[0].mxu0
  %v2552 = vadd.f32 %v2023, %v2551
  %v2553 = vpop.f32.mrb[0].mxu0
  %v2554 = vpop.f32.mrb[0].mxu0
  %v2555 = vadd.f32 %v2026, %v2554
  %v2556 = vpop.f32.mrb[0].mxu0
  %2557 = vmatprep.mubr.bf16.mxu0 0
  %2558 = vmatmul.mubr.bf16.gmra.mrb[0].mxu0 %v1516
  %v2559 = vpop.f32.mrb[0].mxu0
  %v2560 = vadd.f32 %v2031, %v2559
  %v2561 = vpop.f32.mrb[0].mxu0
  %v2562 = vpop.f32.mrb[0].mxu0
  %v2563 = vadd.f32 %v2034, %v2562
  %v2564 = vpop.f32.mrb[0].mxu0
  %2565 = vmatprep.mubr.bf16.mxu0 0
  %2566 = vmatmul.mubr.bf16.gmra.mrb[0].mxu0 %v1519
  %v2567 = vpop.f32.mrb[0].mxu0
  %v2568 = vadd.f32 %v2039, %v2567
  %v2569 = vpop.f32.mrb[0].mxu0
  %v2570 = vpop.f32.mrb[0].mxu0
  %v2571 = vadd.f32 %v2042, %v2570
  %v2572 = vpop.f32.mrb[0].mxu0
  %2573 = vmatprep.mubr.bf16.mxu0 0
  %2574 = vmatmul.mubr.bf16.gmra.mrb[0].mxu0 %v1522
  %v2575 = vpop.f32.mrb[0].mxu0
  %v2576 = vadd.f32 %v2047, %v2575
  %v2577 = vpop.f32.mrb[0].mxu0
  %v2578 = vpop.f32.mrb[0].mxu0
  %v2579 = vadd.f32 %v2050, %v2578
  %v2580 = vpop.f32.mrb[0].mxu0
  %2581 = vdwg.mxu0
  %v2582 = vmax.f32 %v2088, %v2211
  %v2583 = vmax.f32 %v2091, %v2216
  %v2584 = vmax.f32 %v2096, %v2219
  %v2585 = vmax.f32 %v2099, %v2224
  %v2586 = vmax.f32 %v2104, %v2227
  %v2587 = vmax.f32 %v2107, %v2232
  %v2588 = vmax.f32 %v2112, %v2235
  %v2589 = vmax.f32 %v2115, %v2240
  %v2590 = vmax.f32 %v2120, %v2243
  %v2591 = vmax.f32 %v2123, %v2248
  %v2592 = vmax.f32 %v2128, %v2251
  %v2593 = vmax.f32 %v2131, %v2256
  %v2594 = vmax.f32 %v2136, %v2259
  %v2595 = vmax.f32 %v2139, %v2264
  %v2596 = vmax.f32 %v2144, %v2267
  %v2597 = vmax.f32 %v2147, %v2272
  %v2598 = vmax.f32 %v2152, %v2275
  %v2599 = vmax.f32 %v2155, %v2280
  %v2600 = vmax.f32 %v2160, %v2283
  %v2601 = vmax.f32 %v2163, %v2288
  %v2602 = vmax.f32 %v2168, %v2291
  %v2603 = vmax.f32 %v2171, %v2296
  %v2604 = vmax.f32 %v2176, %v2299
  %v2605 = vmax.f32 %v2179, %v2304
  %v2606 = vmax.f32 %v2184, %v2307
  %v2607 = vmax.f32 %v2187, %v2312
  %v2608 = vmax.f32 %v2192, %v2315
  %v2609 = vmax.f32 %v2195, %v2320
  %v2610 = vmax.f32 %v2200, %v2323
  %v2611 = vmax.f32 %v2203, %v2328
  %v2612 = vmax.f32 %v2208, %v2331
  %v2613 = vmax.f32 %v2336, %v2459
  %v2614 = vmax.f32 %v2339, %v2464
  %v2615 = vmax.f32 %v2344, %v2467
  %v2616 = vmax.f32 %v2347, %v2472
  %v2617 = vmax.f32 %v2352, %v2475
  %v2618 = vmax.f32 %v2355, %v2480
  %v2619 = vmax.f32 %v2360, %v2483
  %v2620 = vmax.f32 %v2363, %v2488
  %v2621 = vmax.f32 %v2368, %v2491
  %v2622 = vmax.f32 %v2371, %v2496
  %v2623 = vmax.f32 %v2376, %v2499
  %v2624 = vmax.f32 %v2379, %v2504
  %v2625 = vmax.f32 %v2384, %v2507
  %v2626 = vmax.f32 %v2387, %v2512
  %v2627 = vmax.f32 %v2392, %v2515
  %v2628 = vmax.f32 %v2395, %v2520
  %v2629 = vmax.f32 %v2400, %v2523
  %v2630 = vmax.f32 %v2403, %v2528
  %v2631 = vmax.f32 %v2408, %v2531
  %v2632 = vmax.f32 %v2411, %v2536
  %v2633 = vmax.f32 %v2416, %v2539
  %v2634 = vmax.f32 %v2419, %v2544
  %v2635 = vmax.f32 %v2424, %v2547
  %v2636 = vmax.f32 %v2427, %v2552
  %v2637 = vmax.f32 %v2432, %v2555
  %v2638 = vmax.f32 %v2435, %v2560
  %v2639 = vmax.f32 %v2440, %v2563
  %v2640 = vmax.f32 %v2443, %v2568
  %v2641 = vmax.f32 %v2448, %v2571
  %v2642 = vmax.f32 %v2451, %v2576
  %v2643 = vmax.f32 %v2456, %v2579
  %v2644 = vmax.f32 %v2582, %v2613
  %v2645 = vmax.f32 %v2583, %v2614
  %v2646 = vmax.f32 %v2584, %v2615
  %v2647 = vmax.f32 %v2585, %v2616
  %v2648 = vmax.f32 %v2586, %v2617
  %v2649 = vmax.f32 %v2587, %v2618
  %v2650 = vmax.f32 %v2588, %v2619
  %v2651 = vmax.f32 %v2589, %v2620
  %v2652 = vmax.f32 %v2590, %v2621
  %v2653 = vmax.f32 %v2591, %v2622
  %v2654 = vmax.f32 %v2592, %v2623
  %v2655 = vmax.f32 %v2593, %v2624
  %v2656 = vmax.f32 %v2594, %v2625
  %v2657 = vmax.f32 %v2595, %v2626
  %v2658 = vmax.f32 %v2596, %v2627
  %v2659 = vmax.f32 %v2597, %v2628
  %v2660 = vmax.f32 %v2598, %v2629
  %v2661 = vmax.f32 %v2599, %v2630
  %v2662 = vmax.f32 %v2600, %v2631
  %v2663 = vmax.f32 %v2601, %v2632
  %v2664 = vmax.f32 %v2602, %v2633
  %v2665 = vmax.f32 %v2603, %v2634
  %v2666 = vmax.f32 %v2604, %v2635
  %v2667 = vmax.f32 %v2605, %v2636
  %v2668 = vmax.f32 %v2606, %v2637
  %v2669 = vmax.f32 %v2607, %v2638
  %v2670 = vmax.f32 %v2608, %v2639
  %v2671 = vmax.f32 %v2609, %v2640
  %v2672 = vmax.f32 %v2610, %v2641
  %v2673 = vmax.f32 %v2611, %v2642
  %v2674 = vmax.f32 %v2612, %v2643
  %v2675 = vld [vmem:[%s2] sm:$0x1]
  %v2677 = vlaneseq
  %v2678 = vshrl.u32 %v2677, 7
  %v2679 = vsub.s32 0, %v2678
  %v2680 = vrot.slane %v2675, %v2679
  %v2682 = vadd.f32 %v2644, %v2680
  %v2683 = vadd.f32 %v2645, %v2680
  %v2684 = vadd.f32 %v2646, %v2680
  %v2685 = vadd.f32 %v2647, %v2680
  %v2686 = vadd.f32 %v2648, %v2680
  %v2687 = vadd.f32 %v2649, %v2680
  %v2688 = vadd.f32 %v2650, %v2680
  %v2689 = vadd.f32 %v2651, %v2680
  %v2690 = vadd.f32 %v2652, %v2680
  %v2691 = vadd.f32 %v2653, %v2680
  %v2692 = vadd.f32 %v2654, %v2680
  %v2693 = vadd.f32 %v2655, %v2680
  %v2694 = vadd.f32 %v2656, %v2680
  %v2695 = vadd.f32 %v2657, %v2680
  %v2696 = vadd.f32 %v2658, %v2680
  %v2697 = vadd.f32 %v2659, %v2680
  %v2698 = vadd.f32 %v2660, %v2680
  %v2699 = vadd.f32 %v2661, %v2680
  %v2700 = vadd.f32 %v2662, %v2680
  %v2701 = vadd.f32 %v2663, %v2680
  %v2702 = vadd.f32 %v2664, %v2680
  %v2703 = vadd.f32 %v2665, %v2680
  %v2704 = vadd.f32 %v2666, %v2680
  %v2705 = vadd.f32 %v2667, %v2680
  %v2706 = vadd.f32 %v2668, %v2680
  %v2707 = vadd.f32 %v2669, %v2680
  %v2708 = vadd.f32 %v2670, %v2680
  %v2709 = vadd.f32 %v2671, %v2680
  %v2710 = vadd.f32 %v2672, %v2680
  %v2711 = vadd.f32 %v2673, %v2680
  %v2712 = vadd.f32 %v2674, %v2680
  %v2713 = vmax.f32 %v2682, 0.0
  %v2714 = vmax.f32 %v2683, 0.0
  %v2715 = vmax.f32 %v2684, 0.0
  %v2716 = vmax.f32 %v2685, 0.0
  %v2717 = vmax.f32 %v2686, 0.0
  %v2718 = vmax.f32 %v2687, 0.0
  %v2719 = vmax.f32 %v2688, 0.0
  %v2720 = vmax.f32 %v2689, 0.0
  %v2721 = vmax.f32 %v2690, 0.0
  %v2722 = vmax.f32 %v2691, 0.0
  %v2723 = vmax.f32 %v2692, 0.0
  %v2724 = vmax.f32 %v2693, 0.0
  %v2725 = vmax.f32 %v2694, 0.0
  %v2726 = vmax.f32 %v2695, 0.0
  %v2727 = vmax.f32 %v2696, 0.0
  %v2728 = vmax.f32 %v2697, 0.0
  %v2729 = vmax.f32 %v2698, 0.0
  %v2730 = vmax.f32 %v2699, 0.0
  %v2731 = vmax.f32 %v2700, 0.0
  %v2732 = vmax.f32 %v2701, 0.0
  %v2733 = vmax.f32 %v2702, 0.0
  %v2734 = vmax.f32 %v2703, 0.0
  %v2735 = vmax.f32 %v2704, 0.0
  %v2736 = vmax.f32 %v2705, 0.0
  %v2737 = vmax.f32 %v2706, 0.0
  %v2738 = vmax.f32 %v2707, 0.0
  %v2739 = vmax.f32 %v2708, 0.0
  %v2740 = vmax.f32 %v2709, 0.0
  %v2741 = vmax.f32 %v2710, 0.0
  %v2742 = vmax.f32 %v2711, 0.0
  %v2743 = vmax.f32 %v2712, 0.0
  %v2744 = vpack.c.bf16 %v2714, %v2713
  %v2745 = vpack.c.bf16 %v2716, %v2715
  %v2746 = vpack.c.bf16 %v2718, %v2717
  %v2747 = vpack.c.bf16 %v2720, %v2719
  %v2748 = vpack.c.bf16 %v2722, %v2721
  %v2749 = vpack.c.bf16 %v2724, %v2723
  %v2750 = vpack.c.bf16 %v2726, %v2725
  %v2751 = vpack.c.bf16 %v2728, %v2727
  %v2752 = vpack.c.bf16 %v2730, %v2729
  %v2753 = vpack.c.bf16 %v2732, %v2731
  %v2754 = vpack.c.bf16 %v2734, %v2733
  %v2755 = vpack.c.bf16 %v2736, %v2735
  %v2756 = vpack.c.bf16 %v2738, %v2737
  %v2757 = vpack.c.bf16 %v2740, %v2739
  %v2758 = vpack.c.bf16 %v2742, %v2741
  %v2759 = vpack.c.bf16 %v2743, %v2743
  %v2776 = vunpack.c.l.b16 %v2744
  %v2777 = vunpack.c.h.b16 %v2744
  %v2778 = vunpack.c.l.b16 %v2745
  %v2779 = vunpack.c.h.b16 %v2745
  %v2780 = vunpack.c.l.b16 %v2746
  %v2781 = vunpack.c.h.b16 %v2746
  %v2782 = vunpack.c.l.b16 %v2747
  %v2783 = vunpack.c.h.b16 %v2747
  %v2784 = vunpack.c.l.b16 %v2748
  %v2785 = vunpack.c.h.b16 %v2748
  %v2786 = vunpack.c.l.b16 %v2749
  %v2787 = vunpack.c.h.b16 %v2749
  %v2788 = vunpack.c.l.b16 %v2750
  %v2789 = vunpack.c.h.b16 %v2750
  %v2790 = vunpack.c.l.b16 %v2751
  %v2791 = vunpack.c.h.b16 %v2751
  %v2792 = vunpack.c.l.b16 %v2752
  %v2793 = vunpack.c.h.b16 %v2752
  %v2794 = vunpack.c.l.b16 %v2753
  %v2795 = vunpack.c.h.b16 %v2753
  %v2796 = vunpack.c.l.b16 %v2754
  %v2797 = vunpack.c.h.b16 %v2754
  %v2798 = vunpack.c.l.b16 %v2755
  %v2799 = vunpack.c.h.b16 %v2755
  %v2800 = vunpack.c.l.b16 %v2756
  %v2801 = vunpack.c.h.b16 %v2756
  %v2802 = vunpack.c.l.b16 %v2757
  %v2803 = vunpack.c.h.b16 %v2757
  %v2804 = vunpack.c.l.b16 %v2758
  %v2805 = vunpack.c.h.b16 %v2758
  %v2806 = vunpack.c.l.b16 %v2759
  %v2807 = vpack.c.b16 %v2776, %v2776
  %v2808 = vpack.c.b16 %v2777, %v2777
  %v2809 = vpack.c.b16 %v2778, %v2778
  %v2810 = vpack.c.b16 %v2779, %v2779
  %v2811 = vpack.c.b16 %v2780, %v2780
  %v2812 = vpack.c.b16 %v2781, %v2781
  %v2813 = vpack.c.b16 %v2782, %v2782
  %v2814 = vpack.c.b16 %v2783, %v2783
  %v2815 = vpack.c.b16 %v2784, %v2784
  %v2816 = vpack.c.b16 %v2785, %v2785
  %v2817 = vpack.c.b16 %v2786, %v2786
  %v2818 = vpack.c.b16 %v2787, %v2787
  %v2819 = vpack.c.b16 %v2788, %v2788
  %v2820 = vpack.c.b16 %v2789, %v2789
  %v2821 = vpack.c.b16 %v2790, %v2790
  %v2822 = vpack.c.b16 %v2791, %v2791
  %v2823 = vpack.c.b16 %v2792, %v2792
  %v2824 = vpack.c.b16 %v2793, %v2793
  %v2825 = vpack.c.b16 %v2794, %v2794
  %v2826 = vpack.c.b16 %v2795, %v2795
  %v2827 = vpack.c.b16 %v2796, %v2796
  %v2828 = vpack.c.b16 %v2797, %v2797
  %v2829 = vpack.c.b16 %v2798, %v2798
  %v2830 = vpack.c.b16 %v2799, %v2799
  %v2831 = vpack.c.b16 %v2800, %v2800
  %v2832 = vpack.c.b16 %v2801, %v2801
  %v2833 = vpack.c.b16 %v2802, %v2802
  %v2834 = vpack.c.b16 %v2803, %v2803
  %v2835 = vpack.c.b16 %v2804, %v2804
  %v2836 = vpack.c.b16 %v2805, %v2805
  %v2837 = vpack.c.b16 %v2806, %v2806
  %vm2869 = vcmask 257024
  %2870 = vst.msk [vmem:[%s3] sm:$0xf] %vm2869, %v2807
  %2871 = vst.msk [vmem:[%s3 + $0x4] sm:$0xf] %vm2869, %v2808
  %2872 = vst.msk [vmem:[%s3 + $0x8] sm:$0xf] %vm2869, %v2809
  %2873 = vst.msk [vmem:[%s3 + $0xc] sm:$0xf] %vm2869, %v2810
  %2874 = vst.msk [vmem:[%s3 + $0x10] sm:$0xf] %vm2869, %v2811
  %2875 = vst.msk [vmem:[%s3 + $0x14] sm:$0xf] %vm2869, %v2812
  %2876 = vst.msk [vmem:[%s3 + $0x18] sm:$0xf] %vm2869, %v2813
  %2877 = vst.msk [vmem:[%s3 + $0x1c] sm:$0xf] %vm2869, %v2814
  %2878 = vst.msk [vmem:[%s3 + $0x20] sm:$0xf] %vm2869, %v2815
  %2879 = vst.msk [vmem:[%s3 + $0x24] sm:$0xf] %vm2869, %v2816
  %2880 = vst.msk [vmem:[%s3 + $0x28] sm:$0xf] %vm2869, %v2817
  %2881 = vst.msk [vmem:[%s3 + $0x2c] sm:$0xf] %vm2869, %v2818
  %2882 = vst.msk [vmem:[%s3 + $0x30] sm:$0xf] %vm2869, %v2819
  %2883 = vst.msk [vmem:[%s3 + $0x34] sm:$0xf] %vm2869, %v2820
  %2884 = vst.msk [vmem:[%s3 + $0x38] sm:$0xf] %vm2869, %v2821
  %2885 = vst.msk [vmem:[%s3 + $0x3c] sm:$0xf] %vm2869, %v2822
  %2886 = vst.msk [vmem:[%s3 + $0x40] sm:$0xf] %vm2869, %v2823
  %2887 = vst.msk [vmem:[%s3 + $0x44] sm:$0xf] %vm2869, %v2824
  %2888 = vst.msk [vmem:[%s3 + $0x48] sm:$0xf] %vm2869, %v2825
  %2889 = vst.msk [vmem:[%s3 + $0x4c] sm:$0xf] %vm2869, %v2826
  %2890 = vst.msk [vmem:[%s3 + $0x50] sm:$0xf] %vm2869, %v2827
  %2891 = vst.msk [vmem:[%s3 + $0x54] sm:$0xf] %vm2869, %v2828
  %2892 = vst.msk [vmem:[%s3 + $0x58] sm:$0xf] %vm2869, %v2829
  %2893 = vst.msk [vmem:[%s3 + $0x5c] sm:$0xf] %vm2869, %v2830
  %2894 = vst.msk [vmem:[%s3 + $0x60] sm:$0xf] %vm2869, %v2831
  %2895 = vst.msk [vmem:[%s3 + $0x64] sm:$0xf] %vm2869, %v2832
  %2896 = vst.msk [vmem:[%s3 + $0x68] sm:$0xf] %vm2869, %v2833
  %2897 = vst.msk [vmem:[%s3 + $0x6c] sm:$0xf] %vm2869, %v2834
  %2898 = vst.msk [vmem:[%s3 + $0x70] sm:$0xf] %vm2869, %v2835
  %2899 = vst.msk [vmem:[%s3 + $0x74] sm:$0xf] %vm2869, %v2836
  %2900 = vst.msk [vmem:[%s3 + $0x78] sm:$0xf] %vm2869, %v2837
  // Predicated region
  $region14: #{convnet_forward.4} parent=0 // pred_check
    _
  $region15: #{convnet_forward.4} parent=0 // pred_check_branch
    %2902 = sbr.rel (0) target = $region17
  $region16: #{convnet_forward.4} parent=0 // pred_region
    _
  $region17: #{convnet_forward.4} parent=0 // pred_fallthru
    _
  // Predicated region
  $region18: #{convnet_forward.4} parent=0 // pred_check
    _
  $region19: #{convnet_forward.4} parent=0 // pred_check_branch
    %2904 = sbr.rel (0) target = $region21
  $region20: #{convnet_forward.4} parent=0 // pred_region
    _
  $region21: #{convnet_forward.4} parent=0 // pred_fallthru
    _

// kernel: convnet_forward.5
$region0: #{convnet_forward.5}
  #allocation0 [shape = 'u32[]', space=smem, size = 0x4, offset = 0x4, fixed_abs, tag = 'smem constant byte address 0x4 - core index']
  #allocation1 [shape = 'u32[144,128]{1,0:T(1,128)}', space=vmem, size = 0x12000, scoped, tag = 'internal scratch']
  %s0 = inlined_call_operand.vmem [shape: bf16[2,3872], index: 0, kind: input, shape index: {}]
  %s1 = inlined_call_operand.vmem [shape: bf16[3872,256], index: 1, kind: input, shape index: {}]
  %s2 = inlined_call_operand.vmem [shape: f32[1,256], index: 2, kind: input, shape index: {}]
  %s3 = inlined_call_operand.vmem [shape: bf16[256,128], index: 3, kind: input, shape index: {}]
  %s4 = inlined_call_operand.vmem [shape: f32[1,128], index: 4, kind: input, shape index: {}]
  %s5 = inlined_call_operand.vmem [shape: bf16[128,80], index: 5, kind: input, shape index: {}]
  %s6 = inlined_call_operand.vmem [shape: f32[1,80], index: 6, kind: input, shape index: {}]
  %s7 = inlined_call_operand.hbm [shape: f32[2,80], index: 7, kind: output, shape index: {}]
  %s8 = sld [smem:[#allocation0]]
  $region38: #{convnet_forward.5} parent=0
    _
  %s10 = ssub.s32 1, %s8
  %s11 = scalar_select 0, %s10, %s8
  $region1: #{convnet_forward.5} parent=0
    #allocation2 [shape = 'u8[1024]{0}', space=vmem, size = 0x400, scoped, tag = 'output window, operand 0, single buffered']
    #allocation3 [shape = 's32[1]{0}', space=sflag, size = 0x4, scoped, tag = 'scoped memory for convnet_forward.5']
    %12 = vsyncpa [#allocation3], 0
    // Predicated region
    $region2: #{convnet_forward.5} parent=1 // pred_check
      _
    $region3: #{convnet_forward.5} parent=1 // pred_check_branch
      %14 = sbr.rel (0) target = $region5
    $region4: #{convnet_forward.5} parent=1 // pred_region
      _
    $region5: #{convnet_forward.5} parent=1 // pred_fallthru
      _
    // Predicated region
    $region6: #{convnet_forward.5} parent=1 // pred_check
      _
    $region7: #{convnet_forward.5} parent=1 // pred_check_branch
      %16 = sbr.rel (0) target = $region9
    $region8: #{convnet_forward.5} parent=1 // pred_region
      _
    $region9: #{convnet_forward.5} parent=1 // pred_fallthru
      _
    // Predicated region
    $region10: #{convnet_forward.5} parent=1 // pred_check
      _
    $region11: #{convnet_forward.5} parent=1 // pred_check_branch
      %18 = sbr.rel (0) target = $region13
    $region12: #{convnet_forward.5} parent=1 // pred_region
      _
    $region13: #{convnet_forward.5} parent=1 // pred_fallthru
      _
    // Predicated region
    $region14: #{convnet_forward.5} parent=1 // pred_check
      _
    $region15: #{convnet_forward.5} parent=1 // pred_check_branch
      %20 = sbr.rel (0) target = $region17
    $region16: #{convnet_forward.5} parent=1 // pred_region
      _
    $region17: #{convnet_forward.5} parent=1 // pred_fallthru
      _
    // Predicated region
    $region18: #{convnet_forward.5} parent=1 // pred_check
      _
    $region19: #{convnet_forward.5} parent=1 // pred_check_branch
      %22 = sbr.rel (0) target = $region21
    $region20: #{convnet_forward.5} parent=1 // pred_region
      _
    $region21: #{convnet_forward.5} parent=1 // pred_fallthru
      _
    // Predicated region
    $region22: #{convnet_forward.5} parent=1 // pred_check
      _
    $region23: #{convnet_forward.5} parent=1 // pred_check_branch
      %24 = sbr.rel (0) target = $region25
    $region24: #{convnet_forward.5} parent=1 // pred_region
      _
    $region25: #{convnet_forward.5} parent=1 // pred_fallthru
      _
    // Predicated region
    $region26: #{convnet_forward.5} parent=1 // pred_check
      _
    $region27: #{convnet_forward.5} parent=1 // pred_check_branch
      %26 = sbr.rel (0) target = $region29
    $region28: #{convnet_forward.5} parent=1 // pred_region
      _
    $region29: #{convnet_forward.5} parent=1 // pred_fallthru
      _
    %v28 = vld [vmem:[%s0] sm:$0xff]
    %v29 = vld [vmem:[%s0 + $0x8] sm:$0xff]
    %v30 = vld [vmem:[%s0 + $0x10] sm:$0xff]
    %v31 = vld [vmem:[%s0 + $0x18] sm:$0x7f]
    %v32 = vld [vmem:[%s1] sm:$0xff]
    %v33 = vld [vmem:[%s1 + $0x8] sm:$0xff]
    %v34 = vld [vmem:[%s1 + $0x10] sm:$0xff]
    %v35 = vld [vmem:[%s1 + $0x18] sm:$0xff]
    %v36 = vld [vmem:[%s1 + $0x20] sm:$0xff]
    %v37 = vld [vmem:[%s1 + $0x28] sm:$0xff]
    %v38 = vld [vmem:[%s1 + $0x30] sm:$0xff]
    %v39 = vld [vmem:[%s1 + $0x38] sm:$0xff]
    %v40 = vld [vmem:[%s1 + $0x40] sm:$0xff]
    %v41 = vld [vmem:[%s1 + $0x48] sm:$0xff]
    %v42 = vld [vmem:[%s1 + $0x50] sm:$0xff]
    %v43 = vld [vmem:[%s1 + $0x58] sm:$0xff]
    %v44 = vld [vmem:[%s1 + $0x60] sm:$0xff]
    %v45 = vld [vmem:[%s1 + $0x68] sm:$0xff]
    %v46 = vld [vmem:[%s1 + $0x70] sm:$0xff]
    %v47 = vld [vmem:[%s1 + $0x78] sm:$0xff]
    %v48 = vld [vmem:[%s1 + $0x80] sm:$0xff]
    %v49 = vld [vmem:[%s1 + $0x88] sm:$0xff]
    %v50 = vld [vmem:[%s1 + $0x90] sm:$0xff]
    %v51 = vld [vmem:[%s1 + $0x98] sm:$0xff]
    %v52 = vld [vmem:[%s1 + $0xa0] sm:$0xff]
    %v53 = vld [vmem:[%s1 + $0xa8] sm:$0xff]
    %v54 = vld [vmem:[%s1 + $0xb0] sm:$0xff]
    %v55 = vld [vmem:[%s1 + $0xb8] sm:$0xff]
    %v56 = vld [vmem:[%s1 + $0xc0] sm:$0xff]
    %v57 = vld [vmem:[%s1 + $0xc8] sm:$0xff]
    %v58 = vld [vmem:[%s1 + $0xd0] sm:$0xff]
    %v59 = vld [vmem:[%s1 + $0xd8] sm:$0xff]
    %v60 = vld [vmem:[%s1 + $0xe0] sm:$0xff]
    %v61 = vld [vmem:[%s1 + $0xe8] sm:$0xff]
    %v62 = vld [vmem:[%s1 + $0xf0] sm:$0xff]
    %v63 = vld [vmem:[%s1 + $0xf8] sm:$0xff]
    %v64 = vld [vmem:[%s1 + $0x100] sm:$0xff]
    %v65 = vld [vmem:[%s1 + $0x108] sm:$0xff]
    %v66 = vld [vmem:[%s1 + $0x110] sm:$0xff]
    %v67 = vld [vmem:[%s1 + $0x118] sm:$0xff]
    %v68 = vld [vmem:[%s1 + $0x120] sm:$0xff]
    %v69 = vld [vmem:[%s1 + $0x128] sm:$0xff]
    %v70 = vld [vmem:[%s1 + $0x130] sm:$0xff]
    %v71 = vld [vmem:[%s1 + $0x138] sm:$0xff]
    %v72 = vld [vmem:[%s1 + $0x140] sm:$0xff]
    %v73 = vld [vmem:[%s1 + $0x148] sm:$0xff]
    %v74 = vld [vmem:[%s1 + $0x150] sm:$0xff]
    %v75 = vld [vmem:[%s1 + $0x158] sm:$0xff]
    %v76 = vld [vmem:[%s1 + $0x160] sm:$0xff]
    %v77 = vld [vmem:[%s1 + $0x168] sm:$0xff]
    %v78 = vld [vmem:[%s1 + $0x170] sm:$0xff]
    %v79 = vld [vmem:[%s1 + $0x178] sm:$0xff]
    %v80 = vld [vmem:[%s1 + $0x180] sm:$0xff]
    %v81 = vld [vmem:[%s1 + $0x188] sm:$0xff]
    %v82 = vld [vmem:[%s1 + $0x190] sm:$0xff]
    %v83 = vld [vmem:[%s1 + $0x198] sm:$0xff]
    %v84 = vld [vmem:[%s1 + $0x1a0] sm:$0xff]
    %v85 = vld [vmem:[%s1 + $0x1a8] sm:$0xff]
    %v86 = vld [vmem:[%s1 + $0x1b0] sm:$0xff]
    %v87 = vld [vmem:[%s1 + $0x1b8] sm:$0xff]
    %v88 = vld [vmem:[%s1 + $0x1c0] sm:$0xff]
    %v89 = vld [vmem:[%s1 + $0x1c8] sm:$0xff]
    %v90 = vld [vmem:[%s1 + $0x1d0] sm:$0xff]
    %v91 = vld [vmem:[%s1 + $0x1d8] sm:$0xff]
    %v92 = vld [vmem:[%s1 + $0x1e0] sm:$0xff]
    %v93 = vld [vmem:[%s1 + $0x1e8] sm:$0xff]
    %v94 = vld [vmem:[%s1 + $0x1f0] sm:$0xff]
    %v95 = vld [vmem:[%s1 + $0x1f8] sm:$0xff]
    %v96 = vld [vmem:[%s1 + $0x200] sm:$0xff]
    %v97 = vld [vmem:[%s1 + $0x208] sm:$0xff]
    %v98 = vld [vmem:[%s1 + $0x210] sm:$0xff]
    %v99 = vld [vmem:[%s1 + $0x218] sm:$0xff]
    %v100 = vld [vmem:[%s1 + $0x220] sm:$0xff]
    %v101 = vld [vmem:[%s1 + $0x228] sm:$0xff]
    %v102 = vld [vmem:[%s1 + $0x230] sm:$0xff]
    %v103 = vld [vmem:[%s1 + $0x238] sm:$0xff]
    %v104 = vld [vmem:[%s1 + $0x240] sm:$0xff]
    %v105 = vld [vmem:[%s1 + $0x248] sm:$0xff]
    %v106 = vld [vmem:[%s1 + $0x250] sm:$0xff]
    %v107 = vld [vmem:[%s1 + $0x258] sm:$0xff]
    %v108 = vld [vmem:[%s1 + $0x260] sm:$0xff]
    %v109 = vld [vmem:[%s1 + $0x268] sm:$0xff]
    %v110 = vld [vmem:[%s1 + $0x270] sm:$0xff]
    %v111 = vld [vmem:[%s1 + $0x278] sm:$0xff]
    %v112 = vld [vmem:[%s1 + $0x280] sm:$0xff]
    %v113 = vld [vmem:[%s1 + $0x288] sm:$0xff]
    %v114 = vld [vmem:[%s1 + $0x290] sm:$0xff]
    %v115 = vld [vmem:[%s1 + $0x298] sm:$0xff]
    %v116 = vld [vmem:[%s1 + $0x2a0] sm:$0xff]
    %v117 = vld [vmem:[%s1 + $0x2a8] sm:$0xff]
    %v118 = vld [vmem:[%s1 + $0x2b0] sm:$0xff]
    %v119 = vld [vmem:[%s1 + $0x2b8] sm:$0xff]
    %v120 = vld [vmem:[%s1 + $0x2c0] sm:$0xff]
    %v121 = vld [vmem:[%s1 + $0x2c8] sm:$0xff]
    %v122 = vld [vmem:[%s1 + $0x2d0] sm:$0xff]
    %v123 = vld [vmem:[%s1 + $0x2d8] sm:$0xff]
    %v124 = vld [vmem:[%s1 + $0x2e0] sm:$0xff]
    %v125 = vld [vmem:[%s1 + $0x2e8] sm:$0xff]
    %v126 = vld [vmem:[%s1 + $0x2f0] sm:$0xff]
    %v127 = vld [vmem:[%s1 + $0x2f8] sm:$0xff]
    %v128 = vld [vmem:[%s1 + $0x300] sm:$0xff]
    %v129 = vld [vmem:[%s1 + $0x308] sm:$0xff]
    %v130 = vld [vmem:[%s1 + $0x310] sm:$0xff]
    %v131 = vld [vmem:[%s1 + $0x318] sm:$0xff]
    %v132 = vld [vmem:[%s1 + $0x320] sm:$0xff]
    %v133 = vld [vmem:[%s1 + $0x328] sm:$0xff]
    %v134 = vld [vmem:[%s1 + $0x330] sm:$0xff]
    %v135 = vld [vmem:[%s1 + $0x338] sm:$0xff]
    %v136 = vld [vmem:[%s1 + $0x340] sm:$0xff]
    %v137 = vld [vmem:[%s1 + $0x348] sm:$0xff]
    %v138 = vld [vmem:[%s1 + $0x350] sm:$0xff]
    %v139 = vld [vmem:[%s1 + $0x358] sm:$0xff]
    %v140 = vld [vmem:[%s1 + $0x360] sm:$0xff]
    %v141 = vld [vmem:[%s1 + $0x368] sm:$0xff]
    %v142 = vld [vmem:[%s1 + $0x370] sm:$0xff]
    %v143 = vld [vmem:[%s1 + $0x378] sm:$0xff]
    %v144 = vld [vmem:[%s1 + $0x380] sm:$0xff]
    %v145 = vld [vmem:[%s1 + $0x388] sm:$0xff]
    %v146 = vld [vmem:[%s1 + $0x390] sm:$0xff]
    %v147 = vld [vmem:[%s1 + $0x398] sm:$0xff]
    %v148 = vld [vmem:[%s1 + $0x3a0] sm:$0xff]
    %v149 = vld [vmem:[%s1 + $0x3a8] sm:$0xff]
    %v150 = vld [vmem:[%s1 + $0x3b0] sm:$0xff]
    %v151 = vld [vmem:[%s1 + $0x3b8] sm:$0xff]
    %v152 = vld [vmem:[%s1 + $0x3c0] sm:$0xff]
    %v153 = vld [vmem:[%s1 + $0x3c8] sm:$0xff]
    %v154 = vld [vmem:[%s1 + $0x3d0] sm:$0xff]
    %v155 = vld [vmem:[%s1 + $0x3d8] sm:$0xff]
    %v156 = vld [vmem:[%s1 + $0x3e0] sm:$0xff]
    %v157 = vld [vmem:[%s1 + $0x3e8] sm:$0xff]
    %v158 = vld [vmem:[%s1 + $0x3f0] sm:$0xff]
    %v159 = vld [vmem:[%s1 + $0x3f8] sm:$0xff]
    %v160 = vld [vmem:[%s1 + $0x400] sm:$0xff]
    %v161 = vld [vmem:[%s1 + $0x408] sm:$0xff]
    %v162 = vld [vmem:[%s1 + $0x410] sm:$0xff]
    %v163 = vld [vmem:[%s1 + $0x418] sm:$0xff]
    %v164 = vld [vmem:[%s1 + $0x420] sm:$0xff]
    %v165 = vld [vmem:[%s1 + $0x428] sm:$0xff]
    %v166 = vld [vmem:[%s1 + $0x430] sm:$0xff]
    %v167 = vld [vmem:[%s1 + $0x438] sm:$0xff]
    %v168 = vld [vmem:[%s1 + $0x440] sm:$0xff]
    %v169 = vld [vmem:[%s1 + $0x448] sm:$0xff]
    %v170 = vld [vmem:[%s1 + $0x450] sm:$0xff]
    %v171 = vld [vmem:[%s1 + $0x458] sm:$0xff]
    %v172 = vld [vmem:[%s1 + $0x460] sm:$0xff]
    %v173 = vld [vmem:[%s1 + $0x468] sm:$0xff]
    %v174 = vld [vmem:[%s1 + $0x470] sm:$0xff]
    %v175 = vld [vmem:[%s1 + $0x478] sm:$0xff]
    %v176 = vld [vmem:[%s1 + $0x480] sm:$0xff]
    %v177 = vld [vmem:[%s1 + $0x488] sm:$0xff]
    %v178 = vld [vmem:[%s1 + $0x490] sm:$0xff]
    %v179 = vld [vmem:[%s1 + $0x498] sm:$0xff]
    %v180 = vld [vmem:[%s1 + $0x4a0] sm:$0xff]
    %v181 = vld [vmem:[%s1 + $0x4a8] sm:$0xff]
    %v182 = vld [vmem:[%s1 + $0x4b0] sm:$0xff]
    %v183 = vld [vmem:[%s1 + $0x4b8] sm:$0xff]
    %v184 = vld [vmem:[%s1 + $0x4c0] sm:$0xff]
    %v185 = vld [vmem:[%s1 + $0x4c8] sm:$0xff]
    %v186 = vld [vmem:[%s1 + $0x4d0] sm:$0xff]
    %v187 = vld [vmem:[%s1 + $0x4d8] sm:$0xff]
    %v188 = vld [vmem:[%s1 + $0x4e0] sm:$0xff]
    %v189 = vld [vmem:[%s1 + $0x4e8] sm:$0xff]
    %v190 = vld [vmem:[%s1 + $0x4f0] sm:$0xff]
    %v191 = vld [vmem:[%s1 + $0x4f8] sm:$0xff]
    %v192 = vld [vmem:[%s1 + $0x500] sm:$0xff]
    %v193 = vld [vmem:[%s1 + $0x508] sm:$0xff]
    %v194 = vld [vmem:[%s1 + $0x510] sm:$0xff]
    %v195 = vld [vmem:[%s1 + $0x518] sm:$0xff]
    %v196 = vld [vmem:[%s1 + $0x520] sm:$0xff]
    %v197 = vld [vmem:[%s1 + $0x528] sm:$0xff]
    %v198 = vld [vmem:[%s1 + $0x530] sm:$0xff]
    %v199 = vld [vmem:[%s1 + $0x538] sm:$0xff]
    %v200 = vld [vmem:[%s1 + $0x540] sm:$0xff]
    %v201 = vld [vmem:[%s1 + $0x548] sm:$0xff]
    %v202 = vld [vmem:[%s1 + $0x550] sm:$0xff]
    %v203 = vld [vmem:[%s1 + $0x558] sm:$0xff]
    %v204 = vld [vmem:[%s1 + $0x560] sm:$0xff]
    %v205 = vld [vmem:[%s1 + $0x568] sm:$0xff]
    %v206 = vld [vmem:[%s1 + $0x570] sm:$0xff]
    %v207 = vld [vmem:[%s1 + $0x578] sm:$0xff]
    %v208 = vld [vmem:[%s1 + $0x580] sm:$0xff]
    %v209 = vld [vmem:[%s1 + $0x588] sm:$0xff]
    %v210 = vld [vmem:[%s1 + $0x590] sm:$0xff]
    %v211 = vld [vmem:[%s1 + $0x598] sm:$0xff]
    %v212 = vld [vmem:[%s1 + $0x5a0] sm:$0xff]
    %v213 = vld [vmem:[%s1 + $0x5a8] sm:$0xff]
    %v214 = vld [vmem:[%s1 + $0x5b0] sm:$0xff]
    %v215 = vld [vmem:[%s1 + $0x5b8] sm:$0xff]
    %v216 = vld [vmem:[%s1 + $0x5c0] sm:$0xff]
    %v217 = vld [vmem:[%s1 + $0x5c8] sm:$0xff]
    %v218 = vld [vmem:[%s1 + $0x5d0] sm:$0xff]
    %v219 = vld [vmem:[%s1 + $0x5d8] sm:$0xff]
    %v220 = vld [vmem:[%s1 + $0x5e0] sm:$0xff]
    %v221 = vld [vmem:[%s1 + $0x5e8] sm:$0xff]
    %v222 = vld [vmem:[%s1 + $0x5f0] sm:$0xff]
    %v223 = vld [vmem:[%s1 + $0x5f8] sm:$0xff]
    %v224 = vld [vmem:[%s1 + $0x600] sm:$0xff]
    %v225 = vld [vmem:[%s1 + $0x608] sm:$0xff]
    %v226 = vld [vmem:[%s1 + $0x610] sm:$0xff]
    %v227 = vld [vmem:[%s1 + $0x618] sm:$0xff]
    %v228 = vld [vmem:[%s1 + $0x620] sm:$0xff]
    %v229 = vld [vmem:[%s1 + $0x628] sm:$0xff]
    %v230 = vld [vmem:[%s1 + $0x630] sm:$0xff]
    %v231 = vld [vmem:[%s1 + $0x638] sm:$0xff]
    %v232 = vld [vmem:[%s1 + $0x640] sm:$0xff]
    %v233 = vld [vmem:[%s1 + $0x648] sm:$0xff]
    %v234 = vld [vmem:[%s1 + $0x650] sm:$0xff]
    %v235 = vld [vmem:[%s1 + $0x658] sm:$0xff]
    %v236 = vld [vmem:[%s1 + $0x660] sm:$0xff]
    %v237 = vld [vmem:[%s1 + $0x668] sm:$0xff]
    %v238 = vld [vmem:[%s1 + $0x670] sm:$0xff]
    %v239 = vld [vmem:[%s1 + $0x678] sm:$0xff]
    %v240 = vld [vmem:[%s1 + $0x680] sm:$0xff]
    %v241 = vld [vmem:[%s1 + $0x688] sm:$0xff]
    %v242 = vld [vmem:[%s1 + $0x690] sm:$0xff]
    %v243 = vld [vmem:[%s1 + $0x698] sm:$0xff]
    %v244 = vld [vmem:[%s1 + $0x6a0] sm:$0xff]
    %v245 = vld [vmem:[%s1 + $0x6a8] sm:$0xff]
    %v246 = vld [vmem:[%s1 + $0x6b0] sm:$0xff]
    %v247 = vld [vmem:[%s1 + $0x6b8] sm:$0xff]
    %v248 = vld [vmem:[%s1 + $0x6c0] sm:$0xff]
    %v249 = vld [vmem:[%s1 + $0x6c8] sm:$0xff]
    %v250 = vld [vmem:[%s1 + $0x6d0] sm:$0xff]
    %v251 = vld [vmem:[%s1 + $0x6d8] sm:$0xff]
    %v252 = vld [vmem:[%s1 + $0x6e0] sm:$0xff]
    %v253 = vld [vmem:[%s1 + $0x6e8] sm:$0xff]
    %v254 = vld [vmem:[%s1 + $0x6f0] sm:$0xff]
    %v255 = vld [vmem:[%s1 + $0x6f8] sm:$0xff]
    %v256 = vld [vmem:[%s1 + $0x700] sm:$0xff]
    %v257 = vld [vmem:[%s1 + $0x708] sm:$0xff]
    %v258 = vld [vmem:[%s1 + $0x710] sm:$0xff]
    %v259 = vld [vmem:[%s1 + $0x718] sm:$0xff]
    %v260 = vld [vmem:[%s1 + $0x720] sm:$0xff]
    %v261 = vld [vmem:[%s1 + $0x728] sm:$0xff]
    %v262 = vld [vmem:[%s1 + $0x730] sm:$0xff]
    %v263 = vld [vmem:[%s1 + $0x738] sm:$0xff]
    %v264 = vld [vmem:[%s1 + $0x740] sm:$0xff]
    %v265 = vld [vmem:[%s1 + $0x748] sm:$0xff]
    %v266 = vld [vmem:[%s1 + $0x750] sm:$0xff]
    %v267 = vld [vmem:[%s1 + $0x758] sm:$0xff]
    %v268 = vld [vmem:[%s1 + $0x760] sm:$0xff]
    %v269 = vld [vmem:[%s1 + $0x768] sm:$0xff]
    %v270 = vld [vmem:[%s1 + $0x770] sm:$0xff]
    %v271 = vld [vmem:[%s1 + $0x778] sm:$0xff]
    %v272 = vld [vmem:[%s1 + $0x780] sm:$0xff]
    %v273 = vld [vmem:[%s1 + $0x788] sm:$0xff]
    %v274 = vld [vmem:[%s1 + $0x790] sm:$0xff]
    %v275 = vld [vmem:[%s1 + $0x798] sm:$0xff]
    %v276 = vld [vmem:[%s1 + $0x7a0] sm:$0xff]
    %v277 = vld [vmem:[%s1 + $0x7a8] sm:$0xff]
    %v278 = vld [vmem:[%s1 + $0x7b0] sm:$0xff]
    %v279 = vld [vmem:[%s1 + $0x7b8] sm:$0xff]
    %v280 = vld [vmem:[%s1 + $0x7c0] sm:$0xff]
    %v281 = vld [vmem:[%s1 + $0x7c8] sm:$0xff]
    %v282 = vld [vmem:[%s1 + $0x7d0] sm:$0xff]
    %v283 = vld [vmem:[%s1 + $0x7d8] sm:$0xff]
    %v284 = vld [vmem:[%s1 + $0x7e0] sm:$0xff]
    %v285 = vld [vmem:[%s1 + $0x7e8] sm:$0xff]
    %v286 = vld [vmem:[%s1 + $0x7f0] sm:$0xff]
    %v287 = vld [vmem:[%s1 + $0x7f8] sm:$0xff]
    %v288 = vld [vmem:[%s1 + $0x800] sm:$0xff]
    %v289 = vld [vmem:[%s1 + $0x808] sm:$0xff]
    %v290 = vld [vmem:[%s1 + $0x810] sm:$0xff]
    %v291 = vld [vmem:[%s1 + $0x818] sm:$0xff]
    %v292 = vld [vmem:[%s1 + $0x820] sm:$0xff]
    %v293 = vld [vmem:[%s1 + $0x828] sm:$0xff]
    %v294 = vld [vmem:[%s1 + $0x830] sm:$0xff]
    %v295 = vld [vmem:[%s1 + $0x838] sm:$0xff]
    %v296 = vld [vmem:[%s1 + $0x840] sm:$0xff]
    %v297 = vld [vmem:[%s1 + $0x848] sm:$0xff]
    %v298 = vld [vmem:[%s1 + $0x850] sm:$0xff]
    %v299 = vld [vmem:[%s1 + $0x858] sm:$0xff]
    %v300 = vld [vmem:[%s1 + $0x860] sm:$0xff]
    %v301 = vld [vmem:[%s1 + $0x868] sm:$0xff]
    %v302 = vld [vmem:[%s1 + $0x870] sm:$0xff]
    %v303 = vld [vmem:[%s1 + $0x878] sm:$0xff]
    %v304 = vld [vmem:[%s1 + $0x880] sm:$0xff]
    %v305 = vld [vmem:[%s1 + $0x888] sm:$0xff]
    %v306 = vld [vmem:[%s1 + $0x890] sm:$0xff]
    %v307 = vld [vmem:[%s1 + $0x898] sm:$0xff]
    %v308 = vld [vmem:[%s1 + $0x8a0] sm:$0xff]
    %v309 = vld [vmem:[%s1 + $0x8a8] sm:$0xff]
    %v310 = vld [vmem:[%s1 + $0x8b0] sm:$0xff]
    %v311 = vld [vmem:[%s1 + $0x8b8] sm:$0xff]
    %v312 = vld [vmem:[%s1 + $0x8c0] sm:$0xff]
    %v313 = vld [vmem:[%s1 + $0x8c8] sm:$0xff]
    %v314 = vld [vmem:[%s1 + $0x8d0] sm:$0xff]
    %v315 = vld [vmem:[%s1 + $0x8d8] sm:$0xff]
    %v316 = vld [vmem:[%s1 + $0x8e0] sm:$0xff]
    %v317 = vld [vmem:[%s1 + $0x8e8] sm:$0xff]
    %v318 = vld [vmem:[%s1 + $0x8f0] sm:$0xff]
    %v319 = vld [vmem:[%s1 + $0x8f8] sm:$0xff]
    %v320 = vld [vmem:[%s1 + $0x900] sm:$0xff]
    %v321 = vld [vmem:[%s1 + $0x908] sm:$0xff]
    %v322 = vld [vmem:[%s1 + $0x910] sm:$0xff]
    %v323 = vld [vmem:[%s1 + $0x918] sm:$0xff]
    %v324 = vld [vmem:[%s1 + $0x920] sm:$0xff]
    %v325 = vld [vmem:[%s1 + $0x928] sm:$0xff]
    %v326 = vld [vmem:[%s1 + $0x930] sm:$0xff]
    %v327 = vld [vmem:[%s1 + $0x938] sm:$0xff]
    %v328 = vld [vmem:[%s1 + $0x940] sm:$0xff]
    %v329 = vld [vmem:[%s1 + $0x948] sm:$0xff]
    %v330 = vld [vmem:[%s1 + $0x950] sm:$0xff]
    %v331 = vld [vmem:[%s1 + $0x958] sm:$0xff]
    %v332 = vld [vmem:[%s1 + $0x960] sm:$0xff]
    %v333 = vld [vmem:[%s1 + $0x968] sm:$0xff]
    %v334 = vld [vmem:[%s1 + $0x970] sm:$0xff]
    %v335 = vld [vmem:[%s1 + $0x978] sm:$0xff]
    %v336 = vld [vmem:[%s1 + $0x980] sm:$0xff]
    %v337 = vld [vmem:[%s1 + $0x988] sm:$0xff]
    %v338 = vld [vmem:[%s1 + $0x990] sm:$0xff]
    %v339 = vld [vmem:[%s1 + $0x998] sm:$0xff]
    %v340 = vld [vmem:[%s1 + $0x9a0] sm:$0xff]
    %v341 = vld [vmem:[%s1 + $0x9a8] sm:$0xff]
    %v342 = vld [vmem:[%s1 + $0x9b0] sm:$0xff]
    %v343 = vld [vmem:[%s1 + $0x9b8] sm:$0xff]
    %v344 = vld [vmem:[%s1 + $0x9c0] sm:$0xff]
    %v345 = vld [vmem:[%s1 + $0x9c8] sm:$0xff]
    %v346 = vld [vmem:[%s1 + $0x9d0] sm:$0xff]
    %v347 = vld [vmem:[%s1 + $0x9d8] sm:$0xff]
    %v348 = vld [vmem:[%s1 + $0x9e0] sm:$0xff]
    %v349 = vld [vmem:[%s1 + $0x9e8] sm:$0xff]
    %v350 = vld [vmem:[%s1 + $0x9f0] sm:$0xff]
    %v351 = vld [vmem:[%s1 + $0x9f8] sm:$0xff]
    %v352 = vld [vmem:[%s1 + $0xa00] sm:$0xff]
    %v353 = vld [vmem:[%s1 + $0xa08] sm:$0xff]
    %v354 = vld [vmem:[%s1 + $0xa10] sm:$0xff]
    %v355 = vld [vmem:[%s1 + $0xa18] sm:$0xff]
    %v356 = vld [vmem:[%s1 + $0xa20] sm:$0xff]
    %v357 = vld [vmem:[%s1 + $0xa28] sm:$0xff]
    %v358 = vld [vmem:[%s1 + $0xa30] sm:$0xff]
    %v359 = vld [vmem:[%s1 + $0xa38] sm:$0xff]
    %v360 = vld [vmem:[%s1 + $0xa40] sm:$0xff]
    %v361 = vld [vmem:[%s1 + $0xa48] sm:$0xff]
    %v362 = vld [vmem:[%s1 + $0xa50] sm:$0xff]
    %v363 = vld [vmem:[%s1 + $0xa58] sm:$0xff]
    %v364 = vld [vmem:[%s1 + $0xa60] sm:$0xff]
    %v365 = vld [vmem:[%s1 + $0xa68] sm:$0xff]
    %v366 = vld [vmem:[%s1 + $0xa70] sm:$0xff]
    %v367 = vld [vmem:[%s1 + $0xa78] sm:$0xff]
    %v368 = vld [vmem:[%s1 + $0xa80] sm:$0xff]
    %v369 = vld [vmem:[%s1 + $0xa88] sm:$0xff]
    %v370 = vld [vmem:[%s1 + $0xa90] sm:$0xff]
    %v371 = vld [vmem:[%s1 + $0xa98] sm:$0xff]
    %v372 = vld [vmem:[%s1 + $0xaa0] sm:$0xff]
    %v373 = vld [vmem:[%s1 + $0xaa8] sm:$0xff]
    %v374 = vld [vmem:[%s1 + $0xab0] sm:$0xff]
    %v375 = vld [vmem:[%s1 + $0xab8] sm:$0xff]
    %v376 = vld [vmem:[%s1 + $0xac0] sm:$0xff]
    %v377 = vld [vmem:[%s1 + $0xac8] sm:$0xff]
    %v378 = vld [vmem:[%s1 + $0xad0] sm:$0xff]
    %v379 = vld [vmem:[%s1 + $0xad8] sm:$0xff]
    %v380 = vld [vmem:[%s1 + $0xae0] sm:$0xff]
    %v381 = vld [vmem:[%s1 + $0xae8] sm:$0xff]
    %v382 = vld [vmem:[%s1 + $0xaf0] sm:$0xff]
    %v383 = vld [vmem:[%s1 + $0xaf8] sm:$0xff]
    %v384 = vld [vmem:[%s1 + $0xb00] sm:$0xff]
    %v385 = vld [vmem:[%s1 + $0xb08] sm:$0xff]
    %v386 = vld [vmem:[%s1 + $0xb10] sm:$0xff]
    %v387 = vld [vmem:[%s1 + $0xb18] sm:$0xff]
    %v388 = vld [vmem:[%s1 + $0xb20] sm:$0xff]
    %v389 = vld [vmem:[%s1 + $0xb28] sm:$0xff]
    %v390 = vld [vmem:[%s1 + $0xb30] sm:$0xff]
    %v391 = vld [vmem:[%s1 + $0xb38] sm:$0xff]
    %v392 = vld [vmem:[%s1 + $0xb40] sm:$0xff]
    %v393 = vld [vmem:[%s1 + $0xb48] sm:$0xff]
    %v394 = vld [vmem:[%s1 + $0xb50] sm:$0xff]
    %v395 = vld [vmem:[%s1 + $0xb58] sm:$0xff]
    %v396 = vld [vmem:[%s1 + $0xb60] sm:$0xff]
    %v397 = vld [vmem:[%s1 + $0xb68] sm:$0xff]
    %v398 = vld [vmem:[%s1 + $0xb70] sm:$0xff]
    %v399 = vld [vmem:[%s1 + $0xb78] sm:$0xff]
    %v400 = vld [vmem:[%s1 + $0xb80] sm:$0xff]
    %v401 = vld [vmem:[%s1 + $0xb88] sm:$0xff]
    %v402 = vld [vmem:[%s1 + $0xb90] sm:$0xff]
    %v403 = vld [vmem:[%s1 + $0xb98] sm:$0xff]
    %v404 = vld [vmem:[%s1 + $0xba0] sm:$0xff]
    %v405 = vld [vmem:[%s1 + $0xba8] sm:$0xff]
    %v406 = vld [vmem:[%s1 + $0xbb0] sm:$0xff]
    %v407 = vld [vmem:[%s1 + $0xbb8] sm:$0xff]
    %v408 = vld [vmem:[%s1 + $0xbc0] sm:$0xff]
    %v409 = vld [vmem:[%s1 + $0xbc8] sm:$0xff]
    %v410 = vld [vmem:[%s1 + $0xbd0] sm:$0xff]
    %v411 = vld [vmem:[%s1 + $0xbd8] sm:$0xff]
    %v412 = vld [vmem:[%s1 + $0xbe0] sm:$0xff]
    %v413 = vld [vmem:[%s1 + $0xbe8] sm:$0xff]
    %v414 = vld [vmem:[%s1 + $0xbf0] sm:$0xff]
    %v415 = vld [vmem:[%s1 + $0xbf8] sm:$0xff]
    %v416 = vld [vmem:[%s1 + $0xc00] sm:$0xff]
    %v417 = vld [vmem:[%s1 + $0xc08] sm:$0xff]
    %v418 = vld [vmem:[%s1 + $0xc10] sm:$0xff]
    %v419 = vld [vmem:[%s1 + $0xc18] sm:$0xff]
    %v420 = vld [vmem:[%s1 + $0xc20] sm:$0xff]
    %v421 = vld [vmem:[%s1 + $0xc28] sm:$0xff]
    %v422 = vld [vmem:[%s1 + $0xc30] sm:$0xff]
    %v423 = vld [vmem:[%s1 + $0xc38] sm:$0xff]
    %v424 = vld [vmem:[%s1 + $0xc40] sm:$0xff]
    %v425 = vld [vmem:[%s1 + $0xc48] sm:$0xff]
    %v426 = vld [vmem:[%s1 + $0xc50] sm:$0xff]
    %v427 = vld [vmem:[%s1 + $0xc58] sm:$0xff]
    %v428 = vld [vmem:[%s1 + $0xc60] sm:$0xff]
    %v429 = vld [vmem:[%s1 + $0xc68] sm:$0xff]
    %v430 = vld [vmem:[%s1 + $0xc70] sm:$0xff]
    %v431 = vld [vmem:[%s1 + $0xc78] sm:$0xff]
    %v432 = vld [vmem:[%s1 + $0xc80] sm:$0xff]
    %v433 = vld [vmem:[%s1 + $0xc88] sm:$0xff]
    %v434 = vld [vmem:[%s1 + $0xc90] sm:$0xff]
    %v435 = vld [vmem:[%s1 + $0xc98] sm:$0xff]
    %v436 = vld [vmem:[%s1 + $0xca0] sm:$0xff]
    %v437 = vld [vmem:[%s1 + $0xca8] sm:$0xff]
    %v438 = vld [vmem:[%s1 + $0xcb0] sm:$0xff]
    %v439 = vld [vmem:[%s1 + $0xcb8] sm:$0xff]
    %v440 = vld [vmem:[%s1 + $0xcc0] sm:$0xff]
    %v441 = vld [vmem:[%s1 + $0xcc8] sm:$0xff]
    %v442 = vld [vmem:[%s1 + $0xcd0] sm:$0xff]
    %v443 = vld [vmem:[%s1 + $0xcd8] sm:$0xff]
    %v444 = vld [vmem:[%s1 + $0xce0] sm:$0xff]
    %v445 = vld [vmem:[%s1 + $0xce8] sm:$0xff]
    %v446 = vld [vmem:[%s1 + $0xcf0] sm:$0xff]
    %v447 = vld [vmem:[%s1 + $0xcf8] sm:$0xff]
    %v448 = vld [vmem:[%s1 + $0xd00] sm:$0xff]
    %v449 = vld [vmem:[%s1 + $0xd08] sm:$0xff]
    %v450 = vld [vmem:[%s1 + $0xd10] sm:$0xff]
    %v451 = vld [vmem:[%s1 + $0xd18] sm:$0xff]
    %v452 = vld [vmem:[%s1 + $0xd20] sm:$0xff]
    %v453 = vld [vmem:[%s1 + $0xd28] sm:$0xff]
    %v454 = vld [vmem:[%s1 + $0xd30] sm:$0xff]
    %v455 = vld [vmem:[%s1 + $0xd38] sm:$0xff]
    %v456 = vld [vmem:[%s1 + $0xd40] sm:$0xff]
    %v457 = vld [vmem:[%s1 + $0xd48] sm:$0xff]
    %v458 = vld [vmem:[%s1 + $0xd50] sm:$0xff]
    %v459 = vld [vmem:[%s1 + $0xd58] sm:$0xff]
    %v460 = vld [vmem:[%s1 + $0xd60] sm:$0xff]
    %v461 = vld [vmem:[%s1 + $0xd68] sm:$0xff]
    %v462 = vld [vmem:[%s1 + $0xd70] sm:$0xff]
    %v463 = vld [vmem:[%s1 + $0xd78] sm:$0xff]
    %v464 = vld [vmem:[%s1 + $0xd80] sm:$0xff]
    %v465 = vld [vmem:[%s1 + $0xd88] sm:$0xff]
    %v466 = vld [vmem:[%s1 + $0xd90] sm:$0xff]
    %v467 = vld [vmem:[%s1 + $0xd98] sm:$0xff]
    %v468 = vld [vmem:[%s1 + $0xda0] sm:$0xff]
    %v469 = vld [vmem:[%s1 + $0xda8] sm:$0xff]
    %v470 = vld [vmem:[%s1 + $0xdb0] sm:$0xff]
    %v471 = vld [vmem:[%s1 + $0xdb8] sm:$0xff]
    %v472 = vld [vmem:[%s1 + $0xdc0] sm:$0xff]
    %v473 = vld [vmem:[%s1 + $0xdc8] sm:$0xff]
    %v474 = vld [vmem:[%s1 + $0xdd0] sm:$0xff]
    %v475 = vld [vmem:[%s1 + $0xdd8] sm:$0xff]
    %v476 = vld [vmem:[%s1 + $0xde0] sm:$0xff]
    %v477 = vld [vmem:[%s1 + $0xde8] sm:$0xff]
    %v478 = vld [vmem:[%s1 + $0xdf0] sm:$0xff]
    %v479 = vld [vmem:[%s1 + $0xdf8] sm:$0xff]
    %v480 = vld [vmem:[%s1 + $0xe00] sm:$0xff]
    %v481 = vld [vmem:[%s1 + $0xe08] sm:$0xff]
    %v482 = vld [vmem:[%s1 + $0xe10] sm:$0xff]
    %v483 = vld [vmem:[%s1 + $0xe18] sm:$0xff]
    %v484 = vld [vmem:[%s1 + $0xe20] sm:$0xff]
    %v485 = vld [vmem:[%s1 + $0xe28] sm:$0xff]
    %v486 = vld [vmem:[%s1 + $0xe30] sm:$0xff]
    %v487 = vld [vmem:[%s1 + $0xe38] sm:$0xff]
    %v488 = vld [vmem:[%s1 + $0xe40] sm:$0xff]
    %v489 = vld [vmem:[%s1 + $0xe48] sm:$0xff]
    %v490 = vld [vmem:[%s1 + $0xe50] sm:$0xff]
    %v491 = vld [vmem:[%s1 + $0xe58] sm:$0xff]
    %v492 = vld [vmem:[%s1 + $0xe60] sm:$0xff]
    %v493 = vld [vmem:[%s1 + $0xe68] sm:$0xff]
    %v494 = vld [vmem:[%s1 + $0xe70] sm:$0xff]
    %v495 = vld [vmem:[%s1 + $0xe78] sm:$0xff]
    %v496 = vld [vmem:[%s1 + $0xe80] sm:$0xff]
    %v497 = vld [vmem:[%s1 + $0xe88] sm:$0xff]
    %v498 = vld [vmem:[%s1 + $0xe90] sm:$0xff]
    %v499 = vld [vmem:[%s1 + $0xe98] sm:$0xff]
    %v500 = vld [vmem:[%s1 + $0xea0] sm:$0xff]
    %v501 = vld [vmem:[%s1 + $0xea8] sm:$0xff]
    %v502 = vld [vmem:[%s1 + $0xeb0] sm:$0xff]
    %v503 = vld [vmem:[%s1 + $0xeb8] sm:$0xff]
    %v504 = vld [vmem:[%s1 + $0xec0] sm:$0xff]
    %v505 = vld [vmem:[%s1 + $0xec8] sm:$0xff]
    %v506 = vld [vmem:[%s1 + $0xed0] sm:$0xff]
    %v507 = vld [vmem:[%s1 + $0xed8] sm:$0xff]
    %v508 = vld [vmem:[%s1 + $0xee0] sm:$0xff]
    %v509 = vld [vmem:[%s1 + $0xee8] sm:$0xff]
    %v510 = vld [vmem:[%s1 + $0xef0] sm:$0xff]
    %v511 = vld [vmem:[%s1 + $0xef8] sm:$0xff]
    %v512 = vld [vmem:[%s1 + $0xf00] sm:$0xff]
    %v513 = vld [vmem:[%s1 + $0xf08] sm:$0xff]
    %v514 = vld [vmem:[%s1 + $0xf10] sm:$0xff]
    %v515 = vld [vmem:[%s1 + $0xf18] sm:$0xff]
    %v516 = vld [vmem:[%s2] sm:$0x3]
    %v518 = vlaneseq
    %v519 = vshrl.u32 %v518, 7
    %v520 = vsub.s32 0, %v519
    %v521 = vrot.slane %v516, %v520
    %v522 = vlaneseq
    %v523 = vshrl.u32 %v522, 7
    %v524 = vsub.s32 1, %v523
    %v525 = vrot.slane %v516, %v524
    %v532 = vcombine.high %v28, %v28
    %v534 = vunpack.c.l.s4 1966171168
    %v535 = vunpack.c.0.s8 %v534
    %v536 = vlaneseq
    %v537 = vshrl.u32 %v536, 7
    %v538 = vsub.s32 %v535, %v537
    %v539 = vrot.slane %v28, %v538
    %v541 = vunpack.c.l.s4 1966171168
    %v542 = vunpack.c.0.s8 %v541
    %v543 = vlaneseq
    %v544 = vshrl.u32 %v543, 7
    %v545 = vsub.s32 %v542, %v544
    %v546 = vrot.slane %v532, %v545
    %v547 = vcombine.high %v539, %v539
    %v548 = vcombine.high %v546, %v546
    %v550 = vunpack.c.l.s4 1966171168
    %v551 = vunpack.c.0.s8 %v550
    %v552 = vlaneseq
    %v553 = vshrl.u32 %v552, 7
    %v554 = vsub.s32 %v551, %v553
    %v555 = vrot.slane %v539, %v554
    %v557 = vunpack.c.l.s4 1966171168
    %v558 = vunpack.c.0.s8 %v557
    %v559 = vlaneseq
    %v560 = vshrl.u32 %v559, 7
    %v561 = vsub.s32 %v558, %v560
    %v562 = vrot.slane %v546, %v561
    %v564 = vunpack.c.l.s4 1966171168
    %v565 = vunpack.c.0.s8 %v564
    %v566 = vlaneseq
    %v567 = vshrl.u32 %v566, 7
    %v568 = vsub.s32 %v565, %v567
    %v569 = vrot.slane %v547, %v568
    %v571 = vunpack.c.l.s4 1966171168
    %v572 = vunpack.c.0.s8 %v571
    %v573 = vlaneseq
    %v574 = vshrl.u32 %v573, 7
    %v575 = vsub.s32 %v572, %v574
    %v576 = vrot.slane %v548, %v575
    %v577 = vcombine.high %v555, %v555
    %v578 = vcombine.high %v562, %v562
    %v579 = vcombine.high %v569, %v569
    %v580 = vcombine.high %v576, %v576
    %v581 = vcombine.high %v29, %v29
    %v583 = vunpack.c.l.s4 1966171168
    %v584 = vunpack.c.0.s8 %v583
    %v585 = vlaneseq
    %v586 = vshrl.u32 %v585, 7
    %v587 = vsub.s32 %v584, %v586
    %v588 = vrot.slane %v29, %v587
    %v590 = vunpack.c.l.s4 1966171168
    %v591 = vunpack.c.0.s8 %v590
    %v592 = vlaneseq
    %v593 = vshrl.u32 %v592, 7
    %v594 = vsub.s32 %v591, %v593
    %v595 = vrot.slane %v581, %v594
    %v596 = vcombine.high %v588, %v588
    %v597 = vcombine.high %v595, %v595
    %v599 = vunpack.c.l.s4 1966171168
    %v600 = vunpack.c.0.s8 %v599
    %v601 = vlaneseq
    %v602 = vshrl.u32 %v601, 7
    %v603 = vsub.s32 %v600, %v602
    %v604 = vrot.slane %v588, %v603
    %v606 = vunpack.c.l.s4 1966171168
    %v607 = vunpack.c.0.s8 %v606
    %v608 = vlaneseq
    %v609 = vshrl.u32 %v608, 7
    %v610 = vsub.s32 %v607, %v609
    %v611 = vrot.slane %v595, %v610
    %v613 = vunpack.c.l.s4 1966171168
    %v614 = vunpack.c.0.s8 %v613
    %v615 = vlaneseq
    %v616 = vshrl.u32 %v615, 7
    %v617 = vsub.s32 %v614, %v616
    %v618 = vrot.slane %v596, %v617
    %v620 = vunpack.c.l.s4 1966171168
    %v621 = vunpack.c.0.s8 %v620
    %v622 = vlaneseq
    %v623 = vshrl.u32 %v622, 7
    %v624 = vsub.s32 %v621, %v623
    %v625 = vrot.slane %v597, %v624
    %v626 = vcombine.high %v604, %v604
    %v627 = vcombine.high %v611, %v611
    %v628 = vcombine.high %v618, %v618
    %v629 = vcombine.high %v625, %v625
    %v630 = vcombine.high %v30, %v30
    %v632 = vunpack.c.l.s4 1966171168
    %v633 = vunpack.c.0.s8 %v632
    %v634 = vlaneseq
    %v635 = vshrl.u32 %v634, 7
    %v636 = vsub.s32 %v633, %v635
    %v637 = vrot.slane %v30, %v636
    %v639 = vunpack.c.l.s4 1966171168
    %v640 = vunpack.c.0.s8 %v639
    %v641 = vlaneseq
    %v642 = vshrl.u32 %v641, 7
    %v643 = vsub.s32 %v640, %v642
    %v644 = vrot.slane %v630, %v643
    %v645 = vcombine.high %v637, %v637
    %v646 = vcombine.high %v644, %v644
    %v648 = vunpack.c.l.s4 1966171168
    %v649 = vunpack.c.0.s8 %v648
    %v650 = vlaneseq
    %v651 = vshrl.u32 %v650, 7
    %v652 = vsub.s32 %v649, %v651
    %v653 = vrot.slane %v637, %v652
    %v655 = vunpack.c.l.s4 1966171168
    %v656 = vunpack.c.0.s8 %v655
    %v657 = vlaneseq
    %v658 = vshrl.u32 %v657, 7
    %v659 = vsub.s32 %v656, %v658
    %v660 = vrot.slane %v644, %v659
    %v662 = vunpack.c.l.s4 1966171168
    %v663 = vunpack.c.0.s8 %v662
    %v664 = vlaneseq
    %v665 = vshrl.u32 %v664, 7
    %v666 = vsub.s32 %v663, %v665
    %v667 = vrot.slane %v645, %v666
    %v669 = vunpack.c.l.s4 1966171168
    %v670 = vunpack.c.0.s8 %v669
    %v671 = vlaneseq
    %v672 = vshrl.u32 %v671, 7
    %v673 = vsub.s32 %v670, %v672
    %v674 = vrot.slane %v646, %v673
    %v675 = vcombine.high %v653, %v653
    %v676 = vcombine.high %v660, %v660
    %v677 = vcombine.high %v667, %v667
    %v678 = vcombine.high %v674, %v674
    %v679 = vcombine.high %v31, %v31
    %v681 = vunpack.c.l.s4 1966171168
    %v682 = vunpack.c.0.s8 %v681
    %v683 = vlaneseq
    %v684 = vshrl.u32 %v683, 7
    %v685 = vsub.s32 %v682, %v684
    %v686 = vrot.slane %v31, %v685
    %v688 = vunpack.c.l.s4 1966171168
    %v689 = vunpack.c.0.s8 %v688
    %v690 = vlaneseq
    %v691 = vshrl.u32 %v690, 7
    %v692 = vsub.s32 %v689, %v691
    %v693 = vrot.slane %v679, %v692
    %v694 = vcombine.high %v686, %v686
    %v695 = vcombine.high %v693, %v693
    %v697 = vunpack.c.l.s4 1966171168
    %v698 = vunpack.c.0.s8 %v697
    %v699 = vlaneseq
    %v700 = vshrl.u32 %v699, 7
    %v701 = vsub.s32 %v698, %v700
    %v702 = vrot.slane %v686, %v701
    %v704 = vunpack.c.l.s4 1966171168
    %v705 = vunpack.c.0.s8 %v704
    %v706 = vlaneseq
    %v707 = vshrl.u32 %v706, 7
    %v708 = vsub.s32 %v705, %v707
    %v709 = vrot.slane %v693, %v708
    %v711 = vunpack.c.l.s4 1966171168
    %v712 = vunpack.c.0.s8 %v711
    %v713 = vlaneseq
    %v714 = vshrl.u32 %v713, 7
    %v715 = vsub.s32 %v712, %v714
    %v716 = vrot.slane %v694, %v715
    %v718 = vunpack.c.l.s4 1966171168
    %v719 = vunpack.c.0.s8 %v718
    %v720 = vlaneseq
    %v721 = vshrl.u32 %v720, 7
    %v722 = vsub.s32 %v719, %v721
    %v723 = vrot.slane %v695, %v722
    %v724 = vcombine.high %v702, %v702
    %v725 = vcombine.high %v709, %v709
    %v726 = vcombine.high %v716, %v716
    %v1241 = vunpack.c.l.b16 %v32
    %v1242 = vunpack.c.h.b16 %v32
    %v1243 = vunpack.c.l.b16 %v33
    %v1244 = vunpack.c.h.b16 %v33
    %v1245 = vunpack.c.l.b16 %v34
    %v1246 = vunpack.c.h.b16 %v34
    %v1247 = vunpack.c.l.b16 %v35
    %v1248 = vunpack.c.h.b16 %v35
    %v1249 = vunpack.c.l.b16 %v36
    %v1250 = vunpack.c.h.b16 %v36
    %v1251 = vunpack.c.l.b16 %v37
    %v1252 = vunpack.c.h.b16 %v37
    %v1253 = vunpack.c.l.b16 %v38
    %v1254 = vunpack.c.h.b16 %v38
    %v1255 = vunpack.c.l.b16 %v39
    %v1256 = vunpack.c.h.b16 %v39
    %v1257 = vunpack.c.l.b16 %v40
    %v1258 = vunpack.c.h.b16 %v40
    %v1259 = vunpack.c.l.b16 %v41
    %v1260 = vunpack.c.h.b16 %v41
    %v1261 = vunpack.c.l.b16 %v42
    %v1262 = vunpack.c.h.b16 %v42
    %v1263 = vunpack.c.l.b16 %v43
    %v1264 = vunpack.c.h.b16 %v43
    %v1265 = vunpack.c.l.b16 %v44
    %v1266 = vunpack.c.h.b16 %v44
    %v1267 = vunpack.c.l.b16 %v45
    %v1268 = vunpack.c.h.b16 %v45
    %v1269 = vunpack.c.l.b16 %v46
    %v1270 = vunpack.c.h.b16 %v46
    %v1271 = vunpack.c.l.b16 %v47
    %v1272 = vunpack.c.h.b16 %v47
    %v1273 = vunpack.c.l.b16 %v48
    %v1274 = vunpack.c.h.b16 %v48
    %v1275 = vunpack.c.l.b16 %v49
    %v1276 = vunpack.c.h.b16 %v49
    %v1277 = vunpack.c.l.b16 %v50
    %v1278 = vunpack.c.h.b16 %v50
    %v1279 = vunpack.c.l.b16 %v51
    %v1280 = vunpack.c.h.b16 %v51
    %v1281 = vunpack.c.l.b16 %v52
    %v1282 = vunpack.c.h.b16 %v52
    %v1283 = vunpack.c.l.b16 %v53
    %v1284 = vunpack.c.h.b16 %v53
    %v1285 = vunpack.c.l.b16 %v54
    %v1286 = vunpack.c.h.b16 %v54
    %v1287 = vunpack.c.l.b16 %v55
    %v1288 = vunpack.c.h.b16 %v55
    %v1289 = vunpack.c.l.b16 %v56
    %v1290 = vunpack.c.h.b16 %v56
    %v1291 = vunpack.c.l.b16 %v57
    %v1292 = vunpack.c.h.b16 %v57
    %v1293 = vunpack.c.l.b16 %v58
    %v1294 = vunpack.c.h.b16 %v58
    %v1295 = vunpack.c.l.b16 %v59
    %v1296 = vunpack.c.h.b16 %v59
    %v1297 = vunpack.c.l.b16 %v60
    %v1298 = vunpack.c.h.b16 %v60
    %v1299 = vunpack.c.l.b16 %v61
    %v1300 = vunpack.c.h.b16 %v61
    %v1301 = vunpack.c.l.b16 %v62
    %v1302 = vunpack.c.h.b16 %v62
    %v1303 = vunpack.c.l.b16 %v63
    %v1304 = vunpack.c.h.b16 %v63
    %v1305 = vunpack.c.l.b16 %v64
    %v1306 = vunpack.c.h.b16 %v64
    %v1307 = vunpack.c.l.b16 %v65
    %v1308 = vunpack.c.h.b16 %v65
    %v1309 = vunpack.c.l.b16 %v66
    %v1310 = vunpack.c.h.b16 %v66
    %v1311 = vunpack.c.l.b16 %v67
    %v1312 = vunpack.c.h.b16 %v67
    %v1313 = vunpack.c.l.b16 %v68
    %v1314 = vunpack.c.h.b16 %v68
    %v1315 = vunpack.c.l.b16 %v69
    %v1316 = vunpack.c.h.b16 %v69
    %v1317 = vunpack.c.l.b16 %v70
    %v1318 = vunpack.c.h.b16 %v70
    %v1319 = vunpack.c.l.b16 %v71
    %v1320 = vunpack.c.h.b16 %v71
    %v1321 = vunpack.c.l.b16 %v72
    %v1322 = vunpack.c.h.b16 %v72
    %v1323 = vunpack.c.l.b16 %v73
    %v1324 = vunpack.c.h.b16 %v73
    %v1325 = vunpack.c.l.b16 %v74
    %v1326 = vunpack.c.h.b16 %v74
    %v1327 = vunpack.c.l.b16 %v75
    %v1328 = vunpack.c.h.b16 %v75
    %v1329 = vunpack.c.l.b16 %v76
    %v1330 = vunpack.c.h.b16 %v76
    %v1331 = vunpack.c.l.b16 %v77
    %v1332 = vunpack.c.h.b16 %v77
    %v1333 = vunpack.c.l.b16 %v78
    %v1334 = vunpack.c.h.b16 %v78
    %v1335 = vunpack.c.l.b16 %v79
    %v1336 = vunpack.c.h.b16 %v79
    %v1337 = vunpack.c.l.b16 %v80
    %v1338 = vunpack.c.h.b16 %v80
    %v1339 = vunpack.c.l.b16 %v81
    %v1340 = vunpack.c.h.b16 %v81
    %v1341 = vunpack.c.l.b16 %v82
    %v1342 = vunpack.c.h.b16 %v82
    %v1343 = vunpack.c.l.b16 %v83
    %v1344 = vunpack.c.h.b16 %v83
    %v1345 = vunpack.c.l.b16 %v84
    %v1346 = vunpack.c.h.b16 %v84
    %v1347 = vunpack.c.l.b16 %v85
    %v1348 = vunpack.c.h.b16 %v85
    %v1349 = vunpack.c.l.b16 %v86
    %v1350 = vunpack.c.h.b16 %v86
    %v1351 = vunpack.c.l.b16 %v87
    %v1352 = vunpack.c.h.b16 %v87
    %v1353 = vunpack.c.l.b16 %v88
    %v1354 = vunpack.c.h.b16 %v88
    %v1355 = vunpack.c.l.b16 %v89
    %v1356 = vunpack.c.h.b16 %v89
    %v1357 = vunpack.c.l.b16 %v90
    %v1358 = vunpack.c.h.b16 %v90
    %v1359 = vunpack.c.l.b16 %v91
    %v1360 = vunpack.c.h.b16 %v91
    %v1361 = vunpack.c.l.b16 %v92
    %v1362 = vunpack.c.h.b16 %v92
    %v1363 = vunpack.c.l.b16 %v93
    %v1364 = vunpack.c.h.b16 %v93
    %v1365 = vunpack.c.l.b16 %v94
    %v1366 = vunpack.c.h.b16 %v94
    %v1367 = vunpack.c.l.b16 %v95
    %v1368 = vunpack.c.h.b16 %v95
    %v1369 = vunpack.c.l.b16 %v96
    %v1370 = vunpack.c.h.b16 %v96
    %v1371 = vunpack.c.l.b16 %v97
    %v1372 = vunpack.c.h.b16 %v97
    %v1373 = vunpack.c.l.b16 %v98
    %v1374 = vunpack.c.h.b16 %v98
    %v1375 = vunpack.c.l.b16 %v99
    %v1376 = vunpack.c.h.b16 %v99
    %v1377 = vunpack.c.l.b16 %v100
    %v1378 = vunpack.c.h.b16 %v100
    %v1379 = vunpack.c.l.b16 %v101
    %v1380 = vunpack.c.h.b16 %v101
    %v1381 = vunpack.c.l.b16 %v102
    %v1382 = vunpack.c.h.b16 %v102
    %v1383 = vunpack.c.l.b16 %v103
    %v1384 = vunpack.c.h.b16 %v103
    %v1385 = vunpack.c.l.b16 %v104
    %v1386 = vunpack.c.h.b16 %v104
    %v1387 = vunpack.c.l.b16 %v105
    %v1388 = vunpack.c.h.b16 %v105
    %v1389 = vunpack.c.l.b16 %v106
    %v1390 = vunpack.c.h.b16 %v106
    %v1391 = vunpack.c.l.b16 %v107
    %v1392 = vunpack.c.h.b16 %v107
    %v1393 = vunpack.c.l.b16 %v108
    %v1394 = vunpack.c.h.b16 %v108
    %v1395 = vunpack.c.l.b16 %v109
    %v1396 = vunpack.c.h.b16 %v109
    %v1397 = vunpack.c.l.b16 %v110
    %v1398 = vunpack.c.h.b16 %v110
    %v1399 = vunpack.c.l.b16 %v111
    %v1400 = vunpack.c.h.b16 %v111
    %v1401 = vunpack.c.l.b16 %v112
    %v1402 = vunpack.c.h.b16 %v112
    %v1403 = vunpack.c.l.b16 %v113
    %v1404 = vunpack.c.h.b16 %v113
    %v1405 = vunpack.c.l.b16 %v114
    %v1406 = vunpack.c.h.b16 %v114
    %v1407 = vunpack.c.l.b16 %v115
    %v1408 = vunpack.c.h.b16 %v115
    %v1409 = vunpack.c.l.b16 %v116
    %v1410 = vunpack.c.h.b16 %v116
    %v1411 = vunpack.c.l.b16 %v117
    %v1412 = vunpack.c.h.b16 %v117
    %v1413 = vunpack.c.l.b16 %v118
    %v1414 = vunpack.c.h.b16 %v118
    %v1415 = vunpack.c.l.b16 %v119
    %v1416 = vunpack.c.h.b16 %v119
    %v1417 = vunpack.c.l.b16 %v120
    %v1418 = vunpack.c.h.b16 %v120
    %v1419 = vunpack.c.l.b16 %v121
    %v1420 = vunpack.c.h.b16 %v121
    %v1421 = vunpack.c.l.b16 %v122
    %v1422 = vunpack.c.h.b16 %v122
    %v1423 = vunpack.c.l.b16 %v123
    %v1424 = vunpack.c.h.b16 %v123
    %v1425 = vunpack.c.l.b16 %v124
    %v1426 = vunpack.c.h.b16 %v124
    %v1427 = vunpack.c.l.b16 %v125
    %v1428 = vunpack.c.h.b16 %v125
    %v1429 = vunpack.c.l.b16 %v126
    %v1430 = vunpack.c.h.b16 %v126
    %v1431 = vunpack.c.l.b16 %v127
    %v1432 = vunpack.c.h.b16 %v127
    %v1433 = vunpack.c.l.b16 %v128
    %v1434 = vunpack.c.h.b16 %v128
    %v1435 = vunpack.c.l.b16 %v129
    %v1436 = vunpack.c.h.b16 %v129
    %v1437 = vunpack.c.l.b16 %v130
    %v1438 = vunpack.c.h.b16 %v130
    %v1439 = vunpack.c.l.b16 %v131
    %v1440 = vunpack.c.h.b16 %v131
    %v1441 = vunpack.c.l.b16 %v132
    %v1442 = vunpack.c.h.b16 %v132
    %v1443 = vunpack.c.l.b16 %v133
    %v1444 = vunpack.c.h.b16 %v133
    %v1445 = vunpack.c.l.b16 %v134
    %v1446 = vunpack.c.h.b16 %v134
    %v1447 = vunpack.c.l.b16 %v135
    %v1448 = vunpack.c.h.b16 %v135
    %v1449 = vunpack.c.l.b16 %v136
    %v1450 = vunpack.c.h.b16 %v136
    %v1451 = vunpack.c.l.b16 %v137
    %v1452 = vunpack.c.h.b16 %v137
    %v1453 = vunpack.c.l.b16 %v138
    %v1454 = vunpack.c.h.b16 %v138
    %v1455 = vunpack.c.l.b16 %v139
    %v1456 = vunpack.c.h.b16 %v139
    %v1457 = vunpack.c.l.b16 %v140
    %v1458 = vunpack.c.h.b16 %v140
    %v1459 = vunpack.c.l.b16 %v141
    %v1460 = vunpack.c.h.b16 %v141
    %v1461 = vunpack.c.l.b16 %v142
    %v1462 = vunpack.c.h.b16 %v142
    %v1463 = vunpack.c.l.b16 %v143
    %v1464 = vunpack.c.h.b16 %v143
    %v1465 = vunpack.c.l.b16 %v144
    %v1466 = vunpack.c.h.b16 %v144
    %v1467 = vunpack.c.l.b16 %v145
    %v1468 = vunpack.c.h.b16 %v145
    %v1469 = vunpack.c.l.b16 %v146
    %v1470 = vunpack.c.h.b16 %v146
    %v1471 = vunpack.c.l.b16 %v147
    %v1472 = vunpack.c.h.b16 %v147
    %v1473 = vunpack.c.l.b16 %v148
    %v1474 = vunpack.c.h.b16 %v148
    %v1475 = vunpack.c.l.b16 %v149
    %v1476 = vunpack.c.h.b16 %v149
    %v1477 = vunpack.c.l.b16 %v150
    %v1478 = vunpack.c.h.b16 %v150
    %v1479 = vunpack.c.l.b16 %v151
    %v1480 = vunpack.c.h.b16 %v151
    %v1481 = vunpack.c.l.b16 %v152
    %v1482 = vunpack.c.h.b16 %v152
    %v1483 = vunpack.c.l.b16 %v153
    %v1484 = vunpack.c.h.b16 %v153
    %v1485 = vunpack.c.l.b16 %v154
    %v1486 = vunpack.c.h.b16 %v154
    %v1487 = vunpack.c.l.b16 %v155
    %v1488 = vunpack.c.h.b16 %v155
    %v1489 = vunpack.c.l.b16 %v156
    %v1490 = vunpack.c.h.b16 %v156
    %v1491 = vunpack.c.l.b16 %v157
    %v1492 = vunpack.c.h.b16 %v157
    %v1493 = vunpack.c.l.b16 %v158
    %v1494 = vunpack.c.h.b16 %v158
    %v1495 = vunpack.c.l.b16 %v159
    %v1496 = vunpack.c.h.b16 %v159
    %v1497 = vunpack.c.l.b16 %v160
    %v1498 = vunpack.c.h.b16 %v160
    %v1499 = vunpack.c.l.b16 %v161
    %v1500 = vunpack.c.h.b16 %v161
    %v1501 = vunpack.c.l.b16 %v162
    %v1502 = vunpack.c.h.b16 %v162
    %v1503 = vunpack.c.l.b16 %v163
    %v1504 = vunpack.c.h.b16 %v163
    %v1505 = vunpack.c.l.b16 %v164
    %v1506 = vunpack.c.h.b16 %v164
    %v1507 = vunpack.c.l.b16 %v165
    %v1508 = vunpack.c.h.b16 %v165
    %v1509 = vunpack.c.l.b16 %v166
    %v1510 = vunpack.c.h.b16 %v166
    %v1511 = vunpack.c.l.b16 %v167
    %v1512 = vunpack.c.h.b16 %v167
    %v1513 = vunpack.c.l.b16 %v168
    %v1514 = vunpack.c.h.b16 %v168
    %v1515 = vunpack.c.l.b16 %v169
    %v1516 = vunpack.c.h.b16 %v169
    %v1517 = vunpack.c.l.b16 %v170
    %v1518 = vunpack.c.h.b16 %v170
    %v1519 = vunpack.c.l.b16 %v171
    %v1520 = vunpack.c.h.b16 %v171
    %v1521 = vunpack.c.l.b16 %v172
    %v1522 = vunpack.c.h.b16 %v172
    %v1523 = vunpack.c.l.b16 %v173
    %v1524 = vunpack.c.h.b16 %v173
    %v1525 = vunpack.c.l.b16 %v174
    %v1526 = vunpack.c.h.b16 %v174
    %v1527 = vunpack.c.l.b16 %v175
    %v1528 = vunpack.c.h.b16 %v175
    %v1529 = vunpack.c.l.b16 %v176
    %v1530 = vunpack.c.h.b16 %v176
    %v1531 = vunpack.c.l.b16 %v177
    %v1532 = vunpack.c.h.b16 %v177
    %v1533 = vunpack.c.l.b16 %v178
    %v1534 = vunpack.c.h.b16 %v178
    %v1535 = vunpack.c.l.b16 %v179
    %v1536 = vunpack.c.h.b16 %v179
    %v1537 = vunpack.c.l.b16 %v180
    %v1538 = vunpack.c.h.b16 %v180
    %v1539 = vunpack.c.l.b16 %v181
    %v1540 = vunpack.c.h.b16 %v181
    %v1541 = vunpack.c.l.b16 %v182
    %v1542 = vunpack.c.h.b16 %v182
    %v1543 = vunpack.c.l.b16 %v183
    %v1544 = vunpack.c.h.b16 %v183
    %v1545 = vunpack.c.l.b16 %v184
    %v1546 = vunpack.c.h.b16 %v184
    %v1547 = vunpack.c.l.b16 %v185
    %v1548 = vunpack.c.h.b16 %v185
    %v1549 = vunpack.c.l.b16 %v186
    %v1550 = vunpack.c.h.b16 %v186
    %v1551 = vunpack.c.l.b16 %v187
    %v1552 = vunpack.c.h.b16 %v187
    %v1553 = vunpack.c.l.b16 %v188
    %v1554 = vunpack.c.h.b16 %v188
    %v1555 = vunpack.c.l.b16 %v189
    %v1556 = vunpack.c.h.b16 %v189
    %v1557 = vunpack.c.l.b16 %v190
    %v1558 = vunpack.c.h.b16 %v190
    %v1559 = vunpack.c.l.b16 %v191
    %v1560 = vunpack.c.h.b16 %v191
    %v1561 = vunpack.c.l.b16 %v192
    %v1562 = vunpack.c.h.b16 %v192
    %v1563 = vunpack.c.l.b16 %v193
    %v1564 = vunpack.c.h.b16 %v193
    %v1565 = vunpack.c.l.b16 %v194
    %v1566 = vunpack.c.h.b16 %v194
    %v1567 = vunpack.c.l.b16 %v195
    %v1568 = vunpack.c.h.b16 %v195
    %v1569 = vunpack.c.l.b16 %v196
    %v1570 = vunpack.c.h.b16 %v196
    %v1571 = vunpack.c.l.b16 %v197
    %v1572 = vunpack.c.h.b16 %v197
    %v1573 = vunpack.c.l.b16 %v198
    %v1574 = vunpack.c.h.b16 %v198
    %v1575 = vunpack.c.l.b16 %v199
    %v1576 = vunpack.c.h.b16 %v199
    %v1577 = vunpack.c.l.b16 %v200
    %v1578 = vunpack.c.h.b16 %v200
    %v1579 = vunpack.c.l.b16 %v201
    %v1580 = vunpack.c.h.b16 %v201
    %v1581 = vunpack.c.l.b16 %v202
    %v1582 = vunpack.c.h.b16 %v202
    %v1583 = vunpack.c.l.b16 %v203
    %v1584 = vunpack.c.h.b16 %v203
    %v1585 = vunpack.c.l.b16 %v204
    %v1586 = vunpack.c.h.b16 %v204
    %v1587 = vunpack.c.l.b16 %v205
    %v1588 = vunpack.c.h.b16 %v205
    %v1589 = vunpack.c.l.b16 %v206
    %v1590 = vunpack.c.h.b16 %v206
    %v1591 = vunpack.c.l.b16 %v207
    %v1592 = vunpack.c.h.b16 %v207
    %v1593 = vunpack.c.l.b16 %v208
    %v1594 = vunpack.c.h.b16 %v208
    %v1595 = vunpack.c.l.b16 %v209
    %v1596 = vunpack.c.h.b16 %v209
    %v1597 = vunpack.c.l.b16 %v210
    %v1598 = vunpack.c.h.b16 %v210
    %v1599 = vunpack.c.l.b16 %v211
    %v1600 = vunpack.c.h.b16 %v211
    %v1601 = vunpack.c.l.b16 %v212
    %v1602 = vunpack.c.h.b16 %v212
    %v1603 = vunpack.c.l.b16 %v213
    %v1604 = vunpack.c.h.b16 %v213
    %v1605 = vunpack.c.l.b16 %v214
    %v1606 = vunpack.c.h.b16 %v214
    %v1607 = vunpack.c.l.b16 %v215
    %v1608 = vunpack.c.h.b16 %v215
    %v1609 = vunpack.c.l.b16 %v216
    %v1610 = vunpack.c.h.b16 %v216
    %v1611 = vunpack.c.l.b16 %v217
    %v1612 = vunpack.c.h.b16 %v217
    %v1613 = vunpack.c.l.b16 %v218
    %v1614 = vunpack.c.h.b16 %v218
    %v1615 = vunpack.c.l.b16 %v219
    %v1616 = vunpack.c.h.b16 %v219
    %v1617 = vunpack.c.l.b16 %v220
    %v1618 = vunpack.c.h.b16 %v220
    %v1619 = vunpack.c.l.b16 %v221
    %v1620 = vunpack.c.h.b16 %v221
    %v1621 = vunpack.c.l.b16 %v222
    %v1622 = vunpack.c.h.b16 %v222
    %v1623 = vunpack.c.l.b16 %v223
    %v1624 = vunpack.c.h.b16 %v223
    %v1625 = vunpack.c.l.b16 %v224
    %v1626 = vunpack.c.h.b16 %v224
    %v1627 = vunpack.c.l.b16 %v225
    %v1628 = vunpack.c.h.b16 %v225
    %v1629 = vunpack.c.l.b16 %v226
    %v1630 = vunpack.c.h.b16 %v226
    %v1631 = vunpack.c.l.b16 %v227
    %v1632 = vunpack.c.h.b16 %v227
    %v1633 = vunpack.c.l.b16 %v228
    %v1634 = vunpack.c.h.b16 %v228
    %v1635 = vunpack.c.l.b16 %v229
    %v1636 = vunpack.c.h.b16 %v229
    %v1637 = vunpack.c.l.b16 %v230
    %v1638 = vunpack.c.h.b16 %v230
    %v1639 = vunpack.c.l.b16 %v231
    %v1640 = vunpack.c.h.b16 %v231
    %v1641 = vunpack.c.l.b16 %v232
    %v1642 = vunpack.c.h.b16 %v232
    %v1643 = vunpack.c.l.b16 %v233
    %v1644 = vunpack.c.h.b16 %v233
    %v1645 = vunpack.c.l.b16 %v234
    %v1646 = vunpack.c.h.b16 %v234
    %v1647 = vunpack.c.l.b16 %v235
    %v1648 = vunpack.c.h.b16 %v235
    %v1649 = vunpack.c.l.b16 %v236
    %v1650 = vunpack.c.h.b16 %v236
    %v1651 = vunpack.c.l.b16 %v237
    %v1652 = vunpack.c.h.b16 %v237
    %v1653 = vunpack.c.l.b16 %v238
    %v1654 = vunpack.c.h.b16 %v238
    %v1655 = vunpack.c.l.b16 %v239
    %v1656 = vunpack.c.h.b16 %v239
    %v1657 = vunpack.c.l.b16 %v240
    %v1658 = vunpack.c.h.b16 %v240
    %v1659 = vunpack.c.l.b16 %v241
    %v1660 = vunpack.c.h.b16 %v241
    %v1661 = vunpack.c.l.b16 %v242
    %v1662 = vunpack.c.h.b16 %v242
    %v1663 = vunpack.c.l.b16 %v243
    %v1664 = vunpack.c.h.b16 %v243
    %v1665 = vunpack.c.l.b16 %v244
    %v1666 = vunpack.c.h.b16 %v244
    %v1667 = vunpack.c.l.b16 %v245
    %v1668 = vunpack.c.h.b16 %v245
    %v1669 = vunpack.c.l.b16 %v246
    %v1670 = vunpack.c.h.b16 %v246
    %v1671 = vunpack.c.l.b16 %v247
    %v1672 = vunpack.c.h.b16 %v247
    %v1673 = vunpack.c.l.b16 %v248
    %v1674 = vunpack.c.h.b16 %v248
    %v1675 = vunpack.c.l.b16 %v249
    %v1676 = vunpack.c.h.b16 %v249
    %v1677 = vunpack.c.l.b16 %v250
    %v1678 = vunpack.c.h.b16 %v250
    %v1679 = vunpack.c.l.b16 %v251
    %v1680 = vunpack.c.h.b16 %v251
    %v1681 = vunpack.c.l.b16 %v252
    %v1682 = vunpack.c.h.b16 %v252
    %v1683 = vunpack.c.l.b16 %v253
    %v1684 = vunpack.c.h.b16 %v253
    %v1685 = vunpack.c.l.b16 %v254
    %v1686 = vunpack.c.h.b16 %v254
    %v1687 = vunpack.c.l.b16 %v255
    %v1688 = vunpack.c.h.b16 %v255
    %v1689 = vunpack.c.l.b16 %v256
    %v1690 = vunpack.c.h.b16 %v256
    %v1691 = vunpack.c.l.b16 %v257
    %v1692 = vunpack.c.h.b16 %v257
    %v1693 = vunpack.c.l.b16 %v258
    %v1694 = vunpack.c.h.b16 %v258
    %v1695 = vunpack.c.l.b16 %v259
    %v1696 = vunpack.c.h.b16 %v259
    %v1697 = vunpack.c.l.b16 %v260
    %v1698 = vunpack.c.h.b16 %v260
    %v1699 = vunpack.c.l.b16 %v261
    %v1700 = vunpack.c.h.b16 %v261
    %v1701 = vunpack.c.l.b16 %v262
    %v1702 = vunpack.c.h.b16 %v262
    %v1703 = vunpack.c.l.b16 %v263
    %v1704 = vunpack.c.h.b16 %v263
    %v1705 = vunpack.c.l.b16 %v264
    %v1706 = vunpack.c.h.b16 %v264
    %v1707 = vunpack.c.l.b16 %v265
    %v1708 = vunpack.c.h.b16 %v265
    %v1709 = vunpack.c.l.b16 %v266
    %v1710 = vunpack.c.h.b16 %v266
    %v1711 = vunpack.c.l.b16 %v267
    %v1712 = vunpack.c.h.b16 %v267
    %v1713 = vunpack.c.l.b16 %v268
    %v1714 = vunpack.c.h.b16 %v268
    %v1715 = vunpack.c.l.b16 %v269
    %v1716 = vunpack.c.h.b16 %v269
    %v1717 = vunpack.c.l.b16 %v270
    %v1718 = vunpack.c.h.b16 %v270
    %v1719 = vunpack.c.l.b16 %v271
    %v1720 = vunpack.c.h.b16 %v271
    %v1721 = vunpack.c.l.b16 %v272
    %v1722 = vunpack.c.h.b16 %v272
    %v1723 = vunpack.c.l.b16 %v273
    %v1724 = vunpack.c.h.b16 %v273
    %v1725 = vunpack.c.l.b16 %v274
    %v1726 = vunpack.c.h.b16 %v274
    %v1727 = vunpack.c.l.b16 %v275
    %v1728 = vunpack.c.h.b16 %v275
    %v1729 = vunpack.c.l.b16 %v276
    %v1730 = vunpack.c.h.b16 %v276
    %v1731 = vunpack.c.l.b16 %v277
    %v1732 = vunpack.c.h.b16 %v277
    %v1733 = vunpack.c.l.b16 %v278
    %v1734 = vunpack.c.h.b16 %v278
    %v1735 = vunpack.c.l.b16 %v279
    %v1736 = vunpack.c.h.b16 %v279
    %v1737 = vunpack.c.l.b16 %v280
    %v1738 = vunpack.c.h.b16 %v280
    %v1739 = vunpack.c.l.b16 %v281
    %v1740 = vunpack.c.h.b16 %v281
    %v1741 = vunpack.c.l.b16 %v282
    %v1742 = vunpack.c.h.b16 %v282
    %v1743 = vunpack.c.l.b16 %v283
    %v1744 = vunpack.c.h.b16 %v283
    %v1745 = vunpack.c.l.b16 %v284
    %v1746 = vunpack.c.h.b16 %v284
    %v1747 = vunpack.c.l.b16 %v285
    %v1748 = vunpack.c.h.b16 %v285
    %v1749 = vunpack.c.l.b16 %v286
    %v1750 = vunpack.c.h.b16 %v286
    %v1751 = vunpack.c.l.b16 %v287
    %v1752 = vunpack.c.h.b16 %v287
    %v1753 = vunpack.c.l.b16 %v288
    %v1754 = vunpack.c.h.b16 %v288
    %v1755 = vunpack.c.l.b16 %v289
    %v1756 = vunpack.c.h.b16 %v289
    %v1757 = vunpack.c.l.b16 %v290
    %v1758 = vunpack.c.h.b16 %v290
    %v1759 = vunpack.c.l.b16 %v291
    %v1760 = vunpack.c.h.b16 %v291
    %v1761 = vunpack.c.l.b16 %v292
    %v1762 = vunpack.c.h.b16 %v292
    %v1763 = vunpack.c.l.b16 %v293
    %v1764 = vunpack.c.h.b16 %v293
    %v1765 = vunpack.c.l.b16 %v294
    %v1766 = vunpack.c.h.b16 %v294
    %v1767 = vunpack.c.l.b16 %v295
    %v1768 = vunpack.c.h.b16 %v295
    %v1769 = vunpack.c.l.b16 %v296
    %v1770 = vunpack.c.h.b16 %v296
    %v1771 = vunpack.c.l.b16 %v297
    %v1772 = vunpack.c.h.b16 %v297
    %v1773 = vunpack.c.l.b16 %v298
    %v1774 = vunpack.c.h.b16 %v298
    %v1775 = vunpack.c.l.b16 %v299
    %v1776 = vunpack.c.h.b16 %v299
    %v1777 = vunpack.c.l.b16 %v300
    %v1778 = vunpack.c.h.b16 %v300
    %v1779 = vunpack.c.l.b16 %v301
    %v1780 = vunpack.c.h.b16 %v301
    %v1781 = vunpack.c.l.b16 %v302
    %v1782 = vunpack.c.h.b16 %v302
    %v1783 = vunpack.c.l.b16 %v303
    %v1784 = vunpack.c.h.b16 %v303
    %v1785 = vunpack.c.l.b16 %v304
    %v1786 = vunpack.c.h.b16 %v304
    %v1787 = vunpack.c.l.b16 %v305
    %v1788 = vunpack.c.h.b16 %v305
    %v1789 = vunpack.c.l.b16 %v306
    %v1790 = vunpack.c.h.b16 %v306
    %v1791 = vunpack.c.l.b16 %v307
    %v1792 = vunpack.c.h.b16 %v307
    %v1793 = vunpack.c.l.b16 %v308
    %v1794 = vunpack.c.h.b16 %v308
    %v1795 = vunpack.c.l.b16 %v309
    %v1796 = vunpack.c.h.b16 %v309
    %v1797 = vunpack.c.l.b16 %v310
    %v1798 = vunpack.c.h.b16 %v310
    %v1799 = vunpack.c.l.b16 %v311
    %v1800 = vunpack.c.h.b16 %v311
    %v1801 = vunpack.c.l.b16 %v312
    %v1802 = vunpack.c.h.b16 %v312
    %v1803 = vunpack.c.l.b16 %v313
    %v1804 = vunpack.c.h.b16 %v313
    %v1805 = vunpack.c.l.b16 %v314
    %v1806 = vunpack.c.h.b16 %v314
    %v1807 = vunpack.c.l.b16 %v315
    %v1808 = vunpack.c.h.b16 %v315
    %v1809 = vunpack.c.l.b16 %v316
    %v1810 = vunpack.c.h.b16 %v316
    %v1811 = vunpack.c.l.b16 %v317
    %v1812 = vunpack.c.h.b16 %v317
    %v1813 = vunpack.c.l.b16 %v318
    %v1814 = vunpack.c.h.b16 %v318
    %v1815 = vunpack.c.l.b16 %v319
    %v1816 = vunpack.c.h.b16 %v319
    %v1817 = vunpack.c.l.b16 %v320
    %v1818 = vunpack.c.h.b16 %v320
    %v1819 = vunpack.c.l.b16 %v321
    %v1820 = vunpack.c.h.b16 %v321
    %v1821 = vunpack.c.l.b16 %v322
    %v1822 = vunpack.c.h.b16 %v322
    %v1823 = vunpack.c.l.b16 %v323
    %v1824 = vunpack.c.h.b16 %v323
    %v1825 = vunpack.c.l.b16 %v324
    %v1826 = vunpack.c.h.b16 %v324
    %v1827 = vunpack.c.l.b16 %v325
    %v1828 = vunpack.c.h.b16 %v325
    %v1829 = vunpack.c.l.b16 %v326
    %v1830 = vunpack.c.h.b16 %v326
    %v1831 = vunpack.c.l.b16 %v327
    %v1832 = vunpack.c.h.b16 %v327
    %v1833 = vunpack.c.l.b16 %v328
    %v1834 = vunpack.c.h.b16 %v328
    %v1835 = vunpack.c.l.b16 %v329
    %v1836 = vunpack.c.h.b16 %v329
    %v1837 = vunpack.c.l.b16 %v330
    %v1838 = vunpack.c.h.b16 %v330
    %v1839 = vunpack.c.l.b16 %v331
    %v1840 = vunpack.c.h.b16 %v331
    %v1841 = vunpack.c.l.b16 %v332
    %v1842 = vunpack.c.h.b16 %v332
    %v1843 = vunpack.c.l.b16 %v333
    %v1844 = vunpack.c.h.b16 %v333
    %v1845 = vunpack.c.l.b16 %v334
    %v1846 = vunpack.c.h.b16 %v334
    %v1847 = vunpack.c.l.b16 %v335
    %v1848 = vunpack.c.h.b16 %v335
    %v1849 = vunpack.c.l.b16 %v336
    %v1850 = vunpack.c.h.b16 %v336
    %v1851 = vunpack.c.l.b16 %v337
    %v1852 = vunpack.c.h.b16 %v337
    %v1853 = vunpack.c.l.b16 %v338
    %v1854 = vunpack.c.h.b16 %v338
    %v1855 = vunpack.c.l.b16 %v339
    %v1856 = vunpack.c.h.b16 %v339
    %v1857 = vunpack.c.l.b16 %v340
    %v1858 = vunpack.c.h.b16 %v340
    %v1859 = vunpack.c.l.b16 %v341
    %v1860 = vunpack.c.h.b16 %v341
    %v1861 = vunpack.c.l.b16 %v342
    %v1862 = vunpack.c.h.b16 %v342
    %v1863 = vunpack.c.l.b16 %v343
    %v1864 = vunpack.c.h.b16 %v343
    %v1865 = vunpack.c.l.b16 %v344
    %v1866 = vunpack.c.h.b16 %v344
    %v1867 = vunpack.c.l.b16 %v345
    %v1868 = vunpack.c.h.b16 %v345
    %v1869 = vunpack.c.l.b16 %v346
    %v1870 = vunpack.c.h.b16 %v346
    %v1871 = vunpack.c.l.b16 %v347
    %v1872 = vunpack.c.h.b16 %v347
    %v1873 = vunpack.c.l.b16 %v348
    %v1874 = vunpack.c.h.b16 %v348
    %v1875 = vunpack.c.l.b16 %v349
    %v1876 = vunpack.c.h.b16 %v349
    %v1877 = vunpack.c.l.b16 %v350
    %v1878 = vunpack.c.h.b16 %v350
    %v1879 = vunpack.c.l.b16 %v351
    %v1880 = vunpack.c.h.b16 %v351
    %v1881 = vunpack.c.l.b16 %v352
    %v1882 = vunpack.c.h.b16 %v352
    %v1883 = vunpack.c.l.b16 %v353
    %v1884 = vunpack.c.h.b16 %v353
    %v1885 = vunpack.c.l.b16 %v354
    %v1886 = vunpack.c.h.b16 %v354
    %v1887 = vunpack.c.l.b16 %v355
    %v1888 = vunpack.c.h.b16 %v355
    %v1889 = vunpack.c.l.b16 %v356
    %v1890 = vunpack.c.h.b16 %v356
    %v1891 = vunpack.c.l.b16 %v357
    %v1892 = vunpack.c.h.b16 %v357
    %v1893 = vunpack.c.l.b16 %v358
    %v1894 = vunpack.c.h.b16 %v358
    %v1895 = vunpack.c.l.b16 %v359
    %v1896 = vunpack.c.h.b16 %v359
    %v1897 = vunpack.c.l.b16 %v360
    %v1898 = vunpack.c.h.b16 %v360
    %v1899 = vunpack.c.l.b16 %v361
    %v1900 = vunpack.c.h.b16 %v361
    %v1901 = vunpack.c.l.b16 %v362
    %v1902 = vunpack.c.h.b16 %v362
    %v1903 = vunpack.c.l.b16 %v363
    %v1904 = vunpack.c.h.b16 %v363
    %v1905 = vunpack.c.l.b16 %v364
    %v1906 = vunpack.c.h.b16 %v364
    %v1907 = vunpack.c.l.b16 %v365
    %v1908 = vunpack.c.h.b16 %v365
    %v1909 = vunpack.c.l.b16 %v366
    %v1910 = vunpack.c.h.b16 %v366
    %v1911 = vunpack.c.l.b16 %v367
    %v1912 = vunpack.c.h.b16 %v367
    %v1913 = vunpack.c.l.b16 %v368
    %v1914 = vunpack.c.h.b16 %v368
    %v1915 = vunpack.c.l.b16 %v369
    %v1916 = vunpack.c.h.b16 %v369
    %v1917 = vunpack.c.l.b16 %v370
    %v1918 = vunpack.c.h.b16 %v370
    %v1919 = vunpack.c.l.b16 %v371
    %v1920 = vunpack.c.h.b16 %v371
    %v1921 = vunpack.c.l.b16 %v372
    %v1922 = vunpack.c.h.b16 %v372
    %v1923 = vunpack.c.l.b16 %v373
    %v1924 = vunpack.c.h.b16 %v373
    %v1925 = vunpack.c.l.b16 %v374
    %v1926 = vunpack.c.h.b16 %v374
    %v1927 = vunpack.c.l.b16 %v375
    %v1928 = vunpack.c.h.b16 %v375
    %v1929 = vunpack.c.l.b16 %v376
    %v1930 = vunpack.c.h.b16 %v376
    %v1931 = vunpack.c.l.b16 %v377
    %v1932 = vunpack.c.h.b16 %v377
    %v1933 = vunpack.c.l.b16 %v378
    %v1934 = vunpack.c.h.b16 %v378
    %v1935 = vunpack.c.l.b16 %v379
    %v1936 = vunpack.c.h.b16 %v379
    %v1937 = vunpack.c.l.b16 %v380
    %v1938 = vunpack.c.h.b16 %v380
    %v1939 = vunpack.c.l.b16 %v381
    %v1940 = vunpack.c.h.b16 %v381
    %v1941 = vunpack.c.l.b16 %v382
    %v1942 = vunpack.c.h.b16 %v382
    %v1943 = vunpack.c.l.b16 %v383
    %v1944 = vunpack.c.h.b16 %v383
    %v1945 = vunpack.c.l.b16 %v384
    %v1946 = vunpack.c.h.b16 %v384
    %v1947 = vunpack.c.l.b16 %v385
    %v1948 = vunpack.c.h.b16 %v385
    %v1949 = vunpack.c.l.b16 %v386
    %v1950 = vunpack.c.h.b16 %v386
    %v1951 = vunpack.c.l.b16 %v387
    %v1952 = vunpack.c.h.b16 %v387
    %v1953 = vunpack.c.l.b16 %v388
    %v1954 = vunpack.c.h.b16 %v388
    %v1955 = vunpack.c.l.b16 %v389
    %v1956 = vunpack.c.h.b16 %v389
    %v1957 = vunpack.c.l.b16 %v390
    %v1958 = vunpack.c.h.b16 %v390
    %v1959 = vunpack.c.l.b16 %v391
    %v1960 = vunpack.c.h.b16 %v391
    %v1961 = vunpack.c.l.b16 %v392
    %v1962 = vunpack.c.h.b16 %v392
    %v1963 = vunpack.c.l.b16 %v393
    %v1964 = vunpack.c.h.b16 %v393
    %v1965 = vunpack.c.l.b16 %v394
    %v1966 = vunpack.c.h.b16 %v394
    %v1967 = vunpack.c.l.b16 %v395
    %v1968 = vunpack.c.h.b16 %v395
    %v1969 = vunpack.c.l.b16 %v396
    %v1970 = vunpack.c.h.b16 %v396
    %v1971 = vunpack.c.l.b16 %v397
    %v1972 = vunpack.c.h.b16 %v397
    %v1973 = vunpack.c.l.b16 %v398
    %v1974 = vunpack.c.h.b16 %v398
    %v1975 = vunpack.c.l.b16 %v399
    %v1976 = vunpack.c.h.b16 %v399
    %v1977 = vunpack.c.l.b16 %v400
    %v1978 = vunpack.c.h.b16 %v400
    %v1979 = vunpack.c.l.b16 %v401
    %v1980 = vunpack.c.h.b16 %v401
    %v1981 = vunpack.c.l.b16 %v402
    %v1982 = vunpack.c.h.b16 %v402
    %v1983 = vunpack.c.l.b16 %v403
    %v1984 = vunpack.c.h.b16 %v403
    %v1985 = vunpack.c.l.b16 %v404
    %v1986 = vunpack.c.h.b16 %v404
    %v1987 = vunpack.c.l.b16 %v405
    %v1988 = vunpack.c.h.b16 %v405
    %v1989 = vunpack.c.l.b16 %v406
    %v1990 = vunpack.c.h.b16 %v406
    %v1991 = vunpack.c.l.b16 %v407
    %v1992 = vunpack.c.h.b16 %v407
    %v1993 = vunpack.c.l.b16 %v408
    %v1994 = vunpack.c.h.b16 %v408
    %v1995 = vunpack.c.l.b16 %v409
    %v1996 = vunpack.c.h.b16 %v409
    %v1997 = vunpack.c.l.b16 %v410
    %v1998 = vunpack.c.h.b16 %v410
    %v1999 = vunpack.c.l.b16 %v411
    %v2000 = vunpack.c.h.b16 %v411
    %v2001 = vunpack.c.l.b16 %v412
    %v2002 = vunpack.c.h.b16 %v412
    %v2003 = vunpack.c.l.b16 %v413
    %v2004 = vunpack.c.h.b16 %v413
    %v2005 = vunpack.c.l.b16 %v414
    %v2006 = vunpack.c.h.b16 %v414
    %v2007 = vunpack.c.l.b16 %v415
    %v2008 = vunpack.c.h.b16 %v415
    %v2009 = vunpack.c.l.b16 %v416
    %v2010 = vunpack.c.h.b16 %v416
    %v2011 = vunpack.c.l.b16 %v417
    %v2012 = vunpack.c.h.b16 %v417
    %v2013 = vunpack.c.l.b16 %v418
    %v2014 = vunpack.c.h.b16 %v418
    %v2015 = vunpack.c.l.b16 %v419
    %v2016 = vunpack.c.h.b16 %v419
    %v2017 = vunpack.c.l.b16 %v420
    %v2018 = vunpack.c.h.b16 %v420
    %v2019 = vunpack.c.l.b16 %v421
    %v2020 = vunpack.c.h.b16 %v421
    %v2021 = vunpack.c.l.b16 %v422
    %v2022 = vunpack.c.h.b16 %v422
    %v2023 = vunpack.c.l.b16 %v423
    %v2024 = vunpack.c.h.b16 %v423
    %v2025 = vunpack.c.l.b16 %v424
    %v2026 = vunpack.c.h.b16 %v424
    %v2027 = vunpack.c.l.b16 %v425
    %v2028 = vunpack.c.h.b16 %v425
    %v2029 = vunpack.c.l.b16 %v426
    %v2030 = vunpack.c.h.b16 %v426
    %v2031 = vunpack.c.l.b16 %v427
    %v2032 = vunpack.c.h.b16 %v427
    %v2033 = vunpack.c.l.b16 %v428
    %v2034 = vunpack.c.h.b16 %v428
    %v2035 = vunpack.c.l.b16 %v429
    %v2036 = vunpack.c.h.b16 %v429
    %v2037 = vunpack.c.l.b16 %v430
    %v2038 = vunpack.c.h.b16 %v430
    %v2039 = vunpack.c.l.b16 %v431
    %v2040 = vunpack.c.h.b16 %v431
    %v2041 = vunpack.c.l.b16 %v432
    %v2042 = vunpack.c.h.b16 %v432
    %v2043 = vunpack.c.l.b16 %v433
    %v2044 = vunpack.c.h.b16 %v433
    %v2045 = vunpack.c.l.b16 %v434
    %v2046 = vunpack.c.h.b16 %v434
    %v2047 = vunpack.c.l.b16 %v435
    %v2048 = vunpack.c.h.b16 %v435
    %v2049 = vunpack.c.l.b16 %v436
    %v2050 = vunpack.c.h.b16 %v436
    %v2051 = vunpack.c.l.b16 %v437
    %v2052 = vunpack.c.h.b16 %v437
    %v2053 = vunpack.c.l.b16 %v438
    %v2054 = vunpack.c.h.b16 %v438
    %v2055 = vunpack.c.l.b16 %v439
    %v2056 = vunpack.c.h.b16 %v439
    %v2057 = vunpack.c.l.b16 %v440
    %v2058 = vunpack.c.h.b16 %v440
    %v2059 = vunpack.c.l.b16 %v441
    %v2060 = vunpack.c.h.b16 %v441
    %v2061 = vunpack.c.l.b16 %v442
    %v2062 = vunpack.c.h.b16 %v442
    %v2063 = vunpack.c.l.b16 %v443
    %v2064 = vunpack.c.h.b16 %v443
    %v2065 = vunpack.c.l.b16 %v444
    %v2066 = vunpack.c.h.b16 %v444
    %v2067 = vunpack.c.l.b16 %v445
    %v2068 = vunpack.c.h.b16 %v445
    %v2069 = vunpack.c.l.b16 %v446
    %v2070 = vunpack.c.h.b16 %v446
    %v2071 = vunpack.c.l.b16 %v447
    %v2072 = vunpack.c.h.b16 %v447
    %v2073 = vunpack.c.l.b16 %v448
    %v2074 = vunpack.c.h.b16 %v448
    %v2075 = vunpack.c.l.b16 %v449
    %v2076 = vunpack.c.h.b16 %v449
    %v2077 = vunpack.c.l.b16 %v450
    %v2078 = vunpack.c.h.b16 %v450
    %v2079 = vunpack.c.l.b16 %v451
    %v2080 = vunpack.c.h.b16 %v451
    %v2081 = vunpack.c.l.b16 %v452
    %v2082 = vunpack.c.h.b16 %v452
    %v2083 = vunpack.c.l.b16 %v453
    %v2084 = vunpack.c.h.b16 %v453
    %v2085 = vunpack.c.l.b16 %v454
    %v2086 = vunpack.c.h.b16 %v454
    %v2087 = vunpack.c.l.b16 %v455
    %v2088 = vunpack.c.h.b16 %v455
    %v2089 = vunpack.c.l.b16 %v456
    %v2090 = vunpack.c.h.b16 %v456
    %v2091 = vunpack.c.l.b16 %v457
    %v2092 = vunpack.c.h.b16 %v457
    %v2093 = vunpack.c.l.b16 %v458
    %v2094 = vunpack.c.h.b16 %v458
    %v2095 = vunpack.c.l.b16 %v459
    %v2096 = vunpack.c.h.b16 %v459
    %v2097 = vunpack.c.l.b16 %v460
    %v2098 = vunpack.c.h.b16 %v460
    %v2099 = vunpack.c.l.b16 %v461
    %v2100 = vunpack.c.h.b16 %v461
    %v2101 = vunpack.c.l.b16 %v462
    %v2102 = vunpack.c.h.b16 %v462
    %v2103 = vunpack.c.l.b16 %v463
    %v2104 = vunpack.c.h.b16 %v463
    %v2105 = vunpack.c.l.b16 %v464
    %v2106 = vunpack.c.h.b16 %v464
    %v2107 = vunpack.c.l.b16 %v465
    %v2108 = vunpack.c.h.b16 %v465
    %v2109 = vunpack.c.l.b16 %v466
    %v2110 = vunpack.c.h.b16 %v466
    %v2111 = vunpack.c.l.b16 %v467
    %v2112 = vunpack.c.h.b16 %v467
    %v2113 = vunpack.c.l.b16 %v468
    %v2114 = vunpack.c.h.b16 %v468
    %v2115 = vunpack.c.l.b16 %v469
    %v2116 = vunpack.c.h.b16 %v469
    %v2117 = vunpack.c.l.b16 %v470
    %v2118 = vunpack.c.h.b16 %v470
    %v2119 = vunpack.c.l.b16 %v471
    %v2120 = vunpack.c.h.b16 %v471
    %v2121 = vunpack.c.l.b16 %v472
    %v2122 = vunpack.c.h.b16 %v472
    %v2123 = vunpack.c.l.b16 %v473
    %v2124 = vunpack.c.h.b16 %v473
    %v2125 = vunpack.c.l.b16 %v474
    %v2126 = vunpack.c.h.b16 %v474
    %v2127 = vunpack.c.l.b16 %v475
    %v2128 = vunpack.c.h.b16 %v475
    %v2129 = vunpack.c.l.b16 %v476
    %v2130 = vunpack.c.h.b16 %v476
    %v2131 = vunpack.c.l.b16 %v477
    %v2132 = vunpack.c.h.b16 %v477
    %v2133 = vunpack.c.l.b16 %v478
    %v2134 = vunpack.c.h.b16 %v478
    %v2135 = vunpack.c.l.b16 %v479
    %v2136 = vunpack.c.h.b16 %v479
    %v2137 = vunpack.c.l.b16 %v480
    %v2138 = vunpack.c.h.b16 %v480
    %v2139 = vunpack.c.l.b16 %v481
    %v2140 = vunpack.c.h.b16 %v481
    %v2141 = vunpack.c.l.b16 %v482
    %v2142 = vunpack.c.h.b16 %v482
    %v2143 = vunpack.c.l.b16 %v483
    %v2144 = vunpack.c.h.b16 %v483
    %v2145 = vunpack.c.l.b16 %v484
    %v2146 = vunpack.c.h.b16 %v484
    %v2147 = vunpack.c.l.b16 %v485
    %v2148 = vunpack.c.h.b16 %v485
    %v2149 = vunpack.c.l.b16 %v486
    %v2150 = vunpack.c.h.b16 %v486
    %v2151 = vunpack.c.l.b16 %v487
    %v2152 = vunpack.c.h.b16 %v487
    %v2153 = vunpack.c.l.b16 %v488
    %v2154 = vunpack.c.h.b16 %v488
    %v2155 = vunpack.c.l.b16 %v489
    %v2156 = vunpack.c.h.b16 %v489
    %v2157 = vunpack.c.l.b16 %v490
    %v2158 = vunpack.c.h.b16 %v490
    %v2159 = vunpack.c.l.b16 %v491
    %v2160 = vunpack.c.h.b16 %v491
    %v2161 = vunpack.c.l.b16 %v492
    %v2162 = vunpack.c.h.b16 %v492
    %v2163 = vunpack.c.l.b16 %v493
    %v2164 = vunpack.c.h.b16 %v493
    %v2165 = vunpack.c.l.b16 %v494
    %v2166 = vunpack.c.h.b16 %v494
    %v2167 = vunpack.c.l.b16 %v495
    %v2168 = vunpack.c.h.b16 %v495
    %v2169 = vunpack.c.l.b16 %v496
    %v2170 = vunpack.c.h.b16 %v496
    %v2171 = vunpack.c.l.b16 %v497
    %v2172 = vunpack.c.h.b16 %v497
    %v2173 = vunpack.c.l.b16 %v498
    %v2174 = vunpack.c.h.b16 %v498
    %v2175 = vunpack.c.l.b16 %v499
    %v2176 = vunpack.c.h.b16 %v499
    %v2177 = vunpack.c.l.b16 %v500
    %v2178 = vunpack.c.h.b16 %v500
    %v2179 = vunpack.c.l.b16 %v501
    %v2180 = vunpack.c.h.b16 %v501
    %v2181 = vunpack.c.l.b16 %v502
    %v2182 = vunpack.c.h.b16 %v502
    %v2183 = vunpack.c.l.b16 %v503
    %v2184 = vunpack.c.h.b16 %v503
    %v2185 = vunpack.c.l.b16 %v504
    %v2186 = vunpack.c.h.b16 %v504
    %v2187 = vunpack.c.l.b16 %v505
    %v2188 = vunpack.c.h.b16 %v505
    %v2189 = vunpack.c.l.b16 %v506
    %v2190 = vunpack.c.h.b16 %v506
    %v2191 = vunpack.c.l.b16 %v507
    %v2192 = vunpack.c.h.b16 %v507
    %v2193 = vunpack.c.l.b16 %v508
    %v2194 = vunpack.c.h.b16 %v508
    %v2195 = vunpack.c.l.b16 %v509
    %v2196 = vunpack.c.h.b16 %v509
    %v2197 = vunpack.c.l.b16 %v510
    %v2198 = vunpack.c.h.b16 %v510
    %v2199 = vunpack.c.l.b16 %v511
    %v2200 = vunpack.c.h.b16 %v511
    %v2201 = vunpack.c.l.b16 %v512
    %v2202 = vunpack.c.h.b16 %v512
    %v2203 = vunpack.c.l.b16 %v513
    %v2204 = vunpack.c.h.b16 %v513
    %v2205 = vunpack.c.l.b16 %v514
    %v2206 = vunpack.c.h.b16 %v514
    %v2207 = vunpack.c.l.b16 %v515
    %v2208 = vunpack.c.h.b16 %v515
    %v2209 = vpack.c.b16 %v1243, %v1241
    %v2210 = vpack.c.b16 %v1244, %v1242
    %v2211 = vpack.c.b16 %v1247, %v1245
    %v2212 = vpack.c.b16 %v1248, %v1246
    %v2213 = vpack.c.b16 %v1251, %v1249
    %v2214 = vpack.c.b16 %v1252, %v1250
    %v2215 = vpack.c.b16 %v1255, %v1253
    %v2216 = vpack.c.b16 %v1256, %v1254
    %v2217 = vpack.c.b16 %v1259, %v1257
    %v2218 = vpack.c.b16 %v1260, %v1258
    %v2219 = vpack.c.b16 %v1263, %v1261
    %v2220 = vpack.c.b16 %v1264, %v1262
    %v2221 = vpack.c.b16 %v1267, %v1265
    %v2222 = vpack.c.b16 %v1268, %v1266
    %v2223 = vpack.c.b16 %v1271, %v1269
    %v2224 = vpack.c.b16 %v1272, %v1270
    %v2225 = vpack.c.b16 %v1275, %v1273
    %v2226 = vpack.c.b16 %v1276, %v1274
    %v2227 = vpack.c.b16 %v1279, %v1277
    %v2228 = vpack.c.b16 %v1280, %v1278
    %v2229 = vpack.c.b16 %v1283, %v1281
    %v2230 = vpack.c.b16 %v1284, %v1282
    %v2231 = vpack.c.b16 %v1287, %v1285
    %v2232 = vpack.c.b16 %v1288, %v1286
    %v2233 = vpack.c.b16 %v1291, %v1289
    %v2234 = vpack.c.b16 %v1292, %v1290
    %v2235 = vpack.c.b16 %v1295, %v1293
    %v2236 = vpack.c.b16 %v1296, %v1294
    %v2237 = vpack.c.b16 %v1299, %v1297
    %v2238 = vpack.c.b16 %v1300, %v1298
    %v2239 = vpack.c.b16 %v1303, %v1301
    %v2240 = vpack.c.b16 %v1304, %v1302
    %v2241 = vpack.c.b16 %v1307, %v1305
    %v2242 = vpack.c.b16 %v1308, %v1306
    %v2243 = vpack.c.b16 %v1311, %v1309
    %v2244 = vpack.c.b16 %v1312, %v1310
    %v2245 = vpack.c.b16 %v1315, %v1313
    %v2246 = vpack.c.b16 %v1316, %v1314
    %v2247 = vpack.c.b16 %v1319, %v1317
    %v2248 = vpack.c.b16 %v1320, %v1318
    %v2249 = vpack.c.b16 %v1323, %v1321
    %v2250 = vpack.c.b16 %v1324, %v1322
    %v2251 = vpack.c.b16 %v1327, %v1325
    %v2252 = vpack.c.b16 %v1328, %v1326
    %v2253 = vpack.c.b16 %v1331, %v1329
    %v2254 = vpack.c.b16 %v1332, %v1330
    %v2255 = vpack.c.b16 %v1335, %v1333
    %v2256 = vpack.c.b16 %v1336, %v1334
    %v2257 = vpack.c.b16 %v1339, %v1337
    %v2258 = vpack.c.b16 %v1340, %v1338
    %v2259 = vpack.c.b16 %v1343, %v1341
    %v2260 = vpack.c.b16 %v1344, %v1342
    %v2261 = vpack.c.b16 %v1347, %v1345
    %v2262 = vpack.c.b16 %v1348, %v1346
    %v2263 = vpack.c.b16 %v1351, %v1349
    %v2264 = vpack.c.b16 %v1352, %v1350
    %v2265 = vpack.c.b16 %v1355, %v1353
    %v2266 = vpack.c.b16 %v1356, %v1354
    %v2267 = vpack.c.b16 %v1359, %v1357
    %v2268 = vpack.c.b16 %v1360, %v1358
    %v2269 = vpack.c.b16 %v1363, %v1361
    %v2270 = vpack.c.b16 %v1364, %v1362
    %v2271 = vpack.c.b16 %v1367, %v1365
    %v2272 = vpack.c.b16 %v1368, %v1366
    %v2273 = vpack.c.b16 %v1371, %v1369
    %v2274 = vpack.c.b16 %v1372, %v1370
    %v2275 = vpack.c.b16 %v1375, %v1373
    %v2276 = vpack.c.b16 %v1376, %v1374
    %v2277 = vpack.c.b16 %v1379, %v1377
    %v2278 = vpack.c.b16 %v1380, %v1378
    %v2279 = vpack.c.b16 %v1383, %v1381
    %v2280 = vpack.c.b16 %v1384, %v1382
    %v2281 = vpack.c.b16 %v1387, %v1385
    %v2282 = vpack.c.b16 %v1388, %v1386
    %v2283 = vpack.c.b16 %v1391, %v1389
    %v2284 = vpack.c.b16 %v1392, %v1390
    %v2285 = vpack.c.b16 %v1395, %v1393
    %v2286 = vpack.c.b16 %v1396, %v1394
    %v2287 = vpack.c.b16 %v1399, %v1397
    %v2288 = vpack.c.b16 %v1400, %v1398
    %v2289 = vpack.c.b16 %v1403, %v1401
    %v2290 = vpack.c.b16 %v1404, %v1402
    %v2291 = vpack.c.b16 %v1407, %v1405
    %v2292 = vpack.c.b16 %v1408, %v1406
    %v2293 = vpack.c.b16 %v1411, %v1409
    %v2294 = vpack.c.b16 %v1412, %v1410
    %v2295 = vpack.c.b16 %v1415, %v1413
    %v2296 = vpack.c.b16 %v1416, %v1414
    %v2297 = vpack.c.b16 %v1419, %v1417
    %v2298 = vpack.c.b16 %v1420, %v1418
    %v2299 = vpack.c.b16 %v1423, %v1421
    %v2300 = vpack.c.b16 %v1424, %v1422
    %v2301 = vpack.c.b16 %v1427, %v1425
    %v2302 = vpack.c.b16 %v1428, %v1426
    %v2303 = vpack.c.b16 %v1431, %v1429
    %v2304 = vpack.c.b16 %v1432, %v1430
    %v2305 = vpack.c.b16 %v1435, %v1433
    %v2306 = vpack.c.b16 %v1436, %v1434
    %v2307 = vpack.c.b16 %v1439, %v1437
    %v2308 = vpack.c.b16 %v1440, %v1438
    %v2309 = vpack.c.b16 %v1443, %v1441
    %v2310 = vpack.c.b16 %v1444, %v1442
    %v2311 = vpack.c.b16 %v1447, %v1445
    %v2312 = vpack.c.b16 %v1448, %v1446
    %v2313 = vpack.c.b16 %v1451, %v1449
    %v2314 = vpack.c.b16 %v1452, %v1450
    %v2315 = vpack.c.b16 %v1455, %v1453
    %v2316 = vpack.c.b16 %v1456, %v1454
    %v2317 = vpack.c.b16 %v1459, %v1457
    %v2318 = vpack.c.b16 %v1460, %v1458
    %v2319 = vpack.c.b16 %v1463, %v1461
    %v2320 = vpack.c.b16 %v1464, %v1462
    %v2321 = vpack.c.b16 %v1467, %v1465
    %v2322 = vpack.c.b16 %v1468, %v1466
    %v2323 = vpack.c.b16 %v1471, %v1469
    %v2324 = vpack.c.b16 %v1472, %v1470
    %v2325 = vpack.c.b16 %v1475, %v1473
    %v2326 = vpack.c.b16 %v1476, %v1474
    %v2327 = vpack.c.b16 %v1479, %v1477
    %v2328 = vpack.c.b16 %v1480, %v1478
    %v2329 = vpack.c.b16 %v1483, %v1481
    %v2330 = vpack.c.b16 %v1484, %v1482
    %v2331 = vpack.c.b16 %v1487, %v1485
    %v2332 = vpack.c.b16 %v1488, %v1486
    %v2333 = vpack.c.b16 %v1491, %v1489
    %v2334 = vpack.c.b16 %v1492, %v1490
    %v2335 = vpack.c.b16 %v1495, %v1493
    %v2336 = vpack.c.b16 %v1496, %v1494
    %v2337 = vpack.c.b16 %v1499, %v1497
    %v2338 = vpack.c.b16 %v1500, %v1498
    %v2339 = vpack.c.b16 %v1503, %v1501
    %v2340 = vpack.c.b16 %v1504, %v1502
    %v2341 = vpack.c.b16 %v1507, %v1505
    %v2342 = vpack.c.b16 %v1508, %v1506
    %v2343 = vpack.c.b16 %v1511, %v1509
    %v2344 = vpack.c.b16 %v1512, %v1510
    %v2345 = vpack.c.b16 %v1515, %v1513
    %v2346 = vpack.c.b16 %v1516, %v1514
    %v2347 = vpack.c.b16 %v1519, %v1517
    %v2348 = vpack.c.b16 %v1520, %v1518
    %v2349 = vpack.c.b16 %v1523, %v1521
    %v2350 = vpack.c.b16 %v1524, %v1522
    %v2351 = vpack.c.b16 %v1527, %v1525
    %v2352 = vpack.c.b16 %v1528, %v1526
    %v2353 = vpack.c.b16 %v1531, %v1529
    %v2354 = vpack.c.b16 %v1532, %v1530
    %v2355 = vpack.c.b16 %v1535, %v1533
    %v2356 = vpack.c.b16 %v1536, %v1534
    %v2357 = vpack.c.b16 %v1539, %v1537
    %v2358 = vpack.c.b16 %v1540, %v1538
    %v2359 = vpack.c.b16 %v1543, %v1541
    %v2360 = vpack.c.b16 %v1544, %v1542
    %v2361 = vpack.c.b16 %v1547, %v1545
    %v2362 = vpack.c.b16 %v1548, %v1546
    %v2363 = vpack.c.b16 %v1551, %v1549
    %v2364 = vpack.c.b16 %v1552, %v1550
    %v2365 = vpack.c.b16 %v1555, %v1553
    %v2366 = vpack.c.b16 %v1556, %v1554
    %v2367 = vpack.c.b16 %v1559, %v1557
    %v2368 = vpack.c.b16 %v1560, %v1558
    %v2369 = vpack.c.b16 %v1563, %v1561
    %v2370 = vpack.c.b16 %v1564, %v1562
    %v2371 = vpack.c.b16 %v1567, %v1565
    %v2372 = vpack.c.b16 %v1568, %v1566
    %v2373 = vpack.c.b16 %v1571, %v1569
    %v2374 = vpack.c.b16 %v1572, %v1570
    %v2375 = vpack.c.b16 %v1575, %v1573
    %v2376 = vpack.c.b16 %v1576, %v1574
    %v2377 = vpack.c.b16 %v1579, %v1577
    %v2378 = vpack.c.b16 %v1580, %v1578
    %v2379 = vpack.c.b16 %v1583, %v1581
    %v2380 = vpack.c.b16 %v1584, %v1582
    %v2381 = vpack.c.b16 %v1587, %v1585
    %v2382 = vpack.c.b16 %v1588, %v1586
    %v2383 = vpack.c.b16 %v1591, %v1589
    %v2384 = vpack.c.b16 %v1592, %v1590
    %v2385 = vpack.c.b16 %v1595, %v1593
    %v2386 = vpack.c.b16 %v1596, %v1594
    %v2387 = vpack.c.b16 %v1599, %v1597
    %v2388 = vpack.c.b16 %v1600, %v1598
    %v2389 = vpack.c.b16 %v1603, %v1601
    %v2390 = vpack.c.b16 %v1604, %v1602
    %v2391 = vpack.c.b16 %v1607, %v1605
    %v2392 = vpack.c.b16 %v1608, %v1606
    %v2393 = vpack.c.b16 %v1611, %v1609
    %v2394 = vpack.c.b16 %v1612, %v1610
    %v2395 = vpack.c.b16 %v1615, %v1613
    %v2396 = vpack.c.b16 %v1616, %v1614
    %v2397 = vpack.c.b16 %v1619, %v1617
    %v2398 = vpack.c.b16 %v1620, %v1618
    %v2399 = vpack.c.b16 %v1623, %v1621
    %v2400 = vpack.c.b16 %v1624, %v1622
    %v2401 = vpack.c.b16 %v1627, %v1625
    %v2402 = vpack.c.b16 %v1628, %v1626
    %v2403 = vpack.c.b16 %v1631, %v1629
    %v2404 = vpack.c.b16 %v1632, %v1630
    %v2405 = vpack.c.b16 %v1635, %v1633
    %v2406 = vpack.c.b16 %v1636, %v1634
    %v2407 = vpack.c.b16 %v1639, %v1637
    %v2408 = vpack.c.b16 %v1640, %v1638
    %v2409 = vpack.c.b16 %v1643, %v1641
    %v2410 = vpack.c.b16 %v1644, %v1642
    %v2411 = vpack.c.b16 %v1647, %v1645
    %v2412 = vpack.c.b16 %v1648, %v1646
    %v2413 = vpack.c.b16 %v1651, %v1649
    %v2414 = vpack.c.b16 %v1652, %v1650
    %v2415 = vpack.c.b16 %v1655, %v1653
    %v2416 = vpack.c.b16 %v1656, %v1654
    %v2417 = vpack.c.b16 %v1659, %v1657
    %v2418 = vpack.c.b16 %v1660, %v1658
    %v2419 = vpack.c.b16 %v1663, %v1661
    %v2420 = vpack.c.b16 %v1664, %v1662
    %v2421 = vpack.c.b16 %v1667, %v1665
    %v2422 = vpack.c.b16 %v1668, %v1666
    %v2423 = vpack.c.b16 %v1671, %v1669
    %v2424 = vpack.c.b16 %v1672, %v1670
    %v2425 = vpack.c.b16 %v1675, %v1673
    %v2426 = vpack.c.b16 %v1676, %v1674
    %v2427 = vpack.c.b16 %v1679, %v1677
    %v2428 = vpack.c.b16 %v1680, %v1678
    %v2429 = vpack.c.b16 %v1683, %v1681
    %v2430 = vpack.c.b16 %v1684, %v1682
    %v2431 = vpack.c.b16 %v1687, %v1685
    %v2432 = vpack.c.b16 %v1688, %v1686
    %v2433 = vpack.c.b16 %v1691, %v1689
    %v2434 = vpack.c.b16 %v1692, %v1690
    %v2435 = vpack.c.b16 %v1695, %v1693
    %v2436 = vpack.c.b16 %v1696, %v1694
    %v2437 = vpack.c.b16 %v1699, %v1697
    %v2438 = vpack.c.b16 %v1700, %v1698
    %v2439 = vpack.c.b16 %v1703, %v1701
    %v2440 = vpack.c.b16 %v1704, %v1702
    %v2441 = vpack.c.b16 %v1707, %v1705
    %v2442 = vpack.c.b16 %v1708, %v1706
    %v2443 = vpack.c.b16 %v1711, %v1709
    %v2444 = vpack.c.b16 %v1712, %v1710
    %v2445 = vpack.c.b16 %v1715, %v1713
    %v2446 = vpack.c.b16 %v1716, %v1714
    %v2447 = vpack.c.b16 %v1719, %v1717
    %v2448 = vpack.c.b16 %v1720, %v1718
    %v2449 = vpack.c.b16 %v1723, %v1721
    %v2450 = vpack.c.b16 %v1724, %v1722
    %v2451 = vpack.c.b16 %v1727, %v1725
    %v2452 = vpack.c.b16 %v1728, %v1726
    %v2453 = vpack.c.b16 %v1731, %v1729
    %v2454 = vpack.c.b16 %v1732, %v1730
    %v2455 = vpack.c.b16 %v1735, %v1733
    %v2456 = vpack.c.b16 %v1736, %v1734
    %v2457 = vpack.c.b16 %v1739, %v1737
    %v2458 = vpack.c.b16 %v1740, %v1738
    %v2459 = vpack.c.b16 %v1743, %v1741
    %v2460 = vpack.c.b16 %v1744, %v1742
    %v2461 = vpack.c.b16 %v1747, %v1745
    %v2462 = vpack.c.b16 %v1748, %v1746
    %v2463 = vpack.c.b16 %v1751, %v1749
    %v2464 = vpack.c.b16 %v1752, %v1750
    %v2465 = vpack.c.b16 %v1755, %v1753
    %v2466 = vpack.c.b16 %v1756, %v1754
    %v2467 = vpack.c.b16 %v1759, %v1757
    %v2468 = vpack.c.b16 %v1760, %v1758
    %v2469 = vpack.c.b16 %v1763, %v1761
    %v2470 = vpack.c.b16 %v1764, %v1762
    %v2471 = vpack.c.b16 %v1767, %v1765
    %v2472 = vpack.c.b16 %v1768, %v1766
    %v2473 = vpack.c.b16 %v1771, %v1769
    %v2474 = vpack.c.b16 %v1772, %v1770
    %v2475 = vpack.c.b16 %v1775, %v1773
    %v2476 = vpack.c.b16 %v1776, %v1774
    %v2477 = vpack.c.b16 %v1779, %v1777
    %v2478 = vpack.c.b16 %v1780, %v1778
    %v2479 = vpack.c.b16 %v1783, %v1781
    %v2480 = vpack.c.b16 %v1784, %v1782
    %v2481 = vpack.c.b16 %v1787, %v1785
    %v2482 = vpack.c.b16 %v1788, %v1786
    %v2483 = vpack.c.b16 %v1791, %v1789
    %v2484 = vpack.c.b16 %v1792, %v1790
    %v2485 = vpack.c.b16 %v1795, %v1793
    %v2486 = vpack.c.b16 %v1796, %v1794
    %v2487 = vpack.c.b16 %v1799, %v1797
    %v2488 = vpack.c.b16 %v1800, %v1798
    %v2489 = vpack.c.b16 %v1803, %v1801
    %v2490 = vpack.c.b16 %v1804, %v1802
    %v2491 = vpack.c.b16 %v1807, %v1805
    %v2492 = vpack.c.b16 %v1808, %v1806
    %v2493 = vpack.c.b16 %v1811, %v1809
    %v2494 = vpack.c.b16 %v1812, %v1810
    %v2495 = vpack.c.b16 %v1815, %v1813
    %v2496 = vpack.c.b16 %v1816, %v1814
    %v2497 = vpack.c.b16 %v1819, %v1817
    %v2498 = vpack.c.b16 %v1820, %v1818
    %v2499 = vpack.c.b16 %v1823, %v1821
    %v2500 = vpack.c.b16 %v1824, %v1822
    %v2501 = vpack.c.b16 %v1827, %v1825
    %v2502 = vpack.c.b16 %v1828, %v1826
    %v2503 = vpack.c.b16 %v1831, %v1829
    %v2504 = vpack.c.b16 %v1832, %v1830
    %v2505 = vpack.c.b16 %v1835, %v1833
    %v2506 = vpack.c.b16 %v1836, %v1834
    %v2507 = vpack.c.b16 %v1839, %v1837
    %v2508 = vpack.c.b16 %v1840, %v1838
    %v2509 = vpack.c.b16 %v1843, %v1841
    %v2510 = vpack.c.b16 %v1844, %v1842
    %v2511 = vpack.c.b16 %v1847, %v1845
    %v2512 = vpack.c.b16 %v1848, %v1846
    %v2513 = vpack.c.b16 %v1851, %v1849
    %v2514 = vpack.c.b16 %v1852, %v1850
    %v2515 = vpack.c.b16 %v1855, %v1853
    %v2516 = vpack.c.b16 %v1856, %v1854
    %v2517 = vpack.c.b16 %v1859, %v1857
    %v2518 = vpack.c.b16 %v1860, %v1858
    %v2519 = vpack.c.b16 %v1863, %v1861
    %v2520 = vpack.c.b16 %v1864, %v1862
    %v2521 = vpack.c.b16 %v1867, %v1865
    %v2522 = vpack.c.b16 %v1868, %v1866
    %v2523 = vpack.c.b16 %v1871, %v1869
    %v2524 = vpack.c.b16 %v1872, %v1870
    %v2525 = vpack.c.b16 %v1875, %v1873
    %v2526 = vpack.c.b16 %v1876, %v1874
    %v2527 = vpack.c.b16 %v1879, %v1877
    %v2528 = vpack.c.b16 %v1880, %v1878
    %v2529 = vpack.c.b16 %v1883, %v1881
    %v2530 = vpack.c.b16 %v1884, %v1882
    %v2531 = vpack.c.b16 %v1887, %v1885
    %v2532 = vpack.c.b16 %v1888, %v1886
    %v2533 = vpack.c.b16 %v1891, %v1889
    %v2534 = vpack.c.b16 %v1892, %v1890
    %v2535 = vpack.c.b16 %v1895, %v1893
    %v2536 = vpack.c.b16 %v1896, %v1894
    %v2537 = vpack.c.b16 %v1899, %v1897
    %v2538 = vpack.c.b16 %v1900, %v1898
    %v2539 = vpack.c.b16 %v1903, %v1901
    %v2540 = vpack.c.b16 %v1904, %v1902
    %v2541 = vpack.c.b16 %v1907, %v1905
    %v2542 = vpack.c.b16 %v1908, %v1906
    %v2543 = vpack.c.b16 %v1911, %v1909
    %v2544 = vpack.c.b16 %v1912, %v1910
    %v2545 = vpack.c.b16 %v1915, %v1913
    %v2546 = vpack.c.b16 %v1916, %v1914
    %v2547 = vpack.c.b16 %v1919, %v1917
    %v2548 = vpack.c.b16 %v1920, %v1918
    %v2549 = vpack.c.b16 %v1923, %v1921
    %v2550 = vpack.c.b16 %v1924, %v1922
    %v2551 = vpack.c.b16 %v1927, %v1925
    %v2552 = vpack.c.b16 %v1928, %v1926
    %v2553 = vpack.c.b16 %v1931, %v1929
    %v2554 = vpack.c.b16 %v1932, %v1930
    %v2555 = vpack.c.b16 %v1935, %v1933
    %v2556 = vpack.c.b16 %v1936, %v1934
    %v2557 = vpack.c.b16 %v1939, %v1937
    %v2558 = vpack.c.b16 %v1940, %v1938
    %v2559 = vpack.c.b16 %v1943, %v1941
    %v2560 = vpack.c.b16 %v1944, %v1942
    %v2561 = vpack.c.b16 %v1947, %v1945
    %v2562 = vpack.c.b16 %v1948, %v1946
    %v2563 = vpack.c.b16 %v1951, %v1949
    %v2564 = vpack.c.b16 %v1952, %v1950
    %v2565 = vpack.c.b16 %v1955, %v1953
    %v2566 = vpack.c.b16 %v1956, %v1954
    %v2567 = vpack.c.b16 %v1959, %v1957
    %v2568 = vpack.c.b16 %v1960, %v1958
    %v2569 = vpack.c.b16 %v1963, %v1961
    %v2570 = vpack.c.b16 %v1964, %v1962
    %v2571 = vpack.c.b16 %v1967, %v1965
    %v2572 = vpack.c.b16 %v1968, %v1966
    %v2573 = vpack.c.b16 %v1971, %v1969
    %v2574 = vpack.c.b16 %v1972, %v1970
    %v2575 = vpack.c.b16 %v1975, %v1973
    %v2576 = vpack.c.b16 %v1976, %v1974
    %v2577 = vpack.c.b16 %v1979, %v1977
    %v2578 = vpack.c.b16 %v1980, %v1978
    %v2579 = vpack.c.b16 %v1983, %v1981
    %v2580 = vpack.c.b16 %v1984, %v1982
    %v2581 = vpack.c.b16 %v1987, %v1985
    %v2582 = vpack.c.b16 %v1988, %v1986
    %v2583 = vpack.c.b16 %v1991, %v1989
    %v2584 = vpack.c.b16 %v1992, %v1990
    %v2585 = vpack.c.b16 %v1995, %v1993
    %v2586 = vpack.c.b16 %v1996, %v1994
    %v2587 = vpack.c.b16 %v1999, %v1997
    %v2588 = vpack.c.b16 %v2000, %v1998
    %v2589 = vpack.c.b16 %v2003, %v2001
    %v2590 = vpack.c.b16 %v2004, %v2002
    %v2591 = vpack.c.b16 %v2007, %v2005
    %v2592 = vpack.c.b16 %v2008, %v2006
    %v2593 = vpack.c.b16 %v2011, %v2009
    %v2594 = vpack.c.b16 %v2012, %v2010
    %v2595 = vpack.c.b16 %v2015, %v2013
    %v2596 = vpack.c.b16 %v2016, %v2014
    %v2597 = vpack.c.b16 %v2019, %v2017
    %v2598 = vpack.c.b16 %v2020, %v2018
    %v2599 = vpack.c.b16 %v2023, %v2021
    %v2600 = vpack.c.b16 %v2024, %v2022
    %v2601 = vpack.c.b16 %v2027, %v2025
    %v2602 = vpack.c.b16 %v2028, %v2026
    %v2603 = vpack.c.b16 %v2031, %v2029
    %v2604 = vpack.c.b16 %v2032, %v2030
    %v2605 = vpack.c.b16 %v2035, %v2033
    %v2606 = vpack.c.b16 %v2036, %v2034
    %v2607 = vpack.c.b16 %v2039, %v2037
    %v2608 = vpack.c.b16 %v2040, %v2038
    %v2609 = vpack.c.b16 %v2043, %v2041
    %v2610 = vpack.c.b16 %v2044, %v2042
    %v2611 = vpack.c.b16 %v2047, %v2045
    %v2612 = vpack.c.b16 %v2048, %v2046
    %v2613 = vpack.c.b16 %v2051, %v2049
    %v2614 = vpack.c.b16 %v2052, %v2050
    %v2615 = vpack.c.b16 %v2055, %v2053
    %v2616 = vpack.c.b16 %v2056, %v2054
    %v2617 = vpack.c.b16 %v2059, %v2057
    %v2618 = vpack.c.b16 %v2060, %v2058
    %v2619 = vpack.c.b16 %v2063, %v2061
    %v2620 = vpack.c.b16 %v2064, %v2062
    %v2621 = vpack.c.b16 %v2067, %v2065
    %v2622 = vpack.c.b16 %v2068, %v2066
    %v2623 = vpack.c.b16 %v2071, %v2069
    %v2624 = vpack.c.b16 %v2072, %v2070
    %v2625 = vpack.c.b16 %v2075, %v2073
    %v2626 = vpack.c.b16 %v2076, %v2074
    %v2627 = vpack.c.b16 %v2079, %v2077
    %v2628 = vpack.c.b16 %v2080, %v2078
    %v2629 = vpack.c.b16 %v2083, %v2081
    %v2630 = vpack.c.b16 %v2084, %v2082
    %v2631 = vpack.c.b16 %v2087, %v2085
    %v2632 = vpack.c.b16 %v2088, %v2086
    %v2633 = vpack.c.b16 %v2091, %v2089
    %v2634 = vpack.c.b16 %v2092, %v2090
    %v2635 = vpack.c.b16 %v2095, %v2093
    %v2636 = vpack.c.b16 %v2096, %v2094
    %v2637 = vpack.c.b16 %v2099, %v2097
    %v2638 = vpack.c.b16 %v2100, %v2098
    %v2639 = vpack.c.b16 %v2103, %v2101
    %v2640 = vpack.c.b16 %v2104, %v2102
    %v2641 = vpack.c.b16 %v2107, %v2105
    %v2642 = vpack.c.b16 %v2108, %v2106
    %v2643 = vpack.c.b16 %v2111, %v2109
    %v2644 = vpack.c.b16 %v2112, %v2110
    %v2645 = vpack.c.b16 %v2115, %v2113
    %v2646 = vpack.c.b16 %v2116, %v2114
    %v2647 = vpack.c.b16 %v2119, %v2117
    %v2648 = vpack.c.b16 %v2120, %v2118
    %v2649 = vpack.c.b16 %v2123, %v2121
    %v2650 = vpack.c.b16 %v2124, %v2122
    %v2651 = vpack.c.b16 %v2127, %v2125
    %v2652 = vpack.c.b16 %v2128, %v2126
    %v2653 = vpack.c.b16 %v2131, %v2129
    %v2654 = vpack.c.b16 %v2132, %v2130
    %v2655 = vpack.c.b16 %v2135, %v2133
    %v2656 = vpack.c.b16 %v2136, %v2134
    %v2657 = vpack.c.b16 %v2139, %v2137
    %v2658 = vpack.c.b16 %v2140, %v2138
    %v2659 = vpack.c.b16 %v2143, %v2141
    %v2660 = vpack.c.b16 %v2144, %v2142
    %v2661 = vpack.c.b16 %v2147, %v2145
    %v2662 = vpack.c.b16 %v2148, %v2146
    %v2663 = vpack.c.b16 %v2151, %v2149
    %v2664 = vpack.c.b16 %v2152, %v2150
    %v2665 = vpack.c.b16 %v2155, %v2153
    %v2666 = vpack.c.b16 %v2156, %v2154
    %v2667 = vpack.c.b16 %v2159, %v2157
    %v2668 = vpack.c.b16 %v2160, %v2158
    %v2669 = vpack.c.b16 %v2163, %v2161
    %v2670 = vpack.c.b16 %v2164, %v2162
    %v2671 = vpack.c.b16 %v2167, %v2165
    %v2672 = vpack.c.b16 %v2168, %v2166
    %v2673 = vpack.c.b16 %v2171, %v2169
    %v2674 = vpack.c.b16 %v2172, %v2170
    %v2675 = vpack.c.b16 %v2175, %v2173
    %v2676 = vpack.c.b16 %v2176, %v2174
    %v2677 = vpack.c.b16 %v2179, %v2177
    %v2678 = vpack.c.b16 %v2180, %v2178
    %v2679 = vpack.c.b16 %v2183, %v2181
    %v2680 = vpack.c.b16 %v2184, %v2182
    %v2681 = vpack.c.b16 %v2187, %v2185
    %v2682 = vpack.c.b16 %v2188, %v2186
    %v2683 = vpack.c.b16 %v2191, %v2189
    %v2684 = vpack.c.b16 %v2192, %v2190
    %v2685 = vpack.c.b16 %v2195, %v2193
    %v2686 = vpack.c.b16 %v2196, %v2194
    %v2687 = vpack.c.b16 %v2199, %v2197
    %v2688 = vpack.c.b16 %v2200, %v2198
    %v2689 = vpack.c.b16 %v2203, %v2201
    %v2690 = vpack.c.b16 %v2204, %v2202
    %v2691 = vpack.c.b16 %v2207, %v2205
    %v2692 = vpack.c.b16 %v2208, %v2206
    %vm3177 = vcmask 261120
    %v3179 = vsel %vm3177, %v725, 0
    %3181 = vmatprep.subr.bf16.mxu0 %v2210
    %3182 = vmatpush1.bf16.msra.mxu0 %v2209
    %3183 = vmatprep.subr.bf16.mxu0 %v2212
    %3184 = vmatpush1.bf16.msra.mxu0 %v2211
    %3185 = vmatprep.subr.bf16.mxu0 %v2214
    %3186 = vmatpush1.bf16.msra.mxu0 %v2213
    %3187 = vmatprep.subr.bf16.mxu0 %v2216
    %3188 = vmatpush1.bf16.msra.mxu0 %v2215
    %3189 = vmatprep.subr.bf16.mxu0 %v2218
    %3190 = vmatpush1.bf16.msra.mxu0 %v2217
    %3191 = vmatprep.subr.bf16.mxu0 %v2220
    %3192 = vmatpush1.bf16.msra.mxu0 %v2219
    %3193 = vmatprep.subr.bf16.mxu0 %v2222
    %3194 = vmatpush1.bf16.msra.mxu0 %v2221
    %3195 = vmatprep.subr.bf16.mxu0 %v2224
    %3196 = vmatpush1.bf16.msra.mxu0 %v2223
    %3197 = vmatprep.subr.bf16.mxu0 %v2226
    %3198 = vmatpush1.bf16.msra.mxu0 %v2225
    %3199 = vmatprep.subr.bf16.mxu0 %v2228
    %3200 = vmatpush1.bf16.msra.mxu0 %v2227
    %3201 = vmatprep.subr.bf16.mxu0 %v2230
    %3202 = vmatpush1.bf16.msra.mxu0 %v2229
    %3203 = vmatprep.subr.bf16.mxu0 %v2232
    %3204 = vmatpush1.bf16.msra.mxu0 %v2231
    %3205 = vmatprep.subr.bf16.mxu0 %v2234
    %3206 = vmatpush1.bf16.msra.mxu0 %v2233
    %3207 = vmatprep.subr.bf16.mxu0 %v2236
    %3208 = vmatpush1.bf16.msra.mxu0 %v2235
    %3209 = vmatprep.subr.bf16.mxu0 %v2238
    %3210 = vmatpush1.bf16.msra.mxu0 %v2237
    %3211 = vmatprep.subr.bf16.mxu0 %v2240
    %3212 = vmatpush1.bf16.msra.mxu0 %v2239
    %3213 = vmatprep.mubr.bf16.mxu0 %v569
    %3214 = vmatmul.mubr.bf16.gmra.mrb[0].mxu0 %v555
    %v3215 = vpop.f32.mrb[0].mxu0
    %v3216 = vadd.f32 %v521, %v3215
    %v3217 = vpop.f32.mrb[0].mxu0
    %v3218 = vadd.f32 %v525, %v3217
    %v3219 = vpop.f32.mrb[0].mxu0
    %v3220 = vpop.f32.mrb[0].mxu0
    %3221 = vdwg.mxu0
    %3222 = vmatprep.subr.bf16.mxu0 %v2242
    %3223 = vmatpush1.bf16.msra.mxu0 %v2241
    %3224 = vmatprep.subr.bf16.mxu0 %v2244
    %3225 = vmatpush1.bf16.msra.mxu0 %v2243
    %3226 = vmatprep.subr.bf16.mxu0 %v2246
    %3227 = vmatpush1.bf16.msra.mxu0 %v2245
    %3228 = vmatprep.subr.bf16.mxu0 %v2248
    %3229 = vmatpush1.bf16.msra.mxu0 %v2247
    %3230 = vmatprep.subr.bf16.mxu0 %v2250
    %3231 = vmatpush1.bf16.msra.mxu0 %v2249
    %3232 = vmatprep.subr.bf16.mxu0 %v2252
    %3233 = vmatpush1.bf16.msra.mxu0 %v2251
    %3234 = vmatprep.subr.bf16.mxu0 %v2254
    %3235 = vmatpush1.bf16.msra.mxu0 %v2253
    %3236 = vmatprep.subr.bf16.mxu0 %v2256
    %3237 = vmatpush1.bf16.msra.mxu0 %v2255
    %3238 = vmatprep.subr.bf16.mxu0 %v2258
    %3239 = vmatpush1.bf16.msra.mxu0 %v2257
    %3240 = vmatprep.subr.bf16.mxu0 %v2260
    %3241 = vmatpush1.bf16.msra.mxu0 %v2259
    %3242 = vmatprep.subr.bf16.mxu0 %v2262
    %3243 = vmatpush1.bf16.msra.mxu0 %v2261
    %3244 = vmatprep.subr.bf16.mxu0 %v2264
    %3245 = vmatpush1.bf16.msra.mxu0 %v2263
    %3246 = vmatprep.subr.bf16.mxu0 %v2266
    %3247 = vmatpush1.bf16.msra.mxu0 %v2265
    %3248 = vmatprep.subr.bf16.mxu0 %v2268
    %3249 = vmatpush1.bf16.msra.mxu0 %v2267
    %3250 = vmatprep.subr.bf16.mxu0 %v2270
    %3251 = vmatpush1.bf16.msra.mxu0 %v2269
    %3252 = vmatprep.subr.bf16.mxu0 %v2272
    %3253 = vmatpush1.bf16.msra.mxu0 %v2271
    %3254 = vmatprep.mubr.bf16.mxu0 %v579
    %3255 = vmatmul.mubr.bf16.gmra.mrb[0].mxu0 %v577
    %v3256 = vpop.f32.mrb[0].mxu0
    %v3257 = vadd.f32 %v3216, %v3256
    %v3258 = vpop.f32.mrb[0].mxu0
    %v3259 = vadd.f32 %v3218, %v3258
    %v3260 = vpop.f32.mrb[0].mxu0
    %v3261 = vpop.f32.mrb[0].mxu0
    %3262 = vdwg.mxu0
    %3263 = vmatprep.subr.bf16.mxu0 %v2274
    %3264 = vmatpush1.bf16.msra.mxu0 %v2273
    %3265 = vmatprep.subr.bf16.mxu0 %v2276
    %3266 = vmatpush1.bf16.msra.mxu0 %v2275
    %3267 = vmatprep.subr.bf16.mxu0 %v2278
    %3268 = vmatpush1.bf16.msra.mxu0 %v2277
    %3269 = vmatprep.subr.bf16.mxu0 %v2280
    %3270 = vmatpush1.bf16.msra.mxu0 %v2279
    %3271 = vmatprep.subr.bf16.mxu0 %v2282
    %3272 = vmatpush1.bf16.msra.mxu0 %v2281
    %3273 = vmatprep.subr.bf16.mxu0 %v2284
    %3274 = vmatpush1.bf16.msra.mxu0 %v2283
    %3275 = vmatprep.subr.bf16.mxu0 %v2286
    %3276 = vmatpush1.bf16.msra.mxu0 %v2285
    %3277 = vmatprep.subr.bf16.mxu0 %v2288
    %3278 = vmatpush1.bf16.msra.mxu0 %v2287
    %3279 = vmatprep.subr.bf16.mxu0 %v2290
    %3280 = vmatpush1.bf16.msra.mxu0 %v2289
    %3281 = vmatprep.subr.bf16.mxu0 %v2292
    %3282 = vmatpush1.bf16.msra.mxu0 %v2291
    %3283 = vmatprep.subr.bf16.mxu0 %v2294
    %3284 = vmatpush1.bf16.msra.mxu0 %v2293
    %3285 = vmatprep.subr.bf16.mxu0 %v2296
    %3286 = vmatpush1.bf16.msra.mxu0 %v2295
    %3287 = vmatprep.subr.bf16.mxu0 %v2298
    %3288 = vmatpush1.bf16.msra.mxu0 %v2297
    %3289 = vmatprep.subr.bf16.mxu0 %v2300
    %3290 = vmatpush1.bf16.msra.mxu0 %v2299
    %3291 = vmatprep.subr.bf16.mxu0 %v2302
    %3292 = vmatpush1.bf16.msra.mxu0 %v2301
    %3293 = vmatprep.subr.bf16.mxu0 %v2304
    %3294 = vmatpush1.bf16.msra.mxu0 %v2303
    %3295 = vmatprep.mubr.bf16.mxu0 %v576
    %3296 = vmatmul.mubr.bf16.gmra.mrb[0].mxu0 %v562
    %v3297 = vpop.f32.mrb[0].mxu0
    %v3298 = vadd.f32 %v3257, %v3297
    %v3299 = vpop.f32.mrb[0].mxu0
    %v3300 = vadd.f32 %v3259, %v3299
    %v3301 = vpop.f32.mrb[0].mxu0
    %v3302 = vpop.f32.mrb[0].mxu0
    %3303 = vdwg.mxu0
    %3304 = vmatprep.subr.bf16.mxu0 %v2306
    %3305 = vmatpush1.bf16.msra.mxu0 %v2305
    %3306 = vmatprep.subr.bf16.mxu0 %v2308
    %3307 = vmatpush1.bf16.msra.mxu0 %v2307
    %3308 = vmatprep.subr.bf16.mxu0 %v2310
    %3309 = vmatpush1.bf16.msra.mxu0 %v2309
    %3310 = vmatprep.subr.bf16.mxu0 %v2312
    %3311 = vmatpush1.bf16.msra.mxu0 %v2311
    %3312 = vmatprep.subr.bf16.mxu0 %v2314
    %3313 = vmatpush1.bf16.msra.mxu0 %v2313
    %3314 = vmatprep.subr.bf16.mxu0 %v2316
    %3315 = vmatpush1.bf16.msra.mxu0 %v2315
    %3316 = vmatprep.subr.bf16.mxu0 %v2318
    %3317 = vmatpush1.bf16.msra.mxu0 %v2317
    %3318 = vmatprep.subr.bf16.mxu0 %v2320
    %3319 = vmatpush1.bf16.msra.mxu0 %v2319
    %3320 = vmatprep.subr.bf16.mxu0 %v2322
    %3321 = vmatpush1.bf16.msra.mxu0 %v2321
    %3322 = vmatprep.subr.bf16.mxu0 %v2324
    %3323 = vmatpush1.bf16.msra.mxu0 %v2323
    %3324 = vmatprep.subr.bf16.mxu0 %v2326
    %3325 = vmatpush1.bf16.msra.mxu0 %v2325
    %3326 = vmatprep.subr.bf16.mxu0 %v2328
    %3327 = vmatpush1.bf16.msra.mxu0 %v2327
    %3328 = vmatprep.subr.bf16.mxu0 %v2330
    %3329 = vmatpush1.bf16.msra.mxu0 %v2329
    %3330 = vmatprep.subr.bf16.mxu0 %v2332
    %3331 = vmatpush1.bf16.msra.mxu0 %v2331
    %3332 = vmatprep.subr.bf16.mxu0 %v2334
    %3333 = vmatpush1.bf16.msra.mxu0 %v2333
    %3334 = vmatprep.subr.bf16.mxu0 %v2336
    %3335 = vmatpush1.bf16.msra.mxu0 %v2335
    %3336 = vmatprep.mubr.bf16.mxu0 %v580
    %3337 = vmatmul.mubr.bf16.gmra.mrb[0].mxu0 %v578
    %v3338 = vpop.f32.mrb[0].mxu0
    %v3339 = vadd.f32 %v3298, %v3338
    %v3340 = vpop.f32.mrb[0].mxu0
    %v3341 = vadd.f32 %v3300, %v3340
    %v3342 = vpop.f32.mrb[0].mxu0
    %v3343 = vpop.f32.mrb[0].mxu0
    %3344 = vdwg.mxu0
    %3345 = vmatprep.subr.bf16.mxu0 %v2338
    %3346 = vmatpush1.bf16.msra.mxu0 %v2337
    %3347 = vmatprep.subr.bf16.mxu0 %v2340
    %3348 = vmatpush1.bf16.msra.mxu0 %v2339
    %3349 = vmatprep.subr.bf16.mxu0 %v2342
    %3350 = vmatpush1.bf16.msra.mxu0 %v2341
    %3351 = vmatprep.subr.bf16.mxu0 %v2344
    %3352 = vmatpush1.bf16.msra.mxu0 %v2343
    %3353 = vmatprep.subr.bf16.mxu0 %v2346
    %3354 = vmatpush1.bf16.msra.mxu0 %v2345
    %3355 = vmatprep.subr.bf16.mxu0 %v2348
    %3356 = vmatpush1.bf16.msra.mxu0 %v2347
    %3357 = vmatprep.subr.bf16.mxu0 %v2350
    %3358 = vmatpush1.bf16.msra.mxu0 %v2349
    %3359 = vmatprep.subr.bf16.mxu0 %v2352
    %3360 = vmatpush1.bf16.msra.mxu0 %v2351
    %3361 = vmatprep.subr.bf16.mxu0 %v2354
    %3362 = vmatpush1.bf16.msra.mxu0 %v2353
    %3363 = vmatprep.subr.bf16.mxu0 %v2356
    %3364 = vmatpush1.bf16.msra.mxu0 %v2355
    %3365 = vmatprep.subr.bf16.mxu0 %v2358
    %3366 = vmatpush1.bf16.msra.mxu0 %v2357
    %3367 = vmatprep.subr.bf16.mxu0 %v2360
    %3368 = vmatpush1.bf16.msra.mxu0 %v2359
    %3369 = vmatprep.subr.bf16.mxu0 %v2362
    %3370 = vmatpush1.bf16.msra.mxu0 %v2361
    %3371 = vmatprep.subr.bf16.mxu0 %v2364
    %3372 = vmatpush1.bf16.msra.mxu0 %v2363
    %3373 = vmatprep.subr.bf16.mxu0 %v2366
    %3374 = vmatpush1.bf16.msra.mxu0 %v2365
    %3375 = vmatprep.subr.bf16.mxu0 %v2368
    %3376 = vmatpush1.bf16.msra.mxu0 %v2367
    %3377 = vmatprep.mubr.bf16.mxu0 %v618
    %3378 = vmatmul.mubr.bf16.gmra.mrb[0].mxu0 %v604
    %v3379 = vpop.f32.mrb[0].mxu0
    %v3380 = vadd.f32 %v3339, %v3379
    %v3381 = vpop.f32.mrb[0].mxu0
    %v3382 = vadd.f32 %v3341, %v3381
    %v3383 = vpop.f32.mrb[0].mxu0
    %v3384 = vpop.f32.mrb[0].mxu0
    %3385 = vdwg.mxu0
    %3386 = vmatprep.subr.bf16.mxu0 %v2370
    %3387 = vmatpush1.bf16.msra.mxu0 %v2369
    %3388 = vmatprep.subr.bf16.mxu0 %v2372
    %3389 = vmatpush1.bf16.msra.mxu0 %v2371
    %3390 = vmatprep.subr.bf16.mxu0 %v2374
    %3391 = vmatpush1.bf16.msra.mxu0 %v2373
    %3392 = vmatprep.subr.bf16.mxu0 %v2376
    %3393 = vmatpush1.bf16.msra.mxu0 %v2375
    %3394 = vmatprep.subr.bf16.mxu0 %v2378
    %3395 = vmatpush1.bf16.msra.mxu0 %v2377
    %3396 = vmatprep.subr.bf16.mxu0 %v2380
    %3397 = vmatpush1.bf16.msra.mxu0 %v2379
    %3398 = vmatprep.subr.bf16.mxu0 %v2382
    %3399 = vmatpush1.bf16.msra.mxu0 %v2381
    %3400 = vmatprep.subr.bf16.mxu0 %v2384
    %3401 = vmatpush1.bf16.msra.mxu0 %v2383
    %3402 = vmatprep.subr.bf16.mxu0 %v2386
    %3403 = vmatpush1.bf16.msra.mxu0 %v2385
    %3404 = vmatprep.subr.bf16.mxu0 %v2388
    %3405 = vmatpush1.bf16.msra.mxu0 %v2387
    %3406 = vmatprep.subr.bf16.mxu0 %v2390
    %3407 = vmatpush1.bf16.msra.mxu0 %v2389
    %3408 = vmatprep.subr.bf16.mxu0 %v2392
    %3409 = vmatpush1.bf16.msra.mxu0 %v2391
    %3410 = vmatprep.subr.bf16.mxu0 %v2394
    %3411 = vmatpush1.bf16.msra.mxu0 %v2393
    %3412 = vmatprep.subr.bf16.mxu0 %v2396
    %3413 = vmatpush1.bf16.msra.mxu0 %v2395
    %3414 = vmatprep.subr.bf16.mxu0 %v2398
    %3415 = vmatpush1.bf16.msra.mxu0 %v2397
    %3416 = vmatprep.subr.bf16.mxu0 %v2400
    %3417 = vmatpush1.bf16.msra.mxu0 %v2399
    %3418 = vmatprep.mubr.bf16.mxu0 %v628
    %3419 = vmatmul.mubr.bf16.gmra.mrb[0].mxu0 %v626
    %v3420 = vpop.f32.mrb[0].mxu0
    %v3421 = vadd.f32 %v3380, %v3420
    %v3422 = vpop.f32.mrb[0].mxu0
    %v3423 = vadd.f32 %v3382, %v3422
    %v3424 = vpop.f32.mrb[0].mxu0
    %v3425 = vpop.f32.mrb[0].mxu0
    %3426 = vdwg.mxu0
    %3427 = vmatprep.subr.bf16.mxu0 %v2402
    %3428 = vmatpush1.bf16.msra.mxu0 %v2401
    %3429 = vmatprep.subr.bf16.mxu0 %v2404
    %3430 = vmatpush1.bf16.msra.mxu0 %v2403
    %3431 = vmatprep.subr.bf16.mxu0 %v2406
    %3432 = vmatpush1.bf16.msra.mxu0 %v2405
    %3433 = vmatprep.subr.bf16.mxu0 %v2408
    %3434 = vmatpush1.bf16.msra.mxu0 %v2407
    %3435 = vmatprep.subr.bf16.mxu0 %v2410
    %3436 = vmatpush1.bf16.msra.mxu0 %v2409
    %3437 = vmatprep.subr.bf16.mxu0 %v2412
    %3438 = vmatpush1.bf16.msra.mxu0 %v2411
    %3439 = vmatprep.subr.bf16.mxu0 %v2414
    %3440 = vmatpush1.bf16.msra.mxu0 %v2413
    %3441 = vmatprep.subr.bf16.mxu0 %v2416
    %3442 = vmatpush1.bf16.msra.mxu0 %v2415
    %3443 = vmatprep.subr.bf16.mxu0 %v2418
    %3444 = vmatpush1.bf16.msra.mxu0 %v2417
    %3445 = vmatprep.subr.bf16.mxu0 %v2420
    %3446 = vmatpush1.bf16.msra.mxu0 %v2419
    %3447 = vmatprep.subr.bf16.mxu0 %v2422
    %3448 = vmatpush1.bf16.msra.mxu0 %v2421
    %3449 = vmatprep.subr.bf16.mxu0 %v2424
    %3450 = vmatpush1.bf16.msra.mxu0 %v2423
    %3451 = vmatprep.subr.bf16.mxu0 %v2426
    %3452 = vmatpush1.bf16.msra.mxu0 %v2425
    %3453 = vmatprep.subr.bf16.mxu0 %v2428
    %3454 = vmatpush1.bf16.msra.mxu0 %v2427
    %3455 = vmatprep.subr.bf16.mxu0 %v2430
    %3456 = vmatpush1.bf16.msra.mxu0 %v2429
    %3457 = vmatprep.subr.bf16.mxu0 %v2432
    %3458 = vmatpush1.bf16.msra.mxu0 %v2431
    %3459 = vmatprep.mubr.bf16.mxu0 %v625
    %3460 = vmatmul.mubr.bf16.gmra.mrb[0].mxu0 %v611
    %v3461 = vpop.f32.mrb[0].mxu0
    %v3462 = vadd.f32 %v3421, %v3461
    %v3463 = vpop.f32.mrb[0].mxu0
    %v3464 = vadd.f32 %v3423, %v3463
    %v3465 = vpop.f32.mrb[0].mxu0
    %v3466 = vpop.f32.mrb[0].mxu0
    %3467 = vdwg.mxu0
    %3468 = vmatprep.subr.bf16.mxu0 %v2434
    %3469 = vmatpush1.bf16.msra.mxu0 %v2433
    %3470 = vmatprep.subr.bf16.mxu0 %v2436
    %3471 = vmatpush1.bf16.msra.mxu0 %v2435
    %3472 = vmatprep.subr.bf16.mxu0 %v2438
    %3473 = vmatpush1.bf16.msra.mxu0 %v2437
    %3474 = vmatprep.subr.bf16.mxu0 %v2440
    %3475 = vmatpush1.bf16.msra.mxu0 %v2439
    %3476 = vmatprep.subr.bf16.mxu0 %v2442
    %3477 = vmatpush1.bf16.msra.mxu0 %v2441
    %3478 = vmatprep.subr.bf16.mxu0 %v2444
    %3479 = vmatpush1.bf16.msra.mxu0 %v2443
    %3480 = vmatprep.subr.bf16.mxu0 %v2446
    %3481 = vmatpush1.bf16.msra.mxu0 %v2445
    %3482 = vmatprep.subr.bf16.mxu0 %v2448
    %3483 = vmatpush1.bf16.msra.mxu0 %v2447
    %3484 = vmatprep.subr.bf16.mxu0 %v2450
    %3485 = vmatpush1.bf16.msra.mxu0 %v2449
    %3486 = vmatprep.subr.bf16.mxu0 %v2452
    %3487 = vmatpush1.bf16.msra.mxu0 %v2451
    %3488 = vmatprep.subr.bf16.mxu0 %v2454
    %3489 = vmatpush1.bf16.msra.mxu0 %v2453
    %3490 = vmatprep.subr.bf16.mxu0 %v2456
    %3491 = vmatpush1.bf16.msra.mxu0 %v2455
    %3492 = vmatprep.subr.bf16.mxu0 %v2458
    %3493 = vmatpush1.bf16.msra.mxu0 %v2457
    %3494 = vmatprep.subr.bf16.mxu0 %v2460
    %3495 = vmatpush1.bf16.msra.mxu0 %v2459
    %3496 = vmatprep.subr.bf16.mxu0 %v2462
    %3497 = vmatpush1.bf16.msra.mxu0 %v2461
    %3498 = vmatprep.subr.bf16.mxu0 %v2464
    %3499 = vmatpush1.bf16.msra.mxu0 %v2463
    %3500 = vmatprep.mubr.bf16.mxu0 %v629
    %3501 = vmatmul.mubr.bf16.gmra.mrb[0].mxu0 %v627
    %v3502 = vpop.f32.mrb[0].mxu0
    %v3503 = vadd.f32 %v3462, %v3502
    %v3504 = vpop.f32.mrb[0].mxu0
    %v3505 = vadd.f32 %v3464, %v3504
    %v3506 = vpop.f32.mrb[0].mxu0
    %v3507 = vpop.f32.mrb[0].mxu0
    %3508 = vdwg.mxu0
    %3509 = vmatprep.subr.bf16.mxu0 %v2466
    %3510 = vmatpush1.bf16.msra.mxu0 %v2465
    %3511 = vmatprep.subr.bf16.mxu0 %v2468
    %3512 = vmatpush1.bf16.msra.mxu0 %v2467
    %3513 = vmatprep.subr.bf16.mxu0 %v2470
    %3514 = vmatpush1.bf16.msra.mxu0 %v2469
    %3515 = vmatprep.subr.bf16.mxu0 %v2472
    %3516 = vmatpush1.bf16.msra.mxu0 %v2471
    %3517 = vmatprep.subr.bf16.mxu0 %v2474
    %3518 = vmatpush1.bf16.msra.mxu0 %v2473
    %3519 = vmatprep.subr.bf16.mxu0 %v2476
    %3520 = vmatpush1.bf16.msra.mxu0 %v2475
    %3521 = vmatprep.subr.bf16.mxu0 %v2478
    %3522 = vmatpush1.bf16.msra.mxu0 %v2477
    %3523 = vmatprep.subr.bf16.mxu0 %v2480
    %3524 = vmatpush1.bf16.msra.mxu0 %v2479
    %3525 = vmatprep.subr.bf16.mxu0 %v2482
    %3526 = vmatpush1.bf16.msra.mxu0 %v2481
    %3527 = vmatprep.subr.bf16.mxu0 %v2484
    %3528 = vmatpush1.bf16.msra.mxu0 %v2483
    %3529 = vmatprep.subr.bf16.mxu0 %v2486
    %3530 = vmatpush1.bf16.msra.mxu0 %v2485
    %3531 = vmatprep.subr.bf16.mxu0 %v2488
    %3532 = vmatpush1.bf16.msra.mxu0 %v2487
    %3533 = vmatprep.subr.bf16.mxu0 %v2490
    %3534 = vmatpush1.bf16.msra.mxu0 %v2489
    %3535 = vmatprep.subr.bf16.mxu0 %v2492
    %3536 = vmatpush1.bf16.msra.mxu0 %v2491
    %3537 = vmatprep.subr.bf16.mxu0 %v2494
    %3538 = vmatpush1.bf16.msra.mxu0 %v2493
    %3539 = vmatprep.subr.bf16.mxu0 %v2496
    %3540 = vmatpush1.bf16.msra.mxu0 %v2495
    %3541 = vmatprep.mubr.bf16.mxu0 %v667
    %3542 = vmatmul.mubr.bf16.gmra.mrb[0].mxu0 %v653
    %v3543 = vpop.f32.mrb[0].mxu0
    %v3544 = vadd.f32 %v3503, %v3543
    %v3545 = vpop.f32.mrb[0].mxu0
    %v3546 = vadd.f32 %v3505, %v3545
    %v3547 = vpop.f32.mrb[0].mxu0
    %v3548 = vpop.f32.mrb[0].mxu0
    %3549 = vdwg.mxu0
    %3550 = vmatprep.subr.bf16.mxu0 %v2498
    %3551 = vmatpush1.bf16.msra.mxu0 %v2497
    %3552 = vmatprep.subr.bf16.mxu0 %v2500
    %3553 = vmatpush1.bf16.msra.mxu0 %v2499
    %3554 = vmatprep.subr.bf16.mxu0 %v2502
    %3555 = vmatpush1.bf16.msra.mxu0 %v2501
    %3556 = vmatprep.subr.bf16.mxu0 %v2504
    %3557 = vmatpush1.bf16.msra.mxu0 %v2503
    %3558 = vmatprep.subr.bf16.mxu0 %v2506
    %3559 = vmatpush1.bf16.msra.mxu0 %v2505
    %3560 = vmatprep.subr.bf16.mxu0 %v2508
    %3561 = vmatpush1.bf16.msra.mxu0 %v2507
    %3562 = vmatprep.subr.bf16.mxu0 %v2510
    %3563 = vmatpush1.bf16.msra.mxu0 %v2509
    %3564 = vmatprep.subr.bf16.mxu0 %v2512
    %3565 = vmatpush1.bf16.msra.mxu0 %v2511
    %3566 = vmatprep.subr.bf16.mxu0 %v2514
    %3567 = vmatpush1.bf16.msra.mxu0 %v2513
    %3568 = vmatprep.subr.bf16.mxu0 %v2516
    %3569 = vmatpush1.bf16.msra.mxu0 %v2515
    %3570 = vmatprep.subr.bf16.mxu0 %v2518
    %3571 = vmatpush1.bf16.msra.mxu0 %v2517
    %3572 = vmatprep.subr.bf16.mxu0 %v2520
    %3573 = vmatpush1.bf16.msra.mxu0 %v2519
    %3574 = vmatprep.subr.bf16.mxu0 %v2522
    %3575 = vmatpush1.bf16.msra.mxu0 %v2521
    %3576 = vmatprep.subr.bf16.mxu0 %v2524
    %3577 = vmatpush1.bf16.msra.mxu0 %v2523
    %3578 = vmatprep.subr.bf16.mxu0 %v2526
    %3579 = vmatpush1.bf16.msra.mxu0 %v2525
    %3580 = vmatprep.subr.bf16.mxu0 %v2528
    %3581 = vmatpush1.bf16.msra.mxu0 %v2527
    %3582 = vmatprep.mubr.bf16.mxu0 %v677
    %3583 = vmatmul.mubr.bf16.gmra.mrb[0].mxu0 %v675
    %v3584 = vpop.f32.mrb[0].mxu0
    %v3585 = vadd.f32 %v3544, %v3584
    %v3586 = vpop.f32.mrb[0].mxu0
    %v3587 = vadd.f32 %v3546, %v3586
    %v3588 = vpop.f32.mrb[0].mxu0
    %v3589 = vpop.f32.mrb[0].mxu0
    %3590 = vdwg.mxu0
    %3591 = vmatprep.subr.bf16.mxu0 %v2530
    %3592 = vmatpush1.bf16.msra.mxu0 %v2529
    %3593 = vmatprep.subr.bf16.mxu0 %v2532
    %3594 = vmatpush1.bf16.msra.mxu0 %v2531
    %3595 = vmatprep.subr.bf16.mxu0 %v2534
    %3596 = vmatpush1.bf16.msra.mxu0 %v2533
    %3597 = vmatprep.subr.bf16.mxu0 %v2536
    %3598 = vmatpush1.bf16.msra.mxu0 %v2535
    %3599 = vmatprep.subr.bf16.mxu0 %v2538
    %3600 = vmatpush1.bf16.msra.mxu0 %v2537
    %3601 = vmatprep.subr.bf16.mxu0 %v2540
    %3602 = vmatpush1.bf16.msra.mxu0 %v2539
    %3603 = vmatprep.subr.bf16.mxu0 %v2542
    %3604 = vmatpush1.bf16.msra.mxu0 %v2541
    %3605 = vmatprep.subr.bf16.mxu0 %v2544
    %3606 = vmatpush1.bf16.msra.mxu0 %v2543
    %3607 = vmatprep.subr.bf16.mxu0 %v2546
    %3608 = vmatpush1.bf16.msra.mxu0 %v2545
    %3609 = vmatprep.subr.bf16.mxu0 %v2548
    %3610 = vmatpush1.bf16.msra.mxu0 %v2547
    %3611 = vmatprep.subr.bf16.mxu0 %v2550
    %3612 = vmatpush1.bf16.msra.mxu0 %v2549
    %3613 = vmatprep.subr.bf16.mxu0 %v2552
    %3614 = vmatpush1.bf16.msra.mxu0 %v2551
    %3615 = vmatprep.subr.bf16.mxu0 %v2554
    %3616 = vmatpush1.bf16.msra.mxu0 %v2553
    %3617 = vmatprep.subr.bf16.mxu0 %v2556
    %3618 = vmatpush1.bf16.msra.mxu0 %v2555
    %3619 = vmatprep.subr.bf16.mxu0 %v2558
    %3620 = vmatpush1.bf16.msra.mxu0 %v2557
    %3621 = vmatprep.subr.bf16.mxu0 %v2560
    %3622 = vmatpush1.bf16.msra.mxu0 %v2559
    %3623 = vmatprep.mubr.bf16.mxu0 %v674
    %3624 = vmatmul.mubr.bf16.gmra.mrb[0].mxu0 %v660
    %v3625 = vpop.f32.mrb[0].mxu0
    %v3626 = vadd.f32 %v3585, %v3625
    %v3627 = vpop.f32.mrb[0].mxu0
    %v3628 = vadd.f32 %v3587, %v3627
    %v3629 = vpop.f32.mrb[0].mxu0
    %v3630 = vpop.f32.mrb[0].mxu0
    %3631 = vdwg.mxu0
    %3632 = vmatprep.subr.bf16.mxu0 %v2562
    %3633 = vmatpush1.bf16.msra.mxu0 %v2561
    %3634 = vmatprep.subr.bf16.mxu0 %v2564
    %3635 = vmatpush1.bf16.msra.mxu0 %v2563
    %3636 = vmatprep.subr.bf16.mxu0 %v2566
    %3637 = vmatpush1.bf16.msra.mxu0 %v2565
    %3638 = vmatprep.subr.bf16.mxu0 %v2568
    %3639 = vmatpush1.bf16.msra.mxu0 %v2567
    %3640 = vmatprep.subr.bf16.mxu0 %v2570
    %3641 = vmatpush1.bf16.msra.mxu0 %v2569
    %3642 = vmatprep.subr.bf16.mxu0 %v2572
    %3643 = vmatpush1.bf16.msra.mxu0 %v2571
    %3644 = vmatprep.subr.bf16.mxu0 %v2574
    %3645 = vmatpush1.bf16.msra.mxu0 %v2573
    %3646 = vmatprep.subr.bf16.mxu0 %v2576
    %3647 = vmatpush1.bf16.msra.mxu0 %v2575
    %3648 = vmatprep.subr.bf16.mxu0 %v2578
    %3649 = vmatpush1.bf16.msra.mxu0 %v2577
    %3650 = vmatprep.subr.bf16.mxu0 %v2580
    %3651 = vmatpush1.bf16.msra.mxu0 %v2579
    %3652 = vmatprep.subr.bf16.mxu0 %v2582
    %3653 = vmatpush1.bf16.msra.mxu0 %v2581
    %3654 = vmatprep.subr.bf16.mxu0 %v2584
    %3655 = vmatpush1.bf16.msra.mxu0 %v2583
    %3656 = vmatprep.subr.bf16.mxu0 %v2586
    %3657 = vmatpush1.bf16.msra.mxu0 %v2585
    %3658 = vmatprep.subr.bf16.mxu0 %v2588
    %3659 = vmatpush1.bf16.msra.mxu0 %v2587
    %3660 = vmatprep.subr.bf16.mxu0 %v2590
    %3661 = vmatpush1.bf16.msra.mxu0 %v2589
    %3662 = vmatprep.subr.bf16.mxu0 %v2592
    %3663 = vmatpush1.bf16.msra.mxu0 %v2591
    %3664 = vmatprep.mubr.bf16.mxu0 %v678
    %3665 = vmatmul.mubr.bf16.gmra.mrb[0].mxu0 %v676
    %v3666 = vpop.f32.mrb[0].mxu0
    %v3667 = vadd.f32 %v3626, %v3666
    %v3668 = vpop.f32.mrb[0].mxu0
    %v3669 = vadd.f32 %v3628, %v3668
    %v3670 = vpop.f32.mrb[0].mxu0
    %v3671 = vpop.f32.mrb[0].mxu0
    %3672 = vdwg.mxu0
    %3673 = vmatprep.subr.bf16.mxu0 %v2594
    %3674 = vmatpush1.bf16.msra.mxu0 %v2593
    %3675 = vmatprep.subr.bf16.mxu0 %v2596
    %3676 = vmatpush1.bf16.msra.mxu0 %v2595
    %3677 = vmatprep.subr.bf16.mxu0 %v2598
    %3678 = vmatpush1.bf16.msra.mxu0 %v2597
    %3679 = vmatprep.subr.bf16.mxu0 %v2600
    %3680 = vmatpush1.bf16.msra.mxu0 %v2599
    %3681 = vmatprep.subr.bf16.mxu0 %v2602
    %3682 = vmatpush1.bf16.msra.mxu0 %v2601
    %3683 = vmatprep.subr.bf16.mxu0 %v2604
    %3684 = vmatpush1.bf16.msra.mxu0 %v2603
    %3685 = vmatprep.subr.bf16.mxu0 %v2606
    %3686 = vmatpush1.bf16.msra.mxu0 %v2605
    %3687 = vmatprep.subr.bf16.mxu0 %v2608
    %3688 = vmatpush1.bf16.msra.mxu0 %v2607
    %3689 = vmatprep.subr.bf16.mxu0 %v2610
    %3690 = vmatpush1.bf16.msra.mxu0 %v2609
    %3691 = vmatprep.subr.bf16.mxu0 %v2612
    %3692 = vmatpush1.bf16.msra.mxu0 %v2611
    %3693 = vmatprep.subr.bf16.mxu0 %v2614
    %3694 = vmatpush1.bf16.msra.mxu0 %v2613
    %3695 = vmatprep.subr.bf16.mxu0 %v2616
    %3696 = vmatpush1.bf16.msra.mxu0 %v2615
    %3697 = vmatprep.subr.bf16.mxu0 %v2618
    %3698 = vmatpush1.bf16.msra.mxu0 %v2617
    %3699 = vmatprep.subr.bf16.mxu0 %v2620
    %3700 = vmatpush1.bf16.msra.mxu0 %v2619
    %3701 = vmatprep.subr.bf16.mxu0 %v2622
    %3702 = vmatpush1.bf16.msra.mxu0 %v2621
    %3703 = vmatprep.subr.bf16.mxu0 %v2624
    %3704 = vmatpush1.bf16.msra.mxu0 %v2623
    %3705 = vmatprep.mubr.bf16.mxu0 %v716
    %3706 = vmatmul.mubr.bf16.gmra.mrb[0].mxu0 %v702
    %v3707 = vpop.f32.mrb[0].mxu0
    %v3708 = vadd.f32 %v3667, %v3707
    %v3709 = vpop.f32.mrb[0].mxu0
    %v3710 = vadd.f32 %v3669, %v3709
    %v3711 = vpop.f32.mrb[0].mxu0
    %v3712 = vpop.f32.mrb[0].mxu0
    %3713 = vdwg.mxu0
    %3714 = vmatprep.subr.bf16.mxu0 %v2626
    %3715 = vmatpush1.bf16.msra.mxu0 %v2625
    %3716 = vmatprep.subr.bf16.mxu0 %v2628
    %3717 = vmatpush1.bf16.msra.mxu0 %v2627
    %3718 = vmatprep.subr.bf16.mxu0 %v2630
    %3719 = vmatpush1.bf16.msra.mxu0 %v2629
    %3720 = vmatprep.subr.bf16.mxu0 %v2632
    %3721 = vmatpush1.bf16.msra.mxu0 %v2631
    %3722 = vmatprep.subr.bf16.mxu0 %v2634
    %3723 = vmatpush1.bf16.msra.mxu0 %v2633
    %3724 = vmatprep.subr.bf16.mxu0 %v2636
    %3725 = vmatpush1.bf16.msra.mxu0 %v2635
    %3726 = vmatprep.subr.bf16.mxu0 %v2638
    %3727 = vmatpush1.bf16.msra.mxu0 %v2637
    %3728 = vmatprep.subr.bf16.mxu0 %v2640
    %3729 = vmatpush1.bf16.msra.mxu0 %v2639
    %3730 = vmatprep.subr.bf16.mxu0 %v2642
    %3731 = vmatpush1.bf16.msra.mxu0 %v2641
    %3732 = vmatprep.subr.bf16.mxu0 %v2644
    %3733 = vmatpush1.bf16.msra.mxu0 %v2643
    %3734 = vmatprep.subr.bf16.mxu0 %v2646
    %3735 = vmatpush1.bf16.msra.mxu0 %v2645
    %3736 = vmatprep.subr.bf16.mxu0 %v2648
    %3737 = vmatpush1.bf16.msra.mxu0 %v2647
    %3738 = vmatprep.subr.bf16.mxu0 %v2650
    %3739 = vmatpush1.bf16.msra.mxu0 %v2649
    %3740 = vmatprep.subr.bf16.mxu0 %v2652
    %3741 = vmatpush1.bf16.msra.mxu0 %v2651
    %3742 = vmatprep.subr.bf16.mxu0 %v2654
    %3743 = vmatpush1.bf16.msra.mxu0 %v2653
    %3744 = vmatprep.subr.bf16.mxu0 %v2656
    %3745 = vmatpush1.bf16.msra.mxu0 %v2655
    %3746 = vmatprep.mubr.bf16.mxu0 %v726
    %3747 = vmatmul.mubr.bf16.gmra.mrb[0].mxu0 %v724
    %v3748 = vpop.f32.mrb[0].mxu0
    %v3749 = vadd.f32 %v3708, %v3748
    %v3750 = vpop.f32.mrb[0].mxu0
    %v3751 = vadd.f32 %v3710, %v3750
    %v3752 = vpop.f32.mrb[0].mxu0
    %v3753 = vpop.f32.mrb[0].mxu0
    %3754 = vdwg.mxu0
    %3755 = vmatprep.subr.bf16.mxu0 %v2658
    %3756 = vmatpush1.bf16.msra.mxu0 %v2657
    %3757 = vmatprep.subr.bf16.mxu0 %v2660
    %3758 = vmatpush1.bf16.msra.mxu0 %v2659
    %3759 = vmatprep.subr.bf16.mxu0 %v2662
    %3760 = vmatpush1.bf16.msra.mxu0 %v2661
    %3761 = vmatprep.subr.bf16.mxu0 %v2664
    %3762 = vmatpush1.bf16.msra.mxu0 %v2663
    %3763 = vmatprep.subr.bf16.mxu0 %v2666
    %3764 = vmatpush1.bf16.msra.mxu0 %v2665
    %3765 = vmatprep.subr.bf16.mxu0 %v2668
    %3766 = vmatpush1.bf16.msra.mxu0 %v2667
    %3767 = vmatprep.subr.bf16.mxu0 %v2670
    %3768 = vmatpush1.bf16.msra.mxu0 %v2669
    %3769 = vmatprep.subr.bf16.mxu0 %v2672
    %3770 = vmatpush1.bf16.msra.mxu0 %v2671
    %3771 = vmatprep.subr.bf16.mxu0 %v2674
    %3772 = vmatpush1.bf16.msra.mxu0 %v2673
    %3773 = vmatprep.subr.bf16.mxu0 %v2676
    %3774 = vmatpush1.bf16.msra.mxu0 %v2675
    %3775 = vmatprep.subr.bf16.mxu0 %v2678
    %3776 = vmatpush1.bf16.msra.mxu0 %v2677
    %3777 = vmatprep.subr.bf16.mxu0 %v2680
    %3778 = vmatpush1.bf16.msra.mxu0 %v2679
    %3779 = vmatprep.subr.bf16.mxu0 %v2682
    %3780 = vmatpush1.bf16.msra.mxu0 %v2681
    %3781 = vmatprep.subr.bf16.mxu0 %v2684
    %3782 = vmatpush1.bf16.msra.mxu0 %v2683
    %3783 = vmatprep.subr.bf16.mxu0 %v2686
    %3784 = vmatpush1.bf16.msra.mxu0 %v2685
    %3785 = vmatprep.subr.bf16.mxu0 %v2688
    %3786 = vmatpush1.bf16.msra.mxu0 %v2687
    %3787 = vmatprep.mubr.bf16.mxu0 %v723
    %3788 = vmatmul.mubr.bf16.gmra.mrb[0].mxu0 %v709
    %v3789 = vpop.f32.mrb[0].mxu0
    %v3790 = vadd.f32 %v3749, %v3789
    %v3791 = vpop.f32.mrb[0].mxu0
    %v3792 = vadd.f32 %v3751, %v3791
    %v3793 = vpop.f32.mrb[0].mxu0
    %v3794 = vpop.f32.mrb[0].mxu0
    %3795 = vdwg.mxu0
    %3796 = vmatprep.subr.bf16.mxu0 %v2690
    %3797 = vmatpush1.bf16.msra.mxu0 %v2689
    %3798 = vmatprep.subr.bf16.mxu0 %v2692
    %3799 = vmatpush1.bf16.msra.mxu0 %v2691
    %3800 = vmatprep.subr.bf16.mxu0 0
    %3801 = vmatpush1.bf16.msra.mxu0 0
    %3802 = vmatprep.subr.bf16.mxu0 0
    %3803 = vmatpush1.bf16.msra.mxu0 0
    %3804 = vmatprep.subr.bf16.mxu0 0
    %3805 = vmatpush1.bf16.msra.mxu0 0
    %3806 = vmatprep.subr.bf16.mxu0 0
    %3807 = vmatpush1.bf16.msra.mxu0 0
    %3808 = vmatprep.subr.bf16.mxu0 0
    %3809 = vmatpush1.bf16.msra.mxu0 0
    %3810 = vmatprep.subr.bf16.mxu0 0
    %3811 = vmatpush1.bf16.msra.mxu0 0
    %3812 = vmatprep.subr.bf16.mxu0 0
    %3813 = vmatpush1.bf16.msra.mxu0 0
    %3814 = vmatprep.subr.bf16.mxu0 0
    %3815 = vmatpush1.bf16.msra.mxu0 0
    %3816 = vmatprep.subr.bf16.mxu0 0
    %3817 = vmatpush1.bf16.msra.mxu0 0
    %3818 = vmatprep.subr.bf16.mxu0 0
    %3819 = vmatpush1.bf16.msra.mxu0 0
    %3820 = vmatprep.subr.bf16.mxu0 0
    %3821 = vmatpush1.bf16.msra.mxu0 0
    %3822 = vmatprep.subr.bf16.mxu0 0
    %3823 = vmatpush1.bf16.msra.mxu0 0
    %3824 = vmatprep.subr.bf16.mxu0 0
    %3825 = vmatpush1.bf16.msra.mxu0 0
    %3826 = vmatprep.subr.bf16.mxu0 0
    %3827 = vmatpush1.bf16.msra.mxu0 0
    %3828 = vmatprep.mubr.bf16.mxu0 0
    %3829 = vmatmul.mubr.bf16.gmra.mrb[0].mxu0 %v3179
    %v3830 = vpop.f32.mrb[0].mxu0
    %v3831 = vadd.f32 %v3790, %v3830
    %v3832 = vpop.f32.mrb[0].mxu0
    %v3833 = vadd.f32 %v3792, %v3832
    %v3834 = vpop.f32.mrb[0].mxu0
    %v3835 = vpop.f32.mrb[0].mxu0
    %3836 = vdwg.mxu0
    %v3837 = vmax.f32 %v3831, 0.0
    %v3838 = vmax.f32 %v3833, 0.0
    %v3839 = vpack.c.bf16 %v3837, %v3837
    %v3840 = vpack.c.bf16 %v3838, %v3838
    %v3841 = vld [vmem:[%s3] sm:$0xf]
    %v3842 = vld [vmem:[%s3 + $0x4] sm:$0xf]
    %v3843 = vld [vmem:[%s3 + $0x8] sm:$0xf]
    %v3844 = vld [vmem:[%s3 + $0xc] sm:$0xf]
    %v3845 = vld [vmem:[%s3 + $0x10] sm:$0xf]
    %v3846 = vld [vmem:[%s3 + $0x14] sm:$0xf]
    %v3847 = vld [vmem:[%s3 + $0x18] sm:$0xf]
    %v3848 = vld [vmem:[%s3 + $0x1c] sm:$0xf]
    %v3849 = vld [vmem:[%s3 + $0x20] sm:$0xf]
    %v3850 = vld [vmem:[%s3 + $0x24] sm:$0xf]
    %v3851 = vld [vmem:[%s3 + $0x28] sm:$0xf]
    %v3852 = vld [vmem:[%s3 + $0x2c] sm:$0xf]
    %v3853 = vld [vmem:[%s3 + $0x30] sm:$0xf]
    %v3854 = vld [vmem:[%s3 + $0x34] sm:$0xf]
    %v3855 = vld [vmem:[%s3 + $0x38] sm:$0xf]
    %v3856 = vld [vmem:[%s3 + $0x3c] sm:$0xf]
    %v3857 = vld [vmem:[%s3 + $0x40] sm:$0xf]
    %v3858 = vld [vmem:[%s3 + $0x44] sm:$0xf]
    %v3859 = vld [vmem:[%s3 + $0x48] sm:$0xf]
    %v3860 = vld [vmem:[%s3 + $0x4c] sm:$0xf]
    %v3861 = vld [vmem:[%s3 + $0x50] sm:$0xf]
    %v3862 = vld [vmem:[%s3 + $0x54] sm:$0xf]
    %v3863 = vld [vmem:[%s3 + $0x58] sm:$0xf]
    %v3864 = vld [vmem:[%s3 + $0x5c] sm:$0xf]
    %v3865 = vld [vmem:[%s3 + $0x60] sm:$0xf]
    %v3866 = vld [vmem:[%s3 + $0x64] sm:$0xf]
    %v3867 = vld [vmem:[%s3 + $0x68] sm:$0xf]
    %v3868 = vld [vmem:[%s3 + $0x6c] sm:$0xf]
    %v3869 = vld [vmem:[%s3 + $0x70] sm:$0xf]
    %v3870 = vld [vmem:[%s3 + $0x74] sm:$0xf]
    %v3871 = vld [vmem:[%s3 + $0x78] sm:$0xf]
    %v3872 = vld [vmem:[%s3 + $0x7c] sm:$0xf]
    %v3873 = vld [vmem:[%s4] sm:$0x1]
    %v3875 = vlaneseq
    %v3876 = vshrl.u32 %v3875, 7
    %v3877 = vsub.s32 0, %v3876
    %v3878 = vrot.slane %v3873, %v3877
    %v3912 = vunpack.c.l.b16 %v3841
    %v3913 = vunpack.c.l.b16 %v3842
    %v3914 = vunpack.c.l.b16 %v3843
    %v3915 = vunpack.c.l.b16 %v3844
    %v3916 = vunpack.c.l.b16 %v3845
    %v3917 = vunpack.c.l.b16 %v3846
    %v3918 = vunpack.c.l.b16 %v3847
    %v3919 = vunpack.c.l.b16 %v3848
    %v3920 = vunpack.c.l.b16 %v3849
    %v3921 = vunpack.c.l.b16 %v3850
    %v3922 = vunpack.c.l.b16 %v3851
    %v3923 = vunpack.c.l.b16 %v3852
    %v3924 = vunpack.c.l.b16 %v3853
    %v3925 = vunpack.c.l.b16 %v3854
    %v3926 = vunpack.c.l.b16 %v3855
    %v3927 = vunpack.c.l.b16 %v3856
    %v3928 = vunpack.c.l.b16 %v3857
    %v3929 = vunpack.c.l.b16 %v3858
    %v3930 = vunpack.c.l.b16 %v3859
    %v3931 = vunpack.c.l.b16 %v3860
    %v3932 = vunpack.c.l.b16 %v3861
    %v3933 = vunpack.c.l.b16 %v3862
    %v3934 = vunpack.c.l.b16 %v3863
    %v3935 = vunpack.c.l.b16 %v3864
    %v3936 = vunpack.c.l.b16 %v3865
    %v3937 = vunpack.c.l.b16 %v3866
    %v3938 = vunpack.c.l.b16 %v3867
    %v3939 = vunpack.c.l.b16 %v3868
    %v3940 = vunpack.c.l.b16 %v3869
    %v3941 = vunpack.c.l.b16 %v3870
    %v3942 = vunpack.c.l.b16 %v3871
    %v3943 = vunpack.c.l.b16 %v3872
    %v3944 = vpack.c.b16 %v3913, %v3912
    %v3945 = vpack.c.b16 %v3915, %v3914
    %v3946 = vpack.c.b16 %v3917, %v3916
    %v3947 = vpack.c.b16 %v3919, %v3918
    %v3948 = vpack.c.b16 %v3921, %v3920
    %v3949 = vpack.c.b16 %v3923, %v3922
    %v3950 = vpack.c.b16 %v3925, %v3924
    %v3951 = vpack.c.b16 %v3927, %v3926
    %v3952 = vpack.c.b16 %v3929, %v3928
    %v3953 = vpack.c.b16 %v3931, %v3930
    %v3954 = vpack.c.b16 %v3933, %v3932
    %v3955 = vpack.c.b16 %v3935, %v3934
    %v3956 = vpack.c.b16 %v3937, %v3936
    %v3957 = vpack.c.b16 %v3939, %v3938
    %v3958 = vpack.c.b16 %v3941, %v3940
    %v3959 = vpack.c.b16 %v3943, %v3942
    %3976 = vmatprep.subr.bf16.mxu0 0
    %3977 = vmatpush1.bf16.msra.mxu0 %v3944
    %3978 = vmatprep.subr.bf16.mxu0 0
    %3979 = vmatpush1.bf16.msra.mxu0 %v3945
    %3980 = vmatprep.subr.bf16.mxu0 0
    %3981 = vmatpush1.bf16.msra.mxu0 %v3946
    %3982 = vmatprep.subr.bf16.mxu0 0
    %3983 = vmatpush1.bf16.msra.mxu0 %v3947
    %3984 = vmatprep.subr.bf16.mxu0 0
    %3985 = vmatpush1.bf16.msra.mxu0 %v3948
    %3986 = vmatprep.subr.bf16.mxu0 0
    %3987 = vmatpush1.bf16.msra.mxu0 %v3949
    %3988 = vmatprep.subr.bf16.mxu0 0
    %3989 = vmatpush1.bf16.msra.mxu0 %v3950
    %3990 = vmatprep.subr.bf16.mxu0 0
    %3991 = vmatpush1.bf16.msra.mxu0 %v3951
    %3992 = vmatprep.subr.bf16.mxu0 0
    %3993 = vmatpush1.bf16.msra.mxu0 %v3952
    %3994 = vmatprep.subr.bf16.mxu0 0
    %3995 = vmatpush1.bf16.msra.mxu0 %v3953
    %3996 = vmatprep.subr.bf16.mxu0 0
    %3997 = vmatpush1.bf16.msra.mxu0 %v3954
    %3998 = vmatprep.subr.bf16.mxu0 0
    %3999 = vmatpush1.bf16.msra.mxu0 %v3955
    %4000 = vmatprep.subr.bf16.mxu0 0
    %4001 = vmatpush1.bf16.msra.mxu0 %v3956
    %4002 = vmatprep.subr.bf16.mxu0 0
    %4003 = vmatpush1.bf16.msra.mxu0 %v3957
    %4004 = vmatprep.subr.bf16.mxu0 0
    %4005 = vmatpush1.bf16.msra.mxu0 %v3958
    %4006 = vmatprep.subr.bf16.mxu0 0
    %4007 = vmatpush1.bf16.msra.mxu0 %v3959
    %4008 = vmatprep.mubr.bf16.mxu0 %v3840
    %4009 = vmatmul.mubr.bf16.gmra.mrb[0].mxu0 %v3839
    %v4010 = vpop.f32.mrb[0].mxu0
    %v4011 = vadd.f32 %v3878, %v4010
    %v4012 = vpop.f32.mrb[0].mxu0
    %v4013 = vpop.f32.mrb[0].mxu0
    %v4014 = vpop.f32.mrb[0].mxu0
    %4015 = vdwg.mxu0
    %v4016 = vmax.f32 %v4011, 0.0
    %v4017 = vpack.c.bf16 %v4016, %v4016
    %v4018 = vld [vmem:[%s5] sm:$0xf]
    %v4019 = vld [vmem:[%s5 + $0x4] sm:$0xf]
    %v4020 = vld [vmem:[%s5 + $0x8] sm:$0xf]
    %v4021 = vld [vmem:[%s5 + $0xc] sm:$0xf]
    %v4022 = vld [vmem:[%s5 + $0x10] sm:$0xf]
    %v4023 = vld [vmem:[%s5 + $0x14] sm:$0xf]
    %v4024 = vld [vmem:[%s5 + $0x18] sm:$0xf]
    %v4025 = vld [vmem:[%s5 + $0x1c] sm:$0xf]
    %v4026 = vld [vmem:[%s5 + $0x20] sm:$0xf]
    %v4027 = vld [vmem:[%s5 + $0x24] sm:$0xf]
    %v4028 = vld [vmem:[%s5 + $0x28] sm:$0xf]
    %v4029 = vld [vmem:[%s5 + $0x2c] sm:$0xf]
    %v4030 = vld [vmem:[%s5 + $0x30] sm:$0xf]
    %v4031 = vld [vmem:[%s5 + $0x34] sm:$0xf]
    %v4032 = vld [vmem:[%s5 + $0x38] sm:$0xf]
    %v4033 = vld [vmem:[%s5 + $0x3c] sm:$0xf]
    %v4034 = vld [vmem:[%s6] sm:$0x1]
    %v4036 = vlaneseq
    %v4037 = vshrl.u32 %v4036, 7
    %v4038 = vsub.s32 0, %v4037
    %v4039 = vrot.slane %v4034, %v4038
    %v4057 = vunpack.c.l.b16 %v4018
    %v4058 = vunpack.c.l.b16 %v4019
    %v4059 = vunpack.c.l.b16 %v4020
    %v4060 = vunpack.c.l.b16 %v4021
    %v4061 = vunpack.c.l.b16 %v4022
    %v4062 = vunpack.c.l.b16 %v4023
    %v4063 = vunpack.c.l.b16 %v4024
    %v4064 = vunpack.c.l.b16 %v4025
    %v4065 = vunpack.c.l.b16 %v4026
    %v4066 = vunpack.c.l.b16 %v4027
    %v4067 = vunpack.c.l.b16 %v4028
    %v4068 = vunpack.c.l.b16 %v4029
    %v4069 = vunpack.c.l.b16 %v4030
    %v4070 = vunpack.c.l.b16 %v4031
    %v4071 = vunpack.c.l.b16 %v4032
    %v4072 = vunpack.c.l.b16 %v4033
    %v4073 = vpack.c.b16 %v4058, %v4057
    %v4074 = vpack.c.b16 %v4060, %v4059
    %v4075 = vpack.c.b16 %v4062, %v4061
    %v4076 = vpack.c.b16 %v4064, %v4063
    %v4077 = vpack.c.b16 %v4066, %v4065
    %v4078 = vpack.c.b16 %v4068, %v4067
    %v4079 = vpack.c.b16 %v4070, %v4069
    %v4080 = vpack.c.b16 %v4072, %v4071
    %4089 = vmatprep.subr.bf16.mxu0 0
    %4090 = vmatpush1.bf16.msra.mxu0 %v4073
    %4091 = vmatprep.subr.bf16.mxu0 0
    %4092 = vmatpush1.bf16.msra.mxu0 %v4074
    %4093 = vmatprep.subr.bf16.mxu0 0
    %4094 = vmatpush1.bf16.msra.mxu0 %v4075
    %4095 = vmatprep.subr.bf16.mxu0 0
    %4096 = vmatpush1.bf16.msra.mxu0 %v4076
    %4097 = vmatprep.subr.bf16.mxu0 0
    %4098 = vmatpush1.bf16.msra.mxu0 %v4077
    %4099 = vmatprep.subr.bf16.mxu0 0
    %4100 = vmatpush1.bf16.msra.mxu0 %v4078
    %4101 = vmatprep.subr.bf16.mxu0 0
    %4102 = vmatpush1.bf16.msra.mxu0 %v4079
    %4103 = vmatprep.subr.bf16.mxu0 0
    %4104 = vmatpush1.bf16.msra.mxu0 %v4080
    %4105 = vmatprep.subr.bf16.mxu0 0
    %4106 = vmatpush1.bf16.msra.mxu0 0
    %4107 = vmatprep.subr.bf16.mxu0 0
    %4108 = vmatpush1.bf16.msra.mxu0 0
    %4109 = vmatprep.subr.bf16.mxu0 0
    %4110 = vmatpush1.bf16.msra.mxu0 0
    %4111 = vmatprep.subr.bf16.mxu0 0
    %4112 = vmatpush1.bf16.msra.mxu0 0
    %4113 = vmatprep.subr.bf16.mxu0 0
    %4114 = vmatpush1.bf16.msra.mxu0 0
    %4115 = vmatprep.subr.bf16.mxu0 0
    %4116 = vmatpush1.bf16.msra.mxu0 0
    %4117 = vmatprep.subr.bf16.mxu0 0
    %4118 = vmatpush1.bf16.msra.mxu0 0
    %4119 = vmatprep.subr.bf16.mxu0 0
    %4120 = vmatpush1.bf16.msra.mxu0 0
    %4121 = vmatprep.mubr.bf16.mxu0 0
    %4122 = vmatmul.mubr.bf16.gmra.mrb[0].mxu0 %v4017
    %v4123 = vpop.f32.mrb[0].mxu0
    %v4124 = vadd.f32 %v4039, %v4123
    %v4125 = vpop.f32.mrb[0].mxu0
    %v4126 = vpop.f32.mrb[0].mxu0
    %v4127 = vpop.f32.mrb[0].mxu0
    %4128 = vdwg.mxu0
    %vm4129 = vcmask 648192
    %4130 = vst.msk [vmem:[#allocation2] sm:$0x3] %vm4129, %v4124
    // Predicated region
    $region30: #{convnet_forward.5} parent=1 // pred_check
      _
    $region31: #{convnet_forward.5} parent=1 // pred_check_branch
      %4132 = sbr.rel (0) target = $region33
    $region32: #{convnet_forward.5} parent=1 // pred_region
      %s4134 = ssub.s32 32, 32
      %4135 = vsyncadd [#allocation3], %s4134
      %s4137 = sshll.u32 [#allocation2], 4
      %s4138 = int_to_ptr.vmem [resolvable:$true] %s4137
      %4140 = dma.vmem_to_hbm [thread:$0]  %s4138, 32, %s7, [#allocation3]
    $region33: #{convnet_forward.5} parent=1 // pred_fallthru
      _
    // Predicated region
    $region34: #{convnet_forward.5} parent=1 // pred_check
      _
    $region35: #{convnet_forward.5} parent=1 // pred_check_branch
      %4142 = sbr.rel (0) target = $region37
    $region36: #{convnet_forward.5} parent=1 // pred_region
      %4143 = dma.done [#allocation3], 32
    $region37: #{convnet_forward.5} parent=1 // pred_fallthru
      _
    %4144 = vsyncpa [#allocation3], 1

</llo_original>
